<compile_context>
chip_gen: v7x
topology: tpu7x:2x2x1
jax: 0.10.0
libtpu: 0.0.40
codegen_flags: <defaults>
</compile_context>

<pallas_src>
import jax
import jax.numpy as jnp
from jax import lax
from jax.experimental import pallas as pl
from jax.experimental.pallas import tpu as pltpu

NEG_SLOPE = 0.01     # nn.LeakyReLU() default negative_slope
BN_EPS = 1e-5        # nn.BatchNorm2d default eps
LANE = 128           # TPU lane width / MXU granule


# ----------------------------------------------------------------------------
# Sizing helpers (generation aware)
# ----------------------------------------------------------------------------
def _round_up(v, m):
    return (v + m - 1) // m * m


def _vmem_capacity_bytes():
    """Physical VMEM per TensorCore (v5e/v6e: 128 MiB, v7x: 64 MiB)."""
    try:
        info = pltpu.get_tpu_info()
        cap = int(getattr(info, "vmem_capacity_bytes", 0) or 0)
        if cap > 0:
            return cap
    except Exception:
        pass
    return 64 << 20          # conservative default (v7x per-TensorCore)


def _conv_tile_bytes(th, w, cin_list, cout):
    """Rough per-grid-step VMEM footprint (bytes) of a conv pass."""
    bf, f32 = 2, 4
    wp2 = _round_up(w + 2, 8)
    total = 0
    for c in cin_list:
        cl = _round_up(c, LANE)                     # internal lane padding
        total += 2 * (th + 2) * w * cl * bf         # double-buffered input blocks
        total += (th + 2) * wp2 * cl * f32          # fp32 padded scratch
        total += 9 * c * cout * bf                  # weights (single-buffered)
        total += (th + 2) * w * 3 * cl * bf         # bf16 slab / tap temporaries
        total += th * w * 3 * cl * bf               # live dot LHS slices (approx)
    total += th * w * cout * f32                    # fp32 accumulator
    total += 2 * th * w * cout * bf                 # double-buffered output block
    total += 64 * cout * f32                        # stats / scale / shift
    return total


def _pick_row_tile(h, w, cin_list, cout, budget):
    """Largest divisor of H whose tile fits the VMEM budget (M capped ~8192)."""
    best = 1
    for d in range(1, h + 1):
        if h % d:
            continue
        if _conv_tile_bytes(d, w, cin_list, cout) > budget:
            continue
        if best * w >= 512 and d * w > 8192:
            continue
        best = d
    return best


def _vmem_limit_bytes(tile_bytes, cap):
    hard = int(cap * 0.9)
    want = 2 * tile_bytes + (16 << 20)
    return int(max(min(want, hard), min(32 << 20, hard)))


# ----------------------------------------------------------------------------
# Optional single-buffering of grid-invariant operands (probed at runtime).
# ----------------------------------------------------------------------------
_SINGLE_BUFFER_OK = None


def _single_buffer_ok():
    """True if pipeline_mode=pl.Buffered(1) compiles & runs on this install."""
    global _SINGLE_BUFFER_OK
    if _SINGLE_BUFFER_OK is None:
        try:
            def _probe(x_ref, o_ref):
                o_ref[...] = x_ref[...]

            x = jnp.zeros((8, 128), jnp.float32)
            out = pl.pallas_call(
                _probe,
                grid=(2,),
                in_specs=[pl.BlockSpec((8, 128), lambda i: (0, 0),
                                       pipeline_mode=pl.Buffered(1))],
                out_specs=pl.BlockSpec((8, 128), lambda i: (i, 0)),
                out_shape=jax.ShapeDtypeStruct((16, 128), jnp.float32),
            )(x)
            jax.block_until_ready(out)
            _SINGLE_BUFFER_OK = True
        except Exception:
            _SINGLE_BUFFER_OK = False
    return _SINGLE_BUFFER_OK


def _invariant_spec(shape, index_map):
    """BlockSpec for an operand whose block never changes across the grid."""
    if _single_buffer_ok():
        return pl.BlockSpec(shape, index_map, pipeline_mode=pl.Buffered(1))
    return pl.BlockSpec(shape, index_map)


# ----------------------------------------------------------------------------
# In-kernel helpers
# ----------------------------------------------------------------------------
def _fill_padded(pad_ref, m_ref, t_ref, b_ref, th, w, hb, nhb, fn=None):
    """Assemble a zero-bordered (th+2, w+2, C) tile in the fp32 VMEM scratch.

    Halo rows are written under @pl.when scalar branches: the 1-px zero border
    is the only zero fill, and no affine/activation work is spent on halo rows
    that get zeroed at the grid edges.
    """
    c = pad_ref.shape[-1]
    dt = pad_ref.dtype
    if fn is None:
        conv = lambda v: v.astype(dt)
    else:
        conv = lambda v: fn(v).astype(dt)

    zcol = jnp.zeros((th + 2, 1, c), dt)
    pad_ref[:, 0:1, :] = zcol
    pad_ref[:, w + 1:w + 2, :] = zcol
    pad_ref[1:th + 1, 1:w + 1, :] = conv(m_ref[0])

    zrow = jnp.zeros((1, w, c), dt)

    @pl.when(hb > 0)
    def _():
        pad_ref[0:1, 1:w + 1, :] = conv(t_ref[0])

    @pl.when(hb == 0)
    def _():
        pad_ref[0:1, 1:w + 1, :] = zrow

    @pl.when(hb < nhb - 1)
    def _():
        pad_ref[th + 1:th + 2, 1:w + 1, :] = conv(b_ref[0])

    @pl.when(hb == nhb - 1)
    def _():
        pad_ref[th + 1:th + 2, 1:w + 1, :] = zrow


def _conv3x3_slabs(pad_ref, w_ref, th, w):
    """3x3 conv as three accumulated MXU dots over column-shifted slabs.

    K = 3*Cin (lane-aligned Cin), so no 9*Cin-wide patch is ever materialized.
    Slabs are cast to bf16 once (the MXU needs bf16 anyway) right before dot.
    """
    c = pad_ref.shape[-1]
    k = 3 * c
    bt = w_ref.dtype
    cols = jnp.concatenate(
        [pad_ref[:, 0:w, :].astype(bt),
         pad_ref[:, 1:w + 1, :].astype(bt),
         pad_ref[:, 2:w + 2, :].astype(bt)], axis=-1)      # (th+2, w, 3C) bf16
    acc = jnp.dot(cols[0:th].reshape(th * w, k), w_ref[0],
                  preferred_element_type=jnp.float32)
    acc = acc + jnp.dot(cols[1:th + 1].reshape(th * w, k), w_ref[1],
                        preferred_element_type=jnp.float32)
    acc = acc + jnp.dot(cols[2:th + 2].reshape(th * w, k), w_ref[2],
                        preferred_element_type=jnp.float32)
    return acc                                             # (th*w, Cout) fp32


def _conv3x3_taps(pad_ref, w_ref, th, w, acc=None):
    """3x3 conv of one (not lane-aligned) channel piece as nine K=C MXU dots.

    Used by pass 1 where the two concat pieces have arbitrary channel counts,
    so no lane-unaligned concatenation is ever needed.
    """
    c = pad_ref.shape[-1]
    bt = w_ref.dtype
    for k in range(9):
        kh, kw = divmod(k, 3)
        lhs = pad_ref[kh:kh + th, kw:kw + w, :].astype(bt).reshape(th * w, c)
        d = jnp.dot(lhs, w_ref[k], preferred_element_type=jnp.float32)
        acc = d if acc is None else acc + d
    return acc


def _store_conv_and_stats(acc, a_ref, stats_ref):
    """Write the pre-BN conv tile (bf16) and per-channel (sum, sumsq) partials.

    Note: sum/sumsq partials in fp32 (E[x^2]-mean^2); a Welford merge would be
    more robust for very large batches but is unnecessary at these scales.
    """
    _, th, w, cout = a_ref.shape
    a_ref[...] = acc.reshape(1, th, w, cout).astype(a_ref.dtype)
    s1 = jnp.sum(acc, axis=0, keepdims=True)
    s2 = jnp.sum(acc * acc, axis=0, keepdims=True)
    stats_ref[...] = jnp.concatenate([s1, s2], axis=0).reshape(1, 1, 2, cout)


# ----------------------------------------------------------------------------
# Kernels
# ----------------------------------------------------------------------------
def _concat_conv_stats_kernel(um_ref, ut_ref, ub_ref, cm_ref, ct_ref, cb_ref,
                              wu_ref, wc_ref, a_ref, stats_ref,
                              pu_ref, pc_ref):
    """Pass 1: fused channel-concat (via conv linearity) + conv3x3 + stats."""
    hb = pl.program_id(1)
    nhb = pl.num_programs(1)
    th, w = a_ref.shape[1], a_ref.shape[2]

    _fill_padded(pu_ref, um_ref, ut_ref, ub_ref, th, w, hb, nhb)
    _fill_padded(pc_ref, cm_ref, ct_ref, cb_ref, th, w, hb, nhb)

    acc = _conv3x3_taps(pu_ref, wu_ref, th, w)
    acc = _conv3x3_taps(pc_ref, wc_ref, th, w, acc)
    _store_conv_and_stats(acc, a_ref, stats_ref)


def _affine_act_conv_stats_kernel(m_ref, t_ref, b_ref, scale_ref, shift_ref,
                                  w_ref, a_ref, stats_ref, pad_ref):
    """Pass 2: BN1-affine + LeakyReLU folded into tile assembly, then conv3x3."""
    hb = pl.program_id(1)
    nhb = pl.num_programs(1)
    th, w = a_ref.shape[1], a_ref.shape[2]
    sc = scale_ref[...]
    sh = shift_ref[...]

    def act(v):
        y = v.astype(jnp.float32) * sc + sh
        return jnp.where(y >= 0, y, NEG_SLOPE * y)

    _fill_padded(pad_ref, m_ref, t_ref, b_ref, th, w, hb, nhb, fn=act)
    acc = _conv3x3_slabs(pad_ref, w_ref, th, w)
    _store_conv_and_stats(acc, a_ref, stats_ref)


def _affine_act_kernel(a_ref, scale_ref, shift_ref, out_ref):
    """Pass 3: BN2-affine + LeakyReLU; only the real output channels are
    written (no padded-channel HBM traffic)."""
    cout = out_ref.shape[-1]
    y = a_ref[...].astype(jnp.float32) * scale_ref[...] + shift_ref[...]
    y = jnp.where(y >= 0, y, NEG_SLOPE * y)
    out_ref[...] = y[..., :cout].astype(out_ref.dtype)


# ----------------------------------------------------------------------------
# Pallas wrappers
# ----------------------------------------------------------------------------
def _conv1_pass(up, cat, wu, wc, th):
    """Pass 1, gridded over (batch, row-blocks); returns pre-BN out + stats."""
    n, h, w, cx = up.shape
    cc = cat.shape[-1]
    cout = wu.shape[-1]
    hb_n = h // th
    wp2 = _round_up(w + 2, 8)

    def main_map(ni, hb):
        return (ni, hb, 0, 0)

    def top_map(ni, hb):                 # clamped; zeroed in-kernel at hb==0
        return (ni, jnp.maximum(hb * th - 1, 0), 0, 0)

    def bot_map(ni, hb):                 # clamped; zeroed in-kernel at last hb
        return (ni, jnp.minimum((hb + 1) * th, h - 1), 0, 0)

    rep3 = lambda ni, hb: (0, 0, 0)

    in_specs = [
        pl.BlockSpec((1, th, w, cx), main_map),
        pl.BlockSpec((1, 1, w, cx), top_map),
        pl.BlockSpec((1, 1, w, cx), bot_map),
        pl.BlockSpec((1, th, w, cc), main_map),
        pl.BlockSpec((1, 1, w, cc), top_map),
        pl.BlockSpec((1, 1, w, cc), bot_map),
        _invariant_spec((9, cx, cout), rep3),
        _invariant_spec((9, cc, cout), rep3),
    ]
    out_shape = (jax.ShapeDtypeStruct((n, h, w, cout), jnp.bfloat16),
                 jax.ShapeDtypeStruct((n, hb_n, 2, cout), jnp.float32))
    out_specs = (pl.BlockSpec((1, th, w, cout), main_map),
                 pl.BlockSpec((1, 1, 2, cout), lambda ni, hb: (ni, hb, 0, 0)))

    tile_bytes = _conv_tile_bytes(th, w, [cx, cc], cout)
    cap = _vmem_capacity_bytes()
    return pl.pallas_call(
        _concat_conv_stats_kernel,
        grid=(n, hb_n),
        in_specs=in_specs,
        out_specs=out_specs,
        out_shape=out_shape,
        scratch_shapes=[pltpu.VMEM((th + 2, wp2, cx), jnp.float32),
                        pltpu.VMEM((th + 2, wp2, cc), jnp.float32)],
        compiler_params=pltpu.CompilerParams(
            dimension_semantics=("parallel", "parallel"),
            vmem_limit_bytes=_vmem_limit_bytes(tile_bytes, cap)),
    )(up, up, up, cat, cat, cat, wu, wc)


def _conv2_pass(a1, w2, scale, shift, th):
    """Pass 2 (BN1 affine + LReLU + conv2), gridded over (batch, row-blocks)."""
    n, h, w, cin = a1.shape
    cout = w2.shape[-1]
    hb_n = h // th
    wp2 = _round_up(w + 2, 8)

    def main_map(ni, hb):
        return (ni, hb, 0, 0)

    def top_map(ni, hb):
        return (ni, jnp.maximum(hb * th - 1, 0), 0, 0)

    def bot_map(ni, hb):
        return (ni, jnp.minimum((hb + 1) * th, h - 1), 0, 0)

    rep2 = lambda ni, hb: (0, 0)
    rep3 = lambda ni, hb: (0, 0, 0)

    in_specs = [
        pl.BlockSpec((1, th, w, cin), main_map),
        pl.BlockSpec((1, 1, w, cin), top_map),
        pl.BlockSpec((1, 1, w, cin), bot_map),
        _invariant_spec((1, cin), rep2),
        _invariant_spec((1, cin), rep2),
        _invariant_spec((3, 3 * cin, cout), rep3),
    ]
    out_shape = (jax.ShapeDtypeStruct((n, h, w, cout), jnp.bfloat16),
                 jax.ShapeDtypeStruct((n, hb_n, 2, cout), jnp.float32))
    out_specs = (pl.BlockSpec((1, th, w, cout), main_map),
                 pl.BlockSpec((1, 1, 2, cout), lambda ni, hb: (ni, hb, 0, 0)))

    tile_bytes = _conv_tile_bytes(th, w, [cin], cout)
    cap = _vmem_capacity_bytes()
    return pl.pallas_call(
        _affine_act_conv_stats_kernel,
        grid=(n, hb_n),
        in_specs=in_specs,
        out_specs=out_specs,
        out_shape=out_shape,
        scratch_shapes=[pltpu.VMEM((th + 2, wp2, cin), jnp.float32)],
        compiler_params=pltpu.CompilerParams(
            dimension_semantics=("parallel", "parallel"),
            vmem_limit_bytes=_vmem_limit_bytes(tile_bytes, cap)),
    )(a1, a1, a1, scale, shift, w2)


def _affine_act_pass(a, scale, shift, th, cout_real):
    """Pass 3: final per-channel BN affine + LeakyReLU (real channels only)."""
    n, h, w, c = a.shape
    hb_n = h // th
    rep2 = lambda ni, hb: (0, 0)
    tile_bytes = th * w * (c * 10 + cout_real * 8) + 64 * c
    cap = _vmem_capacity_bytes()
    return pl.pallas_call(
        _affine_act_kernel,
        grid=(n, hb_n),
        in_specs=[pl.BlockSpec((1, th, w, c), lambda ni, hb: (ni, hb, 0, 0)),
                  _invariant_spec((1, c), rep2),
                  _invariant_spec((1, c), rep2)],
        out_specs=pl.BlockSpec((1, th, w, cout_real),
                               lambda ni, hb: (ni, hb, 0, 0)),
        out_shape=jax.ShapeDtypeStruct((n, h, w, cout_real), jnp.float32),
        compiler_params=pltpu.CompilerParams(
            dimension_semantics=("parallel", "parallel"),
            vmem_limit_bytes=_vmem_limit_bytes(tile_bytes, cap)),
    )(a, scale, shift)


def _bn_affine_from_stats(stats, gamma, beta, count):
    """Reduce per-tile (sum, sumsq) to the per-channel BN scale/shift pair."""
    s = jnp.sum(stats, axis=(0, 1))                       # (2, C)
    mean = s[0] / count
    var = jnp.maximum(s[1] / count - mean * mean, 0.0)    # biased batch var
    scale = gamma * lax.rsqrt(var + BN_EPS)
    shift = beta - mean * scale
    return scale.reshape(1, -1), shift.reshape(1, -1)


# ----------------------------------------------------------------------------
# JAX glue: bilinear upsample (align_corners=True).
# ----------------------------------------------------------------------------
def _coords(out_size, in_size):
    if out_size == 1:
        s = jnp.zeros((1,), jnp.float32)
    else:
        s = jnp.arange(out_size, dtype=jnp.float32) * \
            ((in_size - 1) / (out_size - 1))
    i0 = jnp.clip(jnp.floor(s).astype(jnp.int32), 0, in_size - 1)
    i1 = jnp.minimum(i0 + 1, in_size - 1)
    return i0, i1, s - i0.astype(jnp.float32)


def _bilinear_align_corners(x_nhwc, out_h, out_w):
    """Separable bilinear resize, align_corners=True (one lerp per axis)."""
    _, h, w, _ = x_nhwc.shape
    y0, y1, fy = _coords(out_h, h)
    x0, x1, fx = _coords(out_w, w)
    r0 = jnp.take(x_nhwc, y0, axis=1)
    r1 = jnp.take(x_nhwc, y1, axis=1)
    rows = r0 + (r1 - r0) * fy[None, :, None, None]       # (N, out_h, W, C)
    c0 = jnp.take(rows, x0, axis=2)
    c1 = jnp.take(rows, x1, axis=2)
    return c0 + (c1 - c0) * fx[None, None, :, None]       # (N, out_h, out_w, C)


def _pad_last(v, target):
    pad = target - v.shape[-1]
    if pad == 0:
        return v
    return jnp.pad(v, [(0, 0)] * (v.ndim - 1) + [(0, pad)])


@jax.jit
def upsample_bn_forward(x_nchw, concat_nchw, params):
    """Equivalent of UpSampleBN.forward (NCHW in / NCHW out, training-mode BN)."""
    n = x_nchw.shape[0]
    cx = x_nchw.shape[1]
    cc, ho, wo = concat_nchw.shape[1], concat_nchw.shape[2], concat_nchw.shape[3]
    c2 = params["w1"].shape[-1]
    c2p = _round_up(c2, LANE)
    count = n * ho * wo

    cap = _vmem_capacity_bytes()
    budget = int(cap * 0.6)
    th1 = _pick_row_tile(ho, wo, [cx, cc], c2p, budget)
    th2 = _pick_row_tile(ho, wo, [c2p], c2p, budget)

    # Prologue: bilinear upsample (XLA).  The channel concat + lane handling is
    # fused into pass 1, so no full-resolution `f` tensor is materialized.
    x_nhwc = jnp.transpose(x_nchw, (0, 2, 3, 1))
    c_nhwc = jnp.transpose(concat_nchw, (0, 2, 3, 1)).astype(jnp.bfloat16)
    up = _bilinear_align_corners(x_nhwc, ho, wo).astype(jnp.bfloat16)

    # Parameters.  Conv biases are intentionally dropped: a constant per-channel
    # offset before training-mode BatchNorm is cancelled exactly by the mean.
    w1 = jnp.pad(params["w1"].astype(jnp.float32),
                 ((0, 0), (0, 0), (0, 0), (0, c2p - c2)))      # (3,3,C1,C2p)
    w1u = w1[:, :, :cx, :].reshape(9, cx, c2p).astype(jnp.bfloat16)
    w1c = w1[:, :, cx:, :].reshape(9, cc, c2p).astype(jnp.bfloat16)
    w2 = jnp.pad(params["w2"].astype(jnp.float32),
                 ((0, 0), (0, 0), (0, c2p - c2), (0, c2p - c2)))
    w2 = w2.reshape(3, 3 * c2p, c2p).astype(jnp.bfloat16)
    g1 = _pad_last(params["g1"].astype(jnp.float32), c2p)
    be1 = _pad_last(params["be1"].astype(jnp.float32), c2p)
    g2 = _pad_last(params["g2"].astype(jnp.float32), c2p)
    be2 = _pad_last(params["be2"].astype(jnp.float32), c2p)

    # pass 1: fused concat + conv1 -> pre-BN output + batch statistics
    a1, st1 = _conv1_pass(up, c_nhwc, w1u, w1c, th1)
    sc1, sh1 = _bn_affine_from_stats(st1, g1, be1, count)
    # pass 2: BN1 affine + LeakyReLU + conv2 -> pre-BN output + statistics
    a2, st2 = _conv2_pass(a1, w2, sc1, sh1, th2)
    sc2, sh2 = _bn_affine_from_stats(st2, g2, be2, count)
    # pass 3: BN2 affine + LeakyReLU (real channels only)
    y = _affine_act_pass(a2, sc2, sh2, th2, c2)            # (N, Ho, Wo, C2) f32

    return jnp.transpose(y, (0, 3, 1, 2))


# ----------------------------------------------------------------------------
# Deterministic parameter initialization (shapes from the module __init__).
# ----------------------------------------------------------------------------
def init_params(key, skip_input, output_features):
    k0, k1, k2, k3 = jax.random.split(key, 4)
    w1 = jax.random.normal(k0, (3, 3, skip_input, output_features), jnp.float32)
    w1 = w1 / jnp.sqrt(9.0 * skip_input)
    cb1 = 0.01 * jax.random.normal(k1, (output_features,), jnp.float32)
    w2 = jax.random.normal(k2, (3, 3, output_features, output_features),
                           jnp.float32)
    w2 = w2 / jnp.sqrt(9.0 * output_features)
    cb2 = 0.01 * jax.random.normal(k3, (output_features,), jnp.float32)
    ar = jnp.arange(output_features, dtype=jnp.float32)
    return {
        "w1": w1, "cb1": cb1,
        "g1": 1.0 + 0.1 * ar, "be1": 0.05 * ar,
        "w2": w2, "cb2": cb2,
        "g2": 1.0 - 0.05 * ar, "be2": -0.02 * ar,
    }


# ----------------------------------------------------------------------------
# Pure-JAX fp32 reference (includes the conv biases; used for the check).
# ----------------------------------------------------------------------------
def reference_forward(x_nchw, concat_nchw, p):
    ho, wo = concat_nchw.shape[2], concat_nchw.shape[3]
    x_nhwc = jnp.transpose(x_nchw, (0, 2, 3, 1))
    c_nhwc = jnp.transpose(concat_nchw, (0, 2, 3, 1))
    f = jnp.concatenate([_bilinear_align_corners(x_nhwc, ho, wo), c_nhwc],
                        axis=-1)

    def block(inp, w, b, g, be):
        y = lax.conv_general_dilated(
            inp, w, (1, 1), "SAME",
            dimension_numbers=("NHWC", "HWIO", "NHWC")) + b
        m = jnp.mean(y, axis=(0, 1, 2), keepdims=True)
        v = jnp.mean((y - m) ** 2, axis=(0, 1, 2), keepdims=True)
        y = (y - m) * lax.rsqrt(v + BN_EPS) * g + be
        return jnp.where(y >= 0, y, NEG_SLOPE * y)

    y = block(f, p["w1"], p["cb1"], p["g1"], p["be1"])
    y = block(y, p["w2"], p["cb2"], p["g2"], p["be2"])
    return jnp.transpose(y, (0, 3, 1, 2))


if __name__ == "__main__":
    key = jax.random.PRNGKey(0)
    kx, kc, kp = jax.random.split(key, 3)

    N = 2
    Cx, Cc = 3, 5                 # x channels, skip-connection channels
    Hx, Wx = 8, 8                 # low-res spatial
    Hc, Wc = 16, 16               # target (skip) spatial
    skip_input = Cx + Cc
    output_features = 8

    x = jax.random.normal(kx, (N, Cx, Hx, Wx), jnp.float32)
    concat_with = jax.random.normal(kc, (N, Cc, Hc, Wc), jnp.float32)
    params = init_params(kp, skip_input, output_features)

    # Probe single-buffer support outside the jitted trace.
    _single_buffer_ok()

    out = jax.block_until_ready(upsample_bn_forward(x, concat_with, params))
    assert out.shape == (N, output_features, Hc, Wc), out.shape

    ref = jax.block_until_ready(reference_forward(x, concat_with, params))
    max_err = float(jnp.max(jnp.abs(out - ref)))
    # bf16 MXU operands (fp32 accumulation) + bf16 intermediates give ~1e-2
    # relative error on the O(1) post-BN activations.
    assert max_err < 1e-1, f"max_err={max_err}"
    print("KERNEL_OK")
</pallas_src>

<mosaic_0001>
module attributes {stable_mosaic.version = 11 : i64} {
  func.func @_probe(%arg0: i32, %arg1: memref<8x128xf32, #tpu.memory_space<vmem>>, %arg2: memref<8x128xf32, #tpu.memory_space<vmem>>) attributes {dimension_semantics = [#tpu.dimension_semantics<arbitrary>], iteration_bounds = array<i64: 2>, scalar_prefetch = 0 : i64, scratch_operands = 0 : i64, tpu.core_type = #tpu.core_type<tc>, window_params = [{pipeline_mode = #tpu.pipeline_mode<synchronous>, transform_indices = @transform_0, window_bounds = array<i64: 8, 128>}, {transform_indices = @transform_1, window_bounds = array<i64: 8, 128>}]} {
    %c0 = arith.constant 0 : index
    %c0_0 = arith.constant 0 : index
    %0 = vector.load %arg1[%c0, %c0_0] : memref<8x128xf32, #tpu.memory_space<vmem>>, vector<8x128xf32>
    %c0_1 = arith.constant 0 : index
    %c0_2 = arith.constant 0 : index
    %1 = vector.load %arg2[%c0_1, %c0_2] : memref<8x128xf32, #tpu.memory_space<vmem>>, vector<8x128xf32>
    tpu.vector_store %arg2[%c0_1, %c0_2], %0 {strides = array<i32>} : memref<8x128xf32, #tpu.memory_space<vmem>>, vector<8x128xf32>,
    return
  }
  func.func @transform_0(%arg0: i32) -> (i32, i32) {
    %c0_i32 = arith.constant 0 : i32
    %c0_i32_0 = arith.constant 0 : i32
    %c0_i32_1 = arith.constant 0 : i32
    return %c0_i32, %c0_i32_0 : i32, i32
  }
  func.func @transform_1(%arg0: i32) -> (i32, i32) {
    %c0_i32 = arith.constant 0 : i32
    %c0_i32_0 = arith.constant 0 : i32
    return %arg0, %c0_i32 : i32, i32
  }
}

module attributes {stable_mosaic.version = 11 : i64} {
  func.func @_concat_conv_stats_kernel(%arg0: i32, %arg1: i32, %arg2: memref<1x16x16x3xbf16, #tpu.memory_space<vmem>>, %arg3: memref<1x1x16x3xbf16, #tpu.memory_space<vmem>>, %arg4: memref<1x1x16x3xbf16, #tpu.memory_space<vmem>>, %arg5: memref<1x16x16x5xbf16, #tpu.memory_space<vmem>>, %arg6: memref<1x1x16x5xbf16, #tpu.memory_space<vmem>>, %arg7: memref<1x1x16x5xbf16, #tpu.memory_space<vmem>>, %arg8: memref<9x3x128xbf16, #tpu.memory_space<vmem>>, %arg9: memref<9x5x128xbf16, #tpu.memory_space<vmem>>, %arg10: memref<1x16x16x128xbf16, #tpu.memory_space<vmem>>, %arg11: memref<1x1x2x128xf32, #tpu.memory_space<vmem>>, %arg12: memref<18x24x3xf32, #tpu.memory_space<vmem>>, %arg13: memref<18x24x5xf32, #tpu.memory_space<vmem>>) attributes {dimension_semantics = [#tpu.dimension_semantics<parallel>, #tpu.dimension_semantics<parallel>], iteration_bounds = array<i64: 2, 1>, scalar_prefetch = 0 : i64, scratch_operands = 2 : i64, tpu.core_type = #tpu.core_type<tc>, window_params = [{transform_indices = @transform_0, window_bounds = array<i64: 1, 16, 16, 3>}, {transform_indices = @transform_1, window_bounds = array<i64: 1, 1, 16, 3>}, {transform_indices = @transform_2, window_bounds = array<i64: 1, 1, 16, 3>}, {transform_indices = @transform_3, window_bounds = array<i64: 1, 16, 16, 5>}, {transform_indices = @transform_4, window_bounds = array<i64: 1, 1, 16, 5>}, {transform_indices = @transform_5, window_bounds = array<i64: 1, 1, 16, 5>}, {pipeline_mode = #tpu.pipeline_mode<synchronous>, transform_indices = @transform_6, window_bounds = array<i64: 9, 3, 128>}, {pipeline_mode = #tpu.pipeline_mode<synchronous>, transform_indices = @transform_7, window_bounds = array<i64: 9, 5, 128>}, {transform_indices = @transform_8, window_bounds = array<i64: 1, 16, 16, 128>}, {transform_indices = @transform_9, window_bounds = array<i64: 1, 1, 2, 128>}]} {
    %cst = arith.constant 0.000000e+00 : f32
    %0 = vector.broadcast %cst : f32 to vector<18x1x3xf32>
    %c0 = arith.constant 0 : index
    %c0_0 = arith.constant 0 : index
    %c0_1 = arith.constant 0 : index
    %1 = vector.load %arg12[%c0, %c0_0, %c0_1] : memref<18x24x3xf32, #tpu.memory_space<vmem>>, vector<18x1x3xf32>
    tpu.vector_store %arg12[%c0, %c0_0, %c0_1], %0 {strides = array<i32>} : memref<18x24x3xf32, #tpu.memory_space<vmem>>, vector<18x1x3xf32>,
    %c0_2 = arith.constant 0 : index
    %c17 = arith.constant 17 : index
    %c0_3 = arith.constant 0 : index
    %2 = vector.load %arg12[%c0_2, %c17, %c0_3] : memref<18x24x3xf32, #tpu.memory_space<vmem>>, vector<18x1x3xf32>
    tpu.vector_store %arg12[%c0_2, %c17, %c0_3], %0 {strides = array<i32>} : memref<18x24x3xf32, #tpu.memory_space<vmem>>, vector<18x1x3xf32>,
    %c0_4 = arith.constant 0 : index
    %c0_5 = arith.constant 0 : index
    %c0_6 = arith.constant 0 : index
    %c0_7 = arith.constant 0 : index
    %3 = vector.load %arg2[%c0_4, %c0_5, %c0_6, %c0_7] : memref<1x16x16x3xbf16, #tpu.memory_space<vmem>>, vector<1x16x16x3xbf16>
    %4 = vector.shape_cast %3 : vector<1x16x16x3xbf16> to vector<16x16x3xbf16>
    %5 = arith.extf %4 : vector<16x16x3xbf16> to vector<16x16x3xf32>
    %c1 = arith.constant 1 : index
    %c1_8 = arith.constant 1 : index
    %c0_9 = arith.constant 0 : index
    %6 = vector.load %arg12[%c1, %c1_8, %c0_9] : memref<18x24x3xf32, #tpu.memory_space<vmem>>, vector<16x16x3xf32>
    tpu.vector_store %arg12[%c1, %c1_8, %c0_9], %5 {strides = array<i32>} : memref<18x24x3xf32, #tpu.memory_space<vmem>>, vector<16x16x3xf32>,
    %cst_10 = arith.constant 0.000000e+00 : f32
    %7 = vector.broadcast %cst_10 : f32 to vector<1x16x3xf32>
    %c0_i32 = arith.constant 0 : i32
    %8 = arith.cmpi sgt, %arg1, %c0_i32 : i32
    %9 = arith.extui %8 : i1 to i32
    %c0_i32_11 = arith.constant 0 : i32
    %10 = arith.cmpi ne, %9, %c0_i32_11 : i32
    scf.if %10 {
      %c0_170 = arith.constant 0 : index
      %c0_171 = arith.constant 0 : index
      %c0_172 = arith.constant 0 : index
      %c0_173 = arith.constant 0 : index
      %176 = vector.load %arg3[%c0_170, %c0_171, %c0_172, %c0_173] : memref<1x1x16x3xbf16, #tpu.memory_space<vmem>>, vector<1x1x16x3xbf16>
      %177 = vector.shape_cast %176 : vector<1x1x16x3xbf16> to vector<1x16x3xbf16>
      %178 = arith.extf %177 : vector<1x16x3xbf16> to vector<1x16x3xf32>
      %c0_174 = arith.constant 0 : index
      %c1_175 = arith.constant 1 : index
      %c0_176 = arith.constant 0 : index
      %179 = vector.load %arg12[%c0_174, %c1_175, %c0_176] : memref<18x24x3xf32, #tpu.memory_space<vmem>>, vector<1x16x3xf32>
      tpu.vector_store %arg12[%c0_174, %c1_175, %c0_176], %178 {strides = array<i32>} : memref<18x24x3xf32, #tpu.memory_space<vmem>>, vector<1x16x3xf32>,
    } else {
    }
    %c0_i32_12 = arith.constant 0 : i32
    %11 = arith.cmpi eq, %arg1, %c0_i32_12 : i32
    %12 = arith.extui %11 : i1 to i32
    %c0_i32_13 = arith.constant 0 : i32
    %13 = arith.cmpi ne, %12, %c0_i32_13 : i32
    scf.if %13 {
      %c0_170 = arith.constant 0 : index
      %c1_171 = arith.constant 1 : index
      %c0_172 = arith.constant 0 : index
      %176 = vector.load %arg12[%c0_170, %c1_171, %c0_172] : memref<18x24x3xf32, #tpu.memory_space<vmem>>, vector<1x16x3xf32>
      tpu.vector_store %arg12[%c0_170, %c1_171, %c0_172], %7 {strides = array<i32>} : memref<18x24x3xf32, #tpu.memory_space<vmem>>, vector<1x16x3xf32>,
    } else {
    }
    %c0_i32_14 = arith.constant 0 : i32
    %14 = arith.cmpi slt, %arg1, %c0_i32_14 : i32
    %15 = arith.extui %14 : i1 to i32
    %c0_i32_15 = arith.constant 0 : i32
    %16 = arith.cmpi ne, %15, %c0_i32_15 : i32
    scf.if %16 {
      %c0_170 = arith.constant 0 : index
      %c0_171 = arith.constant 0 : index
      %c0_172 = arith.constant 0 : index
      %c0_173 = arith.constant 0 : index
      %176 = vector.load %arg4[%c0_170, %c0_171, %c0_172, %c0_173] : memref<1x1x16x3xbf16, #tpu.memory_space<vmem>>, vector<1x1x16x3xbf16>
      %177 = vector.shape_cast %176 : vector<1x1x16x3xbf16> to vector<1x16x3xbf16>
      %178 = arith.extf %177 : vector<1x16x3xbf16> to vector<1x16x3xf32>
      %c17_174 = arith.constant 17 : index
      %c1_175 = arith.constant 1 : index
      %c0_176 = arith.constant 0 : index
      %179 = vector.load %arg12[%c17_174, %c1_175, %c0_176] : memref<18x24x3xf32, #tpu.memory_space<vmem>>, vector<1x16x3xf32>
      tpu.vector_store %arg12[%c17_174, %c1_175, %c0_176], %178 {strides = array<i32>} : memref<18x24x3xf32, #tpu.memory_space<vmem>>, vector<1x16x3xf32>,
    } else {
    }
    %c0_i32_16 = arith.constant 0 : i32
    %17 = arith.cmpi eq, %arg1, %c0_i32_16 : i32
    %18 = arith.extui %17 : i1 to i32
    %c0_i32_17 = arith.constant 0 : i32
    %19 = arith.cmpi ne, %18, %c0_i32_17 : i32
    scf.if %19 {
      %c17_170 = arith.constant 17 : index
      %c1_171 = arith.constant 1 : index
      %c0_172 = arith.constant 0 : index
      %176 = vector.load %arg12[%c17_170, %c1_171, %c0_172] : memref<18x24x3xf32, #tpu.memory_space<vmem>>, vector<1x16x3xf32>
      tpu.vector_store %arg12[%c17_170, %c1_171, %c0_172], %7 {strides = array<i32>} : memref<18x24x3xf32, #tpu.memory_space<vmem>>, vector<1x16x3xf32>,
    } else {
    }
    %cst_18 = arith.constant 0.000000e+00 : f32
    %20 = vector.broadcast %cst_18 : f32 to vector<18x1x5xf32>
    %c0_19 = arith.constant 0 : index
    %c0_20 = arith.constant 0 : index
    %c0_21 = arith.constant 0 : index
    %21 = vector.load %arg13[%c0_19, %c0_20, %c0_21] : memref<18x24x5xf32, #tpu.memory_space<vmem>>, vector<18x1x5xf32>
    tpu.vector_store %arg13[%c0_19, %c0_20, %c0_21], %20 {strides = array<i32>} : memref<18x24x5xf32, #tpu.memory_space<vmem>>, vector<18x1x5xf32>,
    %c0_22 = arith.constant 0 : index
    %c17_23 = arith.constant 17 : index
    %c0_24 = arith.constant 0 : index
    %22 = vector.load %arg13[%c0_22, %c17_23, %c0_24] : memref<18x24x5xf32, #tpu.memory_space<vmem>>, vector<18x1x5xf32>
    tpu.vector_store %arg13[%c0_22, %c17_23, %c0_24], %20 {strides = array<i32>} : memref<18x24x5xf32, #tpu.memory_space<vmem>>, vector<18x1x5xf32>,
    %c0_25 = arith.constant 0 : index
    %c0_26 = arith.constant 0 : index
    %c0_27 = arith.constant 0 : index
    %c0_28 = arith.constant 0 : index
    %23 = vector.load %arg5[%c0_25, %c0_26, %c0_27, %c0_28] : memref<1x16x16x5xbf16, #tpu.memory_space<vmem>>, vector<1x16x16x5xbf16>
    %24 = vector.shape_cast %23 : vector<1x16x16x5xbf16> to vector<16x16x5xbf16>
    %25 = arith.extf %24 : vector<16x16x5xbf16> to vector<16x16x5xf32>
    %c1_29 = arith.constant 1 : index
    %c1_30 = arith.constant 1 : index
    %c0_31 = arith.constant 0 : index
    %26 = vector.load %arg13[%c1_29, %c1_30, %c0_31] : memref<18x24x5xf32, #tpu.memory_space<vmem>>, vector<16x16x5xf32>
    tpu.vector_store %arg13[%c1_29, %c1_30, %c0_31], %25 {strides = array<i32>} : memref<18x24x5xf32, #tpu.memory_space<vmem>>, vector<16x16x5xf32>,
    %cst_32 = arith.constant 0.000000e+00 : f32
    %27 = vector.broadcast %cst_32 : f32 to vector<1x16x5xf32>
    %c0_i32_33 = arith.constant 0 : i32
    %28 = arith.cmpi sgt, %arg1, %c0_i32_33 : i32
    %29 = arith.extui %28 : i1 to i32
    %c0_i32_34 = arith.constant 0 : i32
    %30 = arith.cmpi ne, %29, %c0_i32_34 : i32
    scf.if %30 {
      %c0_170 = arith.constant 0 : index
      %c0_171 = arith.constant 0 : index
      %c0_172 = arith.constant 0 : index
      %c0_173 = arith.constant 0 : index
      %176 = vector.load %arg6[%c0_170, %c0_171, %c0_172, %c0_173] : memref<1x1x16x5xbf16, #tpu.memory_space<vmem>>, vector<1x1x16x5xbf16>
      %177 = vector.shape_cast %176 : vector<1x1x16x5xbf16> to vector<1x16x5xbf16>
      %178 = arith.extf %177 : vector<1x16x5xbf16> to vector<1x16x5xf32>
      %c0_174 = arith.constant 0 : index
      %c1_175 = arith.constant 1 : index
      %c0_176 = arith.constant 0 : index
      %179 = vector.load %arg13[%c0_174, %c1_175, %c0_176] : memref<18x24x5xf32, #tpu.memory_space<vmem>>, vector<1x16x5xf32>
      tpu.vector_store %arg13[%c0_174, %c1_175, %c0_176], %178 {strides = array<i32>} : memref<18x24x5xf32, #tpu.memory_space<vmem>>, vector<1x16x5xf32>,
    } else {
    }
    %c0_i32_35 = arith.constant 0 : i32
    %31 = arith.cmpi eq, %arg1, %c0_i32_35 : i32
    %32 = arith.extui %31 : i1 to i32
    %c0_i32_36 = arith.constant 0 : i32
    %33 = arith.cmpi ne, %32, %c0_i32_36 : i32
    scf.if %33 {
      %c0_170 = arith.constant 0 : index
      %c1_171 = arith.constant 1 : index
      %c0_172 = arith.constant 0 : index
      %176 = vector.load %arg13[%c0_170, %c1_171, %c0_172] : memref<18x24x5xf32, #tpu.memory_space<vmem>>, vector<1x16x5xf32>
      tpu.vector_store %arg13[%c0_170, %c1_171, %c0_172], %27 {strides = array<i32>} : memref<18x24x5xf32, #tpu.memory_space<vmem>>, vector<1x16x5xf32>,
    } else {
    }
    %c0_i32_37 = arith.constant 0 : i32
    %34 = arith.cmpi slt, %arg1, %c0_i32_37 : i32
    %35 = arith.extui %34 : i1 to i32
    %c0_i32_38 = arith.constant 0 : i32
    %36 = arith.cmpi ne, %35, %c0_i32_38 : i32
    scf.if %36 {
      %c0_170 = arith.constant 0 : index
      %c0_171 = arith.constant 0 : index
      %c0_172 = arith.constant 0 : index
      %c0_173 = arith.constant 0 : index
      %176 = vector.load %arg7[%c0_170, %c0_171, %c0_172, %c0_173] : memref<1x1x16x5xbf16, #tpu.memory_space<vmem>>, vector<1x1x16x5xbf16>
      %177 = vector.shape_cast %176 : vector<1x1x16x5xbf16> to vector<1x16x5xbf16>
      %178 = arith.extf %177 : vector<1x16x5xbf16> to vector<1x16x5xf32>
      %c17_174 = arith.constant 17 : index
      %c1_175 = arith.constant 1 : index
      %c0_176 = arith.constant 0 : index
      %179 = vector.load %arg13[%c17_174, %c1_175, %c0_176] : memref<18x24x5xf32, #tpu.memory_space<vmem>>, vector<1x16x5xf32>
      tpu.vector_store %arg13[%c17_174, %c1_175, %c0_176], %178 {strides = array<i32>} : memref<18x24x5xf32, #tpu.memory_space<vmem>>, vector<1x16x5xf32>,
    } else {
    }
    %c0_i32_39 = arith.constant 0 : i32
    %37 = arith.cmpi eq, %arg1, %c0_i32_39 : i32
    %38 = arith.extui %37 : i1 to i32
    %c0_i32_40 = arith.constant 0 : i32
    %39 = arith.cmpi ne, %38, %c0_i32_40 : i32
    scf.if %39 {
      %c17_170 = arith.constant 17 : index
      %c1_171 = arith.constant 1 : index
      %c0_172 = arith.constant 0 : index
      %176 = vector.load %arg13[%c17_170, %c1_171, %c0_172] : memref<18x24x5xf32, #tpu.memory_space<vmem>>, vector<1x16x5xf32>
      tpu.vector_store %arg13[%c17_170, %c1_171, %c0_172], %27 {strides = array<i32>} : memref<18x24x5xf32, #tpu.memory_space<vmem>>, vector<1x16x5xf32>,
    } else {
    }
    %c0_41 = arith.constant 0 : index
    %c0_42 = arith.constant 0 : index
    %c0_43 = arith.constant 0 : index
    %40 = vector.load %arg12[%c0_41, %c0_42, %c0_43] : memref<18x24x3xf32, #tpu.memory_space<vmem>>, vector<16x16x3xf32>
    %41 = arith.truncf %40 : vector<16x16x3xf32> to vector<16x16x3xbf16>
    %42 = vector.shape_cast %41 : vector<16x16x3xbf16> to vector<256x3xbf16>
    %c0_44 = arith.constant 0 : index
    %c0_45 = arith.constant 0 : index
    %c0_46 = arith.constant 0 : index
    %43 = vector.load %arg8[%c0_44, %c0_45, %c0_46] : memref<9x3x128xbf16, #tpu.memory_space<vmem>>, vector<1x3x128xbf16>
    %44 = vector.shape_cast %43 : vector<1x3x128xbf16> to vector<3x128xbf16>
    %cst_47 = arith.constant dense<0.000000e+00> : vector<256x128xf32>
    %45 = tpu.matmul %42, %44, %cst_47 {dimension_numbers = #tpu.dot_dimension_numbers<[1], [0], [0], [1], [0, 0, 1, 1], [], []>} : vector<256x3xbf16>, vector<3x128xbf16>, vector<256x128xf32> -> vector<256x128xf32>
    %c0_48 = arith.constant 0 : index
    %c1_49 = arith.constant 1 : index
    %c0_50 = arith.constant 0 : index
    %46 = vector.load %arg12[%c0_48, %c1_49, %c0_50] : memref<18x24x3xf32, #tpu.memory_space<vmem>>, vector<16x16x3xf32>
    %47 = arith.truncf %46 : vector<16x16x3xf32> to vector<16x16x3xbf16>
    %48 = vector.shape_cast %47 : vector<16x16x3xbf16> to vector<256x3xbf16>
    %c1_51 = arith.constant 1 : index
    %c0_52 = arith.constant 0 : index
    %c0_53 = arith.constant 0 : index
    %49 = vector.load %arg8[%c1_51, %c0_52, %c0_53] : memref<9x3x128xbf16, #tpu.memory_space<vmem>>, vector<1x3x128xbf16>
    %50 = vector.shape_cast %49 : vector<1x3x128xbf16> to vector<3x128xbf16>
    %cst_54 = arith.constant dense<0.000000e+00> : vector<256x128xf32>
    %51 = tpu.matmul %48, %50, %cst_54 {dimension_numbers = #tpu.dot_dimension_numbers<[1], [0], [0], [1], [0, 0, 1, 1], [], []>} : vector<256x3xbf16>, vector<3x128xbf16>, vector<256x128xf32> -> vector<256x128xf32>
    %52 = arith.addf %45, %51 : vector<256x128xf32>
    %c0_55 = arith.constant 0 : index
    %c2 = arith.constant 2 : index
    %c0_56 = arith.constant 0 : index
    %53 = vector.load %arg12[%c0_55, %c2, %c0_56] : memref<18x24x3xf32, #tpu.memory_space<vmem>>, vector<16x16x3xf32>
    %54 = arith.truncf %53 : vector<16x16x3xf32> to vector<16x16x3xbf16>
    %55 = vector.shape_cast %54 : vector<16x16x3xbf16> to vector<256x3xbf16>
    %c2_57 = arith.constant 2 : index
    %c0_58 = arith.constant 0 : index
    %c0_59 = arith.constant 0 : index
    %56 = vector.load %arg8[%c2_57, %c0_58, %c0_59] : memref<9x3x128xbf16, #tpu.memory_space<vmem>>, vector<1x3x128xbf16>
    %57 = vector.shape_cast %56 : vector<1x3x128xbf16> to vector<3x128xbf16>
    %cst_60 = arith.constant dense<0.000000e+00> : vector<256x128xf32>
    %58 = tpu.matmul %55, %57, %cst_60 {dimension_numbers = #tpu.dot_dimension_numbers<[1], [0], [0], [1], [0, 0, 1, 1], [], []>} : vector<256x3xbf16>, vector<3x128xbf16>, vector<256x128xf32> -> vector<256x128xf32>
    %59 = arith.addf %52, %58 : vector<256x128xf32>
    %c1_61 = arith.constant 1 : index
    %c0_62 = arith.constant 0 : index
    %c0_63 = arith.constant 0 : index
    %60 = vector.load %arg12[%c1_61, %c0_62, %c0_63] : memref<18x24x3xf32, #tpu.memory_space<vmem>>, vector<16x16x3xf32>
    %61 = arith.truncf %60 : vector<16x16x3xf32> to vector<16x16x3xbf16>
    %62 = vector.shape_cast %61 : vector<16x16x3xbf16> to vector<256x3xbf16>
    %c3 = arith.constant 3 : index
    %c0_64 = arith.constant 0 : index
    %c0_65 = arith.constant 0 : index
    %63 = vector.load %arg8[%c3, %c0_64, %c0_65] : memref<9x3x128xbf16, #tpu.memory_space<vmem>>, vector<1x3x128xbf16>
    %64 = vector.shape_cast %63 : vector<1x3x128xbf16> to vector<3x128xbf16>
    %cst_66 = arith.constant dense<0.000000e+00> : vector<256x128xf32>
    %65 = tpu.matmul %62, %64, %cst_66 {dimension_numbers = #tpu.dot_dimension_numbers<[1], [0], [0], [1], [0, 0, 1, 1], [], []>} : vector<256x3xbf16>, vector<3x128xbf16>, vector<256x128xf32> -> vector<256x128xf32>
    %66 = arith.addf %59, %65 : vector<256x128xf32>
    %c1_67 = arith.constant 1 : index
    %c1_68 = arith.constant 1 : index
    %c0_69 = arith.constant 0 : index
    %67 = vector.load %arg12[%c1_67, %c1_68, %c0_69] : memref<18x24x3xf32, #tpu.memory_space<vmem>>, vector<16x16x3xf32>
    %68 = arith.truncf %67 : vector<16x16x3xf32> to vector<16x16x3xbf16>
    %69 = vector.shape_cast %68 : vector<16x16x3xbf16> to vector<256x3xbf16>
    %c4 = arith.constant 4 : index
    %c0_70 = arith.constant 0 : index
    %c0_71 = arith.constant 0 : index
    %70 = vector.load %arg8[%c4, %c0_70, %c0_71] : memref<9x3x128xbf16, #tpu.memory_space<vmem>>, vector<1x3x128xbf16>
    %71 = vector.shape_cast %70 : vector<1x3x128xbf16> to vector<3x128xbf16>
    %cst_72 = arith.constant dense<0.000000e+00> : vector<256x128xf32>
    %72 = tpu.matmul %69, %71, %cst_72 {dimension_numbers = #tpu.dot_dimension_numbers<[1], [0], [0], [1], [0, 0, 1, 1], [], []>} : vector<256x3xbf16>, vector<3x128xbf16>, vector<256x128xf32> -> vector<256x128xf32>
    %73 = arith.addf %66, %72 : vector<256x128xf32>
    %c1_73 = arith.constant 1 : index
    %c2_74 = arith.constant 2 : index
    %c0_75 = arith.constant 0 : index
    %74 = vector.load %arg12[%c1_73, %c2_74, %c0_75] : memref<18x24x3xf32, #tpu.memory_space<vmem>>, vector<16x16x3xf32>
    %75 = arith.truncf %74 : vector<16x16x3xf32> to vector<16x16x3xbf16>
    %76 = vector.shape_cast %75 : vector<16x16x3xbf16> to vector<256x3xbf16>
    %c5 = arith.constant 5 : index
    %c0_76 = arith.constant 0 : index
    %c0_77 = arith.constant 0 : index
    %77 = vector.load %arg8[%c5, %c0_76, %c0_77] : memref<9x3x128xbf16, #tpu.memory_space<vmem>>, vector<1x3x128xbf16>
    %78 = vector.shape_cast %77 : vector<1x3x128xbf16> to vector<3x128xbf16>
    %cst_78 = arith.constant dense<0.000000e+00> : vector<256x128xf32>
    %79 = tpu.matmul %76, %78, %cst_78 {dimension_numbers = #tpu.dot_dimension_numbers<[1], [0], [0], [1], [0, 0, 1, 1], [], []>} : vector<256x3xbf16>, vector<3x128xbf16>, vector<256x128xf32> -> vector<256x128xf32>
    %80 = arith.addf %73, %79 : vector<256x128xf32>
    %c2_79 = arith.constant 2 : index
    %c0_80 = arith.constant 0 : index
    %c0_81 = arith.constant 0 : index
    %81 = vector.load %arg12[%c2_79, %c0_80, %c0_81] : memref<18x24x3xf32, #tpu.memory_space<vmem>>, vector<16x16x3xf32>
    %82 = arith.truncf %81 : vector<16x16x3xf32> to vector<16x16x3xbf16>
    %83 = vector.shape_cast %82 : vector<16x16x3xbf16> to vector<256x3xbf16>
    %c6 = arith.constant 6 : index
    %c0_82 = arith.constant 0 : index
    %c0_83 = arith.constant 0 : index
    %84 = vector.load %arg8[%c6, %c0_82, %c0_83] : memref<9x3x128xbf16, #tpu.memory_space<vmem>>, vector<1x3x128xbf16>
    %85 = vector.shape_cast %84 : vector<1x3x128xbf16> to vector<3x128xbf16>
    %cst_84 = arith.constant dense<0.000000e+00> : vector<256x128xf32>
    %86 = tpu.matmul %83, %85, %cst_84 {dimension_numbers = #tpu.dot_dimension_numbers<[1], [0], [0], [1], [0, 0, 1, 1], [], []>} : vector<256x3xbf16>, vector<3x128xbf16>, vector<256x128xf32> -> vector<256x128xf32>
    %87 = arith.addf %80, %86 : vector<256x128xf32>
    %c2_85 = arith.constant 2 : index
    %c1_86 = arith.constant 1 : index
    %c0_87 = arith.constant 0 : index
    %88 = vector.load %arg12[%c2_85, %c1_86, %c0_87] : memref<18x24x3xf32, #tpu.memory_space<vmem>>, vector<16x16x3xf32>
    %89 = arith.truncf %88 : vector<16x16x3xf32> to vector<16x16x3xbf16>
    %90 = vector.shape_cast %89 : vector<16x16x3xbf16> to vector<256x3xbf16>
    %c7 = arith.constant 7 : index
    %c0_88 = arith.constant 0 : index
    %c0_89 = arith.constant 0 : index
    %91 = vector.load %arg8[%c7, %c0_88, %c0_89] : memref<9x3x128xbf16, #tpu.memory_space<vmem>>, vector<1x3x128xbf16>
    %92 = vector.shape_cast %91 : vector<1x3x128xbf16> to vector<3x128xbf16>
    %cst_90 = arith.constant dense<0.000000e+00> : vector<256x128xf32>
    %93 = tpu.matmul %90, %92, %cst_90 {dimension_numbers = #tpu.dot_dimension_numbers<[1], [0], [0], [1], [0, 0, 1, 1], [], []>} : vector<256x3xbf16>, vector<3x128xbf16>, vector<256x128xf32> -> vector<256x128xf32>
    %94 = arith.addf %87, %93 : vector<256x128xf32>
    %c2_91 = arith.constant 2 : index
    %c2_92 = arith.constant 2 : index
    %c0_93 = arith.constant 0 : index
    %95 = vector.load %arg12[%c2_91, %c2_92, %c0_93] : memref<18x24x3xf32, #tpu.memory_space<vmem>>, vector<16x16x3xf32>
    %96 = arith.truncf %95 : vector<16x16x3xf32> to vector<16x16x3xbf16>
    %97 = vector.shape_cast %96 : vector<16x16x3xbf16> to vector<256x3xbf16>
    %c8 = arith.constant 8 : index
    %c0_94 = arith.constant 0 : index
    %c0_95 = arith.constant 0 : index
    %98 = vector.load %arg8[%c8, %c0_94, %c0_95] : memref<9x3x128xbf16, #tpu.memory_space<vmem>>, vector<1x3x128xbf16>
    %99 = vector.shape_cast %98 : vector<1x3x128xbf16> to vector<3x128xbf16>
    %cst_96 = arith.constant dense<0.000000e+00> : vector<256x128xf32>
    %100 = tpu.matmul %97, %99, %cst_96 {dimension_numbers = #tpu.dot_dimension_numbers<[1], [0], [0], [1], [0, 0, 1, 1], [], []>} : vector<256x3xbf16>, vector<3x128xbf16>, vector<256x128xf32> -> vector<256x128xf32>
    %101 = arith.addf %94, %100 : vector<256x128xf32>
    %c0_97 = arith.constant 0 : index
    %c0_98 = arith.constant 0 : index
    %c0_99 = arith.constant 0 : index
    %102 = vector.load %arg13[%c0_97, %c0_98, %c0_99] : memref<18x24x5xf32, #tpu.memory_space<vmem>>, vector<16x16x5xf32>
    %103 = arith.truncf %102 : vector<16x16x5xf32> to vector<16x16x5xbf16>
    %104 = vector.shape_cast %103 : vector<16x16x5xbf16> to vector<256x5xbf16>
    %c0_100 = arith.constant 0 : index
    %c0_101 = arith.constant 0 : index
    %c0_102 = arith.constant 0 : index
    %105 = vector.load %arg9[%c0_100, %c0_101, %c0_102] : memref<9x5x128xbf16, #tpu.memory_space<vmem>>, vector<1x5x128xbf16>
    %106 = vector.shape_cast %105 : vector<1x5x128xbf16> to vector<5x128xbf16>
    %cst_103 = arith.constant dense<0.000000e+00> : vector<256x128xf32>
    %107 = tpu.matmul %104, %106, %cst_103 {dimension_numbers = #tpu.dot_dimension_numbers<[1], [0], [0], [1], [0, 0, 1, 1], [], []>} : vector<256x5xbf16>, vector<5x128xbf16>, vector<256x128xf32> -> vector<256x128xf32>
    %108 = arith.addf %101, %107 : vector<256x128xf32>
    %c0_104 = arith.constant 0 : index
    %c1_105 = arith.constant 1 : index
    %c0_106 = arith.constant 0 : index
    %109 = vector.load %arg13[%c0_104, %c1_105, %c0_106] : memref<18x24x5xf32, #tpu.memory_space<vmem>>, vector<16x16x5xf32>
    %110 = arith.truncf %109 : vector<16x16x5xf32> to vector<16x16x5xbf16>
    %111 = vector.shape_cast %110 : vector<16x16x5xbf16> to vector<256x5xbf16>
    %c1_107 = arith.constant 1 : index
    %c0_108 = arith.constant 0 : index
    %c0_109 = arith.constant 0 : index
    %112 = vector.load %arg9[%c1_107, %c0_108, %c0_109] : memref<9x5x128xbf16, #tpu.memory_space<vmem>>, vector<1x5x128xbf16>
    %113 = vector.shape_cast %112 : vector<1x5x128xbf16> to vector<5x128xbf16>
    %cst_110 = arith.constant dense<0.000000e+00> : vector<256x128xf32>
    %114 = tpu.matmul %111, %113, %cst_110 {dimension_numbers = #tpu.dot_dimension_numbers<[1], [0], [0], [1], [0, 0, 1, 1], [], []>} : vector<256x5xbf16>, vector<5x128xbf16>, vector<256x128xf32> -> vector<256x128xf32>
    %115 = arith.addf %108, %114 : vector<256x128xf32>
    %c0_111 = arith.constant 0 : index
    %c2_112 = arith.constant 2 : index
    %c0_113 = arith.constant 0 : index
    %116 = vector.load %arg13[%c0_111, %c2_112, %c0_113] : memref<18x24x5xf32, #tpu.memory_space<vmem>>, vector<16x16x5xf32>
    %117 = arith.truncf %116 : vector<16x16x5xf32> to vector<16x16x5xbf16>
    %118 = vector.shape_cast %117 : vector<16x16x5xbf16> to vector<256x5xbf16>
    %c2_114 = arith.constant 2 : index
    %c0_115 = arith.constant 0 : index
    %c0_116 = arith.constant 0 : index
    %119 = vector.load %arg9[%c2_114, %c0_115, %c0_116] : memref<9x5x128xbf16, #tpu.memory_space<vmem>>, vector<1x5x128xbf16>
    %120 = vector.shape_cast %119 : vector<1x5x128xbf16> to vector<5x128xbf16>
    %cst_117 = arith.constant dense<0.000000e+00> : vector<256x128xf32>
    %121 = tpu.matmul %118, %120, %cst_117 {dimension_numbers = #tpu.dot_dimension_numbers<[1], [0], [0], [1], [0, 0, 1, 1], [], []>} : vector<256x5xbf16>, vector<5x128xbf16>, vector<256x128xf32> -> vector<256x128xf32>
    %122 = arith.addf %115, %121 : vector<256x128xf32>
    %c1_118 = arith.constant 1 : index
    %c0_119 = arith.constant 0 : index
    %c0_120 = arith.constant 0 : index
    %123 = vector.load %arg13[%c1_118, %c0_119, %c0_120] : memref<18x24x5xf32, #tpu.memory_space<vmem>>, vector<16x16x5xf32>
    %124 = arith.truncf %123 : vector<16x16x5xf32> to vector<16x16x5xbf16>
    %125 = vector.shape_cast %124 : vector<16x16x5xbf16> to vector<256x5xbf16>
    %c3_121 = arith.constant 3 : index
    %c0_122 = arith.constant 0 : index
    %c0_123 = arith.constant 0 : index
    %126 = vector.load %arg9[%c3_121, %c0_122, %c0_123] : memref<9x5x128xbf16, #tpu.memory_space<vmem>>, vector<1x5x128xbf16>
    %127 = vector.shape_cast %126 : vector<1x5x128xbf16> to vector<5x128xbf16>
    %cst_124 = arith.constant dense<0.000000e+00> : vector<256x128xf32>
    %128 = tpu.matmul %125, %127, %cst_124 {dimension_numbers = #tpu.dot_dimension_numbers<[1], [0], [0], [1], [0, 0, 1, 1], [], []>} : vector<256x5xbf16>, vector<5x128xbf16>, vector<256x128xf32> -> vector<256x128xf32>
    %129 = arith.addf %122, %128 : vector<256x128xf32>
    %c1_125 = arith.constant 1 : index
    %c1_126 = arith.constant 1 : index
    %c0_127 = arith.constant 0 : index
    %130 = vector.load %arg13[%c1_125, %c1_126, %c0_127] : memref<18x24x5xf32, #tpu.memory_space<vmem>>, vector<16x16x5xf32>
    %131 = arith.truncf %130 : vector<16x16x5xf32> to vector<16x16x5xbf16>
    %132 = vector.shape_cast %131 : vector<16x16x5xbf16> to vector<256x5xbf16>
    %c4_128 = arith.constant 4 : index
    %c0_129 = arith.constant 0 : index
    %c0_130 = arith.constant 0 : index
    %133 = vector.load %arg9[%c4_128, %c0_129, %c0_130] : memref<9x5x128xbf16, #tpu.memory_space<vmem>>, vector<1x5x128xbf16>
    %134 = vector.shape_cast %133 : vector<1x5x128xbf16> to vector<5x128xbf16>
    %cst_131 = arith.constant dense<0.000000e+00> : vector<256x128xf32>
    %135 = tpu.matmul %132, %134, %cst_131 {dimension_numbers = #tpu.dot_dimension_numbers<[1], [0], [0], [1], [0, 0, 1, 1], [], []>} : vector<256x5xbf16>, vector<5x128xbf16>, vector<256x128xf32> -> vector<256x128xf32>
    %136 = arith.addf %129, %135 : vector<256x128xf32>
    %c1_132 = arith.constant 1 : index
    %c2_133 = arith.constant 2 : index
    %c0_134 = arith.constant 0 : index
    %137 = vector.load %arg13[%c1_132, %c2_133, %c0_134] : memref<18x24x5xf32, #tpu.memory_space<vmem>>, vector<16x16x5xf32>
    %138 = arith.truncf %137 : vector<16x16x5xf32> to vector<16x16x5xbf16>
    %139 = vector.shape_cast %138 : vector<16x16x5xbf16> to vector<256x5xbf16>
    %c5_135 = arith.constant 5 : index
    %c0_136 = arith.constant 0 : index
    %c0_137 = arith.constant 0 : index
    %140 = vector.load %arg9[%c5_135, %c0_136, %c0_137] : memref<9x5x128xbf16, #tpu.memory_space<vmem>>, vector<1x5x128xbf16>
    %141 = vector.shape_cast %140 : vector<1x5x128xbf16> to vector<5x128xbf16>
    %cst_138 = arith.constant dense<0.000000e+00> : vector<256x128xf32>
    %142 = tpu.matmul %139, %141, %cst_138 {dimension_numbers = #tpu.dot_dimension_numbers<[1], [0], [0], [1], [0, 0, 1, 1], [], []>} : vector<256x5xbf16>, vector<5x128xbf16>, vector<256x128xf32> -> vector<256x128xf32>
    %143 = arith.addf %136, %142 : vector<256x128xf32>
    %c2_139 = arith.constant 2 : index
    %c0_140 = arith.constant 0 : index
    %c0_141 = arith.constant 0 : index
    %144 = vector.load %arg13[%c2_139, %c0_140, %c0_141] : memref<18x24x5xf32, #tpu.memory_space<vmem>>, vector<16x16x5xf32>
    %145 = arith.truncf %144 : vector<16x16x5xf32> to vector<16x16x5xbf16>
    %146 = vector.shape_cast %145 : vector<16x16x5xbf16> to vector<256x5xbf16>
    %c6_142 = arith.constant 6 : index
    %c0_143 = arith.constant 0 : index
    %c0_144 = arith.constant 0 : index
    %147 = vector.load %arg9[%c6_142, %c0_143, %c0_144] : memref<9x5x128xbf16, #tpu.memory_space<vmem>>, vector<1x5x128xbf16>
    %148 = vector.shape_cast %147 : vector<1x5x128xbf16> to vector<5x128xbf16>
    %cst_145 = arith.constant dense<0.000000e+00> : vector<256x128xf32>
    %149 = tpu.matmul %146, %148, %cst_145 {dimension_numbers = #tpu.dot_dimension_numbers<[1], [0], [0], [1], [0, 0, 1, 1], [], []>} : vector<256x5xbf16>, vector<5x128xbf16>, vector<256x128xf32> -> vector<256x128xf32>
    %150 = arith.addf %143, %149 : vector<256x128xf32>
    %c2_146 = arith.constant 2 : index
    %c1_147 = arith.constant 1 : index
    %c0_148 = arith.constant 0 : index
    %151 = vector.load %arg13[%c2_146, %c1_147, %c0_148] : memref<18x24x5xf32, #tpu.memory_space<vmem>>, vector<16x16x5xf32>
    %152 = arith.truncf %151 : vector<16x16x5xf32> to vector<16x16x5xbf16>
    %153 = vector.shape_cast %152 : vector<16x16x5xbf16> to vector<256x5xbf16>
    %c7_149 = arith.constant 7 : index
    %c0_150 = arith.constant 0 : index
    %c0_151 = arith.constant 0 : index
    %154 = vector.load %arg9[%c7_149, %c0_150, %c0_151] : memref<9x5x128xbf16, #tpu.memory_space<vmem>>, vector<1x5x128xbf16>
    %155 = vector.shape_cast %154 : vector<1x5x128xbf16> to vector<5x128xbf16>
    %cst_152 = arith.constant dense<0.000000e+00> : vector<256x128xf32>
    %156 = tpu.matmul %153, %155, %cst_152 {dimension_numbers = #tpu.dot_dimension_numbers<[1], [0], [0], [1], [0, 0, 1, 1], [], []>} : vector<256x5xbf16>, vector<5x128xbf16>, vector<256x128xf32> -> vector<256x128xf32>
    %157 = arith.addf %150, %156 : vector<256x128xf32>
    %c2_153 = arith.constant 2 : index
    %c2_154 = arith.constant 2 : index
    %c0_155 = arith.constant 0 : index
    %158 = vector.load %arg13[%c2_153, %c2_154, %c0_155] : memref<18x24x5xf32, #tpu.memory_space<vmem>>, vector<16x16x5xf32>
    %159 = arith.truncf %158 : vector<16x16x5xf32> to vector<16x16x5xbf16>
    %160 = vector.shape_cast %159 : vector<16x16x5xbf16> to vector<256x5xbf16>
    %c8_156 = arith.constant 8 : index
    %c0_157 = arith.constant 0 : index
    %c0_158 = arith.constant 0 : index
    %161 = vector.load %arg9[%c8_156, %c0_157, %c0_158] : memref<9x5x128xbf16, #tpu.memory_space<vmem>>, vector<1x5x128xbf16>
    %162 = vector.shape_cast %161 : vector<1x5x128xbf16> to vector<5x128xbf16>
    %cst_159 = arith.constant dense<0.000000e+00> : vector<256x128xf32>
    %163 = tpu.matmul %160, %162, %cst_159 {dimension_numbers = #tpu.dot_dimension_numbers<[1], [0], [0], [1], [0, 0, 1, 1], [], []>} : vector<256x5xbf16>, vector<5x128xbf16>, vector<256x128xf32> -> vector<256x128xf32>
    %164 = arith.addf %157, %163 : vector<256x128xf32>
    %165 = vector.shape_cast %164 : vector<256x128xf32> to vector<1x16x16x128xf32>
    %166 = arith.truncf %165 : vector<1x16x16x128xf32> to vector<1x16x16x128xbf16>
    %c0_160 = arith.constant 0 : index
    %c0_161 = arith.constant 0 : index
    %c0_162 = arith.constant 0 : index
    %c0_163 = arith.constant 0 : index
    %167 = vector.load %arg10[%c0_160, %c0_161, %c0_162, %c0_163] : memref<1x16x16x128xbf16, #tpu.memory_space<vmem>>, vector<1x16x16x128xbf16>
    tpu.vector_store %arg10[%c0_160, %c0_161, %c0_162, %c0_163], %166 {strides = array<i32>} : memref<1x16x16x128xbf16, #tpu.memory_space<vmem>>, vector<1x16x16x128xbf16>,
    %cst_164 = arith.constant dense<0.000000e+00> : vector<128xf32>
    %168 = vector.multi_reduction <add>, %164, %cst_164 [0] : vector<256x128xf32> to vector<128xf32>
    %169 = vector.shape_cast %168 : vector<128xf32> to vector<1x128xf32>
    %170 = arith.mulf %164, %164 : vector<256x128xf32>
    %cst_165 = arith.constant dense<0.000000e+00> : vector<128xf32>
    %171 = vector.multi_reduction <add>, %170, %cst_165 [0] : vector<256x128xf32> to vector<128xf32>
    %172 = vector.shape_cast %171 : vector<128xf32> to vector<1x128xf32>
    %173 = tpu.concatenate %169, %172 in 0 : vector<1x128xf32>, vector<1x128xf32> -> vector<2x128xf32>
    %174 = vector.shape_cast %173 : vector<2x128xf32> to vector<1x1x2x128xf32>
    %c0_166 = arith.constant 0 : index
    %c0_167 = arith.constant 0 : index
    %c0_168 = arith.constant 0 : index
    %c0_169 = arith.constant 0 : index
    %175 = vector.load %arg11[%c0_166, %c0_167, %c0_168, %c0_169] : memref<1x1x2x128xf32, #tpu.memory_space<vmem>>, vector<1x1x2x128xf32>
    tpu.vector_store %arg11[%c0_166, %c0_167, %c0_168, %c0_169], %174 {strides = array<i32>} : memref<1x1x2x128xf32, #tpu.memory_space<vmem>>, vector<1x1x2x128xf32>,
    return
  }
  func.func @transform_0(%arg0: i32, %arg1: i32) -> (i32, i32, i32, i32) {
    %c0_i32 = arith.constant 0 : i32
    %c0_i32_0 = arith.constant 0 : i32
    %c0_i32_1 = arith.constant 0 : i32
    return %arg0, %arg1, %c0_i32, %c0_i32_0 : i32, i32, i32, i32
  }
  func.func @transform_1(%arg0: i32, %arg1: i32) -> (i32, i32, i32, i32) {
    %c16_i32 = arith.constant 16 : i32
    %0 = arith.muli %arg1, %c16_i32 : i32
    %c1_i32 = arith.constant 1 : i32
    %1 = arith.subi %0, %c1_i32 : i32
    %c0_i32 = arith.constant 0 : i32
    %2 = arith.maxsi %1, %c0_i32 : i32
    %c0_i32_0 = arith.constant 0 : i32
    %c0_i32_1 = arith.constant 0 : i32
    %c0_i32_2 = arith.constant 0 : i32
    return %arg0, %2, %c0_i32_0, %c0_i32_1 : i32, i32, i32, i32
  }
  func.func @transform_2(%arg0: i32, %arg1: i32) -> (i32, i32, i32, i32) {
    %c1_i32 = arith.constant 1 : i32
    %0 = arith.addi %arg1, %c1_i32 : i32
    %c16_i32 = arith.constant 16 : i32
    %1 = arith.muli %0, %c16_i32 : i32
    %c15_i32 = arith.constant 15 : i32
    %2 = arith.minsi %1, %c15_i32 : i32
    %c0_i32 = arith.constant 0 : i32
    %c0_i32_0 = arith.constant 0 : i32
    %c0_i32_1 = arith.constant 0 : i32
    return %arg0, %2, %c0_i32, %c0_i32_0 : i32, i32, i32, i32
  }
  func.func @transform_3(%arg0: i32, %arg1: i32) -> (i32, i32, i32, i32) {
    %c0_i32 = arith.constant 0 : i32
    %c0_i32_0 = arith.constant 0 : i32
    %c0_i32_1 = arith.constant 0 : i32
    return %arg0, %arg1, %c0_i32, %c0_i32_0 : i32, i32, i32, i32
  }
  func.func @transform_4(%arg0: i32, %arg1: i32) -> (i32, i32, i32, i32) {
    %c16_i32 = arith.constant 16 : i32
    %0 = arith.muli %arg1, %c16_i32 : i32
    %c1_i32 = arith.constant 1 : i32
    %1 = arith.subi %0, %c1_i32 : i32
    %c0_i32 = arith.constant 0 : i32
    %2 = arith.maxsi %1, %c0_i32 : i32
    %c0_i32_0 = arith.constant 0 : i32
    %c0_i32_1 = arith.constant 0 : i32
    %c0_i32_2 = arith.constant 0 : i32
    return %arg0, %2, %c0_i32_0, %c0_i32_1 : i32, i32, i32, i32
  }
  func.func @transform_5(%arg0: i32, %arg1: i32) -> (i32, i32, i32, i32) {
    %c1_i32 = arith.constant 1 : i32
    %0 = arith.addi %arg1, %c1_i32 : i32
    %c16_i32 = arith.constant 16 : i32
    %1 = arith.muli %0, %c16_i32 : i32
    %c15_i32 = arith.constant 15 : i32
    %2 = arith.minsi %1, %c15_i32 : i32
    %c0_i32 = arith.constant 0 : i32
    %c0_i32_0 = arith.constant 0 : i32
    %c0_i32_1 = arith.constant 0 : i32
    return %arg0, %2, %c0_i32, %c0_i32_0 : i32, i32, i32, i32
  }
  func.func @transform_6(%arg0: i32, %arg1: i32) -> (i32, i32, i32) {
    %c0_i32 = arith.constant 0 : i32
    %c0_i32_0 = arith.constant 0 : i32
    %c0_i32_1 = arith.constant 0 : i32
    %c0_i32_2 = arith.constant 0 : i32
    return %c0_i32, %c0_i32_0, %c0_i32_1 : i32, i32, i32
  }
  func.func @transform_7(%arg0: i32, %arg1: i32) -> (i32, i32, i32) {
    %c0_i32 = arith.constant 0 : i32
    %c0_i32_0 = arith.constant 0 : i32
    %c0_i32_1 = arith.constant 0 : i32
    %c0_i32_2 = arith.constant 0 : i32
    return %c0_i32, %c0_i32_0, %c0_i32_1 : i32, i32, i32
  }
  func.func @transform_8(%arg0: i32, %arg1: i32) -> (i32, i32, i32, i32) {
    %c0_i32 = arith.constant 0 : i32
    %c0_i32_0 = arith.constant 0 : i32
    %c0_i32_1 = arith.constant 0 : i32
    return %arg0, %arg1, %c0_i32, %c0_i32_0 : i32, i32, i32, i32
  }
  func.func @transform_9(%arg0: i32, %arg1: i32) -> (i32, i32, i32, i32) {
    %c0_i32 = arith.constant 0 : i32
    %c0_i32_0 = arith.constant 0 : i32
    %c0_i32_1 = arith.constant 0 : i32
    return %arg0, %arg1, %c0_i32, %c0_i32_0 : i32, i32, i32, i32
  }
}

module attributes {stable_mosaic.version = 11 : i64} {
  func.func @_affine_act_kernel(%arg0: i32, %arg1: i32, %arg2: memref<1x16x16x128xbf16, #tpu.memory_space<vmem>>, %arg3: memref<1x128xf32, #tpu.memory_space<vmem>>, %arg4: memref<1x128xf32, #tpu.memory_space<vmem>>, %arg5: memref<1x16x16x8xf32, #tpu.memory_space<vmem>>) attributes {dimension_semantics = [#tpu.dimension_semantics<parallel>, #tpu.dimension_semantics<parallel>], iteration_bounds = array<i64: 2, 1>, scalar_prefetch = 0 : i64, scratch_operands = 0 : i64, tpu.core_type = #tpu.core_type<tc>, window_params = [{transform_indices = @transform_0, window_bounds = array<i64: 1, 16, 16, 128>}, {pipeline_mode = #tpu.pipeline_mode<synchronous>, transform_indices = @transform_1, window_bounds = array<i64: 1, 128>}, {pipeline_mode = #tpu.pipeline_mode<synchronous>, transform_indices = @transform_2, window_bounds = array<i64: 1, 128>}, {transform_indices = @transform_3, window_bounds = array<i64: 1, 16, 16, 8>}]} {
    %c0 = arith.constant 0 : index
    %c0_0 = arith.constant 0 : index
    %c0_1 = arith.constant 0 : index
    %c0_2 = arith.constant 0 : index
    %0 = vector.load %arg2[%c0, %c0_0, %c0_1, %c0_2] : memref<1x16x16x128xbf16, #tpu.memory_space<vmem>>, vector<1x16x16x128xbf16>
    %1 = arith.extf %0 : vector<1x16x16x128xbf16> to vector<1x16x16x128xf32>
    %c0_3 = arith.constant 0 : index
    %c0_4 = arith.constant 0 : index
    %2 = vector.load %arg3[%c0_3, %c0_4] : memref<1x128xf32, #tpu.memory_space<vmem>>, vector<1x128xf32>
    %3 = vector.shape_cast %2 : vector<1x128xf32> to vector<1x1x1x128xf32>
    %4 = vector.broadcast %3 : vector<1x1x1x128xf32> to vector<1x16x16x128xf32>
    %5 = arith.mulf %1, %4 : vector<1x16x16x128xf32>
    %c0_5 = arith.constant 0 : index
    %c0_6 = arith.constant 0 : index
    %6 = vector.load %arg4[%c0_5, %c0_6] : memref<1x128xf32, #tpu.memory_space<vmem>>, vector<1x128xf32>
    %7 = vector.shape_cast %6 : vector<1x128xf32> to vector<1x1x1x128xf32>
    %8 = vector.broadcast %7 : vector<1x1x1x128xf32> to vector<1x16x16x128xf32>
    %9 = arith.addf %5, %8 : vector<1x16x16x128xf32>
    %cst = arith.constant 0.000000e+00 : f32
    %10 = vector.broadcast %cst : f32 to vector<1x16x16x128xf32>
    %11 = arith.cmpf oge, %9, %10 : vector<1x16x16x128xf32>
    %cst_7 = arith.constant 0.00999999977 : f32
    %12 = vector.broadcast %cst_7 : f32 to vector<1x16x16x128xf32>
    %13 = arith.mulf %12, %9 : vector<1x16x16x128xf32>
    %14 = arith.select %11, %9, %13 : vector<1x16x16x128xi1>, vector<1x16x16x128xf32>
    %15 = vector.extract_strided_slice %14 {offsets = [0, 0, 0, 0], sizes = [1, 16, 16, 8], strides = [1, 1, 1, 1]} : vector<1x16x16x128xf32> to vector<1x16x16x8xf32>
    %c0_8 = arith.constant 0 : index
    %c0_9 = arith.constant 0 : index
    %c0_10 = arith.constant 0 : index
    %c0_11 = arith.constant 0 : index
    %16 = vector.load %arg5[%c0_8, %c0_9, %c0_10, %c0_11] : memref<1x16x16x8xf32, #tpu.memory_space<vmem>>, vector<1x16x16x8xf32>
    tpu.vector_store %arg5[%c0_8, %c0_9, %c0_10, %c0_11], %15 {strides = array<i32>} : memref<1x16x16x8xf32, #tpu.memory_space<vmem>>, vector<1x16x16x8xf32>,
    return
  }
  func.func @transform_0(%arg0: i32, %arg1: i32) -> (i32, i32, i32, i32) {
    %c0_i32 = arith.constant 0 : i32
    %c0_i32_0 = arith.constant 0 : i32
    %c0_i32_1 = arith.constant 0 : i32
    return %arg0, %arg1, %c0_i32, %c0_i32_0 : i32, i32, i32, i32
  }
  func.func @transform_1(%arg0: i32, %arg1: i32) -> (i32, i32) {
    %c0_i32 = arith.constant 0 : i32
    %c0_i32_0 = arith.constant 0 : i32
    %c0_i32_1 = arith.constant 0 : i32
    return %c0_i32, %c0_i32_0 : i32, i32
  }
  func.func @transform_2(%arg0: i32, %arg1: i32) -> (i32, i32) {
    %c0_i32 = arith.constant 0 : i32
    %c0_i32_0 = arith.constant 0 : i32
    %c0_i32_1 = arith.constant 0 : i32
    return %c0_i32, %c0_i32_0 : i32, i32
  }
  func.func @transform_3(%arg0: i32, %arg1: i32) -> (i32, i32, i32, i32) {
    %c0_i32 = arith.constant 0 : i32
    %c0_i32_0 = arith.constant 0 : i32
    %c0_i32_1 = arith.constant 0 : i32
    return %arg0, %arg1, %c0_i32, %c0_i32_0 : i32, i32, i32, i32
  }
}

module attributes {stable_mosaic.version = 11 : i64} {
  func.func @_affine_act_conv_stats_kernel(%arg0: i32, %arg1: i32, %arg2: memref<1x16x16x128xbf16, #tpu.memory_space<vmem>>, %arg3: memref<1x1x16x128xbf16, #tpu.memory_space<vmem>>, %arg4: memref<1x1x16x128xbf16, #tpu.memory_space<vmem>>, %arg5: memref<1x128xf32, #tpu.memory_space<vmem>>, %arg6: memref<1x128xf32, #tpu.memory_space<vmem>>, %arg7: memref<3x384x128xbf16, #tpu.memory_space<vmem>>, %arg8: memref<1x16x16x128xbf16, #tpu.memory_space<vmem>>, %arg9: memref<1x1x2x128xf32, #tpu.memory_space<vmem>>, %arg10: memref<18x24x128xf32, #tpu.memory_space<vmem>>) attributes {dimension_semantics = [#tpu.dimension_semantics<parallel>, #tpu.dimension_semantics<parallel>], iteration_bounds = array<i64: 2, 1>, scalar_prefetch = 0 : i64, scratch_operands = 1 : i64, tpu.core_type = #tpu.core_type<tc>, window_params = [{transform_indices = @transform_0, window_bounds = array<i64: 1, 16, 16, 128>}, {transform_indices = @transform_1, window_bounds = array<i64: 1, 1, 16, 128>}, {transform_indices = @transform_2, window_bounds = array<i64: 1, 1, 16, 128>}, {pipeline_mode = #tpu.pipeline_mode<synchronous>, transform_indices = @transform_3, window_bounds = array<i64: 1, 128>}, {pipeline_mode = #tpu.pipeline_mode<synchronous>, transform_indices = @transform_4, window_bounds = array<i64: 1, 128>}, {pipeline_mode = #tpu.pipeline_mode<synchronous>, transform_indices = @transform_5, window_bounds = array<i64: 3, 384, 128>}, {transform_indices = @transform_6, window_bounds = array<i64: 1, 16, 16, 128>}, {transform_indices = @transform_7, window_bounds = array<i64: 1, 1, 2, 128>}]} {
    %c0 = arith.constant 0 : index
    %c0_0 = arith.constant 0 : index
    %0 = vector.load %arg5[%c0, %c0_0] : memref<1x128xf32, #tpu.memory_space<vmem>>, vector<1x128xf32>
    %c0_1 = arith.constant 0 : index
    %c0_2 = arith.constant 0 : index
    %1 = vector.load %arg6[%c0_1, %c0_2] : memref<1x128xf32, #tpu.memory_space<vmem>>, vector<1x128xf32>
    %cst = arith.constant 0.000000e+00 : f32
    %2 = vector.broadcast %cst : f32 to vector<18x1x128xf32>
    %c0_3 = arith.constant 0 : index
    %c0_4 = arith.constant 0 : index
    %c0_5 = arith.constant 0 : index
    %3 = vector.load %arg10[%c0_3, %c0_4, %c0_5] : memref<18x24x128xf32, #tpu.memory_space<vmem>>, vector<18x1x128xf32>
    tpu.vector_store %arg10[%c0_3, %c0_4, %c0_5], %2 {strides = array<i32>} : memref<18x24x128xf32, #tpu.memory_space<vmem>>, vector<18x1x128xf32>,
    %c0_6 = arith.constant 0 : index
    %c17 = arith.constant 17 : index
    %c0_7 = arith.constant 0 : index
    %4 = vector.load %arg10[%c0_6, %c17, %c0_7] : memref<18x24x128xf32, #tpu.memory_space<vmem>>, vector<18x1x128xf32>
    tpu.vector_store %arg10[%c0_6, %c17, %c0_7], %2 {strides = array<i32>} : memref<18x24x128xf32, #tpu.memory_space<vmem>>, vector<18x1x128xf32>,
    %c0_8 = arith.constant 0 : index
    %c0_9 = arith.constant 0 : index
    %c0_10 = arith.constant 0 : index
    %c0_11 = arith.constant 0 : index
    %5 = vector.load %arg2[%c0_8, %c0_9, %c0_10, %c0_11] : memref<1x16x16x128xbf16, #tpu.memory_space<vmem>>, vector<1x16x16x128xbf16>
    %6 = vector.shape_cast %5 : vector<1x16x16x128xbf16> to vector<16x16x128xbf16>
    %7 = arith.extf %6 : vector<16x16x128xbf16> to vector<16x16x128xf32>
    %8 = vector.shape_cast %0 : vector<1x128xf32> to vector<1x1x128xf32>
    %9 = vector.broadcast %8 : vector<1x1x128xf32> to vector<16x16x128xf32>
    %10 = arith.mulf %7, %9 : vector<16x16x128xf32>
    %11 = vector.shape_cast %1 : vector<1x128xf32> to vector<1x1x128xf32>
    %12 = vector.broadcast %11 : vector<1x1x128xf32> to vector<16x16x128xf32>
    %13 = arith.addf %10, %12 : vector<16x16x128xf32>
    %cst_12 = arith.constant 0.000000e+00 : f32
    %14 = vector.broadcast %cst_12 : f32 to vector<16x16x128xf32>
    %15 = arith.cmpf oge, %13, %14 : vector<16x16x128xf32>
    %cst_13 = arith.constant 0.00999999977 : f32
    %16 = vector.broadcast %cst_13 : f32 to vector<16x16x128xf32>
    %17 = arith.mulf %16, %13 : vector<16x16x128xf32>
    %18 = arith.select %15, %13, %17 : vector<16x16x128xi1>, vector<16x16x128xf32>
    %c1 = arith.constant 1 : index
    %c1_14 = arith.constant 1 : index
    %c0_15 = arith.constant 0 : index
    %19 = vector.load %arg10[%c1, %c1_14, %c0_15] : memref<18x24x128xf32, #tpu.memory_space<vmem>>, vector<16x16x128xf32>
    tpu.vector_store %arg10[%c1, %c1_14, %c0_15], %18 {strides = array<i32>} : memref<18x24x128xf32, #tpu.memory_space<vmem>>, vector<16x16x128xf32>,
    %cst_16 = arith.constant 0.000000e+00 : f32
    %20 = vector.broadcast %cst_16 : f32 to vector<1x16x128xf32>
    %c0_i32 = arith.constant 0 : i32
    %21 = arith.cmpi sgt, %arg1, %c0_i32 : i32
    %22 = arith.extui %21 : i1 to i32
    %c0_i32_17 = arith.constant 0 : i32
    %23 = arith.cmpi ne, %22, %c0_i32_17 : i32
    scf.if %23 {
      %c0_54 = arith.constant 0 : index
      %c0_55 = arith.constant 0 : index
      %c0_56 = arith.constant 0 : index
      %c0_57 = arith.constant 0 : index
      %68 = vector.load %arg3[%c0_54, %c0_55, %c0_56, %c0_57] : memref<1x1x16x128xbf16, #tpu.memory_space<vmem>>, vector<1x1x16x128xbf16>
      %69 = vector.shape_cast %68 : vector<1x1x16x128xbf16> to vector<1x16x128xbf16>
      %70 = arith.extf %69 : vector<1x16x128xbf16> to vector<1x16x128xf32>
      %71 = vector.shape_cast %0 : vector<1x128xf32> to vector<1x1x128xf32>
      %72 = vector.broadcast %71 : vector<1x1x128xf32> to vector<1x16x128xf32>
      %73 = arith.mulf %70, %72 : vector<1x16x128xf32>
      %74 = vector.shape_cast %1 : vector<1x128xf32> to vector<1x1x128xf32>
      %75 = vector.broadcast %74 : vector<1x1x128xf32> to vector<1x16x128xf32>
      %76 = arith.addf %73, %75 : vector<1x16x128xf32>
      %cst_58 = arith.constant 0.000000e+00 : f32
      %77 = vector.broadcast %cst_58 : f32 to vector<1x16x128xf32>
      %78 = arith.cmpf oge, %76, %77 : vector<1x16x128xf32>
      %cst_59 = arith.constant 0.00999999977 : f32
      %79 = vector.broadcast %cst_59 : f32 to vector<1x16x128xf32>
      %80 = arith.mulf %79, %76 : vector<1x16x128xf32>
      %81 = arith.select %78, %76, %80 : vector<1x16x128xi1>, vector<1x16x128xf32>
      %c0_60 = arith.constant 0 : index
      %c1_61 = arith.constant 1 : index
      %c0_62 = arith.constant 0 : index
      %82 = vector.load %arg10[%c0_60, %c1_61, %c0_62] : memref<18x24x128xf32, #tpu.memory_space<vmem>>, vector<1x16x128xf32>
      tpu.vector_store %arg10[%c0_60, %c1_61, %c0_62], %81 {strides = array<i32>} : memref<18x24x128xf32, #tpu.memory_space<vmem>>, vector<1x16x128xf32>,
    } else {
    }
    %c0_i32_18 = arith.constant 0 : i32
    %24 = arith.cmpi eq, %arg1, %c0_i32_18 : i32
    %25 = arith.extui %24 : i1 to i32
    %c0_i32_19 = arith.constant 0 : i32
    %26 = arith.cmpi ne, %25, %c0_i32_19 : i32
    scf.if %26 {
      %c0_54 = arith.constant 0 : index
      %c1_55 = arith.constant 1 : index
      %c0_56 = arith.constant 0 : index
      %68 = vector.load %arg10[%c0_54, %c1_55, %c0_56] : memref<18x24x128xf32, #tpu.memory_space<vmem>>, vector<1x16x128xf32>
      tpu.vector_store %arg10[%c0_54, %c1_55, %c0_56], %20 {strides = array<i32>} : memref<18x24x128xf32, #tpu.memory_space<vmem>>, vector<1x16x128xf32>,
    } else {
    }
    %c0_i32_20 = arith.constant 0 : i32
    %27 = arith.cmpi slt, %arg1, %c0_i32_20 : i32
    %28 = arith.extui %27 : i1 to i32
    %c0_i32_21 = arith.constant 0 : i32
    %29 = arith.cmpi ne, %28, %c0_i32_21 : i32
    scf.if %29 {
      %c0_54 = arith.constant 0 : index
      %c0_55 = arith.constant 0 : index
      %c0_56 = arith.constant 0 : index
      %c0_57 = arith.constant 0 : index
      %68 = vector.load %arg4[%c0_54, %c0_55, %c0_56, %c0_57] : memref<1x1x16x128xbf16, #tpu.memory_space<vmem>>, vector<1x1x16x128xbf16>
      %69 = vector.shape_cast %68 : vector<1x1x16x128xbf16> to vector<1x16x128xbf16>
      %70 = arith.extf %69 : vector<1x16x128xbf16> to vector<1x16x128xf32>
      %71 = vector.shape_cast %0 : vector<1x128xf32> to vector<1x1x128xf32>
      %72 = vector.broadcast %71 : vector<1x1x128xf32> to vector<1x16x128xf32>
      %73 = arith.mulf %70, %72 : vector<1x16x128xf32>
      %74 = vector.shape_cast %1 : vector<1x128xf32> to vector<1x1x128xf32>
      %75 = vector.broadcast %74 : vector<1x1x128xf32> to vector<1x16x128xf32>
      %76 = arith.addf %73, %75 : vector<1x16x128xf32>
      %cst_58 = arith.constant 0.000000e+00 : f32
      %77 = vector.broadcast %cst_58 : f32 to vector<1x16x128xf32>
      %78 = arith.cmpf oge, %76, %77 : vector<1x16x128xf32>
      %cst_59 = arith.constant 0.00999999977 : f32
      %79 = vector.broadcast %cst_59 : f32 to vector<1x16x128xf32>
      %80 = arith.mulf %79, %76 : vector<1x16x128xf32>
      %81 = arith.select %78, %76, %80 : vector<1x16x128xi1>, vector<1x16x128xf32>
      %c17_60 = arith.constant 17 : index
      %c1_61 = arith.constant 1 : index
      %c0_62 = arith.constant 0 : index
      %82 = vector.load %arg10[%c17_60, %c1_61, %c0_62] : memref<18x24x128xf32, #tpu.memory_space<vmem>>, vector<1x16x128xf32>
      tpu.vector_store %arg10[%c17_60, %c1_61, %c0_62], %81 {strides = array<i32>} : memref<18x24x128xf32, #tpu.memory_space<vmem>>, vector<1x16x128xf32>,
    } else {
    }
    %c0_i32_22 = arith.constant 0 : i32
    %30 = arith.cmpi eq, %arg1, %c0_i32_22 : i32
    %31 = arith.extui %30 : i1 to i32
    %c0_i32_23 = arith.constant 0 : i32
    %32 = arith.cmpi ne, %31, %c0_i32_23 : i32
    scf.if %32 {
      %c17_54 = arith.constant 17 : index
      %c1_55 = arith.constant 1 : index
      %c0_56 = arith.constant 0 : index
      %68 = vector.load %arg10[%c17_54, %c1_55, %c0_56] : memref<18x24x128xf32, #tpu.memory_space<vmem>>, vector<1x16x128xf32>
      tpu.vector_store %arg10[%c17_54, %c1_55, %c0_56], %20 {strides = array<i32>} : memref<18x24x128xf32, #tpu.memory_space<vmem>>, vector<1x16x128xf32>,
    } else {
    }
    %c0_24 = arith.constant 0 : index
    %c0_25 = arith.constant 0 : index
    %c0_26 = arith.constant 0 : index
    %33 = vector.load %arg10[%c0_24, %c0_25, %c0_26] : memref<18x24x128xf32, #tpu.memory_space<vmem>>, vector<18x16x128xf32>
    %34 = arith.truncf %33 : vector<18x16x128xf32> to vector<18x16x128xbf16>
    %c0_27 = arith.constant 0 : index
    %c1_28 = arith.constant 1 : index
    %c0_29 = arith.constant 0 : index
    %35 = vector.load %arg10[%c0_27, %c1_28, %c0_29] : memref<18x24x128xf32, #tpu.memory_space<vmem>>, vector<18x16x128xf32>
    %36 = arith.truncf %35 : vector<18x16x128xf32> to vector<18x16x128xbf16>
    %c0_30 = arith.constant 0 : index
    %c2 = arith.constant 2 : index
    %c0_31 = arith.constant 0 : index
    %37 = vector.load %arg10[%c0_30, %c2, %c0_31] : memref<18x24x128xf32, #tpu.memory_space<vmem>>, vector<18x16x128xf32>
    %38 = arith.truncf %37 : vector<18x16x128xf32> to vector<18x16x128xbf16>
    %39 = tpu.concatenate %34, %36, %38 in 2 : vector<18x16x128xbf16>, vector<18x16x128xbf16>, vector<18x16x128xbf16> -> vector<18x16x384xbf16>
    %40 = vector.extract_strided_slice %39 {offsets = [0, 0, 0], sizes = [16, 16, 384], strides = [1, 1, 1]} : vector<18x16x384xbf16> to vector<16x16x384xbf16>
    %41 = vector.shape_cast %40 : vector<16x16x384xbf16> to vector<256x384xbf16>
    %c0_32 = arith.constant 0 : index
    %c0_33 = arith.constant 0 : index
    %c0_34 = arith.constant 0 : index
    %42 = vector.load %arg7[%c0_32, %c0_33, %c0_34] : memref<3x384x128xbf16, #tpu.memory_space<vmem>>, vector<1x384x128xbf16>
    %43 = vector.shape_cast %42 : vector<1x384x128xbf16> to vector<384x128xbf16>
    %cst_35 = arith.constant dense<0.000000e+00> : vector<256x128xf32>
    %44 = tpu.matmul %41, %43, %cst_35 {dimension_numbers = #tpu.dot_dimension_numbers<[1], [0], [0], [1], [0, 0, 1, 1], [], []>} : vector<256x384xbf16>, vector<384x128xbf16>, vector<256x128xf32> -> vector<256x128xf32>
    %45 = vector.extract_strided_slice %39 {offsets = [1, 0, 0], sizes = [16, 16, 384], strides = [1, 1, 1]} : vector<18x16x384xbf16> to vector<16x16x384xbf16>
    %46 = vector.shape_cast %45 : vector<16x16x384xbf16> to vector<256x384xbf16>
    %c1_36 = arith.constant 1 : index
    %c0_37 = arith.constant 0 : index
    %c0_38 = arith.constant 0 : index
    %47 = vector.load %arg7[%c1_36, %c0_37, %c0_38] : memref<3x384x128xbf16, #tpu.memory_space<vmem>>, vector<1x384x128xbf16>
    %48 = vector.shape_cast %47 : vector<1x384x128xbf16> to vector<384x128xbf16>
    %cst_39 = arith.constant dense<0.000000e+00> : vector<256x128xf32>
    %49 = tpu.matmul %46, %48, %cst_39 {dimension_numbers = #tpu.dot_dimension_numbers<[1], [0], [0], [1], [0, 0, 1, 1], [], []>} : vector<256x384xbf16>, vector<384x128xbf16>, vector<256x128xf32> -> vector<256x128xf32>
    %50 = arith.addf %44, %49 : vector<256x128xf32>
    %51 = vector.extract_strided_slice %39 {offsets = [2, 0, 0], sizes = [16, 16, 384], strides = [1, 1, 1]} : vector<18x16x384xbf16> to vector<16x16x384xbf16>
    %52 = vector.shape_cast %51 : vector<16x16x384xbf16> to vector<256x384xbf16>
    %c2_40 = arith.constant 2 : index
    %c0_41 = arith.constant 0 : index
    %c0_42 = arith.constant 0 : index
    %53 = vector.load %arg7[%c2_40, %c0_41, %c0_42] : memref<3x384x128xbf16, #tpu.memory_space<vmem>>, vector<1x384x128xbf16>
    %54 = vector.shape_cast %53 : vector<1x384x128xbf16> to vector<384x128xbf16>
    %cst_43 = arith.constant dense<0.000000e+00> : vector<256x128xf32>
    %55 = tpu.matmul %52, %54, %cst_43 {dimension_numbers = #tpu.dot_dimension_numbers<[1], [0], [0], [1], [0, 0, 1, 1], [], []>} : vector<256x384xbf16>, vector<384x128xbf16>, vector<256x128xf32> -> vector<256x128xf32>
    %56 = arith.addf %50, %55 : vector<256x128xf32>
    %57 = vector.shape_cast %56 : vector<256x128xf32> to vector<1x16x16x128xf32>
    %58 = arith.truncf %57 : vector<1x16x16x128xf32> to vector<1x16x16x128xbf16>
    %c0_44 = arith.constant 0 : index
    %c0_45 = arith.constant 0 : index
    %c0_46 = arith.constant 0 : index
    %c0_47 = arith.constant 0 : index
    %59 = vector.load %arg8[%c0_44, %c0_45, %c0_46, %c0_47] : memref<1x16x16x128xbf16, #tpu.memory_space<vmem>>, vector<1x16x16x128xbf16>
    tpu.vector_store %arg8[%c0_44, %c0_45, %c0_46, %c0_47], %58 {strides = array<i32>} : memref<1x16x16x128xbf16, #tpu.memory_space<vmem>>, vector<1x16x16x128xbf16>,
    %cst_48 = arith.constant dense<0.000000e+00> : vector<128xf32>
    %60 = vector.multi_reduction <add>, %56, %cst_48 [0] : vector<256x128xf32> to vector<128xf32>
    %61 = vector.shape_cast %60 : vector<128xf32> to vector<1x128xf32>
    %62 = arith.mulf %56, %56 : vector<256x128xf32>
    %cst_49 = arith.constant dense<0.000000e+00> : vector<128xf32>
    %63 = vector.multi_reduction <add>, %62, %cst_49 [0] : vector<256x128xf32> to vector<128xf32>
    %64 = vector.shape_cast %63 : vector<128xf32> to vector<1x128xf32>
    %65 = tpu.concatenate %61, %64 in 0 : vector<1x128xf32>, vector<1x128xf32> -> vector<2x128xf32>
    %66 = vector.shape_cast %65 : vector<2x128xf32> to vector<1x1x2x128xf32>
    %c0_50 = arith.constant 0 : index
    %c0_51 = arith.constant 0 : index
    %c0_52 = arith.constant 0 : index
    %c0_53 = arith.constant 0 : index
    %67 = vector.load %arg9[%c0_50, %c0_51, %c0_52, %c0_53] : memref<1x1x2x128xf32, #tpu.memory_space<vmem>>, vector<1x1x2x128xf32>
    tpu.vector_store %arg9[%c0_50, %c0_51, %c0_52, %c0_53], %66 {strides = array<i32>} : memref<1x1x2x128xf32, #tpu.memory_space<vmem>>, vector<1x1x2x128xf32>,
    return
  }
  func.func @transform_0(%arg0: i32, %arg1: i32) -> (i32, i32, i32, i32) {
    %c0_i32 = arith.constant 0 : i32
    %c0_i32_0 = arith.constant 0 : i32
    %c0_i32_1 = arith.constant 0 : i32
    return %arg0, %arg1, %c0_i32, %c0_i32_0 : i32, i32, i32, i32
  }
  func.func @transform_1(%arg0: i32, %arg1: i32) -> (i32, i32, i32, i32) {
    %c16_i32 = arith.constant 16 : i32
    %0 = arith.muli %arg1, %c16_i32 : i32
    %c1_i32 = arith.constant 1 : i32
    %1 = arith.subi %0, %c1_i32 : i32
    %c0_i32 = arith.constant 0 : i32
    %2 = arith.maxsi %1, %c0_i32 : i32
    %c0_i32_0 = arith.constant 0 : i32
    %c0_i32_1 = arith.constant 0 : i32
    %c0_i32_2 = arith.constant 0 : i32
    return %arg0, %2, %c0_i32_0, %c0_i32_1 : i32, i32, i32, i32
  }
  func.func @transform_2(%arg0: i32, %arg1: i32) -> (i32, i32, i32, i32) {
    %c1_i32 = arith.constant 1 : i32
    %0 = arith.addi %arg1, %c1_i32 : i32
    %c16_i32 = arith.constant 16 : i32
    %1 = arith.muli %0, %c16_i32 : i32
    %c15_i32 = arith.constant 15 : i32
    %2 = arith.minsi %1, %c15_i32 : i32
    %c0_i32 = arith.constant 0 : i32
    %c0_i32_0 = arith.constant 0 : i32
    %c0_i32_1 = arith.constant 0 : i32
    return %arg0, %2, %c0_i32, %c0_i32_0 : i32, i32, i32, i32
  }
  func.func @transform_3(%arg0: i32, %arg1: i32) -> (i32, i32) {
    %c0_i32 = arith.constant 0 : i32
    %c0_i32_0 = arith.constant 0 : i32
    %c0_i32_1 = arith.constant 0 : i32
    return %c0_i32, %c0_i32_0 : i32, i32
  }
  func.func @transform_4(%arg0: i32, %arg1: i32) -> (i32, i32) {
    %c0_i32 = arith.constant 0 : i32
    %c0_i32_0 = arith.constant 0 : i32
    %c0_i32_1 = arith.constant 0 : i32
    return %c0_i32, %c0_i32_0 : i32, i32
  }
  func.func @transform_5(%arg0: i32, %arg1: i32) -> (i32, i32, i32) {
    %c0_i32 = arith.constant 0 : i32
    %c0_i32_0 = arith.constant 0 : i32
    %c0_i32_1 = arith.constant 0 : i32
    %c0_i32_2 = arith.constant 0 : i32
    return %c0_i32, %c0_i32_0, %c0_i32_1 : i32, i32, i32
  }
  func.func @transform_6(%arg0: i32, %arg1: i32) -> (i32, i32, i32, i32) {
    %c0_i32 = arith.constant 0 : i32
    %c0_i32_0 = arith.constant 0 : i32
    %c0_i32_1 = arith.constant 0 : i32
    return %arg0, %arg1, %c0_i32, %c0_i32_0 : i32, i32, i32, i32
  }
  func.func @transform_7(%arg0: i32, %arg1: i32) -> (i32, i32, i32, i32) {
    %c0_i32 = arith.constant 0 : i32
    %c0_i32_0 = arith.constant 0 : i32
    %c0_i32_1 = arith.constant 0 : i32
    return %arg0, %arg1, %c0_i32, %c0_i32_0 : i32, i32, i32, i32
  }
}

</mosaic_0001>

<llo_original>
// kernel: tpu_custom_call.1
$region0: #{tpu_custom_call.1}
  #allocation0 [shape = 'u32[]', space=smem, size = 0x4, offset = 0x4, fixed_abs, tag = 'smem constant byte address 0x4 - core index']
  #allocation1 [shape = 'u32[144,128]{1,0:T(1,128)}', space=vmem, size = 0x12000, scoped, tag = 'internal scratch']
  %s0 = inlined_call_operand.hbm [shape: f32[8,128], index: 0, kind: input, shape index: {}]
  %s1 = inlined_call_operand.hbm [shape: f32[16,128], index: 1, kind: output, shape index: {}]
  %s2 = sld [smem:[#allocation0]]
  $region41: #{tpu_custom_call.1} parent=0
    _
  %s4 = ssub.s32 1, %s2
  %s5 = scalar_select 0, %s4, %s2
  $region1: #{tpu_custom_call.1} parent=0
    #allocation2 [shape = 'u8[4096]{0}', space=vmem, size = 0x1000, scoped, tag = 'input window, operand 0, single buffered']
    #allocation3 [shape = 's32[2]{0}', space=sflag, size = 0x8, scoped, tag = 'scoped memory for tpu_custom_call.1']
    #allocation4 [shape = 's32[2]{0}', space=sflag, size = 0x8, scoped, tag = 'scoped memory for tpu_custom_call.1']
    #allocation5 [shape = 'u8[8192]{0}', space=vmem, size = 0x2000, scoped, tag = 'output window, operand 0']
    %6 = vsyncpa [#allocation3], 0
    %7 = vsyncpa [#allocation4], 0
    %s8 = scalar_lea.sflag [#allocation4], 1
    %9 = vsyncpa %s8, 0
    loop: start=0, step=1, limit=4
    $region2: #{tpu_custom_call.1} parent=1 // loop_pre_header
      _
    $region3: #{tpu_custom_call.1} parent=1 // loop_header
      %s11 = sphi 0, %s15
      %p12 = scmp.ge.s32.totalorder %s11, 4
      %s19 = sphi 0, %s19
      %s21 = sphi 0, %s19
      %s22 = sphi 0, %s21
      %s36 = sphi 0, %s22
      %s42 = sphi 0, %s44
      %s45 = sphi 0, %s42
      %s46 = sphi 0, %s45
      %s62 = sphi 0, %s46
    $region4: #{tpu_custom_call.1} parent=1 // loop_header_branch
      %14 = sbr.rel (%p12) target = $region8
    $region5: #{tpu_custom_call.1} parent=1 // loop_body
      %s16 = ssub.s32 %s11, 1
      %s17 = ssub.s32 %s11, 2
      %s18 = sadd.s32 %s11, 1
      %s20 = sadd.s32 %s19, 1
      %p23 = scmp.eq.s32.totalorder %s11, 1
      %p24 = scmp.ne.s32.totalorder %s19, %s21
      %p25 = scmp.eq.s32.totalorder %s11, 0
      %p26 = por %p24, %p25
      %p27 = scmp.ne.s32.totalorder %s19, %s21
      %p28 = scmp.eq.s32.totalorder %s16, 1
      %p29 = por %p27, %p28
      %p30 = scmp.ne.s32.totalorder %s21, %s22
      %p31 = scmp.eq.s32.totalorder %s16, 0
      %p32 = por %p30, %p31
      %p33 = scmp.ne.s32.totalorder %s21, %s22
      %p34 = scmp.eq.s32.totalorder %s17, 1
      %p35 = por %p33, %p34
      %p37 = scmp.ne.s32.totalorder %s22, %s36
      %p38 = scmp.eq.s32.totalorder %s17, 0
      %p39 = por %p37, %p38
      %s40 = ssub.s32 %s11, %s18
      %p41 = scmp.eq.s32.totalorder %s40, 0
      %s43 = sadd.s32 %s42, 1
      %s44 = scalar_select %p41, %s42, %s43
      %p47 = pneg %p41
      %p48 = scmp.eq.s32.totalorder %s11, 1
      %p49 = por %p47, %p48
      %p50 = scmp.ne.s32.totalorder %s42, %s45
      %p51 = scmp.eq.s32.totalorder %s11, 0
      %p52 = por %p50, %p51
      %p53 = scmp.ne.s32.totalorder %s42, %s45
      %p54 = scmp.eq.s32.totalorder %s16, 1
      %p55 = por %p53, %p54
      %p56 = scmp.ne.s32.totalorder %s45, %s46
      %p57 = scmp.eq.s32.totalorder %s16, 0
      %p58 = por %p56, %p57
      %p59 = scmp.ne.s32.totalorder %s45, %s46
      %p60 = scmp.eq.s32.totalorder %s17, 1
      %p61 = por %p59, %p60
      %p63 = scmp.ne.s32.totalorder %s46, %s62
      %p64 = scmp.eq.s32.totalorder %s17, 0
      %p65 = por %p63, %p64
      %p66 = scmp.le.s32.totalorder 1, %s11
      %p67 = scmp.lt.s32.totalorder %s11, 3
      %p68 = pnand %p66, %p67
      %p69 = pneg %p68
      // Predicated region
      $region9: #{tpu_custom_call.1} parent=5 // pred_check
        _
      $region10: #{tpu_custom_call.1} parent=5 // pred_check_branch
        %71 = sbr.rel (%p68) target = $region12
      $region11: #{tpu_custom_call.1} parent=5 // pred_region
        %s72 = ssub.s32 %s11, 1
        // Predicated region
        $region13: #{tpu_custom_call.1} parent=11 // pred_check
          %p73 = pneg %p32
        $region14: #{tpu_custom_call.1} parent=11 // pred_check_branch
          %75 = sbr.rel (%p73) target = $region16
        $region15: #{tpu_custom_call.1} parent=11 // pred_region
          %s77 = ssub.s32 128, 128
          %78 = vsyncadd [#allocation3], %s77
          %s80 = sshll.u32 [#allocation2], 4
          %s81 = int_to_ptr.vmem [resolvable:$true] %s80
          %83 = dma.hbm_to_vmem [thread:$0]  %s0, 128, %s81, [#allocation3]
        $region16: #{tpu_custom_call.1} parent=11 // pred_fallthru
          _
      $region12: #{tpu_custom_call.1} parent=5 // pred_fallthru
        _
      %p84 = scmp.lt.s32.totalorder %s11, 2
      // Predicated region
      $region17: #{tpu_custom_call.1} parent=5 // pred_check
        %p85 = pneg %p84
      $region18: #{tpu_custom_call.1} parent=5 // pred_check_branch
        %87 = sbr.rel (%p85) target = $region20
      $region19: #{tpu_custom_call.1} parent=5 // pred_region
        _
      $region20: #{tpu_custom_call.1} parent=5 // pred_fallthru
        _
      %p88 = scmp.le.s32.totalorder 1, %s11
      %p89 = scmp.lt.s32.totalorder %s11, 3
      %p90 = pnand %p88, %p89
      %p91 = pneg %p90
      // Predicated region
      $region21: #{tpu_custom_call.1} parent=5 // pred_check
        _
      $region22: #{tpu_custom_call.1} parent=5 // pred_check_branch
        %93 = sbr.rel (%p90) target = $region24
      $region23: #{tpu_custom_call.1} parent=5 // pred_region
        %s94 = ssub.s32 %s11, 1
        // Predicated region
        $region25: #{tpu_custom_call.1} parent=23 // pred_check
          %p95 = pneg %p32
        $region26: #{tpu_custom_call.1} parent=23 // pred_check_branch
          %97 = sbr.rel (%p95) target = $region28
        $region27: #{tpu_custom_call.1} parent=23 // pred_region
          %98 = dma.done [#allocation3], 128
        $region28: #{tpu_custom_call.1} parent=23 // pred_fallthru
          _
        %p99 = pneg %p32
        %p100 = pneg %p29
        %p101 = pneg %p58
        %p102 = pneg %p55
        %s103 = sand.u32 %s45, 1
        %s104 = scalar_lea.sflag [#allocation4], %s103
        %s105 = sand.u32 %s45, 1
        %s106 = smul.addr %s105, 8
        %s107 = scalar_lea.vmem [#allocation5], %s106
        %v108 = vld [vmem:[#allocation2] sm:$0xff]
        %109 = vst [vmem:[%s107] sm:$0xff] %v108
        %s110 = sand.u32 %s45, 1
        %s111 = scalar_lea.sflag [#allocation4], %s110
        %s112 = sand.u32 %s45, 1
        %s113 = smul.addr %s112, 8
        %s114 = scalar_lea.vmem [#allocation5], %s113
        // Predicated region
        $region29: #{tpu_custom_call.1} parent=23 // pred_check
          %p115 = pneg %p55
        $region30: #{tpu_custom_call.1} parent=23 // pred_check_branch
          %117 = sbr.rel (%p115) target = $region32
        $region31: #{tpu_custom_call.1} parent=23 // pred_region
          %s119 = ssub.s32 128, 128
          %120 = vsyncadd %s111, %s119
          %s121 = smul.addr %s16, 128
          %s122 = scalar_lea.hbm %s1, %s121
          %s124 = sshll.u32 %s114, 4
          %s125 = int_to_ptr.vmem [resolvable:$true] %s124
          %127 = dma.vmem_to_hbm [thread:$0]  %s125, 128, %s122, %s111
        $region32: #{tpu_custom_call.1} parent=23 // pred_fallthru
          _
      $region24: #{tpu_custom_call.1} parent=5 // pred_fallthru
        _
      %p128 = scmp.le.s32.totalorder 2, %s11
      // Predicated region
      $region33: #{tpu_custom_call.1} parent=5 // pred_check
        %p129 = pneg %p128
      $region34: #{tpu_custom_call.1} parent=5 // pred_check_branch
        %131 = sbr.rel (%p129) target = $region36
      $region35: #{tpu_custom_call.1} parent=5 // pred_region
        %s132 = ssub.s32 %s11, 2
        // Predicated region
        $region37: #{tpu_custom_call.1} parent=35 // pred_check
          %p133 = pneg %p61
        $region38: #{tpu_custom_call.1} parent=35 // pred_check_branch
          %135 = sbr.rel (%p133) target = $region40
        $region39: #{tpu_custom_call.1} parent=35 // pred_region
          %s136 = sand.u32 %s46, 1
          %s137 = scalar_lea.sflag [#allocation4], %s136
          %s138 = sand.u32 %s46, 1
          %s139 = smul.addr %s138, 8
          %s140 = scalar_lea.vmem [#allocation5], %s139
          %141 = dma.done %s137, 128
        $region40: #{tpu_custom_call.1} parent=35 // pred_fallthru
          _
      $region36: #{tpu_custom_call.1} parent=5 // pred_fallthru
        _
    $region6: #{tpu_custom_call.1} parent=1 // loop_footer
      %s15 = sadd.s32 1, %s11
    $region7: #{tpu_custom_call.1} parent=1 // loop_footer_branch
      %10 = sbr.rel target = $region3
    $region8: #{tpu_custom_call.1} parent=1 // loop_exit
      _
    %142 = vsyncpa [#allocation3], 1
    %s143 = scalar_lea.sflag [#allocation3], 1
    %144 = vsyncpa %s143, 1
    %145 = vsyncpa [#allocation4], 1
    %s146 = scalar_lea.sflag [#allocation4], 1
    %147 = vsyncpa %s146, 1

// kernel: upsample_bn_forward.5
$region0: #{upsample_bn_forward.5}
  #allocation0 [shape = 'u32[]', space=smem, size = 0x4, offset = 0x4, fixed_abs, tag = 'smem constant byte address 0x4 - core index']
  #allocation1 [shape = 'u32[144,128]{1,0:T(1,128)}', space=vmem, size = 0x12000, scoped, tag = 'internal scratch']
  %s0 = inlined_call_operand.vmem [shape: bf16[2,16,16,128], index: 0, kind: input, shape index: {}]
  %s1 = inlined_call_operand.vmem [shape: f32[1,128], index: 1, kind: input, shape index: {}]
  %s2 = inlined_call_operand.vmem [shape: f32[1,128], index: 2, kind: input, shape index: {}]
  %s3 = inlined_call_operand.vmem [shape: f32[2,16,16,8], index: 3, kind: output, shape index: {}]
  %s4 = sld [smem:[#allocation0]]
  $region45: #{upsample_bn_forward.5} parent=0
    _
  %s6 = ssub.s32 1, %s4
  %s7 = scalar_select 0, %s6, %s4
  loop: start=0, step=1, limit=4
  $region2: #{upsample_bn_forward.5} parent=0 // loop_pre_header
    _
  $region3: #{upsample_bn_forward.5} parent=0 // loop_header
    %s9 = sphi 0, %s13
    %p10 = scmp.ge.s32.totalorder %s9, 4
    %s16 = sphi 0, %s28
    %s17 = sphi 0, %s24
    %s18 = sphi 0, %s16
    %s19 = sphi 0, %s17
    %s20 = sphi 0, %s18
    %s21 = sphi 0, %s19
    %s33 = sphi 0, %s35
    %s36 = sphi 0, %s33
    %s37 = sphi 0, %s36
    %s53 = sphi 0, %s37
    %s57 = sphi 0, %s57
    %s59 = sphi 0, %s57
    %s60 = sphi 0, %s59
    %s74 = sphi 0, %s60
    %s78 = sphi 0, %s78
    %s80 = sphi 0, %s78
    %s81 = sphi 0, %s80
    %s95 = sphi 0, %s81
    %s103 = sphi 0, %s105
    %s106 = sphi 0, %s103
    %s107 = sphi 0, %s106
    %s123 = sphi 0, %s107
  $region4: #{upsample_bn_forward.5} parent=0 // loop_header_branch
    %12 = sbr.rel (%p10) target = $region8
  $region5: #{upsample_bn_forward.5} parent=0 // loop_body
    %s14 = ssub.s32 %s9, 1
    %s15 = ssub.s32 %s9, 2
    %s22 = sadd.s32 1, %s17
    %p23 = scmp.ge.s32.totalorder %s22, 1
    %s24 = scalar_select %p23, 0, %s22
    %s25 = sadd.s32 1, %s16
    %s26 = scalar_select %p23, %s25, %s16
    %p27 = scmp.ge.s32.totalorder %s26, 2
    %s28 = scalar_select %p27, 0, %s26
    %s29 = ssub.s32 %s16, %s28
    %s30 = ssub.s32 %s17, %s24
    %s31 = sor.u32 %s29, %s30
    %p32 = scmp.eq.s32.totalorder %s31, 0
    %s34 = sadd.s32 %s33, 1
    %s35 = scalar_select %p32, %s33, %s34
    %p38 = pneg %p32
    %p39 = scmp.eq.s32.totalorder %s9, 1
    %p40 = por %p38, %p39
    %p41 = scmp.ne.s32.totalorder %s33, %s36
    %p42 = scmp.eq.s32.totalorder %s9, 0
    %p43 = por %p41, %p42
    %p44 = scmp.ne.s32.totalorder %s33, %s36
    %p45 = scmp.eq.s32.totalorder %s14, 1
    %p46 = por %p44, %p45
    %p47 = scmp.ne.s32.totalorder %s36, %s37
    %p48 = scmp.eq.s32.totalorder %s14, 0
    %p49 = por %p47, %p48
    %p50 = scmp.ne.s32.totalorder %s36, %s37
    %p51 = scmp.eq.s32.totalorder %s15, 1
    %p52 = por %p50, %p51
    %p54 = scmp.ne.s32.totalorder %s37, %s53
    %p55 = scmp.eq.s32.totalorder %s15, 0
    %p56 = por %p54, %p55
    %s58 = sadd.s32 %s57, 1
    %p61 = scmp.eq.s32.totalorder %s9, 1
    %p62 = scmp.ne.s32.totalorder %s57, %s59
    %p63 = scmp.eq.s32.totalorder %s9, 0
    %p64 = por %p62, %p63
    %p65 = scmp.ne.s32.totalorder %s57, %s59
    %p66 = scmp.eq.s32.totalorder %s14, 1
    %p67 = por %p65, %p66
    %p68 = scmp.ne.s32.totalorder %s59, %s60
    %p69 = scmp.eq.s32.totalorder %s14, 0
    %p70 = por %p68, %p69
    %p71 = scmp.ne.s32.totalorder %s59, %s60
    %p72 = scmp.eq.s32.totalorder %s15, 1
    %p73 = por %p71, %p72
    %p75 = scmp.ne.s32.totalorder %s60, %s74
    %p76 = scmp.eq.s32.totalorder %s15, 0
    %p77 = por %p75, %p76
    %s79 = sadd.s32 %s78, 1
    %p82 = scmp.eq.s32.totalorder %s9, 1
    %p83 = scmp.ne.s32.totalorder %s78, %s80
    %p84 = scmp.eq.s32.totalorder %s9, 0
    %p85 = por %p83, %p84
    %p86 = scmp.ne.s32.totalorder %s78, %s80
    %p87 = scmp.eq.s32.totalorder %s14, 1
    %p88 = por %p86, %p87
    %p89 = scmp.ne.s32.totalorder %s80, %s81
    %p90 = scmp.eq.s32.totalorder %s14, 0
    %p91 = por %p89, %p90
    %p92 = scmp.ne.s32.totalorder %s80, %s81
    %p93 = scmp.eq.s32.totalorder %s15, 1
    %p94 = por %p92, %p93
    %p96 = scmp.ne.s32.totalorder %s81, %s95
    %p97 = scmp.eq.s32.totalorder %s15, 0
    %p98 = por %p96, %p97
    %s99 = ssub.s32 %s16, %s28
    %s100 = ssub.s32 %s17, %s24
    %s101 = sor.u32 %s99, %s100
    %p102 = scmp.eq.s32.totalorder %s101, 0
    %s104 = sadd.s32 %s103, 1
    %s105 = scalar_select %p102, %s103, %s104
    %p108 = pneg %p102
    %p109 = scmp.eq.s32.totalorder %s9, 1
    %p110 = por %p108, %p109
    %p111 = scmp.ne.s32.totalorder %s103, %s106
    %p112 = scmp.eq.s32.totalorder %s9, 0
    %p113 = por %p111, %p112
    %p114 = scmp.ne.s32.totalorder %s103, %s106
    %p115 = scmp.eq.s32.totalorder %s14, 1
    %p116 = por %p114, %p115
    %p117 = scmp.ne.s32.totalorder %s106, %s107
    %p118 = scmp.eq.s32.totalorder %s14, 0
    %p119 = por %p117, %p118
    %p120 = scmp.ne.s32.totalorder %s106, %s107
    %p121 = scmp.eq.s32.totalorder %s15, 1
    %p122 = por %p120, %p121
    %p124 = scmp.ne.s32.totalorder %s107, %s123
    %p125 = scmp.eq.s32.totalorder %s15, 0
    %p126 = por %p124, %p125
    %p127 = scmp.le.s32.totalorder 1, %s9
    %p128 = scmp.lt.s32.totalorder %s9, 3
    %p129 = pnand %p127, %p128
    %p130 = pneg %p129
    // Predicated region
    $region9: #{upsample_bn_forward.5} parent=5 // pred_check
      _
    $region10: #{upsample_bn_forward.5} parent=5 // pred_check_branch
      %132 = sbr.rel (%p129) target = $region12
    $region11: #{upsample_bn_forward.5} parent=5 // pred_region
      %s133 = ssub.s32 %s9, 1
      // Predicated region
      $region13: #{upsample_bn_forward.5} parent=11 // pred_check
        %p134 = pneg %p70
      $region14: #{upsample_bn_forward.5} parent=11 // pred_check_branch
        %136 = sbr.rel (%p134) target = $region16
      $region15: #{upsample_bn_forward.5} parent=11 // pred_region
        _
      $region16: #{upsample_bn_forward.5} parent=11 // pred_fallthru
        _
      // Predicated region
      $region17: #{upsample_bn_forward.5} parent=11 // pred_check
        %p137 = pneg %p91
      $region18: #{upsample_bn_forward.5} parent=11 // pred_check_branch
        %139 = sbr.rel (%p137) target = $region20
      $region19: #{upsample_bn_forward.5} parent=11 // pred_region
        _
      $region20: #{upsample_bn_forward.5} parent=11 // pred_fallthru
        _
    $region12: #{upsample_bn_forward.5} parent=5 // pred_fallthru
      _
    %p140 = scmp.lt.s32.totalorder %s9, 2
    // Predicated region
    $region21: #{upsample_bn_forward.5} parent=5 // pred_check
      %p141 = pneg %p140
    $region22: #{upsample_bn_forward.5} parent=5 // pred_check_branch
      %143 = sbr.rel (%p141) target = $region24
    $region23: #{upsample_bn_forward.5} parent=5 // pred_region
      // Predicated region
      $region25: #{upsample_bn_forward.5} parent=23 // pred_check
        %p144 = pneg %p43
      $region26: #{upsample_bn_forward.5} parent=23 // pred_check_branch
        %146 = sbr.rel (%p144) target = $region28
      $region27: #{upsample_bn_forward.5} parent=23 // pred_region
        %s147 = smul.u32 16, %s17
        %p148 = scmp.lt.s32.totalorder %s16, 1
        %s149 = scalar_select %p148, %s16, 1
        %p150 = scmp.lt.s32.totalorder %s147, 15
        %s151 = scalar_select %p150, %s147, 15
        %s152 = smul.addr %s151, 2
        %s153 = smul.addr %s149, 32
        %s154 = sadd.s32 %s152, %s153
        %s155 = smul.addr %s154, 4
        %s156 = scalar_lea.vmem %s0, %s155
        %s157 = smul.u32 16, %s17
      $region28: #{upsample_bn_forward.5} parent=23 // pred_fallthru
        _
    $region24: #{upsample_bn_forward.5} parent=5 // pred_fallthru
      _
    %p158 = scmp.le.s32.totalorder 1, %s9
    %p159 = scmp.lt.s32.totalorder %s9, 3
    %p160 = pnand %p158, %p159
    %p161 = pneg %p160
    // Predicated region
    $region29: #{upsample_bn_forward.5} parent=5 // pred_check
      _
    $region30: #{upsample_bn_forward.5} parent=5 // pred_check_branch
      %163 = sbr.rel (%p160) target = $region32
    $region31: #{upsample_bn_forward.5} parent=5 // pred_region
      %s164 = ssub.s32 %s9, 1
      %s165 = smul.u32 16, %s19
      %p166 = scmp.lt.s32.totalorder %s18, 1
      %s167 = scalar_select %p166, %s18, 1
      %p168 = scmp.lt.s32.totalorder %s165, 15
      %s169 = scalar_select %p168, %s165, 15
      %s170 = smul.addr %s169, 2
      %s171 = smul.addr %s167, 32
      %s172 = sadd.s32 %s170, %s171
      %s173 = smul.addr %s172, 4
      %s174 = scalar_lea.vmem %s0, %s173
      %p175 = pneg %p49
      %p176 = pneg %p46
      %p177 = pneg %p70
      %p178 = pneg %p67
      %p179 = pneg %p91
      %p180 = pneg %p88
      %p181 = pneg %p119
      %p182 = pneg %p116
      %s183 = smul.u32 16, %s19
      %p184 = scmp.lt.s32.totalorder %s18, 1
      %s185 = scalar_select %p184, %s18, 1
      %p186 = scmp.lt.s32.totalorder %s183, 15
      %s187 = scalar_select %p186, %s183, 15
      %s188 = smul.addr %s187, 2
      %s189 = smul.addr %s185, 32
      %s190 = sadd.s32 %s188, %s189
      %s191 = smul.addr %s190, 8
      %s192 = scalar_lea.vmem %s3, %s191
      %s193 = smul.u32 16, %s19
      %p194 = scmp.lt.s32.totalorder %s18, 1
      %s195 = scalar_select %p194, %s18, 1
      %p196 = scmp.lt.s32.totalorder %s193, 15
      %s197 = scalar_select %p196, %s193, 15
      %s198 = smul.addr %s197, 2
      %s199 = smul.addr %s195, 32
      %s200 = sadd.s32 %s198, %s199
      %s201 = smul.addr %s200, 4
      %s202 = scalar_lea.vmem %s0, %s201
      %s203 = smul.u32 16, %s19
      %s204 = smul.u32 16, %s19
      %p205 = scmp.lt.s32.totalorder %s18, 1
      %s206 = scalar_select %p205, %s18, 1
      %p207 = scmp.lt.s32.totalorder %s204, 15
      %s208 = scalar_select %p207, %s204, 15
      %s209 = smul.addr %s208, 2
      %s210 = smul.addr %s206, 32
      %s211 = sadd.s32 %s209, %s210
      %s212 = smul.addr %s211, 8
      %s213 = scalar_lea.vmem %s3, %s212
      %s214 = smul.u32 16, %s19
      %v215 = vld [vmem:[%s202] sm:$0xf]
      %v216 = vld [vmem:[%s202 + $0x4] sm:$0xf]
      %v217 = vld [vmem:[%s202 + $0x8] sm:$0xf]
      %v218 = vld [vmem:[%s202 + $0xc] sm:$0xf]
      %v219 = vld [vmem:[%s202 + $0x10] sm:$0xf]
      %v220 = vld [vmem:[%s202 + $0x14] sm:$0xf]
      %v221 = vld [vmem:[%s202 + $0x18] sm:$0xf]
      %v222 = vld [vmem:[%s202 + $0x1c] sm:$0xf]
      %v223 = vld [vmem:[%s202 + $0x20] sm:$0xf]
      %v224 = vld [vmem:[%s202 + $0x24] sm:$0xf]
      %v225 = vld [vmem:[%s202 + $0x28] sm:$0xf]
      %v226 = vld [vmem:[%s202 + $0x2c] sm:$0xf]
      %v227 = vld [vmem:[%s202 + $0x30] sm:$0xf]
      %v228 = vld [vmem:[%s202 + $0x34] sm:$0xf]
      %v229 = vld [vmem:[%s202 + $0x38] sm:$0xf]
      %v230 = vld [vmem:[%s202 + $0x3c] sm:$0xf]
      %v231 = vld [vmem:[%s202 + $0x40] sm:$0xf]
      %v232 = vld [vmem:[%s202 + $0x44] sm:$0xf]
      %v233 = vld [vmem:[%s202 + $0x48] sm:$0xf]
      %v234 = vld [vmem:[%s202 + $0x4c] sm:$0xf]
      %v235 = vld [vmem:[%s202 + $0x50] sm:$0xf]
      %v236 = vld [vmem:[%s202 + $0x54] sm:$0xf]
      %v237 = vld [vmem:[%s202 + $0x58] sm:$0xf]
      %v238 = vld [vmem:[%s202 + $0x5c] sm:$0xf]
      %v239 = vld [vmem:[%s202 + $0x60] sm:$0xf]
      %v240 = vld [vmem:[%s202 + $0x64] sm:$0xf]
      %v241 = vld [vmem:[%s202 + $0x68] sm:$0xf]
      %v242 = vld [vmem:[%s202 + $0x6c] sm:$0xf]
      %v243 = vld [vmem:[%s202 + $0x70] sm:$0xf]
      %v244 = vld [vmem:[%s202 + $0x74] sm:$0xf]
      %v245 = vld [vmem:[%s202 + $0x78] sm:$0xf]
      %v246 = vld [vmem:[%s202 + $0x7c] sm:$0xf]
      %v247 = vunpack.c.l.bf16 %v215
      %v248 = vunpack.c.l.bf16 %v216
      %v249 = vunpack.c.l.bf16 %v217
      %v250 = vunpack.c.l.bf16 %v218
      %v251 = vunpack.c.l.bf16 %v219
      %v252 = vunpack.c.l.bf16 %v220
      %v253 = vunpack.c.l.bf16 %v221
      %v254 = vunpack.c.l.bf16 %v222
      %v255 = vunpack.c.l.bf16 %v223
      %v256 = vunpack.c.l.bf16 %v224
      %v257 = vunpack.c.l.bf16 %v225
      %v258 = vunpack.c.l.bf16 %v226
      %v259 = vunpack.c.l.bf16 %v227
      %v260 = vunpack.c.l.bf16 %v228
      %v261 = vunpack.c.l.bf16 %v229
      %v262 = vunpack.c.l.bf16 %v230
      %v263 = vunpack.c.l.bf16 %v231
      %v264 = vunpack.c.l.bf16 %v232
      %v265 = vunpack.c.l.bf16 %v233
      %v266 = vunpack.c.l.bf16 %v234
      %v267 = vunpack.c.l.bf16 %v235
      %v268 = vunpack.c.l.bf16 %v236
      %v269 = vunpack.c.l.bf16 %v237
      %v270 = vunpack.c.l.bf16 %v238
      %v271 = vunpack.c.l.bf16 %v239
      %v272 = vunpack.c.l.bf16 %v240
      %v273 = vunpack.c.l.bf16 %v241
      %v274 = vunpack.c.l.bf16 %v242
      %v275 = vunpack.c.l.bf16 %v243
      %v276 = vunpack.c.l.bf16 %v244
      %v277 = vunpack.c.l.bf16 %v245
      %v278 = vunpack.c.l.bf16 %v246
      %v279 = vld [vmem:[%s1] sm:$0x1]
      %v281 = vlaneseq
      %v282 = vshrl.u32 %v281, 7
      %v283 = vsub.s32 0, %v282
      %v284 = vrot.slane %v279, %v283
      %v286 = vmul.f32 %v247, %v284
      %v287 = vmul.f32 %v248, %v284
      %v288 = vmul.f32 %v249, %v284
      %v289 = vmul.f32 %v250, %v284
      %v290 = vmul.f32 %v251, %v284
      %v291 = vmul.f32 %v252, %v284
      %v292 = vmul.f32 %v253, %v284
      %v293 = vmul.f32 %v254, %v284
      %v294 = vmul.f32 %v255, %v284
      %v295 = vmul.f32 %v256, %v284
      %v296 = vmul.f32 %v257, %v284
      %v297 = vmul.f32 %v258, %v284
      %v298 = vmul.f32 %v259, %v284
      %v299 = vmul.f32 %v260, %v284
      %v300 = vmul.f32 %v261, %v284
      %v301 = vmul.f32 %v262, %v284
      %v302 = vmul.f32 %v263, %v284
      %v303 = vmul.f32 %v264, %v284
      %v304 = vmul.f32 %v265, %v284
      %v305 = vmul.f32 %v266, %v284
      %v306 = vmul.f32 %v267, %v284
      %v307 = vmul.f32 %v268, %v284
      %v308 = vmul.f32 %v269, %v284
      %v309 = vmul.f32 %v270, %v284
      %v310 = vmul.f32 %v271, %v284
      %v311 = vmul.f32 %v272, %v284
      %v312 = vmul.f32 %v273, %v284
      %v313 = vmul.f32 %v274, %v284
      %v314 = vmul.f32 %v275, %v284
      %v315 = vmul.f32 %v276, %v284
      %v316 = vmul.f32 %v277, %v284
      %v317 = vmul.f32 %v278, %v284
      %v318 = vld [vmem:[%s2] sm:$0x1]
      %v320 = vlaneseq
      %v321 = vshrl.u32 %v320, 7
      %v322 = vsub.s32 0, %v321
      %v323 = vrot.slane %v318, %v322
      %v325 = vadd.f32 %v286, %v323
      %v326 = vadd.f32 %v287, %v323
      %v327 = vadd.f32 %v288, %v323
      %v328 = vadd.f32 %v289, %v323
      %v329 = vadd.f32 %v290, %v323
      %v330 = vadd.f32 %v291, %v323
      %v331 = vadd.f32 %v292, %v323
      %v332 = vadd.f32 %v293, %v323
      %v333 = vadd.f32 %v294, %v323
      %v334 = vadd.f32 %v295, %v323
      %v335 = vadd.f32 %v296, %v323
      %v336 = vadd.f32 %v297, %v323
      %v337 = vadd.f32 %v298, %v323
      %v338 = vadd.f32 %v299, %v323
      %v339 = vadd.f32 %v300, %v323
      %v340 = vadd.f32 %v301, %v323
      %v341 = vadd.f32 %v302, %v323
      %v342 = vadd.f32 %v303, %v323
      %v343 = vadd.f32 %v304, %v323
      %v344 = vadd.f32 %v305, %v323
      %v345 = vadd.f32 %v306, %v323
      %v346 = vadd.f32 %v307, %v323
      %v347 = vadd.f32 %v308, %v323
      %v348 = vadd.f32 %v309, %v323
      %v349 = vadd.f32 %v310, %v323
      %v350 = vadd.f32 %v311, %v323
      %v351 = vadd.f32 %v312, %v323
      %v352 = vadd.f32 %v313, %v323
      %v353 = vadd.f32 %v314, %v323
      %v354 = vadd.f32 %v315, %v323
      %v355 = vadd.f32 %v316, %v323
      %v356 = vadd.f32 %v317, %v323
      %vm357 = vcmp.ge.f32.partialorder %v325, 0.0
      %vm358 = vcmp.ge.f32.partialorder %v326, 0.0
      %vm359 = vcmp.ge.f32.partialorder %v327, 0.0
      %vm360 = vcmp.ge.f32.partialorder %v328, 0.0
      %vm361 = vcmp.ge.f32.partialorder %v329, 0.0
      %vm362 = vcmp.ge.f32.partialorder %v330, 0.0
      %vm363 = vcmp.ge.f32.partialorder %v331, 0.0
      %vm364 = vcmp.ge.f32.partialorder %v332, 0.0
      %vm365 = vcmp.ge.f32.partialorder %v333, 0.0
      %vm366 = vcmp.ge.f32.partialorder %v334, 0.0
      %vm367 = vcmp.ge.f32.partialorder %v335, 0.0
      %vm368 = vcmp.ge.f32.partialorder %v336, 0.0
      %vm369 = vcmp.ge.f32.partialorder %v337, 0.0
      %vm370 = vcmp.ge.f32.partialorder %v338, 0.0
      %vm371 = vcmp.ge.f32.partialorder %v339, 0.0
      %vm372 = vcmp.ge.f32.partialorder %v340, 0.0
      %vm373 = vcmp.ge.f32.partialorder %v341, 0.0
      %vm374 = vcmp.ge.f32.partialorder %v342, 0.0
      %vm375 = vcmp.ge.f32.partialorder %v343, 0.0
      %vm376 = vcmp.ge.f32.partialorder %v344, 0.0
      %vm377 = vcmp.ge.f32.partialorder %v345, 0.0
      %vm378 = vcmp.ge.f32.partialorder %v346, 0.0
      %vm379 = vcmp.ge.f32.partialorder %v347, 0.0
      %vm380 = vcmp.ge.f32.partialorder %v348, 0.0
      %vm381 = vcmp.ge.f32.partialorder %v349, 0.0
      %vm382 = vcmp.ge.f32.partialorder %v350, 0.0
      %vm383 = vcmp.ge.f32.partialorder %v351, 0.0
      %vm384 = vcmp.ge.f32.partialorder %v352, 0.0
      %vm385 = vcmp.ge.f32.partialorder %v353, 0.0
      %vm386 = vcmp.ge.f32.partialorder %v354, 0.0
      %vm387 = vcmp.ge.f32.partialorder %v355, 0.0
      %vm388 = vcmp.ge.f32.partialorder %v356, 0.0
      %v389 = vmul.f32 %v325, 0.01
      %v390 = vmul.f32 %v326, 0.01
      %v391 = vmul.f32 %v327, 0.01
      %v392 = vmul.f32 %v328, 0.01
      %v393 = vmul.f32 %v329, 0.01
      %v394 = vmul.f32 %v330, 0.01
      %v395 = vmul.f32 %v331, 0.01
      %v396 = vmul.f32 %v332, 0.01
      %v397 = vmul.f32 %v333, 0.01
      %v398 = vmul.f32 %v334, 0.01
      %v399 = vmul.f32 %v335, 0.01
      %v400 = vmul.f32 %v336, 0.01
      %v401 = vmul.f32 %v337, 0.01
      %v402 = vmul.f32 %v338, 0.01
      %v403 = vmul.f32 %v339, 0.01
      %v404 = vmul.f32 %v340, 0.01
      %v405 = vmul.f32 %v341, 0.01
      %v406 = vmul.f32 %v342, 0.01
      %v407 = vmul.f32 %v343, 0.01
      %v408 = vmul.f32 %v344, 0.01
      %v409 = vmul.f32 %v345, 0.01
      %v410 = vmul.f32 %v346, 0.01
      %v411 = vmul.f32 %v347, 0.01
      %v412 = vmul.f32 %v348, 0.01
      %v413 = vmul.f32 %v349, 0.01
      %v414 = vmul.f32 %v350, 0.01
      %v415 = vmul.f32 %v351, 0.01
      %v416 = vmul.f32 %v352, 0.01
      %v417 = vmul.f32 %v353, 0.01
      %v418 = vmul.f32 %v354, 0.01
      %v419 = vmul.f32 %v355, 0.01
      %v420 = vmul.f32 %v356, 0.01
      %v421 = vsel %vm357, %v325, %v389
      %v422 = vsel %vm358, %v326, %v390
      %v423 = vsel %vm359, %v327, %v391
      %v424 = vsel %vm360, %v328, %v392
      %v425 = vsel %vm361, %v329, %v393
      %v426 = vsel %vm362, %v330, %v394
      %v427 = vsel %vm363, %v331, %v395
      %v428 = vsel %vm364, %v332, %v396
      %v429 = vsel %vm365, %v333, %v397
      %v430 = vsel %vm366, %v334, %v398
      %v431 = vsel %vm367, %v335, %v399
      %v432 = vsel %vm368, %v336, %v400
      %v433 = vsel %vm369, %v337, %v401
      %v434 = vsel %vm370, %v338, %v402
      %v435 = vsel %vm371, %v339, %v403
      %v436 = vsel %vm372, %v340, %v404
      %v437 = vsel %vm373, %v341, %v405
      %v438 = vsel %vm374, %v342, %v406
      %v439 = vsel %vm375, %v343, %v407
      %v440 = vsel %vm376, %v344, %v408
      %v441 = vsel %vm377, %v345, %v409
      %v442 = vsel %vm378, %v346, %v410
      %v443 = vsel %vm379, %v347, %v411
      %v444 = vsel %vm380, %v348, %v412
      %v445 = vsel %vm381, %v349, %v413
      %v446 = vsel %vm382, %v350, %v414
      %v447 = vsel %vm383, %v351, %v415
      %v448 = vsel %vm384, %v352, %v416
      %v449 = vsel %vm385, %v353, %v417
      %v450 = vsel %vm386, %v354, %v418
      %v451 = vsel %vm387, %v355, %v419
      %v452 = vsel %vm388, %v356, %v420
      %vm453 = vcmask 64512
      %454 = vst.msk [vmem:[%s213] sm:$0xff] %vm453, %v421
      %455 = vst.msk [vmem:[%s213 + $0x8] sm:$0xff] %vm453, %v422
      %456 = vst.msk [vmem:[%s213 + $0x10] sm:$0xff] %vm453, %v423
      %457 = vst.msk [vmem:[%s213 + $0x18] sm:$0xff] %vm453, %v424
      %458 = vst.msk [vmem:[%s213 + $0x20] sm:$0xff] %vm453, %v425
      %459 = vst.msk [vmem:[%s213 + $0x28] sm:$0xff] %vm453, %v426
      %460 = vst.msk [vmem:[%s213 + $0x30] sm:$0xff] %vm453, %v427
      %461 = vst.msk [vmem:[%s213 + $0x38] sm:$0xff] %vm453, %v428
      %462 = vst.msk [vmem:[%s213 + $0x40] sm:$0xff] %vm453, %v429
      %463 = vst.msk [vmem:[%s213 + $0x48] sm:$0xff] %vm453, %v430
      %464 = vst.msk [vmem:[%s213 + $0x50] sm:$0xff] %vm453, %v431
      %465 = vst.msk [vmem:[%s213 + $0x58] sm:$0xff] %vm453, %v432
      %466 = vst.msk [vmem:[%s213 + $0x60] sm:$0xff] %vm453, %v433
      %467 = vst.msk [vmem:[%s213 + $0x68] sm:$0xff] %vm453, %v434
      %468 = vst.msk [vmem:[%s213 + $0x70] sm:$0xff] %vm453, %v435
      %469 = vst.msk [vmem:[%s213 + $0x78] sm:$0xff] %vm453, %v436
      %470 = vst.msk [vmem:[%s213 + $0x80] sm:$0xff] %vm453, %v437
      %471 = vst.msk [vmem:[%s213 + $0x88] sm:$0xff] %vm453, %v438
      %472 = vst.msk [vmem:[%s213 + $0x90] sm:$0xff] %vm453, %v439
      %473 = vst.msk [vmem:[%s213 + $0x98] sm:$0xff] %vm453, %v440
      %474 = vst.msk [vmem:[%s213 + $0xa0] sm:$0xff] %vm453, %v441
      %475 = vst.msk [vmem:[%s213 + $0xa8] sm:$0xff] %vm453, %v442
      %476 = vst.msk [vmem:[%s213 + $0xb0] sm:$0xff] %vm453, %v443
      %477 = vst.msk [vmem:[%s213 + $0xb8] sm:$0xff] %vm453, %v444
      %478 = vst.msk [vmem:[%s213 + $0xc0] sm:$0xff] %vm453, %v445
      %479 = vst.msk [vmem:[%s213 + $0xc8] sm:$0xff] %vm453, %v446
      %480 = vst.msk [vmem:[%s213 + $0xd0] sm:$0xff] %vm453, %v447
      %481 = vst.msk [vmem:[%s213 + $0xd8] sm:$0xff] %vm453, %v448
      %482 = vst.msk [vmem:[%s213 + $0xe0] sm:$0xff] %vm453, %v449
      %483 = vst.msk [vmem:[%s213 + $0xe8] sm:$0xff] %vm453, %v450
      %484 = vst.msk [vmem:[%s213 + $0xf0] sm:$0xff] %vm453, %v451
      %485 = vst.msk [vmem:[%s213 + $0xf8] sm:$0xff] %vm453, %v452
      %s486 = smul.u32 16, %s19
      %p487 = scmp.lt.s32.totalorder %s18, 1
      %s488 = scalar_select %p487, %s18, 1
      %p489 = scmp.lt.s32.totalorder %s486, 15
      %s490 = scalar_select %p489, %s486, 15
      %s491 = smul.addr %s490, 2
      %s492 = smul.addr %s488, 32
      %s493 = sadd.s32 %s491, %s492
      %s494 = smul.addr %s493, 8
      %s495 = scalar_lea.vmem %s3, %s494
      // Predicated region
      $region33: #{upsample_bn_forward.5} parent=31 // pred_check
        %p496 = pneg %p116
      $region34: #{upsample_bn_forward.5} parent=31 // pred_check_branch
        %498 = sbr.rel (%p496) target = $region36
      $region35: #{upsample_bn_forward.5} parent=31 // pred_region
        %s499 = smul.u32 16, %s19
      $region36: #{upsample_bn_forward.5} parent=31 // pred_fallthru
        _
    $region32: #{upsample_bn_forward.5} parent=5 // pred_fallthru
      _
    %p500 = scmp.le.s32.totalorder 2, %s9
    // Predicated region
    $region37: #{upsample_bn_forward.5} parent=5 // pred_check
      %p501 = pneg %p500
    $region38: #{upsample_bn_forward.5} parent=5 // pred_check_branch
      %503 = sbr.rel (%p501) target = $region40
    $region39: #{upsample_bn_forward.5} parent=5 // pred_region
      %s504 = ssub.s32 %s9, 2
      // Predicated region
      $region41: #{upsample_bn_forward.5} parent=39 // pred_check
        %p505 = pneg %p122
      $region42: #{upsample_bn_forward.5} parent=39 // pred_check_branch
        %507 = sbr.rel (%p505) target = $region44
      $region43: #{upsample_bn_forward.5} parent=39 // pred_region
        %s508 = smul.u32 16, %s21
        %p509 = scmp.lt.s32.totalorder %s20, 1
        %s510 = scalar_select %p509, %s20, 1
        %p511 = scmp.lt.s32.totalorder %s508, 15
        %s512 = scalar_select %p511, %s508, 15
        %s513 = smul.addr %s512, 2
        %s514 = smul.addr %s510, 32
        %s515 = sadd.s32 %s513, %s514
        %s516 = smul.addr %s515, 8
        %s517 = scalar_lea.vmem %s3, %s516
      $region44: #{upsample_bn_forward.5} parent=39 // pred_fallthru
        _
    $region40: #{upsample_bn_forward.5} parent=5 // pred_fallthru
      _
  $region6: #{upsample_bn_forward.5} parent=0 // loop_footer
    %s13 = sadd.s32 1, %s9
  $region7: #{upsample_bn_forward.5} parent=0 // loop_footer_branch
    %8 = sbr.rel target = $region3
  $region8: #{upsample_bn_forward.5} parent=0 // loop_exit
    _

// kernel: upsample_bn_forward.4
$region0: #{upsample_bn_forward.4}
  #allocation0 [shape = 'u32[]', space=smem, size = 0x4, offset = 0x4, fixed_abs, tag = 'smem constant byte address 0x4 - core index']
  #allocation1 [shape = 'u32[144,128]{1,0:T(1,128)}', space=vmem, size = 0x12000, scoped, tag = 'internal scratch']
  #allocation2 [shape = 'f32[18,24,128]{2,1,0:T(8,128)}', space=vmem, size = 0x36000, scoped, tag = 'scratch operand']
  %s0 = inlined_call_operand.vmem [shape: bf16[2,16,16,128], index: 0, kind: input, shape index: {}, may-alias: {0,1,2}]
  %s1 = inlined_call_operand.vmem [shape: bf16[2,16,16,128], index: 1, kind: input, shape index: {}, may-alias: {0,1,2}]
  %s2 = inlined_call_operand.vmem [shape: bf16[2,16,16,128], index: 2, kind: input, shape index: {}, may-alias: {0,1,2}]
  %s3 = inlined_call_operand.vmem [shape: f32[1,128], index: 3, kind: input, shape index: {}]
  %s4 = inlined_call_operand.vmem [shape: f32[1,128], index: 4, kind: input, shape index: {}]
  %s5 = inlined_call_operand.vmem [shape: bf16[3,384,128], index: 5, kind: input, shape index: {}]
  %s6 = inlined_call_operand.vmem [shape: bf16[2,16,16,128], index: 6, kind: output, shape index: {0}]
  %s7 = inlined_call_operand.vmem [shape: f32[2,1,2,128], index: 7, kind: output, shape index: {1}]
  %8 = xla_tuple %s6, %s7
  %s9 = sld [smem:[#allocation0]]
  $region81: #{upsample_bn_forward.4} parent=0
    _
  %s11 = ssub.s32 1, %s9
  %s12 = scalar_select 0, %s11, %s9
  loop: start=0, step=1, limit=4
  $region2: #{upsample_bn_forward.4} parent=0 // loop_pre_header
    _
  $region3: #{upsample_bn_forward.4} parent=0 // loop_header
    %s14 = sphi 0, %s18
    %p15 = scmp.ge.s32.totalorder %s14, 4
    %s21 = sphi 0, %s33
    %s22 = sphi 0, %s29
    %s23 = sphi 0, %s21
    %s24 = sphi 0, %s22
    %s25 = sphi 0, %s23
    %s26 = sphi 0, %s24
    %s38 = sphi 0, %s40
    %s41 = sphi 0, %s38
    %s42 = sphi 0, %s41
    %s58 = sphi 0, %s42
    %s74 = sphi 0, %s76
    %s77 = sphi 0, %s74
    %s78 = sphi 0, %s77
    %s94 = sphi 0, %s78
    %s110 = sphi 0, %s112
    %s113 = sphi 0, %s110
    %s114 = sphi 0, %s113
    %s130 = sphi 0, %s114
    %s134 = sphi 0, %s134
    %s136 = sphi 0, %s134
    %s137 = sphi 0, %s136
    %s151 = sphi 0, %s137
    %s155 = sphi 0, %s155
    %s157 = sphi 0, %s155
    %s158 = sphi 0, %s157
    %s172 = sphi 0, %s158
    %s176 = sphi 0, %s176
    %s178 = sphi 0, %s176
    %s179 = sphi 0, %s178
    %s193 = sphi 0, %s179
    %s201 = sphi 0, %s203
    %s204 = sphi 0, %s201
    %s205 = sphi 0, %s204
    %s221 = sphi 0, %s205
    %s229 = sphi 0, %s231
    %s232 = sphi 0, %s229
    %s233 = sphi 0, %s232
    %s249 = sphi 0, %s233
  $region4: #{upsample_bn_forward.4} parent=0 // loop_header_branch
    %17 = sbr.rel (%p15) target = $region8
  $region5: #{upsample_bn_forward.4} parent=0 // loop_body
    %s19 = ssub.s32 %s14, 1
    %s20 = ssub.s32 %s14, 2
    %s27 = sadd.s32 1, %s22
    %p28 = scmp.ge.s32.totalorder %s27, 1
    %s29 = scalar_select %p28, 0, %s27
    %s30 = sadd.s32 1, %s21
    %s31 = scalar_select %p28, %s30, %s21
    %p32 = scmp.ge.s32.totalorder %s31, 2
    %s33 = scalar_select %p32, 0, %s31
    %s34 = ssub.s32 %s21, %s33
    %s35 = ssub.s32 %s22, %s29
    %s36 = sor.u32 %s34, %s35
    %p37 = scmp.eq.s32.totalorder %s36, 0
    %s39 = sadd.s32 %s38, 1
    %s40 = scalar_select %p37, %s38, %s39
    %p43 = pneg %p37
    %p44 = scmp.eq.s32.totalorder %s14, 1
    %p45 = por %p43, %p44
    %p46 = scmp.ne.s32.totalorder %s38, %s41
    %p47 = scmp.eq.s32.totalorder %s14, 0
    %p48 = por %p46, %p47
    %p49 = scmp.ne.s32.totalorder %s38, %s41
    %p50 = scmp.eq.s32.totalorder %s19, 1
    %p51 = por %p49, %p50
    %p52 = scmp.ne.s32.totalorder %s41, %s42
    %p53 = scmp.eq.s32.totalorder %s19, 0
    %p54 = por %p52, %p53
    %p55 = scmp.ne.s32.totalorder %s41, %s42
    %p56 = scmp.eq.s32.totalorder %s20, 1
    %p57 = por %p55, %p56
    %p59 = scmp.ne.s32.totalorder %s42, %s58
    %p60 = scmp.eq.s32.totalorder %s20, 0
    %p61 = por %p59, %p60
    %s62 = smul.u32 %s22, 16
    %s63 = ssub.s32 %s62, 1
    %p64 = scmp.gt.s32.totalorder %s63, 0
    %s65 = scalar_select %p64, %s63, 0
    %s66 = smul.u32 %s29, 16
    %s67 = ssub.s32 %s66, 1
    %p68 = scmp.gt.s32.totalorder %s67, 0
    %s69 = scalar_select %p68, %s67, 0
    %s70 = ssub.s32 %s21, %s33
    %s71 = ssub.s32 %s65, %s69
    %s72 = sor.u32 %s70, %s71
    %p73 = scmp.eq.s32.totalorder %s72, 0
    %s75 = sadd.s32 %s74, 1
    %s76 = scalar_select %p73, %s74, %s75
    %p79 = pneg %p73
    %p80 = scmp.eq.s32.totalorder %s14, 1
    %p81 = por %p79, %p80
    %p82 = scmp.ne.s32.totalorder %s74, %s77
    %p83 = scmp.eq.s32.totalorder %s14, 0
    %p84 = por %p82, %p83
    %p85 = scmp.ne.s32.totalorder %s74, %s77
    %p86 = scmp.eq.s32.totalorder %s19, 1
    %p87 = por %p85, %p86
    %p88 = scmp.ne.s32.totalorder %s77, %s78
    %p89 = scmp.eq.s32.totalorder %s19, 0
    %p90 = por %p88, %p89
    %p91 = scmp.ne.s32.totalorder %s77, %s78
    %p92 = scmp.eq.s32.totalorder %s20, 1
    %p93 = por %p91, %p92
    %p95 = scmp.ne.s32.totalorder %s78, %s94
    %p96 = scmp.eq.s32.totalorder %s20, 0
    %p97 = por %p95, %p96
    %s98 = sadd.s32 %s22, 1
    %s99 = smul.u32 %s98, 16
    %p100 = scmp.lt.s32.totalorder %s99, 15
    %s101 = scalar_select %p100, %s99, 15
    %s102 = sadd.s32 %s29, 1
    %s103 = smul.u32 %s102, 16
    %p104 = scmp.lt.s32.totalorder %s103, 15
    %s105 = scalar_select %p104, %s103, 15
    %s106 = ssub.s32 %s21, %s33
    %s107 = ssub.s32 %s101, %s105
    %s108 = sor.u32 %s106, %s107
    %p109 = scmp.eq.s32.totalorder %s108, 0
    %s111 = sadd.s32 %s110, 1
    %s112 = scalar_select %p109, %s110, %s111
    %p115 = pneg %p109
    %p116 = scmp.eq.s32.totalorder %s14, 1
    %p117 = por %p115, %p116
    %p118 = scmp.ne.s32.totalorder %s110, %s113
    %p119 = scmp.eq.s32.totalorder %s14, 0
    %p120 = por %p118, %p119
    %p121 = scmp.ne.s32.totalorder %s110, %s113
    %p122 = scmp.eq.s32.totalorder %s19, 1
    %p123 = por %p121, %p122
    %p124 = scmp.ne.s32.totalorder %s113, %s114
    %p125 = scmp.eq.s32.totalorder %s19, 0
    %p126 = por %p124, %p125
    %p127 = scmp.ne.s32.totalorder %s113, %s114
    %p128 = scmp.eq.s32.totalorder %s20, 1
    %p129 = por %p127, %p128
    %p131 = scmp.ne.s32.totalorder %s114, %s130
    %p132 = scmp.eq.s32.totalorder %s20, 0
    %p133 = por %p131, %p132
    %s135 = sadd.s32 %s134, 1
    %p138 = scmp.eq.s32.totalorder %s14, 1
    %p139 = scmp.ne.s32.totalorder %s134, %s136
    %p140 = scmp.eq.s32.totalorder %s14, 0
    %p141 = por %p139, %p140
    %p142 = scmp.ne.s32.totalorder %s134, %s136
    %p143 = scmp.eq.s32.totalorder %s19, 1
    %p144 = por %p142, %p143
    %p145 = scmp.ne.s32.totalorder %s136, %s137
    %p146 = scmp.eq.s32.totalorder %s19, 0
    %p147 = por %p145, %p146
    %p148 = scmp.ne.s32.totalorder %s136, %s137
    %p149 = scmp.eq.s32.totalorder %s20, 1
    %p150 = por %p148, %p149
    %p152 = scmp.ne.s32.totalorder %s137, %s151
    %p153 = scmp.eq.s32.totalorder %s20, 0
    %p154 = por %p152, %p153
    %s156 = sadd.s32 %s155, 1
    %p159 = scmp.eq.s32.totalorder %s14, 1
    %p160 = scmp.ne.s32.totalorder %s155, %s157
    %p161 = scmp.eq.s32.totalorder %s14, 0
    %p162 = por %p160, %p161
    %p163 = scmp.ne.s32.totalorder %s155, %s157
    %p164 = scmp.eq.s32.totalorder %s19, 1
    %p165 = por %p163, %p164
    %p166 = scmp.ne.s32.totalorder %s157, %s158
    %p167 = scmp.eq.s32.totalorder %s19, 0
    %p168 = por %p166, %p167
    %p169 = scmp.ne.s32.totalorder %s157, %s158
    %p170 = scmp.eq.s32.totalorder %s20, 1
    %p171 = por %p169, %p170
    %p173 = scmp.ne.s32.totalorder %s158, %s172
    %p174 = scmp.eq.s32.totalorder %s20, 0
    %p175 = por %p173, %p174
    %s177 = sadd.s32 %s176, 1
    %p180 = scmp.eq.s32.totalorder %s14, 1
    %p181 = scmp.ne.s32.totalorder %s176, %s178
    %p182 = scmp.eq.s32.totalorder %s14, 0
    %p183 = por %p181, %p182
    %p184 = scmp.ne.s32.totalorder %s176, %s178
    %p185 = scmp.eq.s32.totalorder %s19, 1
    %p186 = por %p184, %p185
    %p187 = scmp.ne.s32.totalorder %s178, %s179
    %p188 = scmp.eq.s32.totalorder %s19, 0
    %p189 = por %p187, %p188
    %p190 = scmp.ne.s32.totalorder %s178, %s179
    %p191 = scmp.eq.s32.totalorder %s20, 1
    %p192 = por %p190, %p191
    %p194 = scmp.ne.s32.totalorder %s179, %s193
    %p195 = scmp.eq.s32.totalorder %s20, 0
    %p196 = por %p194, %p195
    %s197 = ssub.s32 %s21, %s33
    %s198 = ssub.s32 %s22, %s29
    %s199 = sor.u32 %s197, %s198
    %p200 = scmp.eq.s32.totalorder %s199, 0
    %s202 = sadd.s32 %s201, 1
    %s203 = scalar_select %p200, %s201, %s202
    %p206 = pneg %p200
    %p207 = scmp.eq.s32.totalorder %s14, 1
    %p208 = por %p206, %p207
    %p209 = scmp.ne.s32.totalorder %s201, %s204
    %p210 = scmp.eq.s32.totalorder %s14, 0
    %p211 = por %p209, %p210
    %p212 = scmp.ne.s32.totalorder %s201, %s204
    %p213 = scmp.eq.s32.totalorder %s19, 1
    %p214 = por %p212, %p213
    %p215 = scmp.ne.s32.totalorder %s204, %s205
    %p216 = scmp.eq.s32.totalorder %s19, 0
    %p217 = por %p215, %p216
    %p218 = scmp.ne.s32.totalorder %s204, %s205
    %p219 = scmp.eq.s32.totalorder %s20, 1
    %p220 = por %p218, %p219
    %p222 = scmp.ne.s32.totalorder %s205, %s221
    %p223 = scmp.eq.s32.totalorder %s20, 0
    %p224 = por %p222, %p223
    %s225 = ssub.s32 %s21, %s33
    %s226 = ssub.s32 %s22, %s29
    %s227 = sor.u32 %s225, %s226
    %p228 = scmp.eq.s32.totalorder %s227, 0
    %s230 = sadd.s32 %s229, 1
    %s231 = scalar_select %p228, %s229, %s230
    %p234 = pneg %p228
    %p235 = scmp.eq.s32.totalorder %s14, 1
    %p236 = por %p234, %p235
    %p237 = scmp.ne.s32.totalorder %s229, %s232
    %p238 = scmp.eq.s32.totalorder %s14, 0
    %p239 = por %p237, %p238
    %p240 = scmp.ne.s32.totalorder %s229, %s232
    %p241 = scmp.eq.s32.totalorder %s19, 1
    %p242 = por %p240, %p241
    %p243 = scmp.ne.s32.totalorder %s232, %s233
    %p244 = scmp.eq.s32.totalorder %s19, 0
    %p245 = por %p243, %p244
    %p246 = scmp.ne.s32.totalorder %s232, %s233
    %p247 = scmp.eq.s32.totalorder %s20, 1
    %p248 = por %p246, %p247
    %p250 = scmp.ne.s32.totalorder %s233, %s249
    %p251 = scmp.eq.s32.totalorder %s20, 0
    %p252 = por %p250, %p251
    %p253 = scmp.le.s32.totalorder 1, %s14
    %p254 = scmp.lt.s32.totalorder %s14, 3
    %p255 = pnand %p253, %p254
    %p256 = pneg %p255
    // Predicated region
    $region9: #{upsample_bn_forward.4} parent=5 // pred_check
      _
    $region10: #{upsample_bn_forward.4} parent=5 // pred_check_branch
      %258 = sbr.rel (%p255) target = $region12
    $region11: #{upsample_bn_forward.4} parent=5 // pred_region
      %s259 = ssub.s32 %s14, 1
      // Predicated region
      $region13: #{upsample_bn_forward.4} parent=11 // pred_check
        %p260 = pneg %p147
      $region14: #{upsample_bn_forward.4} parent=11 // pred_check_branch
        %262 = sbr.rel (%p260) target = $region16
      $region15: #{upsample_bn_forward.4} parent=11 // pred_region
        _
      $region16: #{upsample_bn_forward.4} parent=11 // pred_fallthru
        _
      // Predicated region
      $region17: #{upsample_bn_forward.4} parent=11 // pred_check
        %p263 = pneg %p168
      $region18: #{upsample_bn_forward.4} parent=11 // pred_check_branch
        %265 = sbr.rel (%p263) target = $region20
      $region19: #{upsample_bn_forward.4} parent=11 // pred_region
        _
      $region20: #{upsample_bn_forward.4} parent=11 // pred_fallthru
        _
      // Predicated region
      $region21: #{upsample_bn_forward.4} parent=11 // pred_check
        %p266 = pneg %p189
      $region22: #{upsample_bn_forward.4} parent=11 // pred_check_branch
        %268 = sbr.rel (%p266) target = $region24
      $region23: #{upsample_bn_forward.4} parent=11 // pred_region
        _
      $region24: #{upsample_bn_forward.4} parent=11 // pred_fallthru
        _
    $region12: #{upsample_bn_forward.4} parent=5 // pred_fallthru
      _
    %p269 = scmp.lt.s32.totalorder %s14, 2
    // Predicated region
    $region25: #{upsample_bn_forward.4} parent=5 // pred_check
      %p270 = pneg %p269
    $region26: #{upsample_bn_forward.4} parent=5 // pred_check_branch
      %272 = sbr.rel (%p270) target = $region28
    $region27: #{upsample_bn_forward.4} parent=5 // pred_region
      // Predicated region
      $region29: #{upsample_bn_forward.4} parent=27 // pred_check
        %p273 = pneg %p48
      $region30: #{upsample_bn_forward.4} parent=27 // pred_check_branch
        %275 = sbr.rel (%p273) target = $region32
      $region31: #{upsample_bn_forward.4} parent=27 // pred_region
        %s276 = smul.u32 16, %s22
        %p277 = scmp.lt.s32.totalorder %s21, 1
        %s278 = scalar_select %p277, %s21, 1
        %p279 = scmp.lt.s32.totalorder %s276, 15
        %s280 = scalar_select %p279, %s276, 15
        %s281 = smul.addr %s280, 2
        %s282 = smul.addr %s278, 32
        %s283 = sadd.s32 %s281, %s282
        %s284 = smul.addr %s283, 4
        %s285 = scalar_lea.vmem %s0, %s284
        %s286 = smul.u32 16, %s22
      $region32: #{upsample_bn_forward.4} parent=27 // pred_fallthru
        _
      // Predicated region
      $region33: #{upsample_bn_forward.4} parent=27 // pred_check
        %p287 = pneg %p84
      $region34: #{upsample_bn_forward.4} parent=27 // pred_check_branch
        %289 = sbr.rel (%p287) target = $region36
      $region35: #{upsample_bn_forward.4} parent=27 // pred_region
        %s290 = smul.u32 %s22, 16
        %s291 = ssub.s32 %s290, 1
        %p292 = scmp.gt.s32.totalorder %s291, 0
        %s293 = scalar_select %p292, %s291, 0
        %p294 = scmp.lt.s32.totalorder %s21, 1
        %s295 = scalar_select %p294, %s21, 1
        %p296 = scmp.lt.s32.totalorder %s293, 15
        %s297 = scalar_select %p296, %s293, 15
        %s298 = smul.addr %s297, 2
        %s299 = smul.addr %s295, 32
        %s300 = sadd.s32 %s298, %s299
        %s301 = smul.addr %s300, 4
        %s302 = scalar_lea.vmem %s1, %s301
        %s303 = smul.u32 %s22, 16
        %s304 = ssub.s32 %s303, 1
        %p305 = scmp.gt.s32.totalorder %s304, 0
        %s306 = scalar_select %p305, %s304, 0
      $region36: #{upsample_bn_forward.4} parent=27 // pred_fallthru
        _
      // Predicated region
      $region37: #{upsample_bn_forward.4} parent=27 // pred_check
        %p307 = pneg %p120
      $region38: #{upsample_bn_forward.4} parent=27 // pred_check_branch
        %309 = sbr.rel (%p307) target = $region40
      $region39: #{upsample_bn_forward.4} parent=27 // pred_region
        %s310 = sadd.s32 %s22, 1
        %s311 = smul.u32 %s310, 16
        %p312 = scmp.lt.s32.totalorder %s311, 15
        %s313 = scalar_select %p312, %s311, 15
        %p314 = scmp.lt.s32.totalorder %s21, 1
        %s315 = scalar_select %p314, %s21, 1
        %p316 = scmp.lt.s32.totalorder %s313, 15
        %s317 = scalar_select %p316, %s313, 15
        %s318 = smul.addr %s317, 2
        %s319 = smul.addr %s315, 32
        %s320 = sadd.s32 %s318, %s319
        %s321 = smul.addr %s320, 4
        %s322 = scalar_lea.vmem %s2, %s321
        %s323 = sadd.s32 %s22, 1
        %s324 = smul.u32 %s323, 16
        %p325 = scmp.lt.s32.totalorder %s324, 15
        %s326 = scalar_select %p325, %s324, 15
      $region40: #{upsample_bn_forward.4} parent=27 // pred_fallthru
        _
    $region28: #{upsample_bn_forward.4} parent=5 // pred_fallthru
      _
    %p327 = scmp.le.s32.totalorder 1, %s14
    %p328 = scmp.lt.s32.totalorder %s14, 3
    %p329 = pnand %p327, %p328
    %p330 = pneg %p329
    // Predicated region
    $region41: #{upsample_bn_forward.4} parent=5 // pred_check
      _
    $region42: #{upsample_bn_forward.4} parent=5 // pred_check_branch
      %332 = sbr.rel (%p329) target = $region44
    $region43: #{upsample_bn_forward.4} parent=5 // pred_region
      %s333 = ssub.s32 %s14, 1
      %s334 = smul.u32 16, %s24
      %p335 = scmp.lt.s32.totalorder %s23, 1
      %s336 = scalar_select %p335, %s23, 1
      %p337 = scmp.lt.s32.totalorder %s334, 15
      %s338 = scalar_select %p337, %s334, 15
      %s339 = smul.addr %s338, 2
      %s340 = smul.addr %s336, 32
      %s341 = sadd.s32 %s339, %s340
      %s342 = smul.addr %s341, 4
      %s343 = scalar_lea.vmem %s0, %s342
      %p344 = pneg %p54
      %p345 = pneg %p51
      %s346 = smul.u32 %s24, 16
      %s347 = ssub.s32 %s346, 1
      %p348 = scmp.gt.s32.totalorder %s347, 0
      %s349 = scalar_select %p348, %s347, 0
      %p350 = scmp.lt.s32.totalorder %s23, 1
      %s351 = scalar_select %p350, %s23, 1
      %p352 = scmp.lt.s32.totalorder %s349, 15
      %s353 = scalar_select %p352, %s349, 15
      %s354 = smul.addr %s353, 2
      %s355 = smul.addr %s351, 32
      %s356 = sadd.s32 %s354, %s355
      %s357 = smul.addr %s356, 4
      %s358 = scalar_lea.vmem %s1, %s357
      %p359 = pneg %p90
      %p360 = pneg %p87
      %s361 = sadd.s32 %s24, 1
      %s362 = smul.u32 %s361, 16
      %p363 = scmp.lt.s32.totalorder %s362, 15
      %s364 = scalar_select %p363, %s362, 15
      %p365 = scmp.lt.s32.totalorder %s23, 1
      %s366 = scalar_select %p365, %s23, 1
      %p367 = scmp.lt.s32.totalorder %s364, 15
      %s368 = scalar_select %p367, %s364, 15
      %s369 = smul.addr %s368, 2
      %s370 = smul.addr %s366, 32
      %s371 = sadd.s32 %s369, %s370
      %s372 = smul.addr %s371, 4
      %s373 = scalar_lea.vmem %s2, %s372
      %p374 = pneg %p126
      %p375 = pneg %p123
      %p376 = pneg %p147
      %p377 = pneg %p144
      %p378 = pneg %p168
      %p379 = pneg %p165
      %p380 = pneg %p189
      %p381 = pneg %p186
      %p382 = pneg %p217
      %p383 = pneg %p214
      %s384 = smul.u32 16, %s24
      %p385 = scmp.lt.s32.totalorder %s23, 1
      %s386 = scalar_select %p385, %s23, 1
      %p387 = scmp.lt.s32.totalorder %s384, 15
      %s388 = scalar_select %p387, %s384, 15
      %s389 = smul.addr %s388, 2
      %s390 = smul.addr %s386, 32
      %s391 = sadd.s32 %s389, %s390
      %s392 = smul.addr %s391, 4
      %s393 = scalar_lea.vmem %s6, %s392
      %p394 = pneg %p245
      %p395 = pneg %p242
      %p396 = scmp.lt.s32.totalorder %s23, 1
      %s397 = scalar_select %p396, %s23, 1
      %p398 = scmp.lt.s32.totalorder %s24, 0
      %s399 = scalar_select %p398, %s24, 0
      %s400 = sadd.s32 %s399, %s397
      %s401 = smul.addr %s400, 2
      %s402 = scalar_lea.vmem %s7, %s401
      %s403 = smul.u32 16, %s24
      %p404 = scmp.lt.s32.totalorder %s23, 1
      %s405 = scalar_select %p404, %s23, 1
      %p406 = scmp.lt.s32.totalorder %s403, 15
      %s407 = scalar_select %p406, %s403, 15
      %s408 = smul.addr %s407, 2
      %s409 = smul.addr %s405, 32
      %s410 = sadd.s32 %s408, %s409
      %s411 = smul.addr %s410, 4
      %s412 = scalar_lea.vmem %s0, %s411
      %s413 = smul.u32 16, %s24
      %s414 = smul.u32 %s24, 16
      %s415 = ssub.s32 %s414, 1
      %p416 = scmp.gt.s32.totalorder %s415, 0
      %s417 = scalar_select %p416, %s415, 0
      %p418 = scmp.lt.s32.totalorder %s23, 1
      %s419 = scalar_select %p418, %s23, 1
      %p420 = scmp.lt.s32.totalorder %s417, 15
      %s421 = scalar_select %p420, %s417, 15
      %s422 = smul.addr %s421, 2
      %s423 = smul.addr %s419, 32
      %s424 = sadd.s32 %s422, %s423
      %s425 = smul.addr %s424, 4
      %s426 = scalar_lea.vmem %s1, %s425
      %s427 = smul.u32 %s24, 16
      %s428 = ssub.s32 %s427, 1
      %p429 = scmp.gt.s32.totalorder %s428, 0
      %s430 = scalar_select %p429, %s428, 0
      %s431 = sadd.s32 %s24, 1
      %s432 = smul.u32 %s431, 16
      %p433 = scmp.lt.s32.totalorder %s432, 15
      %s434 = scalar_select %p433, %s432, 15
      %p435 = scmp.lt.s32.totalorder %s23, 1
      %s436 = scalar_select %p435, %s23, 1
      %p437 = scmp.lt.s32.totalorder %s434, 15
      %s438 = scalar_select %p437, %s434, 15
      %s439 = smul.addr %s438, 2
      %s440 = smul.addr %s436, 32
      %s441 = sadd.s32 %s439, %s440
      %s442 = smul.addr %s441, 4
      %s443 = scalar_lea.vmem %s2, %s442
      %s444 = sadd.s32 %s24, 1
      %s445 = smul.u32 %s444, 16
      %p446 = scmp.lt.s32.totalorder %s445, 15
      %s447 = scalar_select %p446, %s445, 15
      %s448 = smul.u32 16, %s24
      %p449 = scmp.lt.s32.totalorder %s23, 1
      %s450 = scalar_select %p449, %s23, 1
      %p451 = scmp.lt.s32.totalorder %s448, 15
      %s452 = scalar_select %p451, %s448, 15
      %s453 = smul.addr %s452, 2
      %s454 = smul.addr %s450, 32
      %s455 = sadd.s32 %s453, %s454
      %s456 = smul.addr %s455, 4
      %s457 = scalar_lea.vmem %s6, %s456
      %s458 = smul.u32 16, %s24
      %p459 = scmp.lt.s32.totalorder %s23, 1
      %s460 = scalar_select %p459, %s23, 1
      %p461 = scmp.lt.s32.totalorder %s24, 0
      %s462 = scalar_select %p461, %s24, 0
      %s463 = sadd.s32 %s462, %s460
      %s464 = smul.addr %s463, 2
      %s465 = scalar_lea.vmem %s7, %s464
      %v467 = vld [vmem:[%s3] sm:$0x1]
      %v468 = vld [vmem:[%s4] sm:$0x1]
      %469 = vst [vmem:[#allocation2] sm:$0x1] 0.0
      %470 = vst [vmem:[#allocation2 + $0x18] sm:$0x1] 0.0
      %471 = vst [vmem:[#allocation2 + $0x30] sm:$0x1] 0.0
      %472 = vst [vmem:[#allocation2 + $0x48] sm:$0x1] 0.0
      %473 = vst [vmem:[#allocation2 + $0x60] sm:$0x1] 0.0
      %474 = vst [vmem:[#allocation2 + $0x78] sm:$0x1] 0.0
      %475 = vst [vmem:[#allocation2 + $0x90] sm:$0x1] 0.0
      %476 = vst [vmem:[#allocation2 + $0xa8] sm:$0x1] 0.0
      %477 = vst [vmem:[#allocation2 + $0xc0] sm:$0x1] 0.0
      %478 = vst [vmem:[#allocation2 + $0xd8] sm:$0x1] 0.0
      %479 = vst [vmem:[#allocation2 + $0xf0] sm:$0x1] 0.0
      %480 = vst [vmem:[#allocation2 + $0x108] sm:$0x1] 0.0
      %481 = vst [vmem:[#allocation2 + $0x120] sm:$0x1] 0.0
      %482 = vst [vmem:[#allocation2 + $0x138] sm:$0x1] 0.0
      %483 = vst [vmem:[#allocation2 + $0x150] sm:$0x1] 0.0
      %484 = vst [vmem:[#allocation2 + $0x168] sm:$0x1] 0.0
      %485 = vst [vmem:[#allocation2 + $0x180] sm:$0x1] 0.0
      %486 = vst [vmem:[#allocation2 + $0x198] sm:$0x1] 0.0
      %487 = vst [vmem:[#allocation2 + $0x11] sm:$0x1] 0.0
      %488 = vst [vmem:[#allocation2 + $0x29] sm:$0x1] 0.0
      %489 = vst [vmem:[#allocation2 + $0x41] sm:$0x1] 0.0
      %490 = vst [vmem:[#allocation2 + $0x59] sm:$0x1] 0.0
      %491 = vst [vmem:[#allocation2 + $0x71] sm:$0x1] 0.0
      %492 = vst [vmem:[#allocation2 + $0x89] sm:$0x1] 0.0
      %493 = vst [vmem:[#allocation2 + $0xa1] sm:$0x1] 0.0
      %494 = vst [vmem:[#allocation2 + $0xb9] sm:$0x1] 0.0
      %495 = vst [vmem:[#allocation2 + $0xd1] sm:$0x1] 0.0
      %496 = vst [vmem:[#allocation2 + $0xe9] sm:$0x1] 0.0
      %497 = vst [vmem:[#allocation2 + $0x101] sm:$0x1] 0.0
      %498 = vst [vmem:[#allocation2 + $0x119] sm:$0x1] 0.0
      %499 = vst [vmem:[#allocation2 + $0x131] sm:$0x1] 0.0
      %500 = vst [vmem:[#allocation2 + $0x149] sm:$0x1] 0.0
      %501 = vst [vmem:[#allocation2 + $0x161] sm:$0x1] 0.0
      %502 = vst [vmem:[#allocation2 + $0x179] sm:$0x1] 0.0
      %503 = vst [vmem:[#allocation2 + $0x191] sm:$0x1] 0.0
      %504 = vst [vmem:[#allocation2 + $0x1a9] sm:$0x1] 0.0
      %v505 = vld [vmem:[%s412] sm:$0xf]
      %v506 = vld [vmem:[%s412 + $0x4] sm:$0xf]
      %v507 = vld [vmem:[%s412 + $0x8] sm:$0xf]
      %v508 = vld [vmem:[%s412 + $0xc] sm:$0xf]
      %v509 = vld [vmem:[%s412 + $0x10] sm:$0xf]
      %v510 = vld [vmem:[%s412 + $0x14] sm:$0xf]
      %v511 = vld [vmem:[%s412 + $0x18] sm:$0xf]
      %v512 = vld [vmem:[%s412 + $0x1c] sm:$0xf]
      %v513 = vld [vmem:[%s412 + $0x20] sm:$0xf]
      %v514 = vld [vmem:[%s412 + $0x24] sm:$0xf]
      %v515 = vld [vmem:[%s412 + $0x28] sm:$0xf]
      %v516 = vld [vmem:[%s412 + $0x2c] sm:$0xf]
      %v517 = vld [vmem:[%s412 + $0x30] sm:$0xf]
      %v518 = vld [vmem:[%s412 + $0x34] sm:$0xf]
      %v519 = vld [vmem:[%s412 + $0x38] sm:$0xf]
      %v520 = vld [vmem:[%s412 + $0x3c] sm:$0xf]
      %v521 = vld [vmem:[%s412 + $0x40] sm:$0xf]
      %v522 = vld [vmem:[%s412 + $0x44] sm:$0xf]
      %v523 = vld [vmem:[%s412 + $0x48] sm:$0xf]
      %v524 = vld [vmem:[%s412 + $0x4c] sm:$0xf]
      %v525 = vld [vmem:[%s412 + $0x50] sm:$0xf]
      %v526 = vld [vmem:[%s412 + $0x54] sm:$0xf]
      %v527 = vld [vmem:[%s412 + $0x58] sm:$0xf]
      %v528 = vld [vmem:[%s412 + $0x5c] sm:$0xf]
      %v529 = vld [vmem:[%s412 + $0x60] sm:$0xf]
      %v530 = vld [vmem:[%s412 + $0x64] sm:$0xf]
      %v531 = vld [vmem:[%s412 + $0x68] sm:$0xf]
      %v532 = vld [vmem:[%s412 + $0x6c] sm:$0xf]
      %v533 = vld [vmem:[%s412 + $0x70] sm:$0xf]
      %v534 = vld [vmem:[%s412 + $0x74] sm:$0xf]
      %v535 = vld [vmem:[%s412 + $0x78] sm:$0xf]
      %v536 = vld [vmem:[%s412 + $0x7c] sm:$0xf]
      %v537 = vunpack.c.l.bf16 %v505
      %v538 = vunpack.c.l.bf16 %v506
      %v539 = vunpack.c.l.bf16 %v507
      %v540 = vunpack.c.l.bf16 %v508
      %v541 = vunpack.c.l.bf16 %v509
      %v542 = vunpack.c.l.bf16 %v510
      %v543 = vunpack.c.l.bf16 %v511
      %v544 = vunpack.c.l.bf16 %v512
      %v545 = vunpack.c.l.bf16 %v513
      %v546 = vunpack.c.l.bf16 %v514
      %v547 = vunpack.c.l.bf16 %v515
      %v548 = vunpack.c.l.bf16 %v516
      %v549 = vunpack.c.l.bf16 %v517
      %v550 = vunpack.c.l.bf16 %v518
      %v551 = vunpack.c.l.bf16 %v519
      %v552 = vunpack.c.l.bf16 %v520
      %v553 = vunpack.c.l.bf16 %v521
      %v554 = vunpack.c.l.bf16 %v522
      %v555 = vunpack.c.l.bf16 %v523
      %v556 = vunpack.c.l.bf16 %v524
      %v557 = vunpack.c.l.bf16 %v525
      %v558 = vunpack.c.l.bf16 %v526
      %v559 = vunpack.c.l.bf16 %v527
      %v560 = vunpack.c.l.bf16 %v528
      %v561 = vunpack.c.l.bf16 %v529
      %v562 = vunpack.c.l.bf16 %v530
      %v563 = vunpack.c.l.bf16 %v531
      %v564 = vunpack.c.l.bf16 %v532
      %v565 = vunpack.c.l.bf16 %v533
      %v566 = vunpack.c.l.bf16 %v534
      %v567 = vunpack.c.l.bf16 %v535
      %v568 = vunpack.c.l.bf16 %v536
      %v570 = vlaneseq
      %v571 = vshrl.u32 %v570, 7
      %v572 = vsub.s32 0, %v571
      %v573 = vrot.slane %v467, %v572
      %v575 = vmul.f32 %v537, %v573
      %v576 = vmul.f32 %v538, %v573
      %v577 = vmul.f32 %v539, %v573
      %v578 = vmul.f32 %v540, %v573
      %v579 = vmul.f32 %v541, %v573
      %v580 = vmul.f32 %v542, %v573
      %v581 = vmul.f32 %v543, %v573
      %v582 = vmul.f32 %v544, %v573
      %v583 = vmul.f32 %v545, %v573
      %v584 = vmul.f32 %v546, %v573
      %v585 = vmul.f32 %v547, %v573
      %v586 = vmul.f32 %v548, %v573
      %v587 = vmul.f32 %v549, %v573
      %v588 = vmul.f32 %v550, %v573
      %v589 = vmul.f32 %v551, %v573
      %v590 = vmul.f32 %v552, %v573
      %v591 = vmul.f32 %v553, %v573
      %v592 = vmul.f32 %v554, %v573
      %v593 = vmul.f32 %v555, %v573
      %v594 = vmul.f32 %v556, %v573
      %v595 = vmul.f32 %v557, %v573
      %v596 = vmul.f32 %v558, %v573
      %v597 = vmul.f32 %v559, %v573
      %v598 = vmul.f32 %v560, %v573
      %v599 = vmul.f32 %v561, %v573
      %v600 = vmul.f32 %v562, %v573
      %v601 = vmul.f32 %v563, %v573
      %v602 = vmul.f32 %v564, %v573
      %v603 = vmul.f32 %v565, %v573
      %v604 = vmul.f32 %v566, %v573
      %v605 = vmul.f32 %v567, %v573
      %v606 = vmul.f32 %v568, %v573
      %v608 = vlaneseq
      %v609 = vshrl.u32 %v608, 7
      %v610 = vsub.s32 0, %v609
      %v611 = vrot.slane %v468, %v610
      %v613 = vadd.f32 %v575, %v611
      %v614 = vadd.f32 %v576, %v611
      %v615 = vadd.f32 %v577, %v611
      %v616 = vadd.f32 %v578, %v611
      %v617 = vadd.f32 %v579, %v611
      %v618 = vadd.f32 %v580, %v611
      %v619 = vadd.f32 %v581, %v611
      %v620 = vadd.f32 %v582, %v611
      %v621 = vadd.f32 %v583, %v611
      %v622 = vadd.f32 %v584, %v611
      %v623 = vadd.f32 %v585, %v611
      %v624 = vadd.f32 %v586, %v611
      %v625 = vadd.f32 %v587, %v611
      %v626 = vadd.f32 %v588, %v611
      %v627 = vadd.f32 %v589, %v611
      %v628 = vadd.f32 %v590, %v611
      %v629 = vadd.f32 %v591, %v611
      %v630 = vadd.f32 %v592, %v611
      %v631 = vadd.f32 %v593, %v611
      %v632 = vadd.f32 %v594, %v611
      %v633 = vadd.f32 %v595, %v611
      %v634 = vadd.f32 %v596, %v611
      %v635 = vadd.f32 %v597, %v611
      %v636 = vadd.f32 %v598, %v611
      %v637 = vadd.f32 %v599, %v611
      %v638 = vadd.f32 %v600, %v611
      %v639 = vadd.f32 %v601, %v611
      %v640 = vadd.f32 %v602, %v611
      %v641 = vadd.f32 %v603, %v611
      %v642 = vadd.f32 %v604, %v611
      %v643 = vadd.f32 %v605, %v611
      %v644 = vadd.f32 %v606, %v611
      %vm645 = vcmp.ge.f32.partialorder %v613, 0.0
      %vm646 = vcmp.ge.f32.partialorder %v614, 0.0
      %vm647 = vcmp.ge.f32.partialorder %v615, 0.0
      %vm648 = vcmp.ge.f32.partialorder %v616, 0.0
      %vm649 = vcmp.ge.f32.partialorder %v617, 0.0
      %vm650 = vcmp.ge.f32.partialorder %v618, 0.0
      %vm651 = vcmp.ge.f32.partialorder %v619, 0.0
      %vm652 = vcmp.ge.f32.partialorder %v620, 0.0
      %vm653 = vcmp.ge.f32.partialorder %v621, 0.0
      %vm654 = vcmp.ge.f32.partialorder %v622, 0.0
      %vm655 = vcmp.ge.f32.partialorder %v623, 0.0
      %vm656 = vcmp.ge.f32.partialorder %v624, 0.0
      %vm657 = vcmp.ge.f32.partialorder %v625, 0.0
      %vm658 = vcmp.ge.f32.partialorder %v626, 0.0
      %vm659 = vcmp.ge.f32.partialorder %v627, 0.0
      %vm660 = vcmp.ge.f32.partialorder %v628, 0.0
      %vm661 = vcmp.ge.f32.partialorder %v629, 0.0
      %vm662 = vcmp.ge.f32.partialorder %v630, 0.0
      %vm663 = vcmp.ge.f32.partialorder %v631, 0.0
      %vm664 = vcmp.ge.f32.partialorder %v632, 0.0
      %vm665 = vcmp.ge.f32.partialorder %v633, 0.0
      %vm666 = vcmp.ge.f32.partialorder %v634, 0.0
      %vm667 = vcmp.ge.f32.partialorder %v635, 0.0
      %vm668 = vcmp.ge.f32.partialorder %v636, 0.0
      %vm669 = vcmp.ge.f32.partialorder %v637, 0.0
      %vm670 = vcmp.ge.f32.partialorder %v638, 0.0
      %vm671 = vcmp.ge.f32.partialorder %v639, 0.0
      %vm672 = vcmp.ge.f32.partialorder %v640, 0.0
      %vm673 = vcmp.ge.f32.partialorder %v641, 0.0
      %vm674 = vcmp.ge.f32.partialorder %v642, 0.0
      %vm675 = vcmp.ge.f32.partialorder %v643, 0.0
      %vm676 = vcmp.ge.f32.partialorder %v644, 0.0
      %v677 = vmul.f32 %v613, 0.01
      %v678 = vmul.f32 %v614, 0.01
      %v679 = vmul.f32 %v615, 0.01
      %v680 = vmul.f32 %v616, 0.01
      %v681 = vmul.f32 %v617, 0.01
      %v682 = vmul.f32 %v618, 0.01
      %v683 = vmul.f32 %v619, 0.01
      %v684 = vmul.f32 %v620, 0.01
      %v685 = vmul.f32 %v621, 0.01
      %v686 = vmul.f32 %v622, 0.01
      %v687 = vmul.f32 %v623, 0.01
      %v688 = vmul.f32 %v624, 0.01
      %v689 = vmul.f32 %v625, 0.01
      %v690 = vmul.f32 %v626, 0.01
      %v691 = vmul.f32 %v627, 0.01
      %v692 = vmul.f32 %v628, 0.01
      %v693 = vmul.f32 %v629, 0.01
      %v694 = vmul.f32 %v630, 0.01
      %v695 = vmul.f32 %v631, 0.01
      %v696 = vmul.f32 %v632, 0.01
      %v697 = vmul.f32 %v633, 0.01
      %v698 = vmul.f32 %v634, 0.01
      %v699 = vmul.f32 %v635, 0.01
      %v700 = vmul.f32 %v636, 0.01
      %v701 = vmul.f32 %v637, 0.01
      %v702 = vmul.f32 %v638, 0.01
      %v703 = vmul.f32 %v639, 0.01
      %v704 = vmul.f32 %v640, 0.01
      %v705 = vmul.f32 %v641, 0.01
      %v706 = vmul.f32 %v642, 0.01
      %v707 = vmul.f32 %v643, 0.01
      %v708 = vmul.f32 %v644, 0.01
      %v709 = vsel %vm645, %v613, %v677
      %v710 = vsel %vm646, %v614, %v678
      %v711 = vsel %vm647, %v615, %v679
      %v712 = vsel %vm648, %v616, %v680
      %v713 = vsel %vm649, %v617, %v681
      %v714 = vsel %vm650, %v618, %v682
      %v715 = vsel %vm651, %v619, %v683
      %v716 = vsel %vm652, %v620, %v684
      %v717 = vsel %vm653, %v621, %v685
      %v718 = vsel %vm654, %v622, %v686
      %v719 = vsel %vm655, %v623, %v687
      %v720 = vsel %vm656, %v624, %v688
      %v721 = vsel %vm657, %v625, %v689
      %v722 = vsel %vm658, %v626, %v690
      %v723 = vsel %vm659, %v627, %v691
      %v724 = vsel %vm660, %v628, %v692
      %v725 = vsel %vm661, %v629, %v693
      %v726 = vsel %vm662, %v630, %v694
      %v727 = vsel %vm663, %v631, %v695
      %v728 = vsel %vm664, %v632, %v696
      %v729 = vsel %vm665, %v633, %v697
      %v730 = vsel %vm666, %v634, %v698
      %v731 = vsel %vm667, %v635, %v699
      %v732 = vsel %vm668, %v636, %v700
      %v733 = vsel %vm669, %v637, %v701
      %v734 = vsel %vm670, %v638, %v702
      %v735 = vsel %vm671, %v639, %v703
      %v736 = vsel %vm672, %v640, %v704
      %v737 = vsel %vm673, %v641, %v705
      %v738 = vsel %vm674, %v642, %v706
      %v739 = vsel %vm675, %v643, %v707
      %v740 = vsel %vm676, %v644, %v708
      %s741 = scalar_lea.vmem [#allocation2], 24
      %742 = vst [vmem:[%s741 + $0x1] sm:$0xff] %v709
      %743 = vst [vmem:[%s741 + $0x9] sm:$0xff] %v710
      %744 = vst [vmem:[%s741 + $0x19] sm:$0xff] %v711
      %745 = vst [vmem:[%s741 + $0x21] sm:$0xff] %v712
      %746 = vst [vmem:[%s741 + $0x31] sm:$0xff] %v713
      %747 = vst [vmem:[%s741 + $0x39] sm:$0xff] %v714
      %748 = vst [vmem:[%s741 + $0x49] sm:$0xff] %v715
      %749 = vst [vmem:[%s741 + $0x51] sm:$0xff] %v716
      %750 = vst [vmem:[%s741 + $0x61] sm:$0xff] %v717
      %751 = vst [vmem:[%s741 + $0x69] sm:$0xff] %v718
      %752 = vst [vmem:[%s741 + $0x79] sm:$0xff] %v719
      %753 = vst [vmem:[%s741 + $0x81] sm:$0xff] %v720
      %754 = vst [vmem:[%s741 + $0x91] sm:$0xff] %v721
      %755 = vst [vmem:[%s741 + $0x99] sm:$0xff] %v722
      %756 = vst [vmem:[%s741 + $0xa9] sm:$0xff] %v723
      %757 = vst [vmem:[%s741 + $0xb1] sm:$0xff] %v724
      %758 = vst [vmem:[%s741 + $0xc1] sm:$0xff] %v725
      %759 = vst [vmem:[%s741 + $0xc9] sm:$0xff] %v726
      %760 = vst [vmem:[%s741 + $0xd9] sm:$0xff] %v727
      %761 = vst [vmem:[%s741 + $0xe1] sm:$0xff] %v728
      %762 = vst [vmem:[%s741 + $0xf1] sm:$0xff] %v729
      %763 = vst [vmem:[%s741 + $0xf9] sm:$0xff] %v730
      %764 = vst [vmem:[%s741 + $0x109] sm:$0xff] %v731
      %765 = vst [vmem:[%s741 + $0x111] sm:$0xff] %v732
      %766 = vst [vmem:[%s741 + $0x121] sm:$0xff] %v733
      %767 = vst [vmem:[%s741 + $0x129] sm:$0xff] %v734
      %768 = vst [vmem:[%s741 + $0x139] sm:$0xff] %v735
      %769 = vst [vmem:[%s741 + $0x141] sm:$0xff] %v736
      %770 = vst [vmem:[%s741 + $0x151] sm:$0xff] %v737
      %771 = vst [vmem:[%s741 + $0x159] sm:$0xff] %v738
      %772 = vst [vmem:[%s741 + $0x169] sm:$0xff] %v739
      %773 = vst [vmem:[%s741 + $0x171] sm:$0xff] %v740
      %p774 = scmp.gt.s32.totalorder %s24, 0
      // Predicated region
      $region45: #{upsample_bn_forward.4} parent=43 // pred_check
        %p775 = pneg %p774
      $region46: #{upsample_bn_forward.4} parent=43 // pred_check_branch
        %777 = sbr.rel (%p775) target = $region48
      $region47: #{upsample_bn_forward.4} parent=43 // pred_region
        %v778 = vld [vmem:[%s426] sm:$0xf]
        %v779 = vld [vmem:[%s426 + $0x4] sm:$0xf]
        %v780 = vunpack.c.l.bf16 %v778
        %v781 = vunpack.c.l.bf16 %v779
        %v782 = vmul.f32 %v780, %v573
        %v783 = vmul.f32 %v781, %v573
        %v784 = vadd.f32 %v782, %v611
        %v785 = vadd.f32 %v783, %v611
        %vm786 = vcmp.ge.f32.partialorder %v784, 0.0
        %vm787 = vcmp.ge.f32.partialorder %v785, 0.0
        %v788 = vmul.f32 %v784, 0.01
        %v789 = vmul.f32 %v785, 0.01
        %v790 = vsel %vm786, %v784, %v788
        %v791 = vsel %vm787, %v785, %v789
        %792 = vst [vmem:[#allocation2 + $0x1] sm:$0xff] %v790
        %793 = vst [vmem:[#allocation2 + $0x9] sm:$0xff] %v791
      $region48: #{upsample_bn_forward.4} parent=43 // pred_fallthru
        _
      %p794 = scmp.eq.s32.totalorder %s24, 0
      // Predicated region
      $region49: #{upsample_bn_forward.4} parent=43 // pred_check
        %p795 = pneg %p794
      $region50: #{upsample_bn_forward.4} parent=43 // pred_check_branch
        %797 = sbr.rel (%p795) target = $region52
      $region51: #{upsample_bn_forward.4} parent=43 // pred_region
        %798 = vst [vmem:[#allocation2 + $0x1] sm:$0xff] 0.0
        %799 = vst [vmem:[#allocation2 + $0x9] sm:$0xff] 0.0
      $region52: #{upsample_bn_forward.4} parent=43 // pred_fallthru
        _
      %p800 = scmp.lt.s32.totalorder %s24, 0
      // Predicated region
      $region53: #{upsample_bn_forward.4} parent=43 // pred_check
        %p801 = pneg %p800
      $region54: #{upsample_bn_forward.4} parent=43 // pred_check_branch
        %803 = sbr.rel (%p801) target = $region56
      $region55: #{upsample_bn_forward.4} parent=43 // pred_region
        %v804 = vld [vmem:[%s443] sm:$0xf]
        %v805 = vld [vmem:[%s443 + $0x4] sm:$0xf]
        %v806 = vunpack.c.l.bf16 %v804
        %v807 = vunpack.c.l.bf16 %v805
        %v808 = vmul.f32 %v806, %v573
        %v809 = vmul.f32 %v807, %v573
        %v810 = vadd.f32 %v808, %v611
        %v811 = vadd.f32 %v809, %v611
        %vm812 = vcmp.ge.f32.partialorder %v810, 0.0
        %vm813 = vcmp.ge.f32.partialorder %v811, 0.0
        %v814 = vmul.f32 %v810, 0.01
        %v815 = vmul.f32 %v811, 0.01
        %v816 = vsel %vm812, %v810, %v814
        %v817 = vsel %vm813, %v811, %v815
        %s818 = scalar_lea.vmem [#allocation2], 408
        %819 = vst [vmem:[%s818 + $0x1] sm:$0xff] %v816
        %820 = vst [vmem:[%s818 + $0x9] sm:$0xff] %v817
      $region56: #{upsample_bn_forward.4} parent=43 // pred_fallthru
        _
      // Predicated region
      $region57: #{upsample_bn_forward.4} parent=43 // pred_check
        %p821 = pneg %p794
      $region58: #{upsample_bn_forward.4} parent=43 // pred_check_branch
        %823 = sbr.rel (%p821) target = $region60
      $region59: #{upsample_bn_forward.4} parent=43 // pred_region
        %s824 = scalar_lea.vmem [#allocation2], 408
        %825 = vst [vmem:[%s824 + $0x1] sm:$0xff] 0.0
        %826 = vst [vmem:[%s824 + $0x9] sm:$0xff] 0.0
      $region60: #{upsample_bn_forward.4} parent=43 // pred_fallthru
        _
      %v827 = vld [vmem:[#allocation2] sm:$0xff]
      %v828 = vld [vmem:[#allocation2 + $0x8] sm:$0xff]
      %v829 = vld [vmem:[#allocation2 + $0x18] sm:$0xff]
      %v830 = vld [vmem:[#allocation2 + $0x20] sm:$0xff]
      %v831 = vld [vmem:[#allocation2 + $0x30] sm:$0xff]
      %v832 = vld [vmem:[#allocation2 + $0x38] sm:$0xff]
      %v833 = vld [vmem:[#allocation2 + $0x48] sm:$0xff]
      %v834 = vld [vmem:[#allocation2 + $0x50] sm:$0xff]
      %v835 = vld [vmem:[#allocation2 + $0x60] sm:$0xff]
      %v836 = vld [vmem:[#allocation2 + $0x68] sm:$0xff]
      %v837 = vld [vmem:[#allocation2 + $0x78] sm:$0xff]
      %v838 = vld [vmem:[#allocation2 + $0x80] sm:$0xff]
      %v839 = vld [vmem:[#allocation2 + $0x90] sm:$0xff]
      %v840 = vld [vmem:[#allocation2 + $0x98] sm:$0xff]
      %v841 = vld [vmem:[#allocation2 + $0xa8] sm:$0xff]
      %v842 = vld [vmem:[#allocation2 + $0xb0] sm:$0xff]
      %v843 = vld [vmem:[#allocation2 + $0xc0] sm:$0xff]
      %v844 = vld [vmem:[#allocation2 + $0xc8] sm:$0xff]
      %v845 = vld [vmem:[#allocation2 + $0xd8] sm:$0xff]
      %v846 = vld [vmem:[#allocation2 + $0xe0] sm:$0xff]
      %v847 = vld [vmem:[#allocation2 + $0xf0] sm:$0xff]
      %v848 = vld [vmem:[#allocation2 + $0xf8] sm:$0xff]
      %v849 = vld [vmem:[#allocation2 + $0x108] sm:$0xff]
      %v850 = vld [vmem:[#allocation2 + $0x110] sm:$0xff]
      %v851 = vld [vmem:[#allocation2 + $0x120] sm:$0xff]
      %v852 = vld [vmem:[#allocation2 + $0x128] sm:$0xff]
      %v853 = vld [vmem:[#allocation2 + $0x138] sm:$0xff]
      %v854 = vld [vmem:[#allocation2 + $0x140] sm:$0xff]
      %v855 = vld [vmem:[#allocation2 + $0x150] sm:$0xff]
      %v856 = vld [vmem:[#allocation2 + $0x158] sm:$0xff]
      %v857 = vld [vmem:[#allocation2 + $0x168] sm:$0xff]
      %v858 = vld [vmem:[#allocation2 + $0x170] sm:$0xff]
      %v859 = vld [vmem:[#allocation2 + $0x180] sm:$0xff]
      %v860 = vld [vmem:[#allocation2 + $0x188] sm:$0xff]
      %v861 = vld [vmem:[#allocation2 + $0x198] sm:$0xff]
      %v862 = vld [vmem:[#allocation2 + $0x1a0] sm:$0xff]
      %v863 = vpack.c.bf16 %v828, %v827
      %v864 = vpack.c.bf16 %v830, %v829
      %v865 = vpack.c.bf16 %v832, %v831
      %v866 = vpack.c.bf16 %v834, %v833
      %v867 = vpack.c.bf16 %v836, %v835
      %v868 = vpack.c.bf16 %v838, %v837
      %v869 = vpack.c.bf16 %v840, %v839
      %v870 = vpack.c.bf16 %v842, %v841
      %v871 = vpack.c.bf16 %v844, %v843
      %v872 = vpack.c.bf16 %v846, %v845
      %v873 = vpack.c.bf16 %v848, %v847
      %v874 = vpack.c.bf16 %v850, %v849
      %v875 = vpack.c.bf16 %v852, %v851
      %v876 = vpack.c.bf16 %v854, %v853
      %v877 = vpack.c.bf16 %v856, %v855
      %v878 = vpack.c.bf16 %v858, %v857
      %v879 = vpack.c.bf16 %v860, %v859
      %v880 = vpack.c.bf16 %v862, %v861
      %v881 = vld [vmem:[#allocation2 + $0x1] sm:$0xff]
      %v882 = vld [vmem:[#allocation2 + $0x9] sm:$0xff]
      %v883 = vld [vmem:[#allocation2 + $0x19] sm:$0xff]
      %v884 = vld [vmem:[#allocation2 + $0x21] sm:$0xff]
      %v885 = vld [vmem:[#allocation2 + $0x31] sm:$0xff]
      %v886 = vld [vmem:[#allocation2 + $0x39] sm:$0xff]
      %v887 = vld [vmem:[#allocation2 + $0x49] sm:$0xff]
      %v888 = vld [vmem:[#allocation2 + $0x51] sm:$0xff]
      %v889 = vld [vmem:[#allocation2 + $0x61] sm:$0xff]
      %v890 = vld [vmem:[#allocation2 + $0x69] sm:$0xff]
      %v891 = vld [vmem:[#allocation2 + $0x79] sm:$0xff]
      %v892 = vld [vmem:[#allocation2 + $0x81] sm:$0xff]
      %v893 = vld [vmem:[#allocation2 + $0x91] sm:$0xff]
      %v894 = vld [vmem:[#allocation2 + $0x99] sm:$0xff]
      %v895 = vld [vmem:[#allocation2 + $0xa9] sm:$0xff]
      %v896 = vld [vmem:[#allocation2 + $0xb1] sm:$0xff]
      %v897 = vld [vmem:[#allocation2 + $0xc1] sm:$0xff]
      %v898 = vld [vmem:[#allocation2 + $0xc9] sm:$0xff]
      %v899 = vld [vmem:[#allocation2 + $0xd9] sm:$0xff]
      %v900 = vld [vmem:[#allocation2 + $0xe1] sm:$0xff]
      %v901 = vld [vmem:[#allocation2 + $0xf1] sm:$0xff]
      %v902 = vld [vmem:[#allocation2 + $0xf9] sm:$0xff]
      %v903 = vld [vmem:[#allocation2 + $0x109] sm:$0xff]
      %v904 = vld [vmem:[#allocation2 + $0x111] sm:$0xff]
      %v905 = vld [vmem:[#allocation2 + $0x121] sm:$0xff]
      %v906 = vld [vmem:[#allocation2 + $0x129] sm:$0xff]
      %v907 = vld [vmem:[#allocation2 + $0x139] sm:$0xff]
      %v908 = vld [vmem:[#allocation2 + $0x141] sm:$0xff]
      %v909 = vld [vmem:[#allocation2 + $0x151] sm:$0xff]
      %v910 = vld [vmem:[#allocation2 + $0x159] sm:$0xff]
      %v911 = vld [vmem:[#allocation2 + $0x169] sm:$0xff]
      %v912 = vld [vmem:[#allocation2 + $0x171] sm:$0xff]
      %v913 = vld [vmem:[#allocation2 + $0x181] sm:$0xff]
      %v914 = vld [vmem:[#allocation2 + $0x189] sm:$0xff]
      %v915 = vld [vmem:[#allocation2 + $0x199] sm:$0xff]
      %v916 = vld [vmem:[#allocation2 + $0x1a1] sm:$0xff]
      %v917 = vpack.c.bf16 %v882, %v881
      %v918 = vpack.c.bf16 %v884, %v883
      %v919 = vpack.c.bf16 %v886, %v885
      %v920 = vpack.c.bf16 %v888, %v887
      %v921 = vpack.c.bf16 %v890, %v889
      %v922 = vpack.c.bf16 %v892, %v891
      %v923 = vpack.c.bf16 %v894, %v893
      %v924 = vpack.c.bf16 %v896, %v895
      %v925 = vpack.c.bf16 %v898, %v897
      %v926 = vpack.c.bf16 %v900, %v899
      %v927 = vpack.c.bf16 %v902, %v901
      %v928 = vpack.c.bf16 %v904, %v903
      %v929 = vpack.c.bf16 %v906, %v905
      %v930 = vpack.c.bf16 %v908, %v907
      %v931 = vpack.c.bf16 %v910, %v909
      %v932 = vpack.c.bf16 %v912, %v911
      %v933 = vpack.c.bf16 %v914, %v913
      %v934 = vpack.c.bf16 %v916, %v915
      %v935 = vld [vmem:[#allocation2 + $0x2] sm:$0xff]
      %v936 = vld [vmem:[#allocation2 + $0xa] sm:$0xff]
      %v937 = vld [vmem:[#allocation2 + $0x1a] sm:$0xff]
      %v938 = vld [vmem:[#allocation2 + $0x22] sm:$0xff]
      %v939 = vld [vmem:[#allocation2 + $0x32] sm:$0xff]
      %v940 = vld [vmem:[#allocation2 + $0x3a] sm:$0xff]
      %v941 = vld [vmem:[#allocation2 + $0x4a] sm:$0xff]
      %v942 = vld [vmem:[#allocation2 + $0x52] sm:$0xff]
      %v943 = vld [vmem:[#allocation2 + $0x62] sm:$0xff]
      %v944 = vld [vmem:[#allocation2 + $0x6a] sm:$0xff]
      %v945 = vld [vmem:[#allocation2 + $0x7a] sm:$0xff]
      %v946 = vld [vmem:[#allocation2 + $0x82] sm:$0xff]
      %v947 = vld [vmem:[#allocation2 + $0x92] sm:$0xff]
      %v948 = vld [vmem:[#allocation2 + $0x9a] sm:$0xff]
      %v949 = vld [vmem:[#allocation2 + $0xaa] sm:$0xff]
      %v950 = vld [vmem:[#allocation2 + $0xb2] sm:$0xff]
      %v951 = vld [vmem:[#allocation2 + $0xc2] sm:$0xff]
      %v952 = vld [vmem:[#allocation2 + $0xca] sm:$0xff]
      %v953 = vld [vmem:[#allocation2 + $0xda] sm:$0xff]
      %v954 = vld [vmem:[#allocation2 + $0xe2] sm:$0xff]
      %v955 = vld [vmem:[#allocation2 + $0xf2] sm:$0xff]
      %v956 = vld [vmem:[#allocation2 + $0xfa] sm:$0xff]
      %v957 = vld [vmem:[#allocation2 + $0x10a] sm:$0xff]
      %v958 = vld [vmem:[#allocation2 + $0x112] sm:$0xff]
      %v959 = vld [vmem:[#allocation2 + $0x122] sm:$0xff]
      %v960 = vld [vmem:[#allocation2 + $0x12a] sm:$0xff]
      %v961 = vld [vmem:[#allocation2 + $0x13a] sm:$0xff]
      %v962 = vld [vmem:[#allocation2 + $0x142] sm:$0xff]
      %v963 = vld [vmem:[#allocation2 + $0x152] sm:$0xff]
      %v964 = vld [vmem:[#allocation2 + $0x15a] sm:$0xff]
      %v965 = vld [vmem:[#allocation2 + $0x16a] sm:$0xff]
      %v966 = vld [vmem:[#allocation2 + $0x172] sm:$0xff]
      %v967 = vld [vmem:[#allocation2 + $0x182] sm:$0xff]
      %v968 = vld [vmem:[#allocation2 + $0x18a] sm:$0xff]
      %v969 = vld [vmem:[#allocation2 + $0x19a] sm:$0xff]
      %v970 = vld [vmem:[#allocation2 + $0x1a2] sm:$0xff]
      %v971 = vpack.c.bf16 %v936, %v935
      %v972 = vpack.c.bf16 %v938, %v937
      %v973 = vpack.c.bf16 %v940, %v939
      %v974 = vpack.c.bf16 %v942, %v941
      %v975 = vpack.c.bf16 %v944, %v943
      %v976 = vpack.c.bf16 %v946, %v945
      %v977 = vpack.c.bf16 %v948, %v947
      %v978 = vpack.c.bf16 %v950, %v949
      %v979 = vpack.c.bf16 %v952, %v951
      %v980 = vpack.c.bf16 %v954, %v953
      %v981 = vpack.c.bf16 %v956, %v955
      %v982 = vpack.c.bf16 %v958, %v957
      %v983 = vpack.c.bf16 %v960, %v959
      %v984 = vpack.c.bf16 %v962, %v961
      %v985 = vpack.c.bf16 %v964, %v963
      %v986 = vpack.c.bf16 %v966, %v965
      %v987 = vpack.c.bf16 %v968, %v967
      %v988 = vpack.c.bf16 %v970, %v969
      %v989 = vld [vmem:[%s5] sm:$0xf]
      %v990 = vld [vmem:[%s5 + $0x4] sm:$0xf]
      %v991 = vld [vmem:[%s5 + $0x8] sm:$0xf]
      %v992 = vld [vmem:[%s5 + $0xc] sm:$0xf]
      %v993 = vld [vmem:[%s5 + $0x10] sm:$0xf]
      %v994 = vld [vmem:[%s5 + $0x14] sm:$0xf]
      %v995 = vld [vmem:[%s5 + $0x18] sm:$0xf]
      %v996 = vld [vmem:[%s5 + $0x1c] sm:$0xf]
      %v997 = vld [vmem:[%s5 + $0x20] sm:$0xf]
      %v998 = vld [vmem:[%s5 + $0x24] sm:$0xf]
      %v999 = vld [vmem:[%s5 + $0x28] sm:$0xf]
      %v1000 = vld [vmem:[%s5 + $0x2c] sm:$0xf]
      %v1001 = vld [vmem:[%s5 + $0x30] sm:$0xf]
      %v1002 = vld [vmem:[%s5 + $0x34] sm:$0xf]
      %v1003 = vld [vmem:[%s5 + $0x38] sm:$0xf]
      %v1004 = vld [vmem:[%s5 + $0x3c] sm:$0xf]
      %v1005 = vld [vmem:[%s5 + $0x40] sm:$0xf]
      %v1006 = vld [vmem:[%s5 + $0x44] sm:$0xf]
      %v1007 = vld [vmem:[%s5 + $0x48] sm:$0xf]
      %v1008 = vld [vmem:[%s5 + $0x4c] sm:$0xf]
      %v1009 = vld [vmem:[%s5 + $0x50] sm:$0xf]
      %v1010 = vld [vmem:[%s5 + $0x54] sm:$0xf]
      %v1011 = vld [vmem:[%s5 + $0x58] sm:$0xf]
      %v1012 = vld [vmem:[%s5 + $0x5c] sm:$0xf]
      %v1013 = vld [vmem:[%s5 + $0x60] sm:$0xf]
      %v1014 = vld [vmem:[%s5 + $0x64] sm:$0xf]
      %v1015 = vld [vmem:[%s5 + $0x68] sm:$0xf]
      %v1016 = vld [vmem:[%s5 + $0x6c] sm:$0xf]
      %v1017 = vld [vmem:[%s5 + $0x70] sm:$0xf]
      %v1018 = vld [vmem:[%s5 + $0x74] sm:$0xf]
      %v1019 = vld [vmem:[%s5 + $0x78] sm:$0xf]
      %v1020 = vld [vmem:[%s5 + $0x7c] sm:$0xf]
      %v1021 = vld [vmem:[%s5 + $0x80] sm:$0xf]
      %v1022 = vld [vmem:[%s5 + $0x84] sm:$0xf]
      %v1023 = vld [vmem:[%s5 + $0x88] sm:$0xf]
      %v1024 = vld [vmem:[%s5 + $0x8c] sm:$0xf]
      %v1025 = vld [vmem:[%s5 + $0x90] sm:$0xf]
      %v1026 = vld [vmem:[%s5 + $0x94] sm:$0xf]
      %v1027 = vld [vmem:[%s5 + $0x98] sm:$0xf]
      %v1028 = vld [vmem:[%s5 + $0x9c] sm:$0xf]
      %v1029 = vld [vmem:[%s5 + $0xa0] sm:$0xf]
      %v1030 = vld [vmem:[%s5 + $0xa4] sm:$0xf]
      %v1031 = vld [vmem:[%s5 + $0xa8] sm:$0xf]
      %v1032 = vld [vmem:[%s5 + $0xac] sm:$0xf]
      %v1033 = vld [vmem:[%s5 + $0xb0] sm:$0xf]
      %v1034 = vld [vmem:[%s5 + $0xb4] sm:$0xf]
      %v1035 = vld [vmem:[%s5 + $0xb8] sm:$0xf]
      %v1036 = vld [vmem:[%s5 + $0xbc] sm:$0xf]
      %s1037 = scalar_lea.vmem %s5, 192
      %v1038 = vld [vmem:[%s1037] sm:$0xf]
      %v1039 = vld [vmem:[%s1037 + $0x4] sm:$0xf]
      %v1040 = vld [vmem:[%s1037 + $0x8] sm:$0xf]
      %v1041 = vld [vmem:[%s1037 + $0xc] sm:$0xf]
      %v1042 = vld [vmem:[%s1037 + $0x10] sm:$0xf]
      %v1043 = vld [vmem:[%s1037 + $0x14] sm:$0xf]
      %v1044 = vld [vmem:[%s1037 + $0x18] sm:$0xf]
      %v1045 = vld [vmem:[%s1037 + $0x1c] sm:$0xf]
      %v1046 = vld [vmem:[%s1037 + $0x20] sm:$0xf]
      %v1047 = vld [vmem:[%s1037 + $0x24] sm:$0xf]
      %v1048 = vld [vmem:[%s1037 + $0x28] sm:$0xf]
      %v1049 = vld [vmem:[%s1037 + $0x2c] sm:$0xf]
      %v1050 = vld [vmem:[%s1037 + $0x30] sm:$0xf]
      %v1051 = vld [vmem:[%s1037 + $0x34] sm:$0xf]
      %v1052 = vld [vmem:[%s1037 + $0x38] sm:$0xf]
      %v1053 = vld [vmem:[%s1037 + $0x3c] sm:$0xf]
      %v1054 = vld [vmem:[%s1037 + $0x40] sm:$0xf]
      %v1055 = vld [vmem:[%s1037 + $0x44] sm:$0xf]
      %v1056 = vld [vmem:[%s1037 + $0x48] sm:$0xf]
      %v1057 = vld [vmem:[%s1037 + $0x4c] sm:$0xf]
      %v1058 = vld [vmem:[%s1037 + $0x50] sm:$0xf]
      %v1059 = vld [vmem:[%s1037 + $0x54] sm:$0xf]
      %v1060 = vld [vmem:[%s1037 + $0x58] sm:$0xf]
      %v1061 = vld [vmem:[%s1037 + $0x5c] sm:$0xf]
      %v1062 = vld [vmem:[%s1037 + $0x60] sm:$0xf]
      %v1063 = vld [vmem:[%s1037 + $0x64] sm:$0xf]
      %v1064 = vld [vmem:[%s1037 + $0x68] sm:$0xf]
      %v1065 = vld [vmem:[%s1037 + $0x6c] sm:$0xf]
      %v1066 = vld [vmem:[%s1037 + $0x70] sm:$0xf]
      %v1067 = vld [vmem:[%s1037 + $0x74] sm:$0xf]
      %v1068 = vld [vmem:[%s1037 + $0x78] sm:$0xf]
      %v1069 = vld [vmem:[%s1037 + $0x7c] sm:$0xf]
      %v1070 = vld [vmem:[%s1037 + $0x80] sm:$0xf]
      %v1071 = vld [vmem:[%s1037 + $0x84] sm:$0xf]
      %v1072 = vld [vmem:[%s1037 + $0x88] sm:$0xf]
      %v1073 = vld [vmem:[%s1037 + $0x8c] sm:$0xf]
      %v1074 = vld [vmem:[%s1037 + $0x90] sm:$0xf]
      %v1075 = vld [vmem:[%s1037 + $0x94] sm:$0xf]
      %v1076 = vld [vmem:[%s1037 + $0x98] sm:$0xf]
      %v1077 = vld [vmem:[%s1037 + $0x9c] sm:$0xf]
      %v1078 = vld [vmem:[%s1037 + $0xa0] sm:$0xf]
      %v1079 = vld [vmem:[%s1037 + $0xa4] sm:$0xf]
      %v1080 = vld [vmem:[%s1037 + $0xa8] sm:$0xf]
      %v1081 = vld [vmem:[%s1037 + $0xac] sm:$0xf]
      %v1082 = vld [vmem:[%s1037 + $0xb0] sm:$0xf]
      %v1083 = vld [vmem:[%s1037 + $0xb4] sm:$0xf]
      %v1084 = vld [vmem:[%s1037 + $0xb8] sm:$0xf]
      %v1085 = vld [vmem:[%s1037 + $0xbc] sm:$0xf]
      %v1134 = vunpack.c.l.b16 %v1038
      %v1135 = vunpack.c.l.b16 %v1039
      %v1136 = vunpack.c.l.b16 %v1040
      %v1137 = vunpack.c.l.b16 %v1041
      %v1138 = vunpack.c.l.b16 %v1042
      %v1139 = vunpack.c.l.b16 %v1043
      %v1140 = vunpack.c.l.b16 %v1044
      %v1141 = vunpack.c.l.b16 %v1045
      %v1142 = vunpack.c.l.b16 %v1046
      %v1143 = vunpack.c.l.b16 %v1047
      %v1144 = vunpack.c.l.b16 %v1048
      %v1145 = vunpack.c.l.b16 %v1049
      %v1146 = vunpack.c.l.b16 %v1050
      %v1147 = vunpack.c.l.b16 %v1051
      %v1148 = vunpack.c.l.b16 %v1052
      %v1149 = vunpack.c.l.b16 %v1053
      %v1150 = vunpack.c.l.b16 %v1054
      %v1151 = vunpack.c.l.b16 %v1055
      %v1152 = vunpack.c.l.b16 %v1056
      %v1153 = vunpack.c.l.b16 %v1057
      %v1154 = vunpack.c.l.b16 %v1058
      %v1155 = vunpack.c.l.b16 %v1059
      %v1156 = vunpack.c.l.b16 %v1060
      %v1157 = vunpack.c.l.b16 %v1061
      %v1158 = vunpack.c.l.b16 %v1062
      %v1159 = vunpack.c.l.b16 %v1063
      %v1160 = vunpack.c.l.b16 %v1064
      %v1161 = vunpack.c.l.b16 %v1065
      %v1162 = vunpack.c.l.b16 %v1066
      %v1163 = vunpack.c.l.b16 %v1067
      %v1164 = vunpack.c.l.b16 %v1068
      %v1165 = vunpack.c.l.b16 %v1069
      %v1166 = vunpack.c.l.b16 %v1070
      %v1167 = vunpack.c.l.b16 %v1071
      %v1168 = vunpack.c.l.b16 %v1072
      %v1169 = vunpack.c.l.b16 %v1073
      %v1170 = vunpack.c.l.b16 %v1074
      %v1171 = vunpack.c.l.b16 %v1075
      %v1172 = vunpack.c.l.b16 %v1076
      %v1173 = vunpack.c.l.b16 %v1077
      %v1174 = vunpack.c.l.b16 %v1078
      %v1175 = vunpack.c.l.b16 %v1079
      %v1176 = vunpack.c.l.b16 %v1080
      %v1177 = vunpack.c.l.b16 %v1081
      %v1178 = vunpack.c.l.b16 %v1082
      %v1179 = vunpack.c.l.b16 %v1083
      %v1180 = vunpack.c.l.b16 %v1084
      %v1181 = vunpack.c.l.b16 %v1085
      %v1182 = vpack.c.b16 %v1135, %v1134
      %v1183 = vpack.c.b16 %v1137, %v1136
      %v1184 = vpack.c.b16 %v1139, %v1138
      %v1185 = vpack.c.b16 %v1141, %v1140
      %v1186 = vpack.c.b16 %v1143, %v1142
      %v1187 = vpack.c.b16 %v1145, %v1144
      %v1188 = vpack.c.b16 %v1147, %v1146
      %v1189 = vpack.c.b16 %v1149, %v1148
      %v1190 = vpack.c.b16 %v1151, %v1150
      %v1191 = vpack.c.b16 %v1153, %v1152
      %v1192 = vpack.c.b16 %v1155, %v1154
      %v1193 = vpack.c.b16 %v1157, %v1156
      %v1194 = vpack.c.b16 %v1159, %v1158
      %v1195 = vpack.c.b16 %v1161, %v1160
      %v1196 = vpack.c.b16 %v1163, %v1162
      %v1197 = vpack.c.b16 %v1165, %v1164
      %v1198 = vpack.c.b16 %v1167, %v1166
      %v1199 = vpack.c.b16 %v1169, %v1168
      %v1200 = vpack.c.b16 %v1171, %v1170
      %v1201 = vpack.c.b16 %v1173, %v1172
      %v1202 = vpack.c.b16 %v1175, %v1174
      %v1203 = vpack.c.b16 %v1177, %v1176
      %v1204 = vpack.c.b16 %v1179, %v1178
      %v1205 = vpack.c.b16 %v1181, %v1180
      %1230 = vmatprep.subr.bf16.mxu0 0
      %1231 = vmatpush1.bf16.msra.mxu0 %v1182
      %1232 = vmatprep.subr.bf16.mxu0 0
      %1233 = vmatpush1.bf16.msra.mxu0 %v1183
      %1234 = vmatprep.subr.bf16.mxu0 0
      %1235 = vmatpush1.bf16.msra.mxu0 %v1184
      %1236 = vmatprep.subr.bf16.mxu0 0
      %1237 = vmatpush1.bf16.msra.mxu0 %v1185
      %1238 = vmatprep.subr.bf16.mxu0 0
      %1239 = vmatpush1.bf16.msra.mxu0 %v1186
      %1240 = vmatprep.subr.bf16.mxu0 0
      %1241 = vmatpush1.bf16.msra.mxu0 %v1187
      %1242 = vmatprep.subr.bf16.mxu0 0
      %1243 = vmatpush1.bf16.msra.mxu0 %v1188
      %1244 = vmatprep.subr.bf16.mxu0 0
      %1245 = vmatpush1.bf16.msra.mxu0 %v1189
      %1246 = vmatprep.subr.bf16.mxu0 0
      %1247 = vmatpush1.bf16.msra.mxu0 %v1190
      %1248 = vmatprep.subr.bf16.mxu0 0
      %1249 = vmatpush1.bf16.msra.mxu0 %v1191
      %1250 = vmatprep.subr.bf16.mxu0 0
      %1251 = vmatpush1.bf16.msra.mxu0 %v1192
      %1252 = vmatprep.subr.bf16.mxu0 0
      %1253 = vmatpush1.bf16.msra.mxu0 %v1193
      %1254 = vmatprep.subr.bf16.mxu0 0
      %1255 = vmatpush1.bf16.msra.mxu0 %v1194
      %1256 = vmatprep.subr.bf16.mxu0 0
      %1257 = vmatpush1.bf16.msra.mxu0 %v1195
      %1258 = vmatprep.subr.bf16.mxu0 0
      %1259 = vmatpush1.bf16.msra.mxu0 %v1196
      %1260 = vmatprep.subr.bf16.mxu0 0
      %1261 = vmatpush1.bf16.msra.mxu0 %v1197
      %1262 = vmatprep.mubr.bf16.mxu0 %v918
      %1263 = vmatmul.mubr.bf16.gmra.mrb[0].mxu0 %v864
      %v1264 = vpop.f32.mrb[0].mxu0
      %v1265 = vadd.f32 0.0, %v1264
      %v1266 = vpop.f32.mrb[0].mxu0
      %v1267 = vpop.f32.mrb[0].mxu0
      %v1268 = vadd.f32 0.0, %v1267
      %v1269 = vpop.f32.mrb[0].mxu0
      %1270 = vmatprep.mubr.bf16.mxu0 %v919
      %1271 = vmatmul.mubr.bf16.gmra.mrb[0].mxu0 %v865
      %v1272 = vpop.f32.mrb[0].mxu0
      %v1273 = vadd.f32 0.0, %v1272
      %v1274 = vpop.f32.mrb[0].mxu0
      %v1275 = vpop.f32.mrb[0].mxu0
      %v1276 = vadd.f32 0.0, %v1275
      %v1277 = vpop.f32.mrb[0].mxu0
      %1278 = vmatprep.mubr.bf16.mxu0 %v920
      %1279 = vmatmul.mubr.bf16.gmra.mrb[0].mxu0 %v866
      %v1280 = vpop.f32.mrb[0].mxu0
      %v1281 = vadd.f32 0.0, %v1280
      %v1282 = vpop.f32.mrb[0].mxu0
      %v1283 = vpop.f32.mrb[0].mxu0
      %v1284 = vadd.f32 0.0, %v1283
      %v1285 = vpop.f32.mrb[0].mxu0
      %1286 = vmatprep.mubr.bf16.mxu0 %v921
      %1287 = vmatmul.mubr.bf16.gmra.mrb[0].mxu0 %v867
      %v1288 = vpop.f32.mrb[0].mxu0
      %v1289 = vadd.f32 0.0, %v1288
      %v1290 = vpop.f32.mrb[0].mxu0
      %v1291 = vpop.f32.mrb[0].mxu0
      %v1292 = vadd.f32 0.0, %v1291
      %v1293 = vpop.f32.mrb[0].mxu0
      %1294 = vmatprep.mubr.bf16.mxu0 %v922
      %1295 = vmatmul.mubr.bf16.gmra.mrb[0].mxu0 %v868
      %v1296 = vpop.f32.mrb[0].mxu0
      %v1297 = vadd.f32 0.0, %v1296
      %v1298 = vpop.f32.mrb[0].mxu0
      %v1299 = vpop.f32.mrb[0].mxu0
      %v1300 = vadd.f32 0.0, %v1299
      %v1301 = vpop.f32.mrb[0].mxu0
      %1302 = vmatprep.mubr.bf16.mxu0 %v923
      %1303 = vmatmul.mubr.bf16.gmra.mrb[0].mxu0 %v869
      %v1304 = vpop.f32.mrb[0].mxu0
      %v1305 = vadd.f32 0.0, %v1304
      %v1306 = vpop.f32.mrb[0].mxu0
      %v1307 = vpop.f32.mrb[0].mxu0
      %v1308 = vadd.f32 0.0, %v1307
      %v1309 = vpop.f32.mrb[0].mxu0
      %1310 = vmatprep.mubr.bf16.mxu0 %v924
      %1311 = vmatmul.mubr.bf16.gmra.mrb[0].mxu0 %v870
      %v1312 = vpop.f32.mrb[0].mxu0
      %v1313 = vadd.f32 0.0, %v1312
      %v1314 = vpop.f32.mrb[0].mxu0
      %v1315 = vpop.f32.mrb[0].mxu0
      %v1316 = vadd.f32 0.0, %v1315
      %v1317 = vpop.f32.mrb[0].mxu0
      %1318 = vmatprep.mubr.bf16.mxu0 %v925
      %1319 = vmatmul.mubr.bf16.gmra.mrb[0].mxu0 %v871
      %v1320 = vpop.f32.mrb[0].mxu0
      %v1321 = vadd.f32 0.0, %v1320
      %v1322 = vpop.f32.mrb[0].mxu0
      %v1323 = vpop.f32.mrb[0].mxu0
      %v1324 = vadd.f32 0.0, %v1323
      %v1325 = vpop.f32.mrb[0].mxu0
      %1326 = vmatprep.mubr.bf16.mxu0 %v926
      %1327 = vmatmul.mubr.bf16.gmra.mrb[0].mxu0 %v872
      %v1328 = vpop.f32.mrb[0].mxu0
      %v1329 = vadd.f32 0.0, %v1328
      %v1330 = vpop.f32.mrb[0].mxu0
      %v1331 = vpop.f32.mrb[0].mxu0
      %v1332 = vadd.f32 0.0, %v1331
      %v1333 = vpop.f32.mrb[0].mxu0
      %1334 = vmatprep.mubr.bf16.mxu0 %v927
      %1335 = vmatmul.mubr.bf16.gmra.mrb[0].mxu0 %v873
      %v1336 = vpop.f32.mrb[0].mxu0
      %v1337 = vadd.f32 0.0, %v1336
      %v1338 = vpop.f32.mrb[0].mxu0
      %v1339 = vpop.f32.mrb[0].mxu0
      %v1340 = vadd.f32 0.0, %v1339
      %v1341 = vpop.f32.mrb[0].mxu0
      %1342 = vmatprep.mubr.bf16.mxu0 %v928
      %1343 = vmatmul.mubr.bf16.gmra.mrb[0].mxu0 %v874
      %v1344 = vpop.f32.mrb[0].mxu0
      %v1345 = vadd.f32 0.0, %v1344
      %v1346 = vpop.f32.mrb[0].mxu0
      %v1347 = vpop.f32.mrb[0].mxu0
      %v1348 = vadd.f32 0.0, %v1347
      %v1349 = vpop.f32.mrb[0].mxu0
      %1350 = vmatprep.mubr.bf16.mxu0 %v929
      %1351 = vmatmul.mubr.bf16.gmra.mrb[0].mxu0 %v875
      %v1352 = vpop.f32.mrb[0].mxu0
      %v1353 = vadd.f32 0.0, %v1352
      %v1354 = vpop.f32.mrb[0].mxu0
      %v1355 = vpop.f32.mrb[0].mxu0
      %v1356 = vadd.f32 0.0, %v1355
      %v1357 = vpop.f32.mrb[0].mxu0
      %1358 = vmatprep.mubr.bf16.mxu0 %v930
      %1359 = vmatmul.mubr.bf16.gmra.mrb[0].mxu0 %v876
      %v1360 = vpop.f32.mrb[0].mxu0
      %v1361 = vadd.f32 0.0, %v1360
      %v1362 = vpop.f32.mrb[0].mxu0
      %v1363 = vpop.f32.mrb[0].mxu0
      %v1364 = vadd.f32 0.0, %v1363
      %v1365 = vpop.f32.mrb[0].mxu0
      %1366 = vmatprep.mubr.bf16.mxu0 %v931
      %1367 = vmatmul.mubr.bf16.gmra.mrb[0].mxu0 %v877
      %v1368 = vpop.f32.mrb[0].mxu0
      %v1369 = vadd.f32 0.0, %v1368
      %v1370 = vpop.f32.mrb[0].mxu0
      %v1371 = vpop.f32.mrb[0].mxu0
      %v1372 = vadd.f32 0.0, %v1371
      %v1373 = vpop.f32.mrb[0].mxu0
      %1374 = vmatprep.mubr.bf16.mxu0 %v932
      %1375 = vmatmul.mubr.bf16.gmra.mrb[0].mxu0 %v878
      %v1376 = vpop.f32.mrb[0].mxu0
      %v1377 = vadd.f32 0.0, %v1376
      %v1378 = vpop.f32.mrb[0].mxu0
      %v1379 = vpop.f32.mrb[0].mxu0
      %v1380 = vadd.f32 0.0, %v1379
      %v1381 = vpop.f32.mrb[0].mxu0
      %1382 = vmatprep.mubr.bf16.mxu0 %v933
      %1383 = vmatmul.mubr.bf16.gmra.mrb[0].mxu0 %v879
      %v1384 = vpop.f32.mrb[0].mxu0
      %v1385 = vadd.f32 0.0, %v1384
      %v1386 = vpop.f32.mrb[0].mxu0
      %v1387 = vpop.f32.mrb[0].mxu0
      %v1388 = vadd.f32 0.0, %v1387
      %v1389 = vpop.f32.mrb[0].mxu0
      %1390 = vdwg.mxu0
      %1391 = vmatprep.subr.bf16.mxu0 0
      %1392 = vmatpush1.bf16.msra.mxu0 %v1198
      %1393 = vmatprep.subr.bf16.mxu0 0
      %1394 = vmatpush1.bf16.msra.mxu0 %v1199
      %1395 = vmatprep.subr.bf16.mxu0 0
      %1396 = vmatpush1.bf16.msra.mxu0 %v1200
      %1397 = vmatprep.subr.bf16.mxu0 0
      %1398 = vmatpush1.bf16.msra.mxu0 %v1201
      %1399 = vmatprep.subr.bf16.mxu0 0
      %1400 = vmatpush1.bf16.msra.mxu0 %v1202
      %1401 = vmatprep.subr.bf16.mxu0 0
      %1402 = vmatpush1.bf16.msra.mxu0 %v1203
      %1403 = vmatprep.subr.bf16.mxu0 0
      %1404 = vmatpush1.bf16.msra.mxu0 %v1204
      %1405 = vmatprep.subr.bf16.mxu0 0
      %1406 = vmatpush1.bf16.msra.mxu0 %v1205
      %1407 = vmatprep.subr.bf16.mxu0 0
      %1408 = vmatpush1.bf16.msra.mxu0 0
      %1409 = vmatprep.subr.bf16.mxu0 0
      %1410 = vmatpush1.bf16.msra.mxu0 0
      %1411 = vmatprep.subr.bf16.mxu0 0
      %1412 = vmatpush1.bf16.msra.mxu0 0
      %1413 = vmatprep.subr.bf16.mxu0 0
      %1414 = vmatpush1.bf16.msra.mxu0 0
      %1415 = vmatprep.subr.bf16.mxu0 0
      %1416 = vmatpush1.bf16.msra.mxu0 0
      %1417 = vmatprep.subr.bf16.mxu0 0
      %1418 = vmatpush1.bf16.msra.mxu0 0
      %1419 = vmatprep.subr.bf16.mxu0 0
      %1420 = vmatpush1.bf16.msra.mxu0 0
      %1421 = vmatprep.subr.bf16.mxu0 0
      %1422 = vmatpush1.bf16.msra.mxu0 0
      %1423 = vmatprep.mubr.bf16.mxu0 0
      %1424 = vmatmul.mubr.bf16.gmra.mrb[0].mxu0 %v972
      %v1425 = vpop.f32.mrb[0].mxu0
      %v1426 = vadd.f32 %v1265, %v1425
      %v1427 = vpop.f32.mrb[0].mxu0
      %v1428 = vpop.f32.mrb[0].mxu0
      %v1429 = vadd.f32 %v1268, %v1428
      %v1430 = vpop.f32.mrb[0].mxu0
      %1431 = vmatprep.mubr.bf16.mxu0 0
      %1432 = vmatmul.mubr.bf16.gmra.mrb[0].mxu0 %v973
      %v1433 = vpop.f32.mrb[0].mxu0
      %v1434 = vadd.f32 %v1273, %v1433
      %v1435 = vpop.f32.mrb[0].mxu0
      %v1436 = vpop.f32.mrb[0].mxu0
      %v1437 = vadd.f32 %v1276, %v1436
      %v1438 = vpop.f32.mrb[0].mxu0
      %1439 = vmatprep.mubr.bf16.mxu0 0
      %1440 = vmatmul.mubr.bf16.gmra.mrb[0].mxu0 %v974
      %v1441 = vpop.f32.mrb[0].mxu0
      %v1442 = vadd.f32 %v1281, %v1441
      %v1443 = vpop.f32.mrb[0].mxu0
      %v1444 = vpop.f32.mrb[0].mxu0
      %v1445 = vadd.f32 %v1284, %v1444
      %v1446 = vpop.f32.mrb[0].mxu0
      %1447 = vmatprep.mubr.bf16.mxu0 0
      %1448 = vmatmul.mubr.bf16.gmra.mrb[0].mxu0 %v975
      %v1449 = vpop.f32.mrb[0].mxu0
      %v1450 = vadd.f32 %v1289, %v1449
      %v1451 = vpop.f32.mrb[0].mxu0
      %v1452 = vpop.f32.mrb[0].mxu0
      %v1453 = vadd.f32 %v1292, %v1452
      %v1454 = vpop.f32.mrb[0].mxu0
      %1455 = vmatprep.mubr.bf16.mxu0 0
      %1456 = vmatmul.mubr.bf16.gmra.mrb[0].mxu0 %v976
      %v1457 = vpop.f32.mrb[0].mxu0
      %v1458 = vadd.f32 %v1297, %v1457
      %v1459 = vpop.f32.mrb[0].mxu0
      %v1460 = vpop.f32.mrb[0].mxu0
      %v1461 = vadd.f32 %v1300, %v1460
      %v1462 = vpop.f32.mrb[0].mxu0
      %1463 = vmatprep.mubr.bf16.mxu0 0
      %1464 = vmatmul.mubr.bf16.gmra.mrb[0].mxu0 %v977
      %v1465 = vpop.f32.mrb[0].mxu0
      %v1466 = vadd.f32 %v1305, %v1465
      %v1467 = vpop.f32.mrb[0].mxu0
      %v1468 = vpop.f32.mrb[0].mxu0
      %v1469 = vadd.f32 %v1308, %v1468
      %v1470 = vpop.f32.mrb[0].mxu0
      %1471 = vmatprep.mubr.bf16.mxu0 0
      %1472 = vmatmul.mubr.bf16.gmra.mrb[0].mxu0 %v978
      %v1473 = vpop.f32.mrb[0].mxu0
      %v1474 = vadd.f32 %v1313, %v1473
      %v1475 = vpop.f32.mrb[0].mxu0
      %v1476 = vpop.f32.mrb[0].mxu0
      %v1477 = vadd.f32 %v1316, %v1476
      %v1478 = vpop.f32.mrb[0].mxu0
      %1479 = vmatprep.mubr.bf16.mxu0 0
      %1480 = vmatmul.mubr.bf16.gmra.mrb[0].mxu0 %v979
      %v1481 = vpop.f32.mrb[0].mxu0
      %v1482 = vadd.f32 %v1321, %v1481
      %v1483 = vpop.f32.mrb[0].mxu0
      %v1484 = vpop.f32.mrb[0].mxu0
      %v1485 = vadd.f32 %v1324, %v1484
      %v1486 = vpop.f32.mrb[0].mxu0
      %1487 = vmatprep.mubr.bf16.mxu0 0
      %1488 = vmatmul.mubr.bf16.gmra.mrb[0].mxu0 %v980
      %v1489 = vpop.f32.mrb[0].mxu0
      %v1490 = vadd.f32 %v1329, %v1489
      %v1491 = vpop.f32.mrb[0].mxu0
      %v1492 = vpop.f32.mrb[0].mxu0
      %v1493 = vadd.f32 %v1332, %v1492
      %v1494 = vpop.f32.mrb[0].mxu0
      %1495 = vmatprep.mubr.bf16.mxu0 0
      %1496 = vmatmul.mubr.bf16.gmra.mrb[0].mxu0 %v981
      %v1497 = vpop.f32.mrb[0].mxu0
      %v1498 = vadd.f32 %v1337, %v1497
      %v1499 = vpop.f32.mrb[0].mxu0
      %v1500 = vpop.f32.mrb[0].mxu0
      %v1501 = vadd.f32 %v1340, %v1500
      %v1502 = vpop.f32.mrb[0].mxu0
      %1503 = vmatprep.mubr.bf16.mxu0 0
      %1504 = vmatmul.mubr.bf16.gmra.mrb[0].mxu0 %v982
      %v1505 = vpop.f32.mrb[0].mxu0
      %v1506 = vadd.f32 %v1345, %v1505
      %v1507 = vpop.f32.mrb[0].mxu0
      %v1508 = vpop.f32.mrb[0].mxu0
      %v1509 = vadd.f32 %v1348, %v1508
      %v1510 = vpop.f32.mrb[0].mxu0
      %1511 = vmatprep.mubr.bf16.mxu0 0
      %1512 = vmatmul.mubr.bf16.gmra.mrb[0].mxu0 %v983
      %v1513 = vpop.f32.mrb[0].mxu0
      %v1514 = vadd.f32 %v1353, %v1513
      %v1515 = vpop.f32.mrb[0].mxu0
      %v1516 = vpop.f32.mrb[0].mxu0
      %v1517 = vadd.f32 %v1356, %v1516
      %v1518 = vpop.f32.mrb[0].mxu0
      %1519 = vmatprep.mubr.bf16.mxu0 0
      %1520 = vmatmul.mubr.bf16.gmra.mrb[0].mxu0 %v984
      %v1521 = vpop.f32.mrb[0].mxu0
      %v1522 = vadd.f32 %v1361, %v1521
      %v1523 = vpop.f32.mrb[0].mxu0
      %v1524 = vpop.f32.mrb[0].mxu0
      %v1525 = vadd.f32 %v1364, %v1524
      %v1526 = vpop.f32.mrb[0].mxu0
      %1527 = vmatprep.mubr.bf16.mxu0 0
      %1528 = vmatmul.mubr.bf16.gmra.mrb[0].mxu0 %v985
      %v1529 = vpop.f32.mrb[0].mxu0
      %v1530 = vadd.f32 %v1369, %v1529
      %v1531 = vpop.f32.mrb[0].mxu0
      %v1532 = vpop.f32.mrb[0].mxu0
      %v1533 = vadd.f32 %v1372, %v1532
      %v1534 = vpop.f32.mrb[0].mxu0
      %1535 = vmatprep.mubr.bf16.mxu0 0
      %1536 = vmatmul.mubr.bf16.gmra.mrb[0].mxu0 %v986
      %v1537 = vpop.f32.mrb[0].mxu0
      %v1538 = vadd.f32 %v1377, %v1537
      %v1539 = vpop.f32.mrb[0].mxu0
      %v1540 = vpop.f32.mrb[0].mxu0
      %v1541 = vadd.f32 %v1380, %v1540
      %v1542 = vpop.f32.mrb[0].mxu0
      %1543 = vmatprep.mubr.bf16.mxu0 0
      %1544 = vmatmul.mubr.bf16.gmra.mrb[0].mxu0 %v987
      %v1545 = vpop.f32.mrb[0].mxu0
      %v1546 = vadd.f32 %v1385, %v1545
      %v1547 = vpop.f32.mrb[0].mxu0
      %v1548 = vpop.f32.mrb[0].mxu0
      %v1549 = vadd.f32 %v1388, %v1548
      %v1550 = vpop.f32.mrb[0].mxu0
      %1551 = vdwg.mxu0
      %v1600 = vunpack.c.l.b16 %v989
      %v1601 = vunpack.c.l.b16 %v990
      %v1602 = vunpack.c.l.b16 %v991
      %v1603 = vunpack.c.l.b16 %v992
      %v1604 = vunpack.c.l.b16 %v993
      %v1605 = vunpack.c.l.b16 %v994
      %v1606 = vunpack.c.l.b16 %v995
      %v1607 = vunpack.c.l.b16 %v996
      %v1608 = vunpack.c.l.b16 %v997
      %v1609 = vunpack.c.l.b16 %v998
      %v1610 = vunpack.c.l.b16 %v999
      %v1611 = vunpack.c.l.b16 %v1000
      %v1612 = vunpack.c.l.b16 %v1001
      %v1613 = vunpack.c.l.b16 %v1002
      %v1614 = vunpack.c.l.b16 %v1003
      %v1615 = vunpack.c.l.b16 %v1004
      %v1616 = vunpack.c.l.b16 %v1005
      %v1617 = vunpack.c.l.b16 %v1006
      %v1618 = vunpack.c.l.b16 %v1007
      %v1619 = vunpack.c.l.b16 %v1008
      %v1620 = vunpack.c.l.b16 %v1009
      %v1621 = vunpack.c.l.b16 %v1010
      %v1622 = vunpack.c.l.b16 %v1011
      %v1623 = vunpack.c.l.b16 %v1012
      %v1624 = vunpack.c.l.b16 %v1013
      %v1625 = vunpack.c.l.b16 %v1014
      %v1626 = vunpack.c.l.b16 %v1015
      %v1627 = vunpack.c.l.b16 %v1016
      %v1628 = vunpack.c.l.b16 %v1017
      %v1629 = vunpack.c.l.b16 %v1018
      %v1630 = vunpack.c.l.b16 %v1019
      %v1631 = vunpack.c.l.b16 %v1020
      %v1632 = vunpack.c.l.b16 %v1021
      %v1633 = vunpack.c.l.b16 %v1022
      %v1634 = vunpack.c.l.b16 %v1023
      %v1635 = vunpack.c.l.b16 %v1024
      %v1636 = vunpack.c.l.b16 %v1025
      %v1637 = vunpack.c.l.b16 %v1026
      %v1638 = vunpack.c.l.b16 %v1027
      %v1639 = vunpack.c.l.b16 %v1028
      %v1640 = vunpack.c.l.b16 %v1029
      %v1641 = vunpack.c.l.b16 %v1030
      %v1642 = vunpack.c.l.b16 %v1031
      %v1643 = vunpack.c.l.b16 %v1032
      %v1644 = vunpack.c.l.b16 %v1033
      %v1645 = vunpack.c.l.b16 %v1034
      %v1646 = vunpack.c.l.b16 %v1035
      %v1647 = vunpack.c.l.b16 %v1036
      %v1648 = vpack.c.b16 %v1601, %v1600
      %v1649 = vpack.c.b16 %v1603, %v1602
      %v1650 = vpack.c.b16 %v1605, %v1604
      %v1651 = vpack.c.b16 %v1607, %v1606
      %v1652 = vpack.c.b16 %v1609, %v1608
      %v1653 = vpack.c.b16 %v1611, %v1610
      %v1654 = vpack.c.b16 %v1613, %v1612
      %v1655 = vpack.c.b16 %v1615, %v1614
      %v1656 = vpack.c.b16 %v1617, %v1616
      %v1657 = vpack.c.b16 %v1619, %v1618
      %v1658 = vpack.c.b16 %v1621, %v1620
      %v1659 = vpack.c.b16 %v1623, %v1622
      %v1660 = vpack.c.b16 %v1625, %v1624
      %v1661 = vpack.c.b16 %v1627, %v1626
      %v1662 = vpack.c.b16 %v1629, %v1628
      %v1663 = vpack.c.b16 %v1631, %v1630
      %v1664 = vpack.c.b16 %v1633, %v1632
      %v1665 = vpack.c.b16 %v1635, %v1634
      %v1666 = vpack.c.b16 %v1637, %v1636
      %v1667 = vpack.c.b16 %v1639, %v1638
      %v1668 = vpack.c.b16 %v1641, %v1640
      %v1669 = vpack.c.b16 %v1643, %v1642
      %v1670 = vpack.c.b16 %v1645, %v1644
      %v1671 = vpack.c.b16 %v1647, %v1646
      %1696 = vmatprep.subr.bf16.mxu0 0
      %1697 = vmatpush1.bf16.msra.mxu0 %v1648
      %1698 = vmatprep.subr.bf16.mxu0 0
      %1699 = vmatpush1.bf16.msra.mxu0 %v1649
      %1700 = vmatprep.subr.bf16.mxu0 0
      %1701 = vmatpush1.bf16.msra.mxu0 %v1650
      %1702 = vmatprep.subr.bf16.mxu0 0
      %1703 = vmatpush1.bf16.msra.mxu0 %v1651
      %1704 = vmatprep.subr.bf16.mxu0 0
      %1705 = vmatpush1.bf16.msra.mxu0 %v1652
      %1706 = vmatprep.subr.bf16.mxu0 0
      %1707 = vmatpush1.bf16.msra.mxu0 %v1653
      %1708 = vmatprep.subr.bf16.mxu0 0
      %1709 = vmatpush1.bf16.msra.mxu0 %v1654
      %1710 = vmatprep.subr.bf16.mxu0 0
      %1711 = vmatpush1.bf16.msra.mxu0 %v1655
      %1712 = vmatprep.subr.bf16.mxu0 0
      %1713 = vmatpush1.bf16.msra.mxu0 %v1656
      %1714 = vmatprep.subr.bf16.mxu0 0
      %1715 = vmatpush1.bf16.msra.mxu0 %v1657
      %1716 = vmatprep.subr.bf16.mxu0 0
      %1717 = vmatpush1.bf16.msra.mxu0 %v1658
      %1718 = vmatprep.subr.bf16.mxu0 0
      %1719 = vmatpush1.bf16.msra.mxu0 %v1659
      %1720 = vmatprep.subr.bf16.mxu0 0
      %1721 = vmatpush1.bf16.msra.mxu0 %v1660
      %1722 = vmatprep.subr.bf16.mxu0 0
      %1723 = vmatpush1.bf16.msra.mxu0 %v1661
      %1724 = vmatprep.subr.bf16.mxu0 0
      %1725 = vmatpush1.bf16.msra.mxu0 %v1662
      %1726 = vmatprep.subr.bf16.mxu0 0
      %1727 = vmatpush1.bf16.msra.mxu0 %v1663
      %1728 = vmatprep.mubr.bf16.mxu0 %v917
      %1729 = vmatmul.mubr.bf16.gmra.mrb[0].mxu0 %v863
      %v1730 = vpop.f32.mrb[0].mxu0
      %v1731 = vadd.f32 %v1426, %v1730
      %v1732 = vpop.f32.mrb[0].mxu0
      %v1733 = vpop.f32.mrb[0].mxu0
      %v1734 = vadd.f32 %v1429, %v1733
      %v1735 = vpop.f32.mrb[0].mxu0
      %1736 = vmatprep.mubr.bf16.mxu0 %v918
      %1737 = vmatmul.mubr.bf16.gmra.mrb[0].mxu0 %v864
      %v1738 = vpop.f32.mrb[0].mxu0
      %v1739 = vadd.f32 %v1434, %v1738
      %v1740 = vpop.f32.mrb[0].mxu0
      %v1741 = vpop.f32.mrb[0].mxu0
      %v1742 = vadd.f32 %v1437, %v1741
      %v1743 = vpop.f32.mrb[0].mxu0
      %1744 = vmatprep.mubr.bf16.mxu0 %v919
      %1745 = vmatmul.mubr.bf16.gmra.mrb[0].mxu0 %v865
      %v1746 = vpop.f32.mrb[0].mxu0
      %v1747 = vadd.f32 %v1442, %v1746
      %v1748 = vpop.f32.mrb[0].mxu0
      %v1749 = vpop.f32.mrb[0].mxu0
      %v1750 = vadd.f32 %v1445, %v1749
      %v1751 = vpop.f32.mrb[0].mxu0
      %1752 = vmatprep.mubr.bf16.mxu0 %v920
      %1753 = vmatmul.mubr.bf16.gmra.mrb[0].mxu0 %v866
      %v1754 = vpop.f32.mrb[0].mxu0
      %v1755 = vadd.f32 %v1450, %v1754
      %v1756 = vpop.f32.mrb[0].mxu0
      %v1757 = vpop.f32.mrb[0].mxu0
      %v1758 = vadd.f32 %v1453, %v1757
      %v1759 = vpop.f32.mrb[0].mxu0
      %1760 = vmatprep.mubr.bf16.mxu0 %v921
      %1761 = vmatmul.mubr.bf16.gmra.mrb[0].mxu0 %v867
      %v1762 = vpop.f32.mrb[0].mxu0
      %v1763 = vadd.f32 %v1458, %v1762
      %v1764 = vpop.f32.mrb[0].mxu0
      %v1765 = vpop.f32.mrb[0].mxu0
      %v1766 = vadd.f32 %v1461, %v1765
      %v1767 = vpop.f32.mrb[0].mxu0
      %1768 = vmatprep.mubr.bf16.mxu0 %v922
      %1769 = vmatmul.mubr.bf16.gmra.mrb[0].mxu0 %v868
      %v1770 = vpop.f32.mrb[0].mxu0
      %v1771 = vadd.f32 %v1466, %v1770
      %v1772 = vpop.f32.mrb[0].mxu0
      %v1773 = vpop.f32.mrb[0].mxu0
      %v1774 = vadd.f32 %v1469, %v1773
      %v1775 = vpop.f32.mrb[0].mxu0
      %1776 = vmatprep.mubr.bf16.mxu0 %v923
      %1777 = vmatmul.mubr.bf16.gmra.mrb[0].mxu0 %v869
      %v1778 = vpop.f32.mrb[0].mxu0
      %v1779 = vadd.f32 %v1474, %v1778
      %v1780 = vpop.f32.mrb[0].mxu0
      %v1781 = vpop.f32.mrb[0].mxu0
      %v1782 = vadd.f32 %v1477, %v1781
      %v1783 = vpop.f32.mrb[0].mxu0
      %1784 = vmatprep.mubr.bf16.mxu0 %v924
      %1785 = vmatmul.mubr.bf16.gmra.mrb[0].mxu0 %v870
      %v1786 = vpop.f32.mrb[0].mxu0
      %v1787 = vadd.f32 %v1482, %v1786
      %v1788 = vpop.f32.mrb[0].mxu0
      %v1789 = vpop.f32.mrb[0].mxu0
      %v1790 = vadd.f32 %v1485, %v1789
      %v1791 = vpop.f32.mrb[0].mxu0
      %1792 = vmatprep.mubr.bf16.mxu0 %v925
      %1793 = vmatmul.mubr.bf16.gmra.mrb[0].mxu0 %v871
      %v1794 = vpop.f32.mrb[0].mxu0
      %v1795 = vadd.f32 %v1490, %v1794
      %v1796 = vpop.f32.mrb[0].mxu0
      %v1797 = vpop.f32.mrb[0].mxu0
      %v1798 = vadd.f32 %v1493, %v1797
      %v1799 = vpop.f32.mrb[0].mxu0
      %1800 = vmatprep.mubr.bf16.mxu0 %v926
      %1801 = vmatmul.mubr.bf16.gmra.mrb[0].mxu0 %v872
      %v1802 = vpop.f32.mrb[0].mxu0
      %v1803 = vadd.f32 %v1498, %v1802
      %v1804 = vpop.f32.mrb[0].mxu0
      %v1805 = vpop.f32.mrb[0].mxu0
      %v1806 = vadd.f32 %v1501, %v1805
      %v1807 = vpop.f32.mrb[0].mxu0
      %1808 = vmatprep.mubr.bf16.mxu0 %v927
      %1809 = vmatmul.mubr.bf16.gmra.mrb[0].mxu0 %v873
      %v1810 = vpop.f32.mrb[0].mxu0
      %v1811 = vadd.f32 %v1506, %v1810
      %v1812 = vpop.f32.mrb[0].mxu0
      %v1813 = vpop.f32.mrb[0].mxu0
      %v1814 = vadd.f32 %v1509, %v1813
      %v1815 = vpop.f32.mrb[0].mxu0
      %1816 = vmatprep.mubr.bf16.mxu0 %v928
      %1817 = vmatmul.mubr.bf16.gmra.mrb[0].mxu0 %v874
      %v1818 = vpop.f32.mrb[0].mxu0
      %v1819 = vadd.f32 %v1514, %v1818
      %v1820 = vpop.f32.mrb[0].mxu0
      %v1821 = vpop.f32.mrb[0].mxu0
      %v1822 = vadd.f32 %v1517, %v1821
      %v1823 = vpop.f32.mrb[0].mxu0
      %1824 = vmatprep.mubr.bf16.mxu0 %v929
      %1825 = vmatmul.mubr.bf16.gmra.mrb[0].mxu0 %v875
      %v1826 = vpop.f32.mrb[0].mxu0
      %v1827 = vadd.f32 %v1522, %v1826
      %v1828 = vpop.f32.mrb[0].mxu0
      %v1829 = vpop.f32.mrb[0].mxu0
      %v1830 = vadd.f32 %v1525, %v1829
      %v1831 = vpop.f32.mrb[0].mxu0
      %1832 = vmatprep.mubr.bf16.mxu0 %v930
      %1833 = vmatmul.mubr.bf16.gmra.mrb[0].mxu0 %v876
      %v1834 = vpop.f32.mrb[0].mxu0
      %v1835 = vadd.f32 %v1530, %v1834
      %v1836 = vpop.f32.mrb[0].mxu0
      %v1837 = vpop.f32.mrb[0].mxu0
      %v1838 = vadd.f32 %v1533, %v1837
      %v1839 = vpop.f32.mrb[0].mxu0
      %1840 = vmatprep.mubr.bf16.mxu0 %v931
      %1841 = vmatmul.mubr.bf16.gmra.mrb[0].mxu0 %v877
      %v1842 = vpop.f32.mrb[0].mxu0
      %v1843 = vadd.f32 %v1538, %v1842
      %v1844 = vpop.f32.mrb[0].mxu0
      %v1845 = vpop.f32.mrb[0].mxu0
      %v1846 = vadd.f32 %v1541, %v1845
      %v1847 = vpop.f32.mrb[0].mxu0
      %1848 = vmatprep.mubr.bf16.mxu0 %v932
      %1849 = vmatmul.mubr.bf16.gmra.mrb[0].mxu0 %v878
      %v1850 = vpop.f32.mrb[0].mxu0
      %v1851 = vadd.f32 %v1546, %v1850
      %v1852 = vpop.f32.mrb[0].mxu0
      %v1853 = vpop.f32.mrb[0].mxu0
      %v1854 = vadd.f32 %v1549, %v1853
      %v1855 = vpop.f32.mrb[0].mxu0
      %1856 = vdwg.mxu0
      %1857 = vmatprep.subr.bf16.mxu0 0
      %1858 = vmatpush1.bf16.msra.mxu0 %v1664
      %1859 = vmatprep.subr.bf16.mxu0 0
      %1860 = vmatpush1.bf16.msra.mxu0 %v1665
      %1861 = vmatprep.subr.bf16.mxu0 0
      %1862 = vmatpush1.bf16.msra.mxu0 %v1666
      %1863 = vmatprep.subr.bf16.mxu0 0
      %1864 = vmatpush1.bf16.msra.mxu0 %v1667
      %1865 = vmatprep.subr.bf16.mxu0 0
      %1866 = vmatpush1.bf16.msra.mxu0 %v1668
      %1867 = vmatprep.subr.bf16.mxu0 0
      %1868 = vmatpush1.bf16.msra.mxu0 %v1669
      %1869 = vmatprep.subr.bf16.mxu0 0
      %1870 = vmatpush1.bf16.msra.mxu0 %v1670
      %1871 = vmatprep.subr.bf16.mxu0 0
      %1872 = vmatpush1.bf16.msra.mxu0 %v1671
      %1873 = vmatprep.subr.bf16.mxu0 0
      %1874 = vmatpush1.bf16.msra.mxu0 0
      %1875 = vmatprep.subr.bf16.mxu0 0
      %1876 = vmatpush1.bf16.msra.mxu0 0
      %1877 = vmatprep.subr.bf16.mxu0 0
      %1878 = vmatpush1.bf16.msra.mxu0 0
      %1879 = vmatprep.subr.bf16.mxu0 0
      %1880 = vmatpush1.bf16.msra.mxu0 0
      %1881 = vmatprep.subr.bf16.mxu0 0
      %1882 = vmatpush1.bf16.msra.mxu0 0
      %1883 = vmatprep.subr.bf16.mxu0 0
      %1884 = vmatpush1.bf16.msra.mxu0 0
      %1885 = vmatprep.subr.bf16.mxu0 0
      %1886 = vmatpush1.bf16.msra.mxu0 0
      %1887 = vmatprep.subr.bf16.mxu0 0
      %1888 = vmatpush1.bf16.msra.mxu0 0
      %1889 = vmatprep.mubr.bf16.mxu0 0
      %1890 = vmatmul.mubr.bf16.gmra.mrb[0].mxu0 %v971
      %v1891 = vpop.f32.mrb[0].mxu0
      %v1892 = vadd.f32 %v1731, %v1891
      %v1893 = vpop.f32.mrb[0].mxu0
      %v1894 = vpop.f32.mrb[0].mxu0
      %v1895 = vadd.f32 %v1734, %v1894
      %v1896 = vpop.f32.mrb[0].mxu0
      %1897 = vmatprep.mubr.bf16.mxu0 0
      %1898 = vmatmul.mubr.bf16.gmra.mrb[0].mxu0 %v972
      %v1899 = vpop.f32.mrb[0].mxu0
      %v1900 = vadd.f32 %v1739, %v1899
      %v1901 = vpop.f32.mrb[0].mxu0
      %v1902 = vpop.f32.mrb[0].mxu0
      %v1903 = vadd.f32 %v1742, %v1902
      %v1904 = vpop.f32.mrb[0].mxu0
      %1905 = vmatprep.mubr.bf16.mxu0 0
      %1906 = vmatmul.mubr.bf16.gmra.mrb[0].mxu0 %v973
      %v1907 = vpop.f32.mrb[0].mxu0
      %v1908 = vadd.f32 %v1747, %v1907
      %v1909 = vpop.f32.mrb[0].mxu0
      %v1910 = vpop.f32.mrb[0].mxu0
      %v1911 = vadd.f32 %v1750, %v1910
      %v1912 = vpop.f32.mrb[0].mxu0
      %1913 = vmatprep.mubr.bf16.mxu0 0
      %1914 = vmatmul.mubr.bf16.gmra.mrb[0].mxu0 %v974
      %v1915 = vpop.f32.mrb[0].mxu0
      %v1916 = vadd.f32 %v1755, %v1915
      %v1917 = vpop.f32.mrb[0].mxu0
      %v1918 = vpop.f32.mrb[0].mxu0
      %v1919 = vadd.f32 %v1758, %v1918
      %v1920 = vpop.f32.mrb[0].mxu0
      %1921 = vmatprep.mubr.bf16.mxu0 0
      %1922 = vmatmul.mubr.bf16.gmra.mrb[0].mxu0 %v975
      %v1923 = vpop.f32.mrb[0].mxu0
      %v1924 = vadd.f32 %v1763, %v1923
      %v1925 = vpop.f32.mrb[0].mxu0
      %v1926 = vpop.f32.mrb[0].mxu0
      %v1927 = vadd.f32 %v1766, %v1926
      %v1928 = vpop.f32.mrb[0].mxu0
      %1929 = vmatprep.mubr.bf16.mxu0 0
      %1930 = vmatmul.mubr.bf16.gmra.mrb[0].mxu0 %v976
      %v1931 = vpop.f32.mrb[0].mxu0
      %v1932 = vadd.f32 %v1771, %v1931
      %v1933 = vpop.f32.mrb[0].mxu0
      %v1934 = vpop.f32.mrb[0].mxu0
      %v1935 = vadd.f32 %v1774, %v1934
      %v1936 = vpop.f32.mrb[0].mxu0
      %1937 = vmatprep.mubr.bf16.mxu0 0
      %1938 = vmatmul.mubr.bf16.gmra.mrb[0].mxu0 %v977
      %v1939 = vpop.f32.mrb[0].mxu0
      %v1940 = vadd.f32 %v1779, %v1939
      %v1941 = vpop.f32.mrb[0].mxu0
      %v1942 = vpop.f32.mrb[0].mxu0
      %v1943 = vadd.f32 %v1782, %v1942
      %v1944 = vpop.f32.mrb[0].mxu0
      %1945 = vmatprep.mubr.bf16.mxu0 0
      %1946 = vmatmul.mubr.bf16.gmra.mrb[0].mxu0 %v978
      %v1947 = vpop.f32.mrb[0].mxu0
      %v1948 = vadd.f32 %v1787, %v1947
      %v1949 = vpop.f32.mrb[0].mxu0
      %v1950 = vpop.f32.mrb[0].mxu0
      %v1951 = vadd.f32 %v1790, %v1950
      %v1952 = vpop.f32.mrb[0].mxu0
      %1953 = vmatprep.mubr.bf16.mxu0 0
      %1954 = vmatmul.mubr.bf16.gmra.mrb[0].mxu0 %v979
      %v1955 = vpop.f32.mrb[0].mxu0
      %v1956 = vadd.f32 %v1795, %v1955
      %v1957 = vpop.f32.mrb[0].mxu0
      %v1958 = vpop.f32.mrb[0].mxu0
      %v1959 = vadd.f32 %v1798, %v1958
      %v1960 = vpop.f32.mrb[0].mxu0
      %1961 = vmatprep.mubr.bf16.mxu0 0
      %1962 = vmatmul.mubr.bf16.gmra.mrb[0].mxu0 %v980
      %v1963 = vpop.f32.mrb[0].mxu0
      %v1964 = vadd.f32 %v1803, %v1963
      %v1965 = vpop.f32.mrb[0].mxu0
      %v1966 = vpop.f32.mrb[0].mxu0
      %v1967 = vadd.f32 %v1806, %v1966
      %v1968 = vpop.f32.mrb[0].mxu0
      %1969 = vmatprep.mubr.bf16.mxu0 0
      %1970 = vmatmul.mubr.bf16.gmra.mrb[0].mxu0 %v981
      %v1971 = vpop.f32.mrb[0].mxu0
      %v1972 = vadd.f32 %v1811, %v1971
      %v1973 = vpop.f32.mrb[0].mxu0
      %v1974 = vpop.f32.mrb[0].mxu0
      %v1975 = vadd.f32 %v1814, %v1974
      %v1976 = vpop.f32.mrb[0].mxu0
      %1977 = vmatprep.mubr.bf16.mxu0 0
      %1978 = vmatmul.mubr.bf16.gmra.mrb[0].mxu0 %v982
      %v1979 = vpop.f32.mrb[0].mxu0
      %v1980 = vadd.f32 %v1819, %v1979
      %v1981 = vpop.f32.mrb[0].mxu0
      %v1982 = vpop.f32.mrb[0].mxu0
      %v1983 = vadd.f32 %v1822, %v1982
      %v1984 = vpop.f32.mrb[0].mxu0
      %1985 = vmatprep.mubr.bf16.mxu0 0
      %1986 = vmatmul.mubr.bf16.gmra.mrb[0].mxu0 %v983
      %v1987 = vpop.f32.mrb[0].mxu0
      %v1988 = vadd.f32 %v1827, %v1987
      %v1989 = vpop.f32.mrb[0].mxu0
      %v1990 = vpop.f32.mrb[0].mxu0
      %v1991 = vadd.f32 %v1830, %v1990
      %v1992 = vpop.f32.mrb[0].mxu0
      %1993 = vmatprep.mubr.bf16.mxu0 0
      %1994 = vmatmul.mubr.bf16.gmra.mrb[0].mxu0 %v984
      %v1995 = vpop.f32.mrb[0].mxu0
      %v1996 = vadd.f32 %v1835, %v1995
      %v1997 = vpop.f32.mrb[0].mxu0
      %v1998 = vpop.f32.mrb[0].mxu0
      %v1999 = vadd.f32 %v1838, %v1998
      %v2000 = vpop.f32.mrb[0].mxu0
      %2001 = vmatprep.mubr.bf16.mxu0 0
      %2002 = vmatmul.mubr.bf16.gmra.mrb[0].mxu0 %v985
      %v2003 = vpop.f32.mrb[0].mxu0
      %v2004 = vadd.f32 %v1843, %v2003
      %v2005 = vpop.f32.mrb[0].mxu0
      %v2006 = vpop.f32.mrb[0].mxu0
      %v2007 = vadd.f32 %v1846, %v2006
      %v2008 = vpop.f32.mrb[0].mxu0
      %2009 = vmatprep.mubr.bf16.mxu0 0
      %2010 = vmatmul.mubr.bf16.gmra.mrb[0].mxu0 %v986
      %v2011 = vpop.f32.mrb[0].mxu0
      %v2012 = vadd.f32 %v1851, %v2011
      %v2013 = vpop.f32.mrb[0].mxu0
      %v2014 = vpop.f32.mrb[0].mxu0
      %v2015 = vadd.f32 %v1854, %v2014
      %v2016 = vpop.f32.mrb[0].mxu0
      %2017 = vdwg.mxu0
      %s2018 = scalar_lea.vmem %s5, 384
      %v2019 = vld [vmem:[%s2018] sm:$0xf]
      %v2020 = vld [vmem:[%s2018 + $0x4] sm:$0xf]
      %v2021 = vld [vmem:[%s2018 + $0x8] sm:$0xf]
      %v2022 = vld [vmem:[%s2018 + $0xc] sm:$0xf]
      %v2023 = vld [vmem:[%s2018 + $0x10] sm:$0xf]
      %v2024 = vld [vmem:[%s2018 + $0x14] sm:$0xf]
      %v2025 = vld [vmem:[%s2018 + $0x18] sm:$0xf]
      %v2026 = vld [vmem:[%s2018 + $0x1c] sm:$0xf]
      %v2027 = vld [vmem:[%s2018 + $0x20] sm:$0xf]
      %v2028 = vld [vmem:[%s2018 + $0x24] sm:$0xf]
      %v2029 = vld [vmem:[%s2018 + $0x28] sm:$0xf]
      %v2030 = vld [vmem:[%s2018 + $0x2c] sm:$0xf]
      %v2031 = vld [vmem:[%s2018 + $0x30] sm:$0xf]
      %v2032 = vld [vmem:[%s2018 + $0x34] sm:$0xf]
      %v2033 = vld [vmem:[%s2018 + $0x38] sm:$0xf]
      %v2034 = vld [vmem:[%s2018 + $0x3c] sm:$0xf]
      %v2035 = vld [vmem:[%s2018 + $0x40] sm:$0xf]
      %v2036 = vld [vmem:[%s2018 + $0x44] sm:$0xf]
      %v2037 = vld [vmem:[%s2018 + $0x48] sm:$0xf]
      %v2038 = vld [vmem:[%s2018 + $0x4c] sm:$0xf]
      %v2039 = vld [vmem:[%s2018 + $0x50] sm:$0xf]
      %v2040 = vld [vmem:[%s2018 + $0x54] sm:$0xf]
      %v2041 = vld [vmem:[%s2018 + $0x58] sm:$0xf]
      %v2042 = vld [vmem:[%s2018 + $0x5c] sm:$0xf]
      %v2043 = vld [vmem:[%s2018 + $0x60] sm:$0xf]
      %v2044 = vld [vmem:[%s2018 + $0x64] sm:$0xf]
      %v2045 = vld [vmem:[%s2018 + $0x68] sm:$0xf]
      %v2046 = vld [vmem:[%s2018 + $0x6c] sm:$0xf]
      %v2047 = vld [vmem:[%s2018 + $0x70] sm:$0xf]
      %v2048 = vld [vmem:[%s2018 + $0x74] sm:$0xf]
      %v2049 = vld [vmem:[%s2018 + $0x78] sm:$0xf]
      %v2050 = vld [vmem:[%s2018 + $0x7c] sm:$0xf]
      %v2051 = vld [vmem:[%s2018 + $0x80] sm:$0xf]
      %v2052 = vld [vmem:[%s2018 + $0x84] sm:$0xf]
      %v2053 = vld [vmem:[%s2018 + $0x88] sm:$0xf]
      %v2054 = vld [vmem:[%s2018 + $0x8c] sm:$0xf]
      %v2055 = vld [vmem:[%s2018 + $0x90] sm:$0xf]
      %v2056 = vld [vmem:[%s2018 + $0x94] sm:$0xf]
      %v2057 = vld [vmem:[%s2018 + $0x98] sm:$0xf]
      %v2058 = vld [vmem:[%s2018 + $0x9c] sm:$0xf]
      %v2059 = vld [vmem:[%s2018 + $0xa0] sm:$0xf]
      %v2060 = vld [vmem:[%s2018 + $0xa4] sm:$0xf]
      %v2061 = vld [vmem:[%s2018 + $0xa8] sm:$0xf]
      %v2062 = vld [vmem:[%s2018 + $0xac] sm:$0xf]
      %v2063 = vld [vmem:[%s2018 + $0xb0] sm:$0xf]
      %v2064 = vld [vmem:[%s2018 + $0xb4] sm:$0xf]
      %v2065 = vld [vmem:[%s2018 + $0xb8] sm:$0xf]
      %v2066 = vld [vmem:[%s2018 + $0xbc] sm:$0xf]
      %v2115 = vunpack.c.l.b16 %v2019
      %v2116 = vunpack.c.l.b16 %v2020
      %v2117 = vunpack.c.l.b16 %v2021
      %v2118 = vunpack.c.l.b16 %v2022
      %v2119 = vunpack.c.l.b16 %v2023
      %v2120 = vunpack.c.l.b16 %v2024
      %v2121 = vunpack.c.l.b16 %v2025
      %v2122 = vunpack.c.l.b16 %v2026
      %v2123 = vunpack.c.l.b16 %v2027
      %v2124 = vunpack.c.l.b16 %v2028
      %v2125 = vunpack.c.l.b16 %v2029
      %v2126 = vunpack.c.l.b16 %v2030
      %v2127 = vunpack.c.l.b16 %v2031
      %v2128 = vunpack.c.l.b16 %v2032
      %v2129 = vunpack.c.l.b16 %v2033
      %v2130 = vunpack.c.l.b16 %v2034
      %v2131 = vunpack.c.l.b16 %v2035
      %v2132 = vunpack.c.l.b16 %v2036
      %v2133 = vunpack.c.l.b16 %v2037
      %v2134 = vunpack.c.l.b16 %v2038
      %v2135 = vunpack.c.l.b16 %v2039
      %v2136 = vunpack.c.l.b16 %v2040
      %v2137 = vunpack.c.l.b16 %v2041
      %v2138 = vunpack.c.l.b16 %v2042
      %v2139 = vunpack.c.l.b16 %v2043
      %v2140 = vunpack.c.l.b16 %v2044
      %v2141 = vunpack.c.l.b16 %v2045
      %v2142 = vunpack.c.l.b16 %v2046
      %v2143 = vunpack.c.l.b16 %v2047
      %v2144 = vunpack.c.l.b16 %v2048
      %v2145 = vunpack.c.l.b16 %v2049
      %v2146 = vunpack.c.l.b16 %v2050
      %v2147 = vunpack.c.l.b16 %v2051
      %v2148 = vunpack.c.l.b16 %v2052
      %v2149 = vunpack.c.l.b16 %v2053
      %v2150 = vunpack.c.l.b16 %v2054
      %v2151 = vunpack.c.l.b16 %v2055
      %v2152 = vunpack.c.l.b16 %v2056
      %v2153 = vunpack.c.l.b16 %v2057
      %v2154 = vunpack.c.l.b16 %v2058
      %v2155 = vunpack.c.l.b16 %v2059
      %v2156 = vunpack.c.l.b16 %v2060
      %v2157 = vunpack.c.l.b16 %v2061
      %v2158 = vunpack.c.l.b16 %v2062
      %v2159 = vunpack.c.l.b16 %v2063
      %v2160 = vunpack.c.l.b16 %v2064
      %v2161 = vunpack.c.l.b16 %v2065
      %v2162 = vunpack.c.l.b16 %v2066
      %v2163 = vpack.c.b16 %v2116, %v2115
      %v2164 = vpack.c.b16 %v2118, %v2117
      %v2165 = vpack.c.b16 %v2120, %v2119
      %v2166 = vpack.c.b16 %v2122, %v2121
      %v2167 = vpack.c.b16 %v2124, %v2123
      %v2168 = vpack.c.b16 %v2126, %v2125
      %v2169 = vpack.c.b16 %v2128, %v2127
      %v2170 = vpack.c.b16 %v2130, %v2129
      %v2171 = vpack.c.b16 %v2132, %v2131
      %v2172 = vpack.c.b16 %v2134, %v2133
      %v2173 = vpack.c.b16 %v2136, %v2135
      %v2174 = vpack.c.b16 %v2138, %v2137
      %v2175 = vpack.c.b16 %v2140, %v2139
      %v2176 = vpack.c.b16 %v2142, %v2141
      %v2177 = vpack.c.b16 %v2144, %v2143
      %v2178 = vpack.c.b16 %v2146, %v2145
      %v2179 = vpack.c.b16 %v2148, %v2147
      %v2180 = vpack.c.b16 %v2150, %v2149
      %v2181 = vpack.c.b16 %v2152, %v2151
      %v2182 = vpack.c.b16 %v2154, %v2153
      %v2183 = vpack.c.b16 %v2156, %v2155
      %v2184 = vpack.c.b16 %v2158, %v2157
      %v2185 = vpack.c.b16 %v2160, %v2159
      %v2186 = vpack.c.b16 %v2162, %v2161
      %2211 = vmatprep.subr.bf16.mxu0 0
      %2212 = vmatpush1.bf16.msra.mxu0 %v2163
      %2213 = vmatprep.subr.bf16.mxu0 0
      %2214 = vmatpush1.bf16.msra.mxu0 %v2164
      %2215 = vmatprep.subr.bf16.mxu0 0
      %2216 = vmatpush1.bf16.msra.mxu0 %v2165
      %2217 = vmatprep.subr.bf16.mxu0 0
      %2218 = vmatpush1.bf16.msra.mxu0 %v2166
      %2219 = vmatprep.subr.bf16.mxu0 0
      %2220 = vmatpush1.bf16.msra.mxu0 %v2167
      %2221 = vmatprep.subr.bf16.mxu0 0
      %2222 = vmatpush1.bf16.msra.mxu0 %v2168
      %2223 = vmatprep.subr.bf16.mxu0 0
      %2224 = vmatpush1.bf16.msra.mxu0 %v2169
      %2225 = vmatprep.subr.bf16.mxu0 0
      %2226 = vmatpush1.bf16.msra.mxu0 %v2170
      %2227 = vmatprep.subr.bf16.mxu0 0
      %2228 = vmatpush1.bf16.msra.mxu0 %v2171
      %2229 = vmatprep.subr.bf16.mxu0 0
      %2230 = vmatpush1.bf16.msra.mxu0 %v2172
      %2231 = vmatprep.subr.bf16.mxu0 0
      %2232 = vmatpush1.bf16.msra.mxu0 %v2173
      %2233 = vmatprep.subr.bf16.mxu0 0
      %2234 = vmatpush1.bf16.msra.mxu0 %v2174
      %2235 = vmatprep.subr.bf16.mxu0 0
      %2236 = vmatpush1.bf16.msra.mxu0 %v2175
      %2237 = vmatprep.subr.bf16.mxu0 0
      %2238 = vmatpush1.bf16.msra.mxu0 %v2176
      %2239 = vmatprep.subr.bf16.mxu0 0
      %2240 = vmatpush1.bf16.msra.mxu0 %v2177
      %2241 = vmatprep.subr.bf16.mxu0 0
      %2242 = vmatpush1.bf16.msra.mxu0 %v2178
      %2243 = vmatprep.mubr.bf16.mxu0 %v919
      %2244 = vmatmul.mubr.bf16.gmra.mrb[0].mxu0 %v865
      %v2245 = vpop.f32.mrb[0].mxu0
      %v2246 = vadd.f32 0.0, %v2245
      %v2247 = vpop.f32.mrb[0].mxu0
      %v2248 = vpop.f32.mrb[0].mxu0
      %v2249 = vadd.f32 0.0, %v2248
      %v2250 = vpop.f32.mrb[0].mxu0
      %2251 = vmatprep.mubr.bf16.mxu0 %v920
      %2252 = vmatmul.mubr.bf16.gmra.mrb[0].mxu0 %v866
      %v2253 = vpop.f32.mrb[0].mxu0
      %v2254 = vadd.f32 0.0, %v2253
      %v2255 = vpop.f32.mrb[0].mxu0
      %v2256 = vpop.f32.mrb[0].mxu0
      %v2257 = vadd.f32 0.0, %v2256
      %v2258 = vpop.f32.mrb[0].mxu0
      %2259 = vmatprep.mubr.bf16.mxu0 %v921
      %2260 = vmatmul.mubr.bf16.gmra.mrb[0].mxu0 %v867
      %v2261 = vpop.f32.mrb[0].mxu0
      %v2262 = vadd.f32 0.0, %v2261
      %v2263 = vpop.f32.mrb[0].mxu0
      %v2264 = vpop.f32.mrb[0].mxu0
      %v2265 = vadd.f32 0.0, %v2264
      %v2266 = vpop.f32.mrb[0].mxu0
      %2267 = vmatprep.mubr.bf16.mxu0 %v922
      %2268 = vmatmul.mubr.bf16.gmra.mrb[0].mxu0 %v868
      %v2269 = vpop.f32.mrb[0].mxu0
      %v2270 = vadd.f32 0.0, %v2269
      %v2271 = vpop.f32.mrb[0].mxu0
      %v2272 = vpop.f32.mrb[0].mxu0
      %v2273 = vadd.f32 0.0, %v2272
      %v2274 = vpop.f32.mrb[0].mxu0
      %2275 = vmatprep.mubr.bf16.mxu0 %v923
      %2276 = vmatmul.mubr.bf16.gmra.mrb[0].mxu0 %v869
      %v2277 = vpop.f32.mrb[0].mxu0
      %v2278 = vadd.f32 0.0, %v2277
      %v2279 = vpop.f32.mrb[0].mxu0
      %v2280 = vpop.f32.mrb[0].mxu0
      %v2281 = vadd.f32 0.0, %v2280
      %v2282 = vpop.f32.mrb[0].mxu0
      %2283 = vmatprep.mubr.bf16.mxu0 %v924
      %2284 = vmatmul.mubr.bf16.gmra.mrb[0].mxu0 %v870
      %v2285 = vpop.f32.mrb[0].mxu0
      %v2286 = vadd.f32 0.0, %v2285
      %v2287 = vpop.f32.mrb[0].mxu0
      %v2288 = vpop.f32.mrb[0].mxu0
      %v2289 = vadd.f32 0.0, %v2288
      %v2290 = vpop.f32.mrb[0].mxu0
      %2291 = vmatprep.mubr.bf16.mxu0 %v925
      %2292 = vmatmul.mubr.bf16.gmra.mrb[0].mxu0 %v871
      %v2293 = vpop.f32.mrb[0].mxu0
      %v2294 = vadd.f32 0.0, %v2293
      %v2295 = vpop.f32.mrb[0].mxu0
      %v2296 = vpop.f32.mrb[0].mxu0
      %v2297 = vadd.f32 0.0, %v2296
      %v2298 = vpop.f32.mrb[0].mxu0
      %2299 = vmatprep.mubr.bf16.mxu0 %v926
      %2300 = vmatmul.mubr.bf16.gmra.mrb[0].mxu0 %v872
      %v2301 = vpop.f32.mrb[0].mxu0
      %v2302 = vadd.f32 0.0, %v2301
      %v2303 = vpop.f32.mrb[0].mxu0
      %v2304 = vpop.f32.mrb[0].mxu0
      %v2305 = vadd.f32 0.0, %v2304
      %v2306 = vpop.f32.mrb[0].mxu0
      %2307 = vmatprep.mubr.bf16.mxu0 %v927
      %2308 = vmatmul.mubr.bf16.gmra.mrb[0].mxu0 %v873
      %v2309 = vpop.f32.mrb[0].mxu0
      %v2310 = vadd.f32 0.0, %v2309
      %v2311 = vpop.f32.mrb[0].mxu0
      %v2312 = vpop.f32.mrb[0].mxu0
      %v2313 = vadd.f32 0.0, %v2312
      %v2314 = vpop.f32.mrb[0].mxu0
      %2315 = vmatprep.mubr.bf16.mxu0 %v928
      %2316 = vmatmul.mubr.bf16.gmra.mrb[0].mxu0 %v874
      %v2317 = vpop.f32.mrb[0].mxu0
      %v2318 = vadd.f32 0.0, %v2317
      %v2319 = vpop.f32.mrb[0].mxu0
      %v2320 = vpop.f32.mrb[0].mxu0
      %v2321 = vadd.f32 0.0, %v2320
      %v2322 = vpop.f32.mrb[0].mxu0
      %2323 = vmatprep.mubr.bf16.mxu0 %v929
      %2324 = vmatmul.mubr.bf16.gmra.mrb[0].mxu0 %v875
      %v2325 = vpop.f32.mrb[0].mxu0
      %v2326 = vadd.f32 0.0, %v2325
      %v2327 = vpop.f32.mrb[0].mxu0
      %v2328 = vpop.f32.mrb[0].mxu0
      %v2329 = vadd.f32 0.0, %v2328
      %v2330 = vpop.f32.mrb[0].mxu0
      %2331 = vmatprep.mubr.bf16.mxu0 %v930
      %2332 = vmatmul.mubr.bf16.gmra.mrb[0].mxu0 %v876
      %v2333 = vpop.f32.mrb[0].mxu0
      %v2334 = vadd.f32 0.0, %v2333
      %v2335 = vpop.f32.mrb[0].mxu0
      %v2336 = vpop.f32.mrb[0].mxu0
      %v2337 = vadd.f32 0.0, %v2336
      %v2338 = vpop.f32.mrb[0].mxu0
      %2339 = vmatprep.mubr.bf16.mxu0 %v931
      %2340 = vmatmul.mubr.bf16.gmra.mrb[0].mxu0 %v877
      %v2341 = vpop.f32.mrb[0].mxu0
      %v2342 = vadd.f32 0.0, %v2341
      %v2343 = vpop.f32.mrb[0].mxu0
      %v2344 = vpop.f32.mrb[0].mxu0
      %v2345 = vadd.f32 0.0, %v2344
      %v2346 = vpop.f32.mrb[0].mxu0
      %2347 = vmatprep.mubr.bf16.mxu0 %v932
      %2348 = vmatmul.mubr.bf16.gmra.mrb[0].mxu0 %v878
      %v2349 = vpop.f32.mrb[0].mxu0
      %v2350 = vadd.f32 0.0, %v2349
      %v2351 = vpop.f32.mrb[0].mxu0
      %v2352 = vpop.f32.mrb[0].mxu0
      %v2353 = vadd.f32 0.0, %v2352
      %v2354 = vpop.f32.mrb[0].mxu0
      %2355 = vmatprep.mubr.bf16.mxu0 %v933
      %2356 = vmatmul.mubr.bf16.gmra.mrb[0].mxu0 %v879
      %v2357 = vpop.f32.mrb[0].mxu0
      %v2358 = vadd.f32 0.0, %v2357
      %v2359 = vpop.f32.mrb[0].mxu0
      %v2360 = vpop.f32.mrb[0].mxu0
      %v2361 = vadd.f32 0.0, %v2360
      %v2362 = vpop.f32.mrb[0].mxu0
      %2363 = vmatprep.mubr.bf16.mxu0 %v934
      %2364 = vmatmul.mubr.bf16.gmra.mrb[0].mxu0 %v880
      %v2365 = vpop.f32.mrb[0].mxu0
      %v2366 = vadd.f32 0.0, %v2365
      %v2367 = vpop.f32.mrb[0].mxu0
      %v2368 = vpop.f32.mrb[0].mxu0
      %v2369 = vadd.f32 0.0, %v2368
      %v2370 = vpop.f32.mrb[0].mxu0
      %2371 = vdwg.mxu0
      %2372 = vmatprep.subr.bf16.mxu0 0
      %2373 = vmatpush1.bf16.msra.mxu0 %v2179
      %2374 = vmatprep.subr.bf16.mxu0 0
      %2375 = vmatpush1.bf16.msra.mxu0 %v2180
      %2376 = vmatprep.subr.bf16.mxu0 0
      %2377 = vmatpush1.bf16.msra.mxu0 %v2181
      %2378 = vmatprep.subr.bf16.mxu0 0
      %2379 = vmatpush1.bf16.msra.mxu0 %v2182
      %2380 = vmatprep.subr.bf16.mxu0 0
      %2381 = vmatpush1.bf16.msra.mxu0 %v2183
      %2382 = vmatprep.subr.bf16.mxu0 0
      %2383 = vmatpush1.bf16.msra.mxu0 %v2184
      %2384 = vmatprep.subr.bf16.mxu0 0
      %2385 = vmatpush1.bf16.msra.mxu0 %v2185
      %2386 = vmatprep.subr.bf16.mxu0 0
      %2387 = vmatpush1.bf16.msra.mxu0 %v2186
      %2388 = vmatprep.subr.bf16.mxu0 0
      %2389 = vmatpush1.bf16.msra.mxu0 0
      %2390 = vmatprep.subr.bf16.mxu0 0
      %2391 = vmatpush1.bf16.msra.mxu0 0
      %2392 = vmatprep.subr.bf16.mxu0 0
      %2393 = vmatpush1.bf16.msra.mxu0 0
      %2394 = vmatprep.subr.bf16.mxu0 0
      %2395 = vmatpush1.bf16.msra.mxu0 0
      %2396 = vmatprep.subr.bf16.mxu0 0
      %2397 = vmatpush1.bf16.msra.mxu0 0
      %2398 = vmatprep.subr.bf16.mxu0 0
      %2399 = vmatpush1.bf16.msra.mxu0 0
      %2400 = vmatprep.subr.bf16.mxu0 0
      %2401 = vmatpush1.bf16.msra.mxu0 0
      %2402 = vmatprep.subr.bf16.mxu0 0
      %2403 = vmatpush1.bf16.msra.mxu0 0
      %2404 = vmatprep.mubr.bf16.mxu0 0
      %2405 = vmatmul.mubr.bf16.gmra.mrb[0].mxu0 %v973
      %v2406 = vpop.f32.mrb[0].mxu0
      %v2407 = vadd.f32 %v2246, %v2406
      %v2408 = vpop.f32.mrb[0].mxu0
      %v2409 = vpop.f32.mrb[0].mxu0
      %v2410 = vadd.f32 %v2249, %v2409
      %v2411 = vpop.f32.mrb[0].mxu0
      %2412 = vmatprep.mubr.bf16.mxu0 0
      %2413 = vmatmul.mubr.bf16.gmra.mrb[0].mxu0 %v974
      %v2414 = vpop.f32.mrb[0].mxu0
      %v2415 = vadd.f32 %v2254, %v2414
      %v2416 = vpop.f32.mrb[0].mxu0
      %v2417 = vpop.f32.mrb[0].mxu0
      %v2418 = vadd.f32 %v2257, %v2417
      %v2419 = vpop.f32.mrb[0].mxu0
      %2420 = vmatprep.mubr.bf16.mxu0 0
      %2421 = vmatmul.mubr.bf16.gmra.mrb[0].mxu0 %v975
      %v2422 = vpop.f32.mrb[0].mxu0
      %v2423 = vadd.f32 %v2262, %v2422
      %v2424 = vpop.f32.mrb[0].mxu0
      %v2425 = vpop.f32.mrb[0].mxu0
      %v2426 = vadd.f32 %v2265, %v2425
      %v2427 = vpop.f32.mrb[0].mxu0
      %2428 = vmatprep.mubr.bf16.mxu0 0
      %2429 = vmatmul.mubr.bf16.gmra.mrb[0].mxu0 %v976
      %v2430 = vpop.f32.mrb[0].mxu0
      %v2431 = vadd.f32 %v2270, %v2430
      %v2432 = vpop.f32.mrb[0].mxu0
      %v2433 = vpop.f32.mrb[0].mxu0
      %v2434 = vadd.f32 %v2273, %v2433
      %v2435 = vpop.f32.mrb[0].mxu0
      %2436 = vmatprep.mubr.bf16.mxu0 0
      %2437 = vmatmul.mubr.bf16.gmra.mrb[0].mxu0 %v977
      %v2438 = vpop.f32.mrb[0].mxu0
      %v2439 = vadd.f32 %v2278, %v2438
      %v2440 = vpop.f32.mrb[0].mxu0
      %v2441 = vpop.f32.mrb[0].mxu0
      %v2442 = vadd.f32 %v2281, %v2441
      %v2443 = vpop.f32.mrb[0].mxu0
      %2444 = vmatprep.mubr.bf16.mxu0 0
      %2445 = vmatmul.mubr.bf16.gmra.mrb[0].mxu0 %v978
      %v2446 = vpop.f32.mrb[0].mxu0
      %v2447 = vadd.f32 %v2286, %v2446
      %v2448 = vpop.f32.mrb[0].mxu0
      %v2449 = vpop.f32.mrb[0].mxu0
      %v2450 = vadd.f32 %v2289, %v2449
      %v2451 = vpop.f32.mrb[0].mxu0
      %2452 = vmatprep.mubr.bf16.mxu0 0
      %2453 = vmatmul.mubr.bf16.gmra.mrb[0].mxu0 %v979
      %v2454 = vpop.f32.mrb[0].mxu0
      %v2455 = vadd.f32 %v2294, %v2454
      %v2456 = vpop.f32.mrb[0].mxu0
      %v2457 = vpop.f32.mrb[0].mxu0
      %v2458 = vadd.f32 %v2297, %v2457
      %v2459 = vpop.f32.mrb[0].mxu0
      %2460 = vmatprep.mubr.bf16.mxu0 0
      %2461 = vmatmul.mubr.bf16.gmra.mrb[0].mxu0 %v980
      %v2462 = vpop.f32.mrb[0].mxu0
      %v2463 = vadd.f32 %v2302, %v2462
      %v2464 = vpop.f32.mrb[0].mxu0
      %v2465 = vpop.f32.mrb[0].mxu0
      %v2466 = vadd.f32 %v2305, %v2465
      %v2467 = vpop.f32.mrb[0].mxu0
      %2468 = vmatprep.mubr.bf16.mxu0 0
      %2469 = vmatmul.mubr.bf16.gmra.mrb[0].mxu0 %v981
      %v2470 = vpop.f32.mrb[0].mxu0
      %v2471 = vadd.f32 %v2310, %v2470
      %v2472 = vpop.f32.mrb[0].mxu0
      %v2473 = vpop.f32.mrb[0].mxu0
      %v2474 = vadd.f32 %v2313, %v2473
      %v2475 = vpop.f32.mrb[0].mxu0
      %2476 = vmatprep.mubr.bf16.mxu0 0
      %2477 = vmatmul.mubr.bf16.gmra.mrb[0].mxu0 %v982
      %v2478 = vpop.f32.mrb[0].mxu0
      %v2479 = vadd.f32 %v2318, %v2478
      %v2480 = vpop.f32.mrb[0].mxu0
      %v2481 = vpop.f32.mrb[0].mxu0
      %v2482 = vadd.f32 %v2321, %v2481
      %v2483 = vpop.f32.mrb[0].mxu0
      %2484 = vmatprep.mubr.bf16.mxu0 0
      %2485 = vmatmul.mubr.bf16.gmra.mrb[0].mxu0 %v983
      %v2486 = vpop.f32.mrb[0].mxu0
      %v2487 = vadd.f32 %v2326, %v2486
      %v2488 = vpop.f32.mrb[0].mxu0
      %v2489 = vpop.f32.mrb[0].mxu0
      %v2490 = vadd.f32 %v2329, %v2489
      %v2491 = vpop.f32.mrb[0].mxu0
      %2492 = vmatprep.mubr.bf16.mxu0 0
      %2493 = vmatmul.mubr.bf16.gmra.mrb[0].mxu0 %v984
      %v2494 = vpop.f32.mrb[0].mxu0
      %v2495 = vadd.f32 %v2334, %v2494
      %v2496 = vpop.f32.mrb[0].mxu0
      %v2497 = vpop.f32.mrb[0].mxu0
      %v2498 = vadd.f32 %v2337, %v2497
      %v2499 = vpop.f32.mrb[0].mxu0
      %2500 = vmatprep.mubr.bf16.mxu0 0
      %2501 = vmatmul.mubr.bf16.gmra.mrb[0].mxu0 %v985
      %v2502 = vpop.f32.mrb[0].mxu0
      %v2503 = vadd.f32 %v2342, %v2502
      %v2504 = vpop.f32.mrb[0].mxu0
      %v2505 = vpop.f32.mrb[0].mxu0
      %v2506 = vadd.f32 %v2345, %v2505
      %v2507 = vpop.f32.mrb[0].mxu0
      %2508 = vmatprep.mubr.bf16.mxu0 0
      %2509 = vmatmul.mubr.bf16.gmra.mrb[0].mxu0 %v986
      %v2510 = vpop.f32.mrb[0].mxu0
      %v2511 = vadd.f32 %v2350, %v2510
      %v2512 = vpop.f32.mrb[0].mxu0
      %v2513 = vpop.f32.mrb[0].mxu0
      %v2514 = vadd.f32 %v2353, %v2513
      %v2515 = vpop.f32.mrb[0].mxu0
      %2516 = vmatprep.mubr.bf16.mxu0 0
      %2517 = vmatmul.mubr.bf16.gmra.mrb[0].mxu0 %v987
      %v2518 = vpop.f32.mrb[0].mxu0
      %v2519 = vadd.f32 %v2358, %v2518
      %v2520 = vpop.f32.mrb[0].mxu0
      %v2521 = vpop.f32.mrb[0].mxu0
      %v2522 = vadd.f32 %v2361, %v2521
      %v2523 = vpop.f32.mrb[0].mxu0
      %2524 = vmatprep.mubr.bf16.mxu0 0
      %2525 = vmatmul.mubr.bf16.gmra.mrb[0].mxu0 %v988
      %v2526 = vpop.f32.mrb[0].mxu0
      %v2527 = vadd.f32 %v2366, %v2526
      %v2528 = vpop.f32.mrb[0].mxu0
      %v2529 = vpop.f32.mrb[0].mxu0
      %v2530 = vadd.f32 %v2369, %v2529
      %v2531 = vpop.f32.mrb[0].mxu0
      %2532 = vdwg.mxu0
      %v2533 = vadd.f32 %v1892, %v2407
      %v2534 = vadd.f32 %v1895, %v2410
      %v2535 = vadd.f32 %v1900, %v2415
      %v2536 = vadd.f32 %v1903, %v2418
      %v2537 = vadd.f32 %v1908, %v2423
      %v2538 = vadd.f32 %v1911, %v2426
      %v2539 = vadd.f32 %v1916, %v2431
      %v2540 = vadd.f32 %v1919, %v2434
      %v2541 = vadd.f32 %v1924, %v2439
      %v2542 = vadd.f32 %v1927, %v2442
      %v2543 = vadd.f32 %v1932, %v2447
      %v2544 = vadd.f32 %v1935, %v2450
      %v2545 = vadd.f32 %v1940, %v2455
      %v2546 = vadd.f32 %v1943, %v2458
      %v2547 = vadd.f32 %v1948, %v2463
      %v2548 = vadd.f32 %v1951, %v2466
      %v2549 = vadd.f32 %v1956, %v2471
      %v2550 = vadd.f32 %v1959, %v2474
      %v2551 = vadd.f32 %v1964, %v2479
      %v2552 = vadd.f32 %v1967, %v2482
      %v2553 = vadd.f32 %v1972, %v2487
      %v2554 = vadd.f32 %v1975, %v2490
      %v2555 = vadd.f32 %v1980, %v2495
      %v2556 = vadd.f32 %v1983, %v2498
      %v2557 = vadd.f32 %v1988, %v2503
      %v2558 = vadd.f32 %v1991, %v2506
      %v2559 = vadd.f32 %v1996, %v2511
      %v2560 = vadd.f32 %v1999, %v2514
      %v2561 = vadd.f32 %v2004, %v2519
      %v2562 = vadd.f32 %v2007, %v2522
      %v2563 = vadd.f32 %v2012, %v2527
      %v2564 = vadd.f32 %v2015, %v2530
      %v2565 = vpack.c.bf16 %v2534, %v2533
      %v2566 = vpack.c.bf16 %v2536, %v2535
      %v2567 = vpack.c.bf16 %v2538, %v2537
      %v2568 = vpack.c.bf16 %v2540, %v2539
      %v2569 = vpack.c.bf16 %v2542, %v2541
      %v2570 = vpack.c.bf16 %v2544, %v2543
      %v2571 = vpack.c.bf16 %v2546, %v2545
      %v2572 = vpack.c.bf16 %v2548, %v2547
      %v2573 = vpack.c.bf16 %v2550, %v2549
      %v2574 = vpack.c.bf16 %v2552, %v2551
      %v2575 = vpack.c.bf16 %v2554, %v2553
      %v2576 = vpack.c.bf16 %v2556, %v2555
      %v2577 = vpack.c.bf16 %v2558, %v2557
      %v2578 = vpack.c.bf16 %v2560, %v2559
      %v2579 = vpack.c.bf16 %v2562, %v2561
      %v2580 = vpack.c.bf16 %v2564, %v2563
      %v2597 = vunpack.c.l.b16 %v2565
      %v2598 = vunpack.c.h.b16 %v2565
      %v2599 = vunpack.c.l.b16 %v2566
      %v2600 = vunpack.c.h.b16 %v2566
      %v2601 = vunpack.c.l.b16 %v2567
      %v2602 = vunpack.c.h.b16 %v2567
      %v2603 = vunpack.c.l.b16 %v2568
      %v2604 = vunpack.c.h.b16 %v2568
      %v2605 = vunpack.c.l.b16 %v2569
      %v2606 = vunpack.c.h.b16 %v2569
      %v2607 = vunpack.c.l.b16 %v2570
      %v2608 = vunpack.c.h.b16 %v2570
      %v2609 = vunpack.c.l.b16 %v2571
      %v2610 = vunpack.c.h.b16 %v2571
      %v2611 = vunpack.c.l.b16 %v2572
      %v2612 = vunpack.c.h.b16 %v2572
      %v2613 = vunpack.c.l.b16 %v2573
      %v2614 = vunpack.c.h.b16 %v2573
      %v2615 = vunpack.c.l.b16 %v2574
      %v2616 = vunpack.c.h.b16 %v2574
      %v2617 = vunpack.c.l.b16 %v2575
      %v2618 = vunpack.c.h.b16 %v2575
      %v2619 = vunpack.c.l.b16 %v2576
      %v2620 = vunpack.c.h.b16 %v2576
      %v2621 = vunpack.c.l.b16 %v2577
      %v2622 = vunpack.c.h.b16 %v2577
      %v2623 = vunpack.c.l.b16 %v2578
      %v2624 = vunpack.c.h.b16 %v2578
      %v2625 = vunpack.c.l.b16 %v2579
      %v2626 = vunpack.c.h.b16 %v2579
      %v2627 = vunpack.c.l.b16 %v2580
      %v2628 = vunpack.c.h.b16 %v2580
      %v2629 = vpack.c.b16 %v2597, %v2597
      %v2630 = vpack.c.b16 %v2598, %v2598
      %v2631 = vpack.c.b16 %v2599, %v2599
      %v2632 = vpack.c.b16 %v2600, %v2600
      %v2633 = vpack.c.b16 %v2601, %v2601
      %v2634 = vpack.c.b16 %v2602, %v2602
      %v2635 = vpack.c.b16 %v2603, %v2603
      %v2636 = vpack.c.b16 %v2604, %v2604
      %v2637 = vpack.c.b16 %v2605, %v2605
      %v2638 = vpack.c.b16 %v2606, %v2606
      %v2639 = vpack.c.b16 %v2607, %v2607
      %v2640 = vpack.c.b16 %v2608, %v2608
      %v2641 = vpack.c.b16 %v2609, %v2609
      %v2642 = vpack.c.b16 %v2610, %v2610
      %v2643 = vpack.c.b16 %v2611, %v2611
      %v2644 = vpack.c.b16 %v2612, %v2612
      %v2645 = vpack.c.b16 %v2613, %v2613
      %v2646 = vpack.c.b16 %v2614, %v2614
      %v2647 = vpack.c.b16 %v2615, %v2615
      %v2648 = vpack.c.b16 %v2616, %v2616
      %v2649 = vpack.c.b16 %v2617, %v2617
      %v2650 = vpack.c.b16 %v2618, %v2618
      %v2651 = vpack.c.b16 %v2619, %v2619
      %v2652 = vpack.c.b16 %v2620, %v2620
      %v2653 = vpack.c.b16 %v2621, %v2621
      %v2654 = vpack.c.b16 %v2622, %v2622
      %v2655 = vpack.c.b16 %v2623, %v2623
      %v2656 = vpack.c.b16 %v2624, %v2624
      %v2657 = vpack.c.b16 %v2625, %v2625
      %v2658 = vpack.c.b16 %v2626, %v2626
      %v2659 = vpack.c.b16 %v2627, %v2627
      %v2660 = vpack.c.b16 %v2628, %v2628
      %2693 = vst [vmem:[%s457] sm:$0xf] %v2629
      %2694 = vst [vmem:[%s457 + $0x4] sm:$0xf] %v2630
      %2695 = vst [vmem:[%s457 + $0x8] sm:$0xf] %v2631
      %2696 = vst [vmem:[%s457 + $0xc] sm:$0xf] %v2632
      %2697 = vst [vmem:[%s457 + $0x10] sm:$0xf] %v2633
      %2698 = vst [vmem:[%s457 + $0x14] sm:$0xf] %v2634
      %2699 = vst [vmem:[%s457 + $0x18] sm:$0xf] %v2635
      %2700 = vst [vmem:[%s457 + $0x1c] sm:$0xf] %v2636
      %2701 = vst [vmem:[%s457 + $0x20] sm:$0xf] %v2637
      %2702 = vst [vmem:[%s457 + $0x24] sm:$0xf] %v2638
      %2703 = vst [vmem:[%s457 + $0x28] sm:$0xf] %v2639
      %2704 = vst [vmem:[%s457 + $0x2c] sm:$0xf] %v2640
      %2705 = vst [vmem:[%s457 + $0x30] sm:$0xf] %v2641
      %2706 = vst [vmem:[%s457 + $0x34] sm:$0xf] %v2642
      %2707 = vst [vmem:[%s457 + $0x38] sm:$0xf] %v2643
      %2708 = vst [vmem:[%s457 + $0x3c] sm:$0xf] %v2644
      %2709 = vst [vmem:[%s457 + $0x40] sm:$0xf] %v2645
      %2710 = vst [vmem:[%s457 + $0x44] sm:$0xf] %v2646
      %2711 = vst [vmem:[%s457 + $0x48] sm:$0xf] %v2647
      %2712 = vst [vmem:[%s457 + $0x4c] sm:$0xf] %v2648
      %2713 = vst [vmem:[%s457 + $0x50] sm:$0xf] %v2649
      %2714 = vst [vmem:[%s457 + $0x54] sm:$0xf] %v2650
      %2715 = vst [vmem:[%s457 + $0x58] sm:$0xf] %v2651
      %2716 = vst [vmem:[%s457 + $0x5c] sm:$0xf] %v2652
      %2717 = vst [vmem:[%s457 + $0x60] sm:$0xf] %v2653
      %2718 = vst [vmem:[%s457 + $0x64] sm:$0xf] %v2654
      %2719 = vst [vmem:[%s457 + $0x68] sm:$0xf] %v2655
      %2720 = vst [vmem:[%s457 + $0x6c] sm:$0xf] %v2656
      %2721 = vst [vmem:[%s457 + $0x70] sm:$0xf] %v2657
      %2722 = vst [vmem:[%s457 + $0x74] sm:$0xf] %v2658
      %2723 = vst [vmem:[%s457 + $0x78] sm:$0xf] %v2659
      %2724 = vst [vmem:[%s457 + $0x7c] sm:$0xf] %v2660
      %v2725 = vadd.f32 %v2533, %v2534
      %v2726 = vadd.f32 %v2725, %v2535
      %v2727 = vadd.f32 %v2726, %v2536
      %v2728 = vadd.f32 %v2727, %v2537
      %v2729 = vadd.f32 %v2728, %v2538
      %v2730 = vadd.f32 %v2729, %v2539
      %v2731 = vadd.f32 %v2730, %v2540
      %v2732 = vadd.f32 %v2731, %v2541
      %v2733 = vadd.f32 %v2732, %v2542
      %v2734 = vadd.f32 %v2733, %v2543
      %v2735 = vadd.f32 %v2734, %v2544
      %v2736 = vadd.f32 %v2735, %v2545
      %v2737 = vadd.f32 %v2736, %v2546
      %v2738 = vadd.f32 %v2737, %v2547
      %v2739 = vadd.f32 %v2738, %v2548
      %v2740 = vadd.f32 %v2739, %v2549
      %v2741 = vadd.f32 %v2740, %v2550
      %v2742 = vadd.f32 %v2741, %v2551
      %v2743 = vadd.f32 %v2742, %v2552
      %v2744 = vadd.f32 %v2743, %v2553
      %v2745 = vadd.f32 %v2744, %v2554
      %v2746 = vadd.f32 %v2745, %v2555
      %v2747 = vadd.f32 %v2746, %v2556
      %v2748 = vadd.f32 %v2747, %v2557
      %v2749 = vadd.f32 %v2748, %v2558
      %v2750 = vadd.f32 %v2749, %v2559
      %v2751 = vadd.f32 %v2750, %v2560
      %v2752 = vadd.f32 %v2751, %v2561
      %v2753 = vadd.f32 %v2752, %v2562
      %v2754 = vadd.f32 %v2753, %v2563
      %v2755 = vadd.f32 %v2754, %v2564
      %v2756 = vrot.slane %v2755, 4
      %v2757 = vadd.f32 %v2755, %v2756
      %v2758 = vrot.slane %v2757, 2
      %v2759 = vadd.f32 %v2757, %v2758
      %v2760 = vrot.slane %v2759, 1
      %v2761 = vadd.f32 %v2759, %v2760
      %v2762 = vmul.f32 %v2533, %v2533
      %v2763 = vmul.f32 %v2534, %v2534
      %v2764 = vmul.f32 %v2535, %v2535
      %v2765 = vmul.f32 %v2536, %v2536
      %v2766 = vmul.f32 %v2537, %v2537
      %v2767 = vmul.f32 %v2538, %v2538
      %v2768 = vmul.f32 %v2539, %v2539
      %v2769 = vmul.f32 %v2540, %v2540
      %v2770 = vmul.f32 %v2541, %v2541
      %v2771 = vmul.f32 %v2542, %v2542
      %v2772 = vmul.f32 %v2543, %v2543
      %v2773 = vmul.f32 %v2544, %v2544
      %v2774 = vmul.f32 %v2545, %v2545
      %v2775 = vmul.f32 %v2546, %v2546
      %v2776 = vmul.f32 %v2547, %v2547
      %v2777 = vmul.f32 %v2548, %v2548
      %v2778 = vmul.f32 %v2549, %v2549
      %v2779 = vmul.f32 %v2550, %v2550
      %v2780 = vmul.f32 %v2551, %v2551
      %v2781 = vmul.f32 %v2552, %v2552
      %v2782 = vmul.f32 %v2553, %v2553
      %v2783 = vmul.f32 %v2554, %v2554
      %v2784 = vmul.f32 %v2555, %v2555
      %v2785 = vmul.f32 %v2556, %v2556
      %v2786 = vmul.f32 %v2557, %v2557
      %v2787 = vmul.f32 %v2558, %v2558
      %v2788 = vmul.f32 %v2559, %v2559
      %v2789 = vmul.f32 %v2560, %v2560
      %v2790 = vmul.f32 %v2561, %v2561
      %v2791 = vmul.f32 %v2562, %v2562
      %v2792 = vmul.f32 %v2563, %v2563
      %v2793 = vmul.f32 %v2564, %v2564
      %v2794 = vadd.f32 %v2762, %v2763
      %v2795 = vadd.f32 %v2794, %v2764
      %v2796 = vadd.f32 %v2795, %v2765
      %v2797 = vadd.f32 %v2796, %v2766
      %v2798 = vadd.f32 %v2797, %v2767
      %v2799 = vadd.f32 %v2798, %v2768
      %v2800 = vadd.f32 %v2799, %v2769
      %v2801 = vadd.f32 %v2800, %v2770
      %v2802 = vadd.f32 %v2801, %v2771
      %v2803 = vadd.f32 %v2802, %v2772
      %v2804 = vadd.f32 %v2803, %v2773
      %v2805 = vadd.f32 %v2804, %v2774
      %v2806 = vadd.f32 %v2805, %v2775
      %v2807 = vadd.f32 %v2806, %v2776
      %v2808 = vadd.f32 %v2807, %v2777
      %v2809 = vadd.f32 %v2808, %v2778
      %v2810 = vadd.f32 %v2809, %v2779
      %v2811 = vadd.f32 %v2810, %v2780
      %v2812 = vadd.f32 %v2811, %v2781
      %v2813 = vadd.f32 %v2812, %v2782
      %v2814 = vadd.f32 %v2813, %v2783
      %v2815 = vadd.f32 %v2814, %v2784
      %v2816 = vadd.f32 %v2815, %v2785
      %v2817 = vadd.f32 %v2816, %v2786
      %v2818 = vadd.f32 %v2817, %v2787
      %v2819 = vadd.f32 %v2818, %v2788
      %v2820 = vadd.f32 %v2819, %v2789
      %v2821 = vadd.f32 %v2820, %v2790
      %v2822 = vadd.f32 %v2821, %v2791
      %v2823 = vadd.f32 %v2822, %v2792
      %v2824 = vadd.f32 %v2823, %v2793
      %v2825 = vrot.slane %v2824, 4
      %v2826 = vadd.f32 %v2824, %v2825
      %v2827 = vrot.slane %v2826, 2
      %v2828 = vadd.f32 %v2826, %v2827
      %v2829 = vrot.slane %v2828, 1
      %v2830 = vadd.f32 %v2828, %v2829
      %vm2831 = vcmask 1040384
      %v2832 = vsel %vm2831, %v2761, %v2830
      %2833 = vst [vmem:[%s465] sm:$0x3] %v2832
      %s2834 = smul.u32 16, %s24
      %p2835 = scmp.lt.s32.totalorder %s23, 1
      %s2836 = scalar_select %p2835, %s23, 1
      %p2837 = scmp.lt.s32.totalorder %s2834, 15
      %s2838 = scalar_select %p2837, %s2834, 15
      %s2839 = smul.addr %s2838, 2
      %s2840 = smul.addr %s2836, 32
      %s2841 = sadd.s32 %s2839, %s2840
      %s2842 = smul.addr %s2841, 4
      %s2843 = scalar_lea.vmem %s6, %s2842
      %p2844 = scmp.lt.s32.totalorder %s23, 1
      %s2845 = scalar_select %p2844, %s23, 1
      %p2846 = scmp.lt.s32.totalorder %s24, 0
      %s2847 = scalar_select %p2846, %s24, 0
      %s2848 = sadd.s32 %s2847, %s2845
      %s2849 = smul.addr %s2848, 2
      %s2850 = scalar_lea.vmem %s7, %s2849
      // Predicated region
      $region61: #{upsample_bn_forward.4} parent=43 // pred_check
        %p2851 = pneg %p214
      $region62: #{upsample_bn_forward.4} parent=43 // pred_check_branch
        %2853 = sbr.rel (%p2851) target = $region64
      $region63: #{upsample_bn_forward.4} parent=43 // pred_region
        %s2854 = smul.u32 16, %s24
      $region64: #{upsample_bn_forward.4} parent=43 // pred_fallthru
        _
      // Predicated region
      $region65: #{upsample_bn_forward.4} parent=43 // pred_check
        %p2855 = pneg %p242
      $region66: #{upsample_bn_forward.4} parent=43 // pred_check_branch
        %2857 = sbr.rel (%p2855) target = $region68
      $region67: #{upsample_bn_forward.4} parent=43 // pred_region
        _
      $region68: #{upsample_bn_forward.4} parent=43 // pred_fallthru
        _
    $region44: #{upsample_bn_forward.4} parent=5 // pred_fallthru
      _
    %p2858 = scmp.le.s32.totalorder 2, %s14
    // Predicated region
    $region69: #{upsample_bn_forward.4} parent=5 // pred_check
      %p2859 = pneg %p2858
    $region70: #{upsample_bn_forward.4} parent=5 // pred_check_branch
      %2861 = sbr.rel (%p2859) target = $region72
    $region71: #{upsample_bn_forward.4} parent=5 // pred_region
      %s2862 = ssub.s32 %s14, 2
      // Predicated region
      $region73: #{upsample_bn_forward.4} parent=71 // pred_check
        %p2863 = pneg %p220
      $region74: #{upsample_bn_forward.4} parent=71 // pred_check_branch
        %2865 = sbr.rel (%p2863) target = $region76
      $region75: #{upsample_bn_forward.4} parent=71 // pred_region
        %s2866 = smul.u32 16, %s26
        %p2867 = scmp.lt.s32.totalorder %s25, 1
        %s2868 = scalar_select %p2867, %s25, 1
        %p2869 = scmp.lt.s32.totalorder %s2866, 15
        %s2870 = scalar_select %p2869, %s2866, 15
        %s2871 = smul.addr %s2870, 2
        %s2872 = smul.addr %s2868, 32
        %s2873 = sadd.s32 %s2871, %s2872
        %s2874 = smul.addr %s2873, 4
        %s2875 = scalar_lea.vmem %s6, %s2874
      $region76: #{upsample_bn_forward.4} parent=71 // pred_fallthru
        _
      // Predicated region
      $region77: #{upsample_bn_forward.4} parent=71 // pred_check
        %p2876 = pneg %p248
      $region78: #{upsample_bn_forward.4} parent=71 // pred_check_branch
        %2878 = sbr.rel (%p2876) target = $region80
      $region79: #{upsample_bn_forward.4} parent=71 // pred_region
        %p2879 = scmp.lt.s32.totalorder %s25, 1
        %s2880 = scalar_select %p2879, %s25, 1
        %p2881 = scmp.lt.s32.totalorder %s26, 0
        %s2882 = scalar_select %p2881, %s26, 0
        %s2883 = sadd.s32 %s2882, %s2880
        %s2884 = smul.addr %s2883, 2
        %s2885 = scalar_lea.vmem %s7, %s2884
      $region80: #{upsample_bn_forward.4} parent=71 // pred_fallthru
        _
    $region72: #{upsample_bn_forward.4} parent=5 // pred_fallthru
      _
  $region6: #{upsample_bn_forward.4} parent=0 // loop_footer
    %s18 = sadd.s32 1, %s14
  $region7: #{upsample_bn_forward.4} parent=0 // loop_footer_branch
    %13 = sbr.rel target = $region3
  $region8: #{upsample_bn_forward.4} parent=0 // loop_exit
    _

// kernel: upsample_bn_forward.3
$region0: #{upsample_bn_forward.3}
  #allocation0 [shape = 'u32[]', space=smem, size = 0x4, offset = 0x4, fixed_abs, tag = 'smem constant byte address 0x4 - core index']
  #allocation1 [shape = 'u32[144,128]{1,0:T(1,128)}', space=vmem, size = 0x12000, scoped, tag = 'internal scratch']
  #allocation2 [shape = 'f32[18,24,3]{2,1,0:T(8,128)}', space=vmem, size = 0x36000, scoped, tag = 'scratch operand']
  #allocation3 [shape = 'f32[18,24,5]{2,1,0:T(8,128)}', space=vmem, size = 0x36000, scoped, tag = 'scratch operand']
  %s0 = inlined_call_operand.vmem [shape: bf16[2,16,16,3], index: 0, kind: input, shape index: {}, may-alias: {0,1,2}]
  %s1 = inlined_call_operand.vmem [shape: bf16[2,16,16,3], index: 1, kind: input, shape index: {}, may-alias: {0,1,2}]
  %s2 = inlined_call_operand.vmem [shape: bf16[2,16,16,3], index: 2, kind: input, shape index: {}, may-alias: {0,1,2}]
  %s3 = inlined_call_operand.vmem [shape: bf16[2,16,16,5], index: 3, kind: input, shape index: {}, may-alias: {3,4,5}]
  %s4 = inlined_call_operand.vmem [shape: bf16[2,16,16,5], index: 4, kind: input, shape index: {}, may-alias: {3,4,5}]
  %s5 = inlined_call_operand.vmem [shape: bf16[2,16,16,5], index: 5, kind: input, shape index: {}, may-alias: {3,4,5}]
  %s6 = inlined_call_operand.vmem [shape: bf16[9,3,128], index: 6, kind: input, shape index: {}]
  %s7 = inlined_call_operand.vmem [shape: bf16[9,5,128], index: 7, kind: input, shape index: {}]
  %s8 = inlined_call_operand.vmem [shape: bf16[2,16,16,128], index: 8, kind: output, shape index: {0}]
  %s9 = inlined_call_operand.vmem [shape: f32[2,1,2,128], index: 9, kind: output, shape index: {1}]
  %10 = xla_tuple %s8, %s9
  %s11 = sld [smem:[#allocation0]]
  $region105: #{upsample_bn_forward.3} parent=0
    _
  %s13 = ssub.s32 1, %s11
  %s14 = scalar_select 0, %s13, %s11
  loop: start=0, step=1, limit=4
  $region2: #{upsample_bn_forward.3} parent=0 // loop_pre_header
    _
  $region3: #{upsample_bn_forward.3} parent=0 // loop_header
    %s16 = sphi 0, %s20
    %p17 = scmp.ge.s32.totalorder %s16, 4
    %s23 = sphi 0, %s35
    %s24 = sphi 0, %s31
    %s25 = sphi 0, %s23
    %s26 = sphi 0, %s24
    %s27 = sphi 0, %s25
    %s28 = sphi 0, %s26
    %s40 = sphi 0, %s42
    %s43 = sphi 0, %s40
    %s44 = sphi 0, %s43
    %s60 = sphi 0, %s44
    %s76 = sphi 0, %s78
    %s79 = sphi 0, %s76
    %s80 = sphi 0, %s79
    %s96 = sphi 0, %s80
    %s112 = sphi 0, %s114
    %s115 = sphi 0, %s112
    %s116 = sphi 0, %s115
    %s132 = sphi 0, %s116
    %s140 = sphi 0, %s142
    %s143 = sphi 0, %s140
    %s144 = sphi 0, %s143
    %s160 = sphi 0, %s144
    %s176 = sphi 0, %s178
    %s179 = sphi 0, %s176
    %s180 = sphi 0, %s179
    %s196 = sphi 0, %s180
    %s212 = sphi 0, %s214
    %s215 = sphi 0, %s212
    %s216 = sphi 0, %s215
    %s232 = sphi 0, %s216
    %s236 = sphi 0, %s236
    %s238 = sphi 0, %s236
    %s239 = sphi 0, %s238
    %s253 = sphi 0, %s239
    %s257 = sphi 0, %s257
    %s259 = sphi 0, %s257
    %s260 = sphi 0, %s259
    %s274 = sphi 0, %s260
    %s282 = sphi 0, %s284
    %s285 = sphi 0, %s282
    %s286 = sphi 0, %s285
    %s302 = sphi 0, %s286
    %s310 = sphi 0, %s312
    %s313 = sphi 0, %s310
    %s314 = sphi 0, %s313
    %s330 = sphi 0, %s314
  $region4: #{upsample_bn_forward.3} parent=0 // loop_header_branch
    %19 = sbr.rel (%p17) target = $region8
  $region5: #{upsample_bn_forward.3} parent=0 // loop_body
    %s21 = ssub.s32 %s16, 1
    %s22 = ssub.s32 %s16, 2
    %s29 = sadd.s32 1, %s24
    %p30 = scmp.ge.s32.totalorder %s29, 1
    %s31 = scalar_select %p30, 0, %s29
    %s32 = sadd.s32 1, %s23
    %s33 = scalar_select %p30, %s32, %s23
    %p34 = scmp.ge.s32.totalorder %s33, 2
    %s35 = scalar_select %p34, 0, %s33
    %s36 = ssub.s32 %s23, %s35
    %s37 = ssub.s32 %s24, %s31
    %s38 = sor.u32 %s36, %s37
    %p39 = scmp.eq.s32.totalorder %s38, 0
    %s41 = sadd.s32 %s40, 1
    %s42 = scalar_select %p39, %s40, %s41
    %p45 = pneg %p39
    %p46 = scmp.eq.s32.totalorder %s16, 1
    %p47 = por %p45, %p46
    %p48 = scmp.ne.s32.totalorder %s40, %s43
    %p49 = scmp.eq.s32.totalorder %s16, 0
    %p50 = por %p48, %p49
    %p51 = scmp.ne.s32.totalorder %s40, %s43
    %p52 = scmp.eq.s32.totalorder %s21, 1
    %p53 = por %p51, %p52
    %p54 = scmp.ne.s32.totalorder %s43, %s44
    %p55 = scmp.eq.s32.totalorder %s21, 0
    %p56 = por %p54, %p55
    %p57 = scmp.ne.s32.totalorder %s43, %s44
    %p58 = scmp.eq.s32.totalorder %s22, 1
    %p59 = por %p57, %p58
    %p61 = scmp.ne.s32.totalorder %s44, %s60
    %p62 = scmp.eq.s32.totalorder %s22, 0
    %p63 = por %p61, %p62
    %s64 = smul.u32 %s24, 16
    %s65 = ssub.s32 %s64, 1
    %p66 = scmp.gt.s32.totalorder %s65, 0
    %s67 = scalar_select %p66, %s65, 0
    %s68 = smul.u32 %s31, 16
    %s69 = ssub.s32 %s68, 1
    %p70 = scmp.gt.s32.totalorder %s69, 0
    %s71 = scalar_select %p70, %s69, 0
    %s72 = ssub.s32 %s23, %s35
    %s73 = ssub.s32 %s67, %s71
    %s74 = sor.u32 %s72, %s73
    %p75 = scmp.eq.s32.totalorder %s74, 0
    %s77 = sadd.s32 %s76, 1
    %s78 = scalar_select %p75, %s76, %s77
    %p81 = pneg %p75
    %p82 = scmp.eq.s32.totalorder %s16, 1
    %p83 = por %p81, %p82
    %p84 = scmp.ne.s32.totalorder %s76, %s79
    %p85 = scmp.eq.s32.totalorder %s16, 0
    %p86 = por %p84, %p85
    %p87 = scmp.ne.s32.totalorder %s76, %s79
    %p88 = scmp.eq.s32.totalorder %s21, 1
    %p89 = por %p87, %p88
    %p90 = scmp.ne.s32.totalorder %s79, %s80
    %p91 = scmp.eq.s32.totalorder %s21, 0
    %p92 = por %p90, %p91
    %p93 = scmp.ne.s32.totalorder %s79, %s80
    %p94 = scmp.eq.s32.totalorder %s22, 1
    %p95 = por %p93, %p94
    %p97 = scmp.ne.s32.totalorder %s80, %s96
    %p98 = scmp.eq.s32.totalorder %s22, 0
    %p99 = por %p97, %p98
    %s100 = sadd.s32 %s24, 1
    %s101 = smul.u32 %s100, 16
    %p102 = scmp.lt.s32.totalorder %s101, 15
    %s103 = scalar_select %p102, %s101, 15
    %s104 = sadd.s32 %s31, 1
    %s105 = smul.u32 %s104, 16
    %p106 = scmp.lt.s32.totalorder %s105, 15
    %s107 = scalar_select %p106, %s105, 15
    %s108 = ssub.s32 %s23, %s35
    %s109 = ssub.s32 %s103, %s107
    %s110 = sor.u32 %s108, %s109
    %p111 = scmp.eq.s32.totalorder %s110, 0
    %s113 = sadd.s32 %s112, 1
    %s114 = scalar_select %p111, %s112, %s113
    %p117 = pneg %p111
    %p118 = scmp.eq.s32.totalorder %s16, 1
    %p119 = por %p117, %p118
    %p120 = scmp.ne.s32.totalorder %s112, %s115
    %p121 = scmp.eq.s32.totalorder %s16, 0
    %p122 = por %p120, %p121
    %p123 = scmp.ne.s32.totalorder %s112, %s115
    %p124 = scmp.eq.s32.totalorder %s21, 1
    %p125 = por %p123, %p124
    %p126 = scmp.ne.s32.totalorder %s115, %s116
    %p127 = scmp.eq.s32.totalorder %s21, 0
    %p128 = por %p126, %p127
    %p129 = scmp.ne.s32.totalorder %s115, %s116
    %p130 = scmp.eq.s32.totalorder %s22, 1
    %p131 = por %p129, %p130
    %p133 = scmp.ne.s32.totalorder %s116, %s132
    %p134 = scmp.eq.s32.totalorder %s22, 0
    %p135 = por %p133, %p134
    %s136 = ssub.s32 %s23, %s35
    %s137 = ssub.s32 %s24, %s31
    %s138 = sor.u32 %s136, %s137
    %p139 = scmp.eq.s32.totalorder %s138, 0
    %s141 = sadd.s32 %s140, 1
    %s142 = scalar_select %p139, %s140, %s141
    %p145 = pneg %p139
    %p146 = scmp.eq.s32.totalorder %s16, 1
    %p147 = por %p145, %p146
    %p148 = scmp.ne.s32.totalorder %s140, %s143
    %p149 = scmp.eq.s32.totalorder %s16, 0
    %p150 = por %p148, %p149
    %p151 = scmp.ne.s32.totalorder %s140, %s143
    %p152 = scmp.eq.s32.totalorder %s21, 1
    %p153 = por %p151, %p152
    %p154 = scmp.ne.s32.totalorder %s143, %s144
    %p155 = scmp.eq.s32.totalorder %s21, 0
    %p156 = por %p154, %p155
    %p157 = scmp.ne.s32.totalorder %s143, %s144
    %p158 = scmp.eq.s32.totalorder %s22, 1
    %p159 = por %p157, %p158
    %p161 = scmp.ne.s32.totalorder %s144, %s160
    %p162 = scmp.eq.s32.totalorder %s22, 0
    %p163 = por %p161, %p162
    %s164 = smul.u32 %s24, 16
    %s165 = ssub.s32 %s164, 1
    %p166 = scmp.gt.s32.totalorder %s165, 0
    %s167 = scalar_select %p166, %s165, 0
    %s168 = smul.u32 %s31, 16
    %s169 = ssub.s32 %s168, 1
    %p170 = scmp.gt.s32.totalorder %s169, 0
    %s171 = scalar_select %p170, %s169, 0
    %s172 = ssub.s32 %s23, %s35
    %s173 = ssub.s32 %s167, %s171
    %s174 = sor.u32 %s172, %s173
    %p175 = scmp.eq.s32.totalorder %s174, 0
    %s177 = sadd.s32 %s176, 1
    %s178 = scalar_select %p175, %s176, %s177
    %p181 = pneg %p175
    %p182 = scmp.eq.s32.totalorder %s16, 1
    %p183 = por %p181, %p182
    %p184 = scmp.ne.s32.totalorder %s176, %s179
    %p185 = scmp.eq.s32.totalorder %s16, 0
    %p186 = por %p184, %p185
    %p187 = scmp.ne.s32.totalorder %s176, %s179
    %p188 = scmp.eq.s32.totalorder %s21, 1
    %p189 = por %p187, %p188
    %p190 = scmp.ne.s32.totalorder %s179, %s180
    %p191 = scmp.eq.s32.totalorder %s21, 0
    %p192 = por %p190, %p191
    %p193 = scmp.ne.s32.totalorder %s179, %s180
    %p194 = scmp.eq.s32.totalorder %s22, 1
    %p195 = por %p193, %p194
    %p197 = scmp.ne.s32.totalorder %s180, %s196
    %p198 = scmp.eq.s32.totalorder %s22, 0
    %p199 = por %p197, %p198
    %s200 = sadd.s32 %s24, 1
    %s201 = smul.u32 %s200, 16
    %p202 = scmp.lt.s32.totalorder %s201, 15
    %s203 = scalar_select %p202, %s201, 15
    %s204 = sadd.s32 %s31, 1
    %s205 = smul.u32 %s204, 16
    %p206 = scmp.lt.s32.totalorder %s205, 15
    %s207 = scalar_select %p206, %s205, 15
    %s208 = ssub.s32 %s23, %s35
    %s209 = ssub.s32 %s203, %s207
    %s210 = sor.u32 %s208, %s209
    %p211 = scmp.eq.s32.totalorder %s210, 0
    %s213 = sadd.s32 %s212, 1
    %s214 = scalar_select %p211, %s212, %s213
    %p217 = pneg %p211
    %p218 = scmp.eq.s32.totalorder %s16, 1
    %p219 = por %p217, %p218
    %p220 = scmp.ne.s32.totalorder %s212, %s215
    %p221 = scmp.eq.s32.totalorder %s16, 0
    %p222 = por %p220, %p221
    %p223 = scmp.ne.s32.totalorder %s212, %s215
    %p224 = scmp.eq.s32.totalorder %s21, 1
    %p225 = por %p223, %p224
    %p226 = scmp.ne.s32.totalorder %s215, %s216
    %p227 = scmp.eq.s32.totalorder %s21, 0
    %p228 = por %p226, %p227
    %p229 = scmp.ne.s32.totalorder %s215, %s216
    %p230 = scmp.eq.s32.totalorder %s22, 1
    %p231 = por %p229, %p230
    %p233 = scmp.ne.s32.totalorder %s216, %s232
    %p234 = scmp.eq.s32.totalorder %s22, 0
    %p235 = por %p233, %p234
    %s237 = sadd.s32 %s236, 1
    %p240 = scmp.eq.s32.totalorder %s16, 1
    %p241 = scmp.ne.s32.totalorder %s236, %s238
    %p242 = scmp.eq.s32.totalorder %s16, 0
    %p243 = por %p241, %p242
    %p244 = scmp.ne.s32.totalorder %s236, %s238
    %p245 = scmp.eq.s32.totalorder %s21, 1
    %p246 = por %p244, %p245
    %p247 = scmp.ne.s32.totalorder %s238, %s239
    %p248 = scmp.eq.s32.totalorder %s21, 0
    %p249 = por %p247, %p248
    %p250 = scmp.ne.s32.totalorder %s238, %s239
    %p251 = scmp.eq.s32.totalorder %s22, 1
    %p252 = por %p250, %p251
    %p254 = scmp.ne.s32.totalorder %s239, %s253
    %p255 = scmp.eq.s32.totalorder %s22, 0
    %p256 = por %p254, %p255
    %s258 = sadd.s32 %s257, 1
    %p261 = scmp.eq.s32.totalorder %s16, 1
    %p262 = scmp.ne.s32.totalorder %s257, %s259
    %p263 = scmp.eq.s32.totalorder %s16, 0
    %p264 = por %p262, %p263
    %p265 = scmp.ne.s32.totalorder %s257, %s259
    %p266 = scmp.eq.s32.totalorder %s21, 1
    %p267 = por %p265, %p266
    %p268 = scmp.ne.s32.totalorder %s259, %s260
    %p269 = scmp.eq.s32.totalorder %s21, 0
    %p270 = por %p268, %p269
    %p271 = scmp.ne.s32.totalorder %s259, %s260
    %p272 = scmp.eq.s32.totalorder %s22, 1
    %p273 = por %p271, %p272
    %p275 = scmp.ne.s32.totalorder %s260, %s274
    %p276 = scmp.eq.s32.totalorder %s22, 0
    %p277 = por %p275, %p276
    %s278 = ssub.s32 %s23, %s35
    %s279 = ssub.s32 %s24, %s31
    %s280 = sor.u32 %s278, %s279
    %p281 = scmp.eq.s32.totalorder %s280, 0
    %s283 = sadd.s32 %s282, 1
    %s284 = scalar_select %p281, %s282, %s283
    %p287 = pneg %p281
    %p288 = scmp.eq.s32.totalorder %s16, 1
    %p289 = por %p287, %p288
    %p290 = scmp.ne.s32.totalorder %s282, %s285
    %p291 = scmp.eq.s32.totalorder %s16, 0
    %p292 = por %p290, %p291
    %p293 = scmp.ne.s32.totalorder %s282, %s285
    %p294 = scmp.eq.s32.totalorder %s21, 1
    %p295 = por %p293, %p294
    %p296 = scmp.ne.s32.totalorder %s285, %s286
    %p297 = scmp.eq.s32.totalorder %s21, 0
    %p298 = por %p296, %p297
    %p299 = scmp.ne.s32.totalorder %s285, %s286
    %p300 = scmp.eq.s32.totalorder %s22, 1
    %p301 = por %p299, %p300
    %p303 = scmp.ne.s32.totalorder %s286, %s302
    %p304 = scmp.eq.s32.totalorder %s22, 0
    %p305 = por %p303, %p304
    %s306 = ssub.s32 %s23, %s35
    %s307 = ssub.s32 %s24, %s31
    %s308 = sor.u32 %s306, %s307
    %p309 = scmp.eq.s32.totalorder %s308, 0
    %s311 = sadd.s32 %s310, 1
    %s312 = scalar_select %p309, %s310, %s311
    %p315 = pneg %p309
    %p316 = scmp.eq.s32.totalorder %s16, 1
    %p317 = por %p315, %p316
    %p318 = scmp.ne.s32.totalorder %s310, %s313
    %p319 = scmp.eq.s32.totalorder %s16, 0
    %p320 = por %p318, %p319
    %p321 = scmp.ne.s32.totalorder %s310, %s313
    %p322 = scmp.eq.s32.totalorder %s21, 1
    %p323 = por %p321, %p322
    %p324 = scmp.ne.s32.totalorder %s313, %s314
    %p325 = scmp.eq.s32.totalorder %s21, 0
    %p326 = por %p324, %p325
    %p327 = scmp.ne.s32.totalorder %s313, %s314
    %p328 = scmp.eq.s32.totalorder %s22, 1
    %p329 = por %p327, %p328
    %p331 = scmp.ne.s32.totalorder %s314, %s330
    %p332 = scmp.eq.s32.totalorder %s22, 0
    %p333 = por %p331, %p332
    %p334 = scmp.le.s32.totalorder 1, %s16
    %p335 = scmp.lt.s32.totalorder %s16, 3
    %p336 = pnand %p334, %p335
    %p337 = pneg %p336
    // Predicated region
    $region9: #{upsample_bn_forward.3} parent=5 // pred_check
      _
    $region10: #{upsample_bn_forward.3} parent=5 // pred_check_branch
      %339 = sbr.rel (%p336) target = $region12
    $region11: #{upsample_bn_forward.3} parent=5 // pred_region
      %s340 = ssub.s32 %s16, 1
      // Predicated region
      $region13: #{upsample_bn_forward.3} parent=11 // pred_check
        %p341 = pneg %p249
      $region14: #{upsample_bn_forward.3} parent=11 // pred_check_branch
        %343 = sbr.rel (%p341) target = $region16
      $region15: #{upsample_bn_forward.3} parent=11 // pred_region
        _
      $region16: #{upsample_bn_forward.3} parent=11 // pred_fallthru
        _
      // Predicated region
      $region17: #{upsample_bn_forward.3} parent=11 // pred_check
        %p344 = pneg %p270
      $region18: #{upsample_bn_forward.3} parent=11 // pred_check_branch
        %346 = sbr.rel (%p344) target = $region20
      $region19: #{upsample_bn_forward.3} parent=11 // pred_region
        _
      $region20: #{upsample_bn_forward.3} parent=11 // pred_fallthru
        _
    $region12: #{upsample_bn_forward.3} parent=5 // pred_fallthru
      _
    %p347 = scmp.lt.s32.totalorder %s16, 2
    // Predicated region
    $region21: #{upsample_bn_forward.3} parent=5 // pred_check
      %p348 = pneg %p347
    $region22: #{upsample_bn_forward.3} parent=5 // pred_check_branch
      %350 = sbr.rel (%p348) target = $region24
    $region23: #{upsample_bn_forward.3} parent=5 // pred_region
      // Predicated region
      $region25: #{upsample_bn_forward.3} parent=23 // pred_check
        %p351 = pneg %p50
      $region26: #{upsample_bn_forward.3} parent=23 // pred_check_branch
        %353 = sbr.rel (%p351) target = $region28
      $region27: #{upsample_bn_forward.3} parent=23 // pred_region
        %s354 = smul.u32 16, %s24
        %p355 = scmp.lt.s32.totalorder %s23, 1
        %s356 = scalar_select %p355, %s23, 1
        %p357 = scmp.lt.s32.totalorder %s354, 15
        %s358 = scalar_select %p357, %s354, 15
        %s359 = smul.addr %s358, 2
        %s360 = smul.addr %s356, 32
        %s361 = sadd.s32 %s359, %s360
        %s362 = smul.addr %s361, 4
        %s363 = scalar_lea.vmem %s0, %s362
        %s364 = smul.u32 16, %s24
      $region28: #{upsample_bn_forward.3} parent=23 // pred_fallthru
        _
      // Predicated region
      $region29: #{upsample_bn_forward.3} parent=23 // pred_check
        %p365 = pneg %p86
      $region30: #{upsample_bn_forward.3} parent=23 // pred_check_branch
        %367 = sbr.rel (%p365) target = $region32
      $region31: #{upsample_bn_forward.3} parent=23 // pred_region
        %s368 = smul.u32 %s24, 16
        %s369 = ssub.s32 %s368, 1
        %p370 = scmp.gt.s32.totalorder %s369, 0
        %s371 = scalar_select %p370, %s369, 0
        %p372 = scmp.lt.s32.totalorder %s23, 1
        %s373 = scalar_select %p372, %s23, 1
        %p374 = scmp.lt.s32.totalorder %s371, 15
        %s375 = scalar_select %p374, %s371, 15
        %s376 = smul.addr %s375, 2
        %s377 = smul.addr %s373, 32
        %s378 = sadd.s32 %s376, %s377
        %s379 = smul.addr %s378, 4
        %s380 = scalar_lea.vmem %s1, %s379
        %s381 = smul.u32 %s24, 16
        %s382 = ssub.s32 %s381, 1
        %p383 = scmp.gt.s32.totalorder %s382, 0
        %s384 = scalar_select %p383, %s382, 0
      $region32: #{upsample_bn_forward.3} parent=23 // pred_fallthru
        _
      // Predicated region
      $region33: #{upsample_bn_forward.3} parent=23 // pred_check
        %p385 = pneg %p122
      $region34: #{upsample_bn_forward.3} parent=23 // pred_check_branch
        %387 = sbr.rel (%p385) target = $region36
      $region35: #{upsample_bn_forward.3} parent=23 // pred_region
        %s388 = sadd.s32 %s24, 1
        %s389 = smul.u32 %s388, 16
        %p390 = scmp.lt.s32.totalorder %s389, 15
        %s391 = scalar_select %p390, %s389, 15
        %p392 = scmp.lt.s32.totalorder %s23, 1
        %s393 = scalar_select %p392, %s23, 1
        %p394 = scmp.lt.s32.totalorder %s391, 15
        %s395 = scalar_select %p394, %s391, 15
        %s396 = smul.addr %s395, 2
        %s397 = smul.addr %s393, 32
        %s398 = sadd.s32 %s396, %s397
        %s399 = smul.addr %s398, 4
        %s400 = scalar_lea.vmem %s2, %s399
        %s401 = sadd.s32 %s24, 1
        %s402 = smul.u32 %s401, 16
        %p403 = scmp.lt.s32.totalorder %s402, 15
        %s404 = scalar_select %p403, %s402, 15
      $region36: #{upsample_bn_forward.3} parent=23 // pred_fallthru
        _
      // Predicated region
      $region37: #{upsample_bn_forward.3} parent=23 // pred_check
        %p405 = pneg %p150
      $region38: #{upsample_bn_forward.3} parent=23 // pred_check_branch
        %407 = sbr.rel (%p405) target = $region40
      $region39: #{upsample_bn_forward.3} parent=23 // pred_region
        %s408 = smul.u32 16, %s24
        %p409 = scmp.lt.s32.totalorder %s23, 1
        %s410 = scalar_select %p409, %s23, 1
        %p411 = scmp.lt.s32.totalorder %s408, 15
        %s412 = scalar_select %p411, %s408, 15
        %s413 = smul.addr %s412, 2
        %s414 = smul.addr %s410, 32
        %s415 = sadd.s32 %s413, %s414
        %s416 = smul.addr %s415, 4
        %s417 = scalar_lea.vmem %s3, %s416
        %s418 = smul.u32 16, %s24
      $region40: #{upsample_bn_forward.3} parent=23 // pred_fallthru
        _
      // Predicated region
      $region41: #{upsample_bn_forward.3} parent=23 // pred_check
        %p419 = pneg %p186
      $region42: #{upsample_bn_forward.3} parent=23 // pred_check_branch
        %421 = sbr.rel (%p419) target = $region44
      $region43: #{upsample_bn_forward.3} parent=23 // pred_region
        %s422 = smul.u32 %s24, 16
        %s423 = ssub.s32 %s422, 1
        %p424 = scmp.gt.s32.totalorder %s423, 0
        %s425 = scalar_select %p424, %s423, 0
        %p426 = scmp.lt.s32.totalorder %s23, 1
        %s427 = scalar_select %p426, %s23, 1
        %p428 = scmp.lt.s32.totalorder %s425, 15
        %s429 = scalar_select %p428, %s425, 15
        %s430 = smul.addr %s429, 2
        %s431 = smul.addr %s427, 32
        %s432 = sadd.s32 %s430, %s431
        %s433 = smul.addr %s432, 4
        %s434 = scalar_lea.vmem %s4, %s433
        %s435 = smul.u32 %s24, 16
        %s436 = ssub.s32 %s435, 1
        %p437 = scmp.gt.s32.totalorder %s436, 0
        %s438 = scalar_select %p437, %s436, 0
      $region44: #{upsample_bn_forward.3} parent=23 // pred_fallthru
        _
      // Predicated region
      $region45: #{upsample_bn_forward.3} parent=23 // pred_check
        %p439 = pneg %p222
      $region46: #{upsample_bn_forward.3} parent=23 // pred_check_branch
        %441 = sbr.rel (%p439) target = $region48
      $region47: #{upsample_bn_forward.3} parent=23 // pred_region
        %s442 = sadd.s32 %s24, 1
        %s443 = smul.u32 %s442, 16
        %p444 = scmp.lt.s32.totalorder %s443, 15
        %s445 = scalar_select %p444, %s443, 15
        %p446 = scmp.lt.s32.totalorder %s23, 1
        %s447 = scalar_select %p446, %s23, 1
        %p448 = scmp.lt.s32.totalorder %s445, 15
        %s449 = scalar_select %p448, %s445, 15
        %s450 = smul.addr %s449, 2
        %s451 = smul.addr %s447, 32
        %s452 = sadd.s32 %s450, %s451
        %s453 = smul.addr %s452, 4
        %s454 = scalar_lea.vmem %s5, %s453
        %s455 = sadd.s32 %s24, 1
        %s456 = smul.u32 %s455, 16
        %p457 = scmp.lt.s32.totalorder %s456, 15
        %s458 = scalar_select %p457, %s456, 15
      $region48: #{upsample_bn_forward.3} parent=23 // pred_fallthru
        _
    $region24: #{upsample_bn_forward.3} parent=5 // pred_fallthru
      _
    %p459 = scmp.le.s32.totalorder 1, %s16
    %p460 = scmp.lt.s32.totalorder %s16, 3
    %p461 = pnand %p459, %p460
    %p462 = pneg %p461
    // Predicated region
    $region49: #{upsample_bn_forward.3} parent=5 // pred_check
      _
    $region50: #{upsample_bn_forward.3} parent=5 // pred_check_branch
      %464 = sbr.rel (%p461) target = $region52
    $region51: #{upsample_bn_forward.3} parent=5 // pred_region
      %s465 = ssub.s32 %s16, 1
      %s466 = smul.u32 16, %s26
      %p467 = scmp.lt.s32.totalorder %s25, 1
      %s468 = scalar_select %p467, %s25, 1
      %p469 = scmp.lt.s32.totalorder %s466, 15
      %s470 = scalar_select %p469, %s466, 15
      %s471 = smul.addr %s470, 2
      %s472 = smul.addr %s468, 32
      %s473 = sadd.s32 %s471, %s472
      %s474 = smul.addr %s473, 4
      %s475 = scalar_lea.vmem %s0, %s474
      %p476 = pneg %p56
      %p477 = pneg %p53
      %s478 = smul.u32 %s26, 16
      %s479 = ssub.s32 %s478, 1
      %p480 = scmp.gt.s32.totalorder %s479, 0
      %s481 = scalar_select %p480, %s479, 0
      %p482 = scmp.lt.s32.totalorder %s25, 1
      %s483 = scalar_select %p482, %s25, 1
      %p484 = scmp.lt.s32.totalorder %s481, 15
      %s485 = scalar_select %p484, %s481, 15
      %s486 = smul.addr %s485, 2
      %s487 = smul.addr %s483, 32
      %s488 = sadd.s32 %s486, %s487
      %s489 = smul.addr %s488, 4
      %s490 = scalar_lea.vmem %s1, %s489
      %p491 = pneg %p92
      %p492 = pneg %p89
      %s493 = sadd.s32 %s26, 1
      %s494 = smul.u32 %s493, 16
      %p495 = scmp.lt.s32.totalorder %s494, 15
      %s496 = scalar_select %p495, %s494, 15
      %p497 = scmp.lt.s32.totalorder %s25, 1
      %s498 = scalar_select %p497, %s25, 1
      %p499 = scmp.lt.s32.totalorder %s496, 15
      %s500 = scalar_select %p499, %s496, 15
      %s501 = smul.addr %s500, 2
      %s502 = smul.addr %s498, 32
      %s503 = sadd.s32 %s501, %s502
      %s504 = smul.addr %s503, 4
      %s505 = scalar_lea.vmem %s2, %s504
      %p506 = pneg %p128
      %p507 = pneg %p125
      %s508 = smul.u32 16, %s26
      %p509 = scmp.lt.s32.totalorder %s25, 1
      %s510 = scalar_select %p509, %s25, 1
      %p511 = scmp.lt.s32.totalorder %s508, 15
      %s512 = scalar_select %p511, %s508, 15
      %s513 = smul.addr %s512, 2
      %s514 = smul.addr %s510, 32
      %s515 = sadd.s32 %s513, %s514
      %s516 = smul.addr %s515, 4
      %s517 = scalar_lea.vmem %s3, %s516
      %p518 = pneg %p156
      %p519 = pneg %p153
      %s520 = smul.u32 %s26, 16
      %s521 = ssub.s32 %s520, 1
      %p522 = scmp.gt.s32.totalorder %s521, 0
      %s523 = scalar_select %p522, %s521, 0
      %p524 = scmp.lt.s32.totalorder %s25, 1
      %s525 = scalar_select %p524, %s25, 1
      %p526 = scmp.lt.s32.totalorder %s523, 15
      %s527 = scalar_select %p526, %s523, 15
      %s528 = smul.addr %s527, 2
      %s529 = smul.addr %s525, 32
      %s530 = sadd.s32 %s528, %s529
      %s531 = smul.addr %s530, 4
      %s532 = scalar_lea.vmem %s4, %s531
      %p533 = pneg %p192
      %p534 = pneg %p189
      %s535 = sadd.s32 %s26, 1
      %s536 = smul.u32 %s535, 16
      %p537 = scmp.lt.s32.totalorder %s536, 15
      %s538 = scalar_select %p537, %s536, 15
      %p539 = scmp.lt.s32.totalorder %s25, 1
      %s540 = scalar_select %p539, %s25, 1
      %p541 = scmp.lt.s32.totalorder %s538, 15
      %s542 = scalar_select %p541, %s538, 15
      %s543 = smul.addr %s542, 2
      %s544 = smul.addr %s540, 32
      %s545 = sadd.s32 %s543, %s544
      %s546 = smul.addr %s545, 4
      %s547 = scalar_lea.vmem %s5, %s546
      %p548 = pneg %p228
      %p549 = pneg %p225
      %p550 = pneg %p249
      %p551 = pneg %p246
      %p552 = pneg %p270
      %p553 = pneg %p267
      %p554 = pneg %p298
      %p555 = pneg %p295
      %s556 = smul.u32 16, %s26
      %p557 = scmp.lt.s32.totalorder %s25, 1
      %s558 = scalar_select %p557, %s25, 1
      %p559 = scmp.lt.s32.totalorder %s556, 15
      %s560 = scalar_select %p559, %s556, 15
      %s561 = smul.addr %s560, 2
      %s562 = smul.addr %s558, 32
      %s563 = sadd.s32 %s561, %s562
      %s564 = smul.addr %s563, 4
      %s565 = scalar_lea.vmem %s8, %s564
      %p566 = pneg %p326
      %p567 = pneg %p323
      %p568 = scmp.lt.s32.totalorder %s25, 1
      %s569 = scalar_select %p568, %s25, 1
      %p570 = scmp.lt.s32.totalorder %s26, 0
      %s571 = scalar_select %p570, %s26, 0
      %s572 = sadd.s32 %s571, %s569
      %s573 = smul.addr %s572, 2
      %s574 = scalar_lea.vmem %s9, %s573
      %s575 = smul.u32 16, %s26
      %p576 = scmp.lt.s32.totalorder %s25, 1
      %s577 = scalar_select %p576, %s25, 1
      %p578 = scmp.lt.s32.totalorder %s575, 15
      %s579 = scalar_select %p578, %s575, 15
      %s580 = smul.addr %s579, 2
      %s581 = smul.addr %s577, 32
      %s582 = sadd.s32 %s580, %s581
      %s583 = smul.addr %s582, 4
      %s584 = scalar_lea.vmem %s0, %s583
      %s585 = smul.u32 16, %s26
      %s586 = smul.u32 %s26, 16
      %s587 = ssub.s32 %s586, 1
      %p588 = scmp.gt.s32.totalorder %s587, 0
      %s589 = scalar_select %p588, %s587, 0
      %p590 = scmp.lt.s32.totalorder %s25, 1
      %s591 = scalar_select %p590, %s25, 1
      %p592 = scmp.lt.s32.totalorder %s589, 15
      %s593 = scalar_select %p592, %s589, 15
      %s594 = smul.addr %s593, 2
      %s595 = smul.addr %s591, 32
      %s596 = sadd.s32 %s594, %s595
      %s597 = smul.addr %s596, 4
      %s598 = scalar_lea.vmem %s1, %s597
      %s599 = smul.u32 %s26, 16
      %s600 = ssub.s32 %s599, 1
      %p601 = scmp.gt.s32.totalorder %s600, 0
      %s602 = scalar_select %p601, %s600, 0
      %s603 = sadd.s32 %s26, 1
      %s604 = smul.u32 %s603, 16
      %p605 = scmp.lt.s32.totalorder %s604, 15
      %s606 = scalar_select %p605, %s604, 15
      %p607 = scmp.lt.s32.totalorder %s25, 1
      %s608 = scalar_select %p607, %s25, 1
      %p609 = scmp.lt.s32.totalorder %s606, 15
      %s610 = scalar_select %p609, %s606, 15
      %s611 = smul.addr %s610, 2
      %s612 = smul.addr %s608, 32
      %s613 = sadd.s32 %s611, %s612
      %s614 = smul.addr %s613, 4
      %s615 = scalar_lea.vmem %s2, %s614
      %s616 = sadd.s32 %s26, 1
      %s617 = smul.u32 %s616, 16
      %p618 = scmp.lt.s32.totalorder %s617, 15
      %s619 = scalar_select %p618, %s617, 15
      %s620 = smul.u32 16, %s26
      %p621 = scmp.lt.s32.totalorder %s25, 1
      %s622 = scalar_select %p621, %s25, 1
      %p623 = scmp.lt.s32.totalorder %s620, 15
      %s624 = scalar_select %p623, %s620, 15
      %s625 = smul.addr %s624, 2
      %s626 = smul.addr %s622, 32
      %s627 = sadd.s32 %s625, %s626
      %s628 = smul.addr %s627, 4
      %s629 = scalar_lea.vmem %s3, %s628
      %s630 = smul.u32 16, %s26
      %s631 = smul.u32 %s26, 16
      %s632 = ssub.s32 %s631, 1
      %p633 = scmp.gt.s32.totalorder %s632, 0
      %s634 = scalar_select %p633, %s632, 0
      %p635 = scmp.lt.s32.totalorder %s25, 1
      %s636 = scalar_select %p635, %s25, 1
      %p637 = scmp.lt.s32.totalorder %s634, 15
      %s638 = scalar_select %p637, %s634, 15
      %s639 = smul.addr %s638, 2
      %s640 = smul.addr %s636, 32
      %s641 = sadd.s32 %s639, %s640
      %s642 = smul.addr %s641, 4
      %s643 = scalar_lea.vmem %s4, %s642
      %s644 = smul.u32 %s26, 16
      %s645 = ssub.s32 %s644, 1
      %p646 = scmp.gt.s32.totalorder %s645, 0
      %s647 = scalar_select %p646, %s645, 0
      %s648 = sadd.s32 %s26, 1
      %s649 = smul.u32 %s648, 16
      %p650 = scmp.lt.s32.totalorder %s649, 15
      %s651 = scalar_select %p650, %s649, 15
      %p652 = scmp.lt.s32.totalorder %s25, 1
      %s653 = scalar_select %p652, %s25, 1
      %p654 = scmp.lt.s32.totalorder %s651, 15
      %s655 = scalar_select %p654, %s651, 15
      %s656 = smul.addr %s655, 2
      %s657 = smul.addr %s653, 32
      %s658 = sadd.s32 %s656, %s657
      %s659 = smul.addr %s658, 4
      %s660 = scalar_lea.vmem %s5, %s659
      %s661 = sadd.s32 %s26, 1
      %s662 = smul.u32 %s661, 16
      %p663 = scmp.lt.s32.totalorder %s662, 15
      %s664 = scalar_select %p663, %s662, 15
      %s665 = smul.u32 16, %s26
      %p666 = scmp.lt.s32.totalorder %s25, 1
      %s667 = scalar_select %p666, %s25, 1
      %p668 = scmp.lt.s32.totalorder %s665, 15
      %s669 = scalar_select %p668, %s665, 15
      %s670 = smul.addr %s669, 2
      %s671 = smul.addr %s667, 32
      %s672 = sadd.s32 %s670, %s671
      %s673 = smul.addr %s672, 4
      %s674 = scalar_lea.vmem %s8, %s673
      %s675 = smul.u32 16, %s26
      %p676 = scmp.lt.s32.totalorder %s25, 1
      %s677 = scalar_select %p676, %s25, 1
      %p678 = scmp.lt.s32.totalorder %s26, 0
      %s679 = scalar_select %p678, %s26, 0
      %s680 = sadd.s32 %s679, %s677
      %s681 = smul.addr %s680, 2
      %s682 = scalar_lea.vmem %s9, %s681
      %vm684 = vcmask 16384
      %685 = vst.msk [vmem:[#allocation2] sm:$0x1] %vm684, 0.0
      %686 = vst.msk [vmem:[#allocation2 + $0x18] sm:$0x1] %vm684, 0.0
      %687 = vst.msk [vmem:[#allocation2 + $0x30] sm:$0x1] %vm684, 0.0
      %688 = vst.msk [vmem:[#allocation2 + $0x48] sm:$0x1] %vm684, 0.0
      %689 = vst.msk [vmem:[#allocation2 + $0x60] sm:$0x1] %vm684, 0.0
      %690 = vst.msk [vmem:[#allocation2 + $0x78] sm:$0x1] %vm684, 0.0
      %691 = vst.msk [vmem:[#allocation2 + $0x90] sm:$0x1] %vm684, 0.0
      %692 = vst.msk [vmem:[#allocation2 + $0xa8] sm:$0x1] %vm684, 0.0
      %693 = vst.msk [vmem:[#allocation2 + $0xc0] sm:$0x1] %vm684, 0.0
      %694 = vst.msk [vmem:[#allocation2 + $0xd8] sm:$0x1] %vm684, 0.0
      %695 = vst.msk [vmem:[#allocation2 + $0xf0] sm:$0x1] %vm684, 0.0
      %696 = vst.msk [vmem:[#allocation2 + $0x108] sm:$0x1] %vm684, 0.0
      %697 = vst.msk [vmem:[#allocation2 + $0x120] sm:$0x1] %vm684, 0.0
      %698 = vst.msk [vmem:[#allocation2 + $0x138] sm:$0x1] %vm684, 0.0
      %699 = vst.msk [vmem:[#allocation2 + $0x150] sm:$0x1] %vm684, 0.0
      %700 = vst.msk [vmem:[#allocation2 + $0x168] sm:$0x1] %vm684, 0.0
      %701 = vst.msk [vmem:[#allocation2 + $0x180] sm:$0x1] %vm684, 0.0
      %702 = vst.msk [vmem:[#allocation2 + $0x198] sm:$0x1] %vm684, 0.0
      %703 = vst.msk [vmem:[#allocation2 + $0x11] sm:$0x1] %vm684, 0.0
      %704 = vst.msk [vmem:[#allocation2 + $0x29] sm:$0x1] %vm684, 0.0
      %705 = vst.msk [vmem:[#allocation2 + $0x41] sm:$0x1] %vm684, 0.0
      %706 = vst.msk [vmem:[#allocation2 + $0x59] sm:$0x1] %vm684, 0.0
      %707 = vst.msk [vmem:[#allocation2 + $0x71] sm:$0x1] %vm684, 0.0
      %708 = vst.msk [vmem:[#allocation2 + $0x89] sm:$0x1] %vm684, 0.0
      %709 = vst.msk [vmem:[#allocation2 + $0xa1] sm:$0x1] %vm684, 0.0
      %710 = vst.msk [vmem:[#allocation2 + $0xb9] sm:$0x1] %vm684, 0.0
      %711 = vst.msk [vmem:[#allocation2 + $0xd1] sm:$0x1] %vm684, 0.0
      %712 = vst.msk [vmem:[#allocation2 + $0xe9] sm:$0x1] %vm684, 0.0
      %713 = vst.msk [vmem:[#allocation2 + $0x101] sm:$0x1] %vm684, 0.0
      %714 = vst.msk [vmem:[#allocation2 + $0x119] sm:$0x1] %vm684, 0.0
      %715 = vst.msk [vmem:[#allocation2 + $0x131] sm:$0x1] %vm684, 0.0
      %716 = vst.msk [vmem:[#allocation2 + $0x149] sm:$0x1] %vm684, 0.0
      %717 = vst.msk [vmem:[#allocation2 + $0x161] sm:$0x1] %vm684, 0.0
      %718 = vst.msk [vmem:[#allocation2 + $0x179] sm:$0x1] %vm684, 0.0
      %719 = vst.msk [vmem:[#allocation2 + $0x191] sm:$0x1] %vm684, 0.0
      %720 = vst.msk [vmem:[#allocation2 + $0x1a9] sm:$0x1] %vm684, 0.0
      %v721 = vld [vmem:[%s584] sm:$0xf]
      %v722 = vld [vmem:[%s584 + $0x4] sm:$0xf]
      %v723 = vld [vmem:[%s584 + $0x8] sm:$0xf]
      %v724 = vld [vmem:[%s584 + $0xc] sm:$0xf]
      %v725 = vld [vmem:[%s584 + $0x10] sm:$0xf]
      %v726 = vld [vmem:[%s584 + $0x14] sm:$0xf]
      %v727 = vld [vmem:[%s584 + $0x18] sm:$0xf]
      %v728 = vld [vmem:[%s584 + $0x1c] sm:$0xf]
      %v729 = vld [vmem:[%s584 + $0x20] sm:$0xf]
      %v730 = vld [vmem:[%s584 + $0x24] sm:$0xf]
      %v731 = vld [vmem:[%s584 + $0x28] sm:$0xf]
      %v732 = vld [vmem:[%s584 + $0x2c] sm:$0xf]
      %v733 = vld [vmem:[%s584 + $0x30] sm:$0xf]
      %v734 = vld [vmem:[%s584 + $0x34] sm:$0xf]
      %v735 = vld [vmem:[%s584 + $0x38] sm:$0xf]
      %v736 = vld [vmem:[%s584 + $0x3c] sm:$0xf]
      %v737 = vld [vmem:[%s584 + $0x40] sm:$0xf]
      %v738 = vld [vmem:[%s584 + $0x44] sm:$0xf]
      %v739 = vld [vmem:[%s584 + $0x48] sm:$0xf]
      %v740 = vld [vmem:[%s584 + $0x4c] sm:$0xf]
      %v741 = vld [vmem:[%s584 + $0x50] sm:$0xf]
      %v742 = vld [vmem:[%s584 + $0x54] sm:$0xf]
      %v743 = vld [vmem:[%s584 + $0x58] sm:$0xf]
      %v744 = vld [vmem:[%s584 + $0x5c] sm:$0xf]
      %v745 = vld [vmem:[%s584 + $0x60] sm:$0xf]
      %v746 = vld [vmem:[%s584 + $0x64] sm:$0xf]
      %v747 = vld [vmem:[%s584 + $0x68] sm:$0xf]
      %v748 = vld [vmem:[%s584 + $0x6c] sm:$0xf]
      %v749 = vld [vmem:[%s584 + $0x70] sm:$0xf]
      %v750 = vld [vmem:[%s584 + $0x74] sm:$0xf]
      %v751 = vld [vmem:[%s584 + $0x78] sm:$0xf]
      %v752 = vld [vmem:[%s584 + $0x7c] sm:$0xf]
      %v753 = vunpack.c.l.bf16 %v721
      %v754 = vunpack.c.l.bf16 %v722
      %v755 = vunpack.c.l.bf16 %v723
      %v756 = vunpack.c.l.bf16 %v724
      %v757 = vunpack.c.l.bf16 %v725
      %v758 = vunpack.c.l.bf16 %v726
      %v759 = vunpack.c.l.bf16 %v727
      %v760 = vunpack.c.l.bf16 %v728
      %v761 = vunpack.c.l.bf16 %v729
      %v762 = vunpack.c.l.bf16 %v730
      %v763 = vunpack.c.l.bf16 %v731
      %v764 = vunpack.c.l.bf16 %v732
      %v765 = vunpack.c.l.bf16 %v733
      %v766 = vunpack.c.l.bf16 %v734
      %v767 = vunpack.c.l.bf16 %v735
      %v768 = vunpack.c.l.bf16 %v736
      %v769 = vunpack.c.l.bf16 %v737
      %v770 = vunpack.c.l.bf16 %v738
      %v771 = vunpack.c.l.bf16 %v739
      %v772 = vunpack.c.l.bf16 %v740
      %v773 = vunpack.c.l.bf16 %v741
      %v774 = vunpack.c.l.bf16 %v742
      %v775 = vunpack.c.l.bf16 %v743
      %v776 = vunpack.c.l.bf16 %v744
      %v777 = vunpack.c.l.bf16 %v745
      %v778 = vunpack.c.l.bf16 %v746
      %v779 = vunpack.c.l.bf16 %v747
      %v780 = vunpack.c.l.bf16 %v748
      %v781 = vunpack.c.l.bf16 %v749
      %v782 = vunpack.c.l.bf16 %v750
      %v783 = vunpack.c.l.bf16 %v751
      %v784 = vunpack.c.l.bf16 %v752
      %s785 = scalar_lea.vmem [#allocation2], 24
      %vm786 = vcmask 23552
      %787 = vst.msk [vmem:[%s785 + $0x1] sm:$0xff] %vm786, %v753
      %788 = vst.msk [vmem:[%s785 + $0x9] sm:$0xff] %vm786, %v754
      %789 = vst.msk [vmem:[%s785 + $0x19] sm:$0xff] %vm786, %v755
      %790 = vst.msk [vmem:[%s785 + $0x21] sm:$0xff] %vm786, %v756
      %791 = vst.msk [vmem:[%s785 + $0x31] sm:$0xff] %vm786, %v757
      %792 = vst.msk [vmem:[%s785 + $0x39] sm:$0xff] %vm786, %v758
      %793 = vst.msk [vmem:[%s785 + $0x49] sm:$0xff] %vm786, %v759
      %794 = vst.msk [vmem:[%s785 + $0x51] sm:$0xff] %vm786, %v760
      %795 = vst.msk [vmem:[%s785 + $0x61] sm:$0xff] %vm786, %v761
      %796 = vst.msk [vmem:[%s785 + $0x69] sm:$0xff] %vm786, %v762
      %797 = vst.msk [vmem:[%s785 + $0x79] sm:$0xff] %vm786, %v763
      %798 = vst.msk [vmem:[%s785 + $0x81] sm:$0xff] %vm786, %v764
      %799 = vst.msk [vmem:[%s785 + $0x91] sm:$0xff] %vm786, %v765
      %800 = vst.msk [vmem:[%s785 + $0x99] sm:$0xff] %vm786, %v766
      %801 = vst.msk [vmem:[%s785 + $0xa9] sm:$0xff] %vm786, %v767
      %802 = vst.msk [vmem:[%s785 + $0xb1] sm:$0xff] %vm786, %v768
      %803 = vst.msk [vmem:[%s785 + $0xc1] sm:$0xff] %vm786, %v769
      %804 = vst.msk [vmem:[%s785 + $0xc9] sm:$0xff] %vm786, %v770
      %805 = vst.msk [vmem:[%s785 + $0xd9] sm:$0xff] %vm786, %v771
      %806 = vst.msk [vmem:[%s785 + $0xe1] sm:$0xff] %vm786, %v772
      %807 = vst.msk [vmem:[%s785 + $0xf1] sm:$0xff] %vm786, %v773
      %808 = vst.msk [vmem:[%s785 + $0xf9] sm:$0xff] %vm786, %v774
      %809 = vst.msk [vmem:[%s785 + $0x109] sm:$0xff] %vm786, %v775
      %810 = vst.msk [vmem:[%s785 + $0x111] sm:$0xff] %vm786, %v776
      %811 = vst.msk [vmem:[%s785 + $0x121] sm:$0xff] %vm786, %v777
      %812 = vst.msk [vmem:[%s785 + $0x129] sm:$0xff] %vm786, %v778
      %813 = vst.msk [vmem:[%s785 + $0x139] sm:$0xff] %vm786, %v779
      %814 = vst.msk [vmem:[%s785 + $0x141] sm:$0xff] %vm786, %v780
      %815 = vst.msk [vmem:[%s785 + $0x151] sm:$0xff] %vm786, %v781
      %816 = vst.msk [vmem:[%s785 + $0x159] sm:$0xff] %vm786, %v782
      %817 = vst.msk [vmem:[%s785 + $0x169] sm:$0xff] %vm786, %v783
      %818 = vst.msk [vmem:[%s785 + $0x171] sm:$0xff] %vm786, %v784
      %p819 = scmp.gt.s32.totalorder %s26, 0
      // Predicated region
      $region53: #{upsample_bn_forward.3} parent=51 // pred_check
        %p820 = pneg %p819
      $region54: #{upsample_bn_forward.3} parent=51 // pred_check_branch
        %822 = sbr.rel (%p820) target = $region56
      $region55: #{upsample_bn_forward.3} parent=51 // pred_region
        %v823 = vld [vmem:[%s598] sm:$0xf]
        %v824 = vld [vmem:[%s598 + $0x4] sm:$0xf]
        %v825 = vunpack.c.l.bf16 %v823
        %v826 = vunpack.c.l.bf16 %v824
        %827 = vst.msk [vmem:[#allocation2 + $0x1] sm:$0xff] %vm786, %v825
        %828 = vst.msk [vmem:[#allocation2 + $0x9] sm:$0xff] %vm786, %v826
      $region56: #{upsample_bn_forward.3} parent=51 // pred_fallthru
        _
      %p829 = scmp.eq.s32.totalorder %s26, 0
      // Predicated region
      $region57: #{upsample_bn_forward.3} parent=51 // pred_check
        %p830 = pneg %p829
      $region58: #{upsample_bn_forward.3} parent=51 // pred_check_branch
        %832 = sbr.rel (%p830) target = $region60
      $region59: #{upsample_bn_forward.3} parent=51 // pred_region
        %833 = vst.msk [vmem:[#allocation2 + $0x1] sm:$0xff] %vm786, 0.0
        %834 = vst.msk [vmem:[#allocation2 + $0x9] sm:$0xff] %vm786, 0.0
      $region60: #{upsample_bn_forward.3} parent=51 // pred_fallthru
        _
      %p835 = scmp.lt.s32.totalorder %s26, 0
      // Predicated region
      $region61: #{upsample_bn_forward.3} parent=51 // pred_check
        %p836 = pneg %p835
      $region62: #{upsample_bn_forward.3} parent=51 // pred_check_branch
        %838 = sbr.rel (%p836) target = $region64
      $region63: #{upsample_bn_forward.3} parent=51 // pred_region
        %v839 = vld [vmem:[%s615] sm:$0xf]
        %v840 = vld [vmem:[%s615 + $0x4] sm:$0xf]
        %v841 = vunpack.c.l.bf16 %v839
        %v842 = vunpack.c.l.bf16 %v840
        %s843 = scalar_lea.vmem [#allocation2], 408
        %844 = vst.msk [vmem:[%s843 + $0x1] sm:$0xff] %vm786, %v841
        %845 = vst.msk [vmem:[%s843 + $0x9] sm:$0xff] %vm786, %v842
      $region64: #{upsample_bn_forward.3} parent=51 // pred_fallthru
        _
      // Predicated region
      $region65: #{upsample_bn_forward.3} parent=51 // pred_check
        %p846 = pneg %p829
      $region66: #{upsample_bn_forward.3} parent=51 // pred_check_branch
        %848 = sbr.rel (%p846) target = $region68
      $region67: #{upsample_bn_forward.3} parent=51 // pred_region
        %s849 = scalar_lea.vmem [#allocation2], 408
        %850 = vst.msk [vmem:[%s849 + $0x1] sm:$0xff] %vm786, 0.0
        %851 = vst.msk [vmem:[%s849 + $0x9] sm:$0xff] %vm786, 0.0
      $region68: #{upsample_bn_forward.3} parent=51 // pred_fallthru
        _
      %vm852 = vcmask 32768
      %853 = vst.msk [vmem:[#allocation3] sm:$0x1] %vm852, 0.0
      %854 = vst.msk [vmem:[#allocation3 + $0x18] sm:$0x1] %vm852, 0.0
      %855 = vst.msk [vmem:[#allocation3 + $0x30] sm:$0x1] %vm852, 0.0
      %856 = vst.msk [vmem:[#allocation3 + $0x48] sm:$0x1] %vm852, 0.0
      %857 = vst.msk [vmem:[#allocation3 + $0x60] sm:$0x1] %vm852, 0.0
      %858 = vst.msk [vmem:[#allocation3 + $0x78] sm:$0x1] %vm852, 0.0
      %859 = vst.msk [vmem:[#allocation3 + $0x90] sm:$0x1] %vm852, 0.0
      %860 = vst.msk [vmem:[#allocation3 + $0xa8] sm:$0x1] %vm852, 0.0
      %861 = vst.msk [vmem:[#allocation3 + $0xc0] sm:$0x1] %vm852, 0.0
      %862 = vst.msk [vmem:[#allocation3 + $0xd8] sm:$0x1] %vm852, 0.0
      %863 = vst.msk [vmem:[#allocation3 + $0xf0] sm:$0x1] %vm852, 0.0
      %864 = vst.msk [vmem:[#allocation3 + $0x108] sm:$0x1] %vm852, 0.0
      %865 = vst.msk [vmem:[#allocation3 + $0x120] sm:$0x1] %vm852, 0.0
      %866 = vst.msk [vmem:[#allocation3 + $0x138] sm:$0x1] %vm852, 0.0
      %867 = vst.msk [vmem:[#allocation3 + $0x150] sm:$0x1] %vm852, 0.0
      %868 = vst.msk [vmem:[#allocation3 + $0x168] sm:$0x1] %vm852, 0.0
      %869 = vst.msk [vmem:[#allocation3 + $0x180] sm:$0x1] %vm852, 0.0
      %870 = vst.msk [vmem:[#allocation3 + $0x198] sm:$0x1] %vm852, 0.0
      %871 = vst.msk [vmem:[#allocation3 + $0x11] sm:$0x1] %vm852, 0.0
      %872 = vst.msk [vmem:[#allocation3 + $0x29] sm:$0x1] %vm852, 0.0
      %873 = vst.msk [vmem:[#allocation3 + $0x41] sm:$0x1] %vm852, 0.0
      %874 = vst.msk [vmem:[#allocation3 + $0x59] sm:$0x1] %vm852, 0.0
      %875 = vst.msk [vmem:[#allocation3 + $0x71] sm:$0x1] %vm852, 0.0
      %876 = vst.msk [vmem:[#allocation3 + $0x89] sm:$0x1] %vm852, 0.0
      %877 = vst.msk [vmem:[#allocation3 + $0xa1] sm:$0x1] %vm852, 0.0
      %878 = vst.msk [vmem:[#allocation3 + $0xb9] sm:$0x1] %vm852, 0.0
      %879 = vst.msk [vmem:[#allocation3 + $0xd1] sm:$0x1] %vm852, 0.0
      %880 = vst.msk [vmem:[#allocation3 + $0xe9] sm:$0x1] %vm852, 0.0
      %881 = vst.msk [vmem:[#allocation3 + $0x101] sm:$0x1] %vm852, 0.0
      %882 = vst.msk [vmem:[#allocation3 + $0x119] sm:$0x1] %vm852, 0.0
      %883 = vst.msk [vmem:[#allocation3 + $0x131] sm:$0x1] %vm852, 0.0
      %884 = vst.msk [vmem:[#allocation3 + $0x149] sm:$0x1] %vm852, 0.0
      %885 = vst.msk [vmem:[#allocation3 + $0x161] sm:$0x1] %vm852, 0.0
      %886 = vst.msk [vmem:[#allocation3 + $0x179] sm:$0x1] %vm852, 0.0
      %887 = vst.msk [vmem:[#allocation3 + $0x191] sm:$0x1] %vm852, 0.0
      %888 = vst.msk [vmem:[#allocation3 + $0x1a9] sm:$0x1] %vm852, 0.0
      %v889 = vld [vmem:[%s629] sm:$0xf]
      %v890 = vld [vmem:[%s629 + $0x4] sm:$0xf]
      %v891 = vld [vmem:[%s629 + $0x8] sm:$0xf]
      %v892 = vld [vmem:[%s629 + $0xc] sm:$0xf]
      %v893 = vld [vmem:[%s629 + $0x10] sm:$0xf]
      %v894 = vld [vmem:[%s629 + $0x14] sm:$0xf]
      %v895 = vld [vmem:[%s629 + $0x18] sm:$0xf]
      %v896 = vld [vmem:[%s629 + $0x1c] sm:$0xf]
      %v897 = vld [vmem:[%s629 + $0x20] sm:$0xf]
      %v898 = vld [vmem:[%s629 + $0x24] sm:$0xf]
      %v899 = vld [vmem:[%s629 + $0x28] sm:$0xf]
      %v900 = vld [vmem:[%s629 + $0x2c] sm:$0xf]
      %v901 = vld [vmem:[%s629 + $0x30] sm:$0xf]
      %v902 = vld [vmem:[%s629 + $0x34] sm:$0xf]
      %v903 = vld [vmem:[%s629 + $0x38] sm:$0xf]
      %v904 = vld [vmem:[%s629 + $0x3c] sm:$0xf]
      %v905 = vld [vmem:[%s629 + $0x40] sm:$0xf]
      %v906 = vld [vmem:[%s629 + $0x44] sm:$0xf]
      %v907 = vld [vmem:[%s629 + $0x48] sm:$0xf]
      %v908 = vld [vmem:[%s629 + $0x4c] sm:$0xf]
      %v909 = vld [vmem:[%s629 + $0x50] sm:$0xf]
      %v910 = vld [vmem:[%s629 + $0x54] sm:$0xf]
      %v911 = vld [vmem:[%s629 + $0x58] sm:$0xf]
      %v912 = vld [vmem:[%s629 + $0x5c] sm:$0xf]
      %v913 = vld [vmem:[%s629 + $0x60] sm:$0xf]
      %v914 = vld [vmem:[%s629 + $0x64] sm:$0xf]
      %v915 = vld [vmem:[%s629 + $0x68] sm:$0xf]
      %v916 = vld [vmem:[%s629 + $0x6c] sm:$0xf]
      %v917 = vld [vmem:[%s629 + $0x70] sm:$0xf]
      %v918 = vld [vmem:[%s629 + $0x74] sm:$0xf]
      %v919 = vld [vmem:[%s629 + $0x78] sm:$0xf]
      %v920 = vld [vmem:[%s629 + $0x7c] sm:$0xf]
      %v921 = vunpack.c.l.bf16 %v889
      %v922 = vunpack.c.l.bf16 %v890
      %v923 = vunpack.c.l.bf16 %v891
      %v924 = vunpack.c.l.bf16 %v892
      %v925 = vunpack.c.l.bf16 %v893
      %v926 = vunpack.c.l.bf16 %v894
      %v927 = vunpack.c.l.bf16 %v895
      %v928 = vunpack.c.l.bf16 %v896
      %v929 = vunpack.c.l.bf16 %v897
      %v930 = vunpack.c.l.bf16 %v898
      %v931 = vunpack.c.l.bf16 %v899
      %v932 = vunpack.c.l.bf16 %v900
      %v933 = vunpack.c.l.bf16 %v901
      %v934 = vunpack.c.l.bf16 %v902
      %v935 = vunpack.c.l.bf16 %v903
      %v936 = vunpack.c.l.bf16 %v904
      %v937 = vunpack.c.l.bf16 %v905
      %v938 = vunpack.c.l.bf16 %v906
      %v939 = vunpack.c.l.bf16 %v907
      %v940 = vunpack.c.l.bf16 %v908
      %v941 = vunpack.c.l.bf16 %v909
      %v942 = vunpack.c.l.bf16 %v910
      %v943 = vunpack.c.l.bf16 %v911
      %v944 = vunpack.c.l.bf16 %v912
      %v945 = vunpack.c.l.bf16 %v913
      %v946 = vunpack.c.l.bf16 %v914
      %v947 = vunpack.c.l.bf16 %v915
      %v948 = vunpack.c.l.bf16 %v916
      %v949 = vunpack.c.l.bf16 %v917
      %v950 = vunpack.c.l.bf16 %v918
      %v951 = vunpack.c.l.bf16 %v919
      %v952 = vunpack.c.l.bf16 %v920
      %s953 = scalar_lea.vmem [#allocation3], 24
      %vm954 = vcmask 39936
      %955 = vst.msk [vmem:[%s953 + $0x1] sm:$0xff] %vm954, %v921
      %956 = vst.msk [vmem:[%s953 + $0x9] sm:$0xff] %vm954, %v922
      %957 = vst.msk [vmem:[%s953 + $0x19] sm:$0xff] %vm954, %v923
      %958 = vst.msk [vmem:[%s953 + $0x21] sm:$0xff] %vm954, %v924
      %959 = vst.msk [vmem:[%s953 + $0x31] sm:$0xff] %vm954, %v925
      %960 = vst.msk [vmem:[%s953 + $0x39] sm:$0xff] %vm954, %v926
      %961 = vst.msk [vmem:[%s953 + $0x49] sm:$0xff] %vm954, %v927
      %962 = vst.msk [vmem:[%s953 + $0x51] sm:$0xff] %vm954, %v928
      %963 = vst.msk [vmem:[%s953 + $0x61] sm:$0xff] %vm954, %v929
      %964 = vst.msk [vmem:[%s953 + $0x69] sm:$0xff] %vm954, %v930
      %965 = vst.msk [vmem:[%s953 + $0x79] sm:$0xff] %vm954, %v931
      %966 = vst.msk [vmem:[%s953 + $0x81] sm:$0xff] %vm954, %v932
      %967 = vst.msk [vmem:[%s953 + $0x91] sm:$0xff] %vm954, %v933
      %968 = vst.msk [vmem:[%s953 + $0x99] sm:$0xff] %vm954, %v934
      %969 = vst.msk [vmem:[%s953 + $0xa9] sm:$0xff] %vm954, %v935
      %970 = vst.msk [vmem:[%s953 + $0xb1] sm:$0xff] %vm954, %v936
      %971 = vst.msk [vmem:[%s953 + $0xc1] sm:$0xff] %vm954, %v937
      %972 = vst.msk [vmem:[%s953 + $0xc9] sm:$0xff] %vm954, %v938
      %973 = vst.msk [vmem:[%s953 + $0xd9] sm:$0xff] %vm954, %v939
      %974 = vst.msk [vmem:[%s953 + $0xe1] sm:$0xff] %vm954, %v940
      %975 = vst.msk [vmem:[%s953 + $0xf1] sm:$0xff] %vm954, %v941
      %976 = vst.msk [vmem:[%s953 + $0xf9] sm:$0xff] %vm954, %v942
      %977 = vst.msk [vmem:[%s953 + $0x109] sm:$0xff] %vm954, %v943
      %978 = vst.msk [vmem:[%s953 + $0x111] sm:$0xff] %vm954, %v944
      %979 = vst.msk [vmem:[%s953 + $0x121] sm:$0xff] %vm954, %v945
      %980 = vst.msk [vmem:[%s953 + $0x129] sm:$0xff] %vm954, %v946
      %981 = vst.msk [vmem:[%s953 + $0x139] sm:$0xff] %vm954, %v947
      %982 = vst.msk [vmem:[%s953 + $0x141] sm:$0xff] %vm954, %v948
      %983 = vst.msk [vmem:[%s953 + $0x151] sm:$0xff] %vm954, %v949
      %984 = vst.msk [vmem:[%s953 + $0x159] sm:$0xff] %vm954, %v950
      %985 = vst.msk [vmem:[%s953 + $0x169] sm:$0xff] %vm954, %v951
      %986 = vst.msk [vmem:[%s953 + $0x171] sm:$0xff] %vm954, %v952
      // Predicated region
      $region69: #{upsample_bn_forward.3} parent=51 // pred_check
        %p987 = pneg %p819
      $region70: #{upsample_bn_forward.3} parent=51 // pred_check_branch
        %989 = sbr.rel (%p987) target = $region72
      $region71: #{upsample_bn_forward.3} parent=51 // pred_region
        %v990 = vld [vmem:[%s643] sm:$0xf]
        %v991 = vld [vmem:[%s643 + $0x4] sm:$0xf]
        %v992 = vunpack.c.l.bf16 %v990
        %v993 = vunpack.c.l.bf16 %v991
        %994 = vst.msk [vmem:[#allocation3 + $0x1] sm:$0xff] %vm954, %v992
        %995 = vst.msk [vmem:[#allocation3 + $0x9] sm:$0xff] %vm954, %v993
      $region72: #{upsample_bn_forward.3} parent=51 // pred_fallthru
        _
      // Predicated region
      $region73: #{upsample_bn_forward.3} parent=51 // pred_check
        %p996 = pneg %p829
      $region74: #{upsample_bn_forward.3} parent=51 // pred_check_branch
        %998 = sbr.rel (%p996) target = $region76
      $region75: #{upsample_bn_forward.3} parent=51 // pred_region
        %999 = vst.msk [vmem:[#allocation3 + $0x1] sm:$0xff] %vm954, 0.0
        %1000 = vst.msk [vmem:[#allocation3 + $0x9] sm:$0xff] %vm954, 0.0
      $region76: #{upsample_bn_forward.3} parent=51 // pred_fallthru
        _
      // Predicated region
      $region77: #{upsample_bn_forward.3} parent=51 // pred_check
        %p1001 = pneg %p835
      $region78: #{upsample_bn_forward.3} parent=51 // pred_check_branch
        %1003 = sbr.rel (%p1001) target = $region80
      $region79: #{upsample_bn_forward.3} parent=51 // pred_region
        %v1004 = vld [vmem:[%s660] sm:$0xf]
        %v1005 = vld [vmem:[%s660 + $0x4] sm:$0xf]
        %v1006 = vunpack.c.l.bf16 %v1004
        %v1007 = vunpack.c.l.bf16 %v1005
        %s1008 = scalar_lea.vmem [#allocation3], 408
        %1009 = vst.msk [vmem:[%s1008 + $0x1] sm:$0xff] %vm954, %v1006
        %1010 = vst.msk [vmem:[%s1008 + $0x9] sm:$0xff] %vm954, %v1007
      $region80: #{upsample_bn_forward.3} parent=51 // pred_fallthru
        _
      // Predicated region
      $region81: #{upsample_bn_forward.3} parent=51 // pred_check
        %p1011 = pneg %p829
      $region82: #{upsample_bn_forward.3} parent=51 // pred_check_branch
        %1013 = sbr.rel (%p1011) target = $region84
      $region83: #{upsample_bn_forward.3} parent=51 // pred_region
        %s1014 = scalar_lea.vmem [#allocation3], 408
        %1015 = vst.msk [vmem:[%s1014 + $0x1] sm:$0xff] %vm954, 0.0
        %1016 = vst.msk [vmem:[%s1014 + $0x9] sm:$0xff] %vm954, 0.0
      $region84: #{upsample_bn_forward.3} parent=51 // pred_fallthru
        _
      %v1017 = vld [vmem:[#allocation2] sm:$0xff]
      %v1018 = vld [vmem:[#allocation2 + $0x8] sm:$0xff]
      %v1019 = vld [vmem:[#allocation2 + $0x18] sm:$0xff]
      %v1020 = vld [vmem:[#allocation2 + $0x20] sm:$0xff]
      %v1021 = vld [vmem:[#allocation2 + $0x30] sm:$0xff]
      %v1022 = vld [vmem:[#allocation2 + $0x38] sm:$0xff]
      %v1023 = vld [vmem:[#allocation2 + $0x48] sm:$0xff]
      %v1024 = vld [vmem:[#allocation2 + $0x50] sm:$0xff]
      %v1025 = vld [vmem:[#allocation2 + $0x60] sm:$0xff]
      %v1026 = vld [vmem:[#allocation2 + $0x68] sm:$0xff]
      %v1027 = vld [vmem:[#allocation2 + $0x78] sm:$0xff]
      %v1028 = vld [vmem:[#allocation2 + $0x80] sm:$0xff]
      %v1029 = vld [vmem:[#allocation2 + $0x90] sm:$0xff]
      %v1030 = vld [vmem:[#allocation2 + $0x98] sm:$0xff]
      %v1031 = vld [vmem:[#allocation2 + $0xa8] sm:$0xff]
      %v1032 = vld [vmem:[#allocation2 + $0xb0] sm:$0xff]
      %v1033 = vld [vmem:[#allocation2 + $0xc0] sm:$0xff]
      %v1034 = vld [vmem:[#allocation2 + $0xc8] sm:$0xff]
      %v1035 = vld [vmem:[#allocation2 + $0xd8] sm:$0xff]
      %v1036 = vld [vmem:[#allocation2 + $0xe0] sm:$0xff]
      %v1037 = vld [vmem:[#allocation2 + $0xf0] sm:$0xff]
      %v1038 = vld [vmem:[#allocation2 + $0xf8] sm:$0xff]
      %v1039 = vld [vmem:[#allocation2 + $0x108] sm:$0xff]
      %v1040 = vld [vmem:[#allocation2 + $0x110] sm:$0xff]
      %v1041 = vld [vmem:[#allocation2 + $0x120] sm:$0xff]
      %v1042 = vld [vmem:[#allocation2 + $0x128] sm:$0xff]
      %v1043 = vld [vmem:[#allocation2 + $0x138] sm:$0xff]
      %v1044 = vld [vmem:[#allocation2 + $0x140] sm:$0xff]
      %v1045 = vld [vmem:[#allocation2 + $0x150] sm:$0xff]
      %v1046 = vld [vmem:[#allocation2 + $0x158] sm:$0xff]
      %v1047 = vld [vmem:[#allocation2 + $0x168] sm:$0xff]
      %v1048 = vld [vmem:[#allocation2 + $0x170] sm:$0xff]
      %v1049 = vpack.c.bf16 %v1018, %v1017
      %v1050 = vpack.c.bf16 %v1020, %v1019
      %v1051 = vpack.c.bf16 %v1022, %v1021
      %v1052 = vpack.c.bf16 %v1024, %v1023
      %v1053 = vpack.c.bf16 %v1026, %v1025
      %v1054 = vpack.c.bf16 %v1028, %v1027
      %v1055 = vpack.c.bf16 %v1030, %v1029
      %v1056 = vpack.c.bf16 %v1032, %v1031
      %v1057 = vpack.c.bf16 %v1034, %v1033
      %v1058 = vpack.c.bf16 %v1036, %v1035
      %v1059 = vpack.c.bf16 %v1038, %v1037
      %v1060 = vpack.c.bf16 %v1040, %v1039
      %v1061 = vpack.c.bf16 %v1042, %v1041
      %v1062 = vpack.c.bf16 %v1044, %v1043
      %v1063 = vpack.c.bf16 %v1046, %v1045
      %v1064 = vpack.c.bf16 %v1048, %v1047
      %v1065 = vld [vmem:[%s6] sm:$0x3]
      %v1066 = vld [vmem:[#allocation2 + $0x1] sm:$0xff]
      %v1067 = vld [vmem:[#allocation2 + $0x9] sm:$0xff]
      %v1068 = vld [vmem:[#allocation2 + $0x19] sm:$0xff]
      %v1069 = vld [vmem:[#allocation2 + $0x21] sm:$0xff]
      %v1070 = vld [vmem:[#allocation2 + $0x31] sm:$0xff]
      %v1071 = vld [vmem:[#allocation2 + $0x39] sm:$0xff]
      %v1072 = vld [vmem:[#allocation2 + $0x49] sm:$0xff]
      %v1073 = vld [vmem:[#allocation2 + $0x51] sm:$0xff]
      %v1074 = vld [vmem:[#allocation2 + $0x61] sm:$0xff]
      %v1075 = vld [vmem:[#allocation2 + $0x69] sm:$0xff]
      %v1076 = vld [vmem:[#allocation2 + $0x79] sm:$0xff]
      %v1077 = vld [vmem:[#allocation2 + $0x81] sm:$0xff]
      %v1078 = vld [vmem:[#allocation2 + $0x91] sm:$0xff]
      %v1079 = vld [vmem:[#allocation2 + $0x99] sm:$0xff]
      %v1080 = vld [vmem:[#allocation2 + $0xa9] sm:$0xff]
      %v1081 = vld [vmem:[#allocation2 + $0xb1] sm:$0xff]
      %v1082 = vld [vmem:[#allocation2 + $0xc1] sm:$0xff]
      %v1083 = vld [vmem:[#allocation2 + $0xc9] sm:$0xff]
      %v1084 = vld [vmem:[#allocation2 + $0xd9] sm:$0xff]
      %v1085 = vld [vmem:[#allocation2 + $0xe1] sm:$0xff]
      %v1086 = vld [vmem:[#allocation2 + $0xf1] sm:$0xff]
      %v1087 = vld [vmem:[#allocation2 + $0xf9] sm:$0xff]
      %v1088 = vld [vmem:[#allocation2 + $0x109] sm:$0xff]
      %v1089 = vld [vmem:[#allocation2 + $0x111] sm:$0xff]
      %v1090 = vld [vmem:[#allocation2 + $0x121] sm:$0xff]
      %v1091 = vld [vmem:[#allocation2 + $0x129] sm:$0xff]
      %v1092 = vld [vmem:[#allocation2 + $0x139] sm:$0xff]
      %v1093 = vld [vmem:[#allocation2 + $0x141] sm:$0xff]
      %v1094 = vld [vmem:[#allocation2 + $0x151] sm:$0xff]
      %v1095 = vld [vmem:[#allocation2 + $0x159] sm:$0xff]
      %v1096 = vld [vmem:[#allocation2 + $0x169] sm:$0xff]
      %v1097 = vld [vmem:[#allocation2 + $0x171] sm:$0xff]
      %v1098 = vpack.c.bf16 %v1067, %v1066
      %v1099 = vpack.c.bf16 %v1069, %v1068
      %v1100 = vpack.c.bf16 %v1071, %v1070
      %v1101 = vpack.c.bf16 %v1073, %v1072
      %v1102 = vpack.c.bf16 %v1075, %v1074
      %v1103 = vpack.c.bf16 %v1077, %v1076
      %v1104 = vpack.c.bf16 %v1079, %v1078
      %v1105 = vpack.c.bf16 %v1081, %v1080
      %v1106 = vpack.c.bf16 %v1083, %v1082
      %v1107 = vpack.c.bf16 %v1085, %v1084
      %v1108 = vpack.c.bf16 %v1087, %v1086
      %v1109 = vpack.c.bf16 %v1089, %v1088
      %v1110 = vpack.c.bf16 %v1091, %v1090
      %v1111 = vpack.c.bf16 %v1093, %v1092
      %v1112 = vpack.c.bf16 %v1095, %v1094
      %v1113 = vpack.c.bf16 %v1097, %v1096
      %s1114 = scalar_lea.vmem %s6, 2
      %v1115 = vld [vmem:[%s1114] sm:$0x3]
      %v1117 = vsel %vm786, %v1098, 0
      %v1120 = vsel %vm786, %v1099, 0
      %v1123 = vsel %vm786, %v1100, 0
      %v1126 = vsel %vm786, %v1101, 0
      %v1129 = vsel %vm786, %v1102, 0
      %v1132 = vsel %vm786, %v1103, 0
      %v1135 = vsel %vm786, %v1104, 0
      %v1138 = vsel %vm786, %v1105, 0
      %v1141 = vsel %vm786, %v1106, 0
      %v1144 = vsel %vm786, %v1107, 0
      %v1147 = vsel %vm786, %v1108, 0
      %v1150 = vsel %vm786, %v1109, 0
      %v1153 = vsel %vm786, %v1110, 0
      %v1156 = vsel %vm786, %v1111, 0
      %v1159 = vsel %vm786, %v1112, 0
      %v1162 = vsel %vm786, %v1113, 0
      %vm1164 = vcmask 1040384
      %vm1165 = vcmask 1041408
      %v1166 = vsel %vm1164, 4294967295, 65535
      %v1167 = vsel %vm1165, %v1166, 0
      %v1169 = vand.u32 %v1115, %v1167
      %1171 = vmatprep.subr.bf16.mxu0 0
      %1172 = vmatpush1.bf16.msra.mxu0 %v1169
      %1173 = vmatprep.subr.bf16.mxu0 0
      %1174 = vmatpush1.bf16.msra.mxu0 0
      %1175 = vmatprep.subr.bf16.mxu0 0
      %1176 = vmatpush1.bf16.msra.mxu0 0
      %1177 = vmatprep.subr.bf16.mxu0 0
      %1178 = vmatpush1.bf16.msra.mxu0 0
      %1179 = vmatprep.subr.bf16.mxu0 0
      %1180 = vmatpush1.bf16.msra.mxu0 0
      %1181 = vmatprep.subr.bf16.mxu0 0
      %1182 = vmatpush1.bf16.msra.mxu0 0
      %1183 = vmatprep.subr.bf16.mxu0 0
      %1184 = vmatpush1.bf16.msra.mxu0 0
      %1185 = vmatprep.subr.bf16.mxu0 0
      %1186 = vmatpush1.bf16.msra.mxu0 0
      %1187 = vmatprep.subr.bf16.mxu0 0
      %1188 = vmatpush1.bf16.msra.mxu0 0
      %1189 = vmatprep.subr.bf16.mxu0 0
      %1190 = vmatpush1.bf16.msra.mxu0 0
      %1191 = vmatprep.subr.bf16.mxu0 0
      %1192 = vmatpush1.bf16.msra.mxu0 0
      %1193 = vmatprep.subr.bf16.mxu0 0
      %1194 = vmatpush1.bf16.msra.mxu0 0
      %1195 = vmatprep.subr.bf16.mxu0 0
      %1196 = vmatpush1.bf16.msra.mxu0 0
      %1197 = vmatprep.subr.bf16.mxu0 0
      %1198 = vmatpush1.bf16.msra.mxu0 0
      %1199 = vmatprep.subr.bf16.mxu0 0
      %1200 = vmatpush1.bf16.msra.mxu0 0
      %1201 = vmatprep.subr.bf16.mxu0 0
      %1202 = vmatpush1.bf16.msra.mxu0 0
      %1203 = vmatprep.mubr.bf16.mxu0 0
      %1204 = vmatmul.mubr.bf16.gmra.mrb[0].mxu0 %v1117
      %v1205 = vpop.f32.mrb[0].mxu0
      %v1206 = vadd.f32 0.0, %v1205
      %v1207 = vpop.f32.mrb[0].mxu0
      %v1208 = vpop.f32.mrb[0].mxu0
      %v1209 = vadd.f32 0.0, %v1208
      %v1210 = vpop.f32.mrb[0].mxu0
      %1211 = vmatprep.mubr.bf16.mxu0 0
      %1212 = vmatmul.mubr.bf16.gmra.mrb[0].mxu0 %v1120
      %v1213 = vpop.f32.mrb[0].mxu0
      %v1214 = vadd.f32 0.0, %v1213
      %v1215 = vpop.f32.mrb[0].mxu0
      %v1216 = vpop.f32.mrb[0].mxu0
      %v1217 = vadd.f32 0.0, %v1216
      %v1218 = vpop.f32.mrb[0].mxu0
      %1219 = vmatprep.mubr.bf16.mxu0 0
      %1220 = vmatmul.mubr.bf16.gmra.mrb[0].mxu0 %v1123
      %v1221 = vpop.f32.mrb[0].mxu0
      %v1222 = vadd.f32 0.0, %v1221
      %v1223 = vpop.f32.mrb[0].mxu0
      %v1224 = vpop.f32.mrb[0].mxu0
      %v1225 = vadd.f32 0.0, %v1224
      %v1226 = vpop.f32.mrb[0].mxu0
      %1227 = vmatprep.mubr.bf16.mxu0 0
      %1228 = vmatmul.mubr.bf16.gmra.mrb[0].mxu0 %v1126
      %v1229 = vpop.f32.mrb[0].mxu0
      %v1230 = vadd.f32 0.0, %v1229
      %v1231 = vpop.f32.mrb[0].mxu0
      %v1232 = vpop.f32.mrb[0].mxu0
      %v1233 = vadd.f32 0.0, %v1232
      %v1234 = vpop.f32.mrb[0].mxu0
      %1235 = vmatprep.mubr.bf16.mxu0 0
      %1236 = vmatmul.mubr.bf16.gmra.mrb[0].mxu0 %v1129
      %v1237 = vpop.f32.mrb[0].mxu0
      %v1238 = vadd.f32 0.0, %v1237
      %v1239 = vpop.f32.mrb[0].mxu0
      %v1240 = vpop.f32.mrb[0].mxu0
      %v1241 = vadd.f32 0.0, %v1240
      %v1242 = vpop.f32.mrb[0].mxu0
      %1243 = vmatprep.mubr.bf16.mxu0 0
      %1244 = vmatmul.mubr.bf16.gmra.mrb[0].mxu0 %v1132
      %v1245 = vpop.f32.mrb[0].mxu0
      %v1246 = vadd.f32 0.0, %v1245
      %v1247 = vpop.f32.mrb[0].mxu0
      %v1248 = vpop.f32.mrb[0].mxu0
      %v1249 = vadd.f32 0.0, %v1248
      %v1250 = vpop.f32.mrb[0].mxu0
      %1251 = vmatprep.mubr.bf16.mxu0 0
      %1252 = vmatmul.mubr.bf16.gmra.mrb[0].mxu0 %v1135
      %v1253 = vpop.f32.mrb[0].mxu0
      %v1254 = vadd.f32 0.0, %v1253
      %v1255 = vpop.f32.mrb[0].mxu0
      %v1256 = vpop.f32.mrb[0].mxu0
      %v1257 = vadd.f32 0.0, %v1256
      %v1258 = vpop.f32.mrb[0].mxu0
      %1259 = vmatprep.mubr.bf16.mxu0 0
      %1260 = vmatmul.mubr.bf16.gmra.mrb[0].mxu0 %v1138
      %v1261 = vpop.f32.mrb[0].mxu0
      %v1262 = vadd.f32 0.0, %v1261
      %v1263 = vpop.f32.mrb[0].mxu0
      %v1264 = vpop.f32.mrb[0].mxu0
      %v1265 = vadd.f32 0.0, %v1264
      %v1266 = vpop.f32.mrb[0].mxu0
      %1267 = vmatprep.mubr.bf16.mxu0 0
      %1268 = vmatmul.mubr.bf16.gmra.mrb[0].mxu0 %v1141
      %v1269 = vpop.f32.mrb[0].mxu0
      %v1270 = vadd.f32 0.0, %v1269
      %v1271 = vpop.f32.mrb[0].mxu0
      %v1272 = vpop.f32.mrb[0].mxu0
      %v1273 = vadd.f32 0.0, %v1272
      %v1274 = vpop.f32.mrb[0].mxu0
      %1275 = vmatprep.mubr.bf16.mxu0 0
      %1276 = vmatmul.mubr.bf16.gmra.mrb[0].mxu0 %v1144
      %v1277 = vpop.f32.mrb[0].mxu0
      %v1278 = vadd.f32 0.0, %v1277
      %v1279 = vpop.f32.mrb[0].mxu0
      %v1280 = vpop.f32.mrb[0].mxu0
      %v1281 = vadd.f32 0.0, %v1280
      %v1282 = vpop.f32.mrb[0].mxu0
      %1283 = vmatprep.mubr.bf16.mxu0 0
      %1284 = vmatmul.mubr.bf16.gmra.mrb[0].mxu0 %v1147
      %v1285 = vpop.f32.mrb[0].mxu0
      %v1286 = vadd.f32 0.0, %v1285
      %v1287 = vpop.f32.mrb[0].mxu0
      %v1288 = vpop.f32.mrb[0].mxu0
      %v1289 = vadd.f32 0.0, %v1288
      %v1290 = vpop.f32.mrb[0].mxu0
      %1291 = vmatprep.mubr.bf16.mxu0 0
      %1292 = vmatmul.mubr.bf16.gmra.mrb[0].mxu0 %v1150
      %v1293 = vpop.f32.mrb[0].mxu0
      %v1294 = vadd.f32 0.0, %v1293
      %v1295 = vpop.f32.mrb[0].mxu0
      %v1296 = vpop.f32.mrb[0].mxu0
      %v1297 = vadd.f32 0.0, %v1296
      %v1298 = vpop.f32.mrb[0].mxu0
      %1299 = vmatprep.mubr.bf16.mxu0 0
      %1300 = vmatmul.mubr.bf16.gmra.mrb[0].mxu0 %v1153
      %v1301 = vpop.f32.mrb[0].mxu0
      %v1302 = vadd.f32 0.0, %v1301
      %v1303 = vpop.f32.mrb[0].mxu0
      %v1304 = vpop.f32.mrb[0].mxu0
      %v1305 = vadd.f32 0.0, %v1304
      %v1306 = vpop.f32.mrb[0].mxu0
      %1307 = vmatprep.mubr.bf16.mxu0 0
      %1308 = vmatmul.mubr.bf16.gmra.mrb[0].mxu0 %v1156
      %v1309 = vpop.f32.mrb[0].mxu0
      %v1310 = vadd.f32 0.0, %v1309
      %v1311 = vpop.f32.mrb[0].mxu0
      %v1312 = vpop.f32.mrb[0].mxu0
      %v1313 = vadd.f32 0.0, %v1312
      %v1314 = vpop.f32.mrb[0].mxu0
      %1315 = vmatprep.mubr.bf16.mxu0 0
      %1316 = vmatmul.mubr.bf16.gmra.mrb[0].mxu0 %v1159
      %v1317 = vpop.f32.mrb[0].mxu0
      %v1318 = vadd.f32 0.0, %v1317
      %v1319 = vpop.f32.mrb[0].mxu0
      %v1320 = vpop.f32.mrb[0].mxu0
      %v1321 = vadd.f32 0.0, %v1320
      %v1322 = vpop.f32.mrb[0].mxu0
      %1323 = vmatprep.mubr.bf16.mxu0 0
      %1324 = vmatmul.mubr.bf16.gmra.mrb[0].mxu0 %v1162
      %v1325 = vpop.f32.mrb[0].mxu0
      %v1326 = vadd.f32 0.0, %v1325
      %v1327 = vpop.f32.mrb[0].mxu0
      %v1328 = vpop.f32.mrb[0].mxu0
      %v1329 = vadd.f32 0.0, %v1328
      %v1330 = vpop.f32.mrb[0].mxu0
      %1331 = vdwg.mxu0
      %v1333 = vsel %vm786, %v1049, 0
      %v1336 = vsel %vm786, %v1050, 0
      %v1339 = vsel %vm786, %v1051, 0
      %v1342 = vsel %vm786, %v1052, 0
      %v1345 = vsel %vm786, %v1053, 0
      %v1348 = vsel %vm786, %v1054, 0
      %v1351 = vsel %vm786, %v1055, 0
      %v1354 = vsel %vm786, %v1056, 0
      %v1357 = vsel %vm786, %v1057, 0
      %v1360 = vsel %vm786, %v1058, 0
      %v1363 = vsel %vm786, %v1059, 0
      %v1366 = vsel %vm786, %v1060, 0
      %v1369 = vsel %vm786, %v1061, 0
      %v1372 = vsel %vm786, %v1062, 0
      %v1375 = vsel %vm786, %v1063, 0
      %v1378 = vsel %vm786, %v1064, 0
      %v1381 = vand.u32 %v1065, %v1167
      %1383 = vmatprep.subr.bf16.mxu0 0
      %1384 = vmatpush1.bf16.msra.mxu0 %v1381
      %1385 = vmatprep.subr.bf16.mxu0 0
      %1386 = vmatpush1.bf16.msra.mxu0 0
      %1387 = vmatprep.subr.bf16.mxu0 0
      %1388 = vmatpush1.bf16.msra.mxu0 0
      %1389 = vmatprep.subr.bf16.mxu0 0
      %1390 = vmatpush1.bf16.msra.mxu0 0
      %1391 = vmatprep.subr.bf16.mxu0 0
      %1392 = vmatpush1.bf16.msra.mxu0 0
      %1393 = vmatprep.subr.bf16.mxu0 0
      %1394 = vmatpush1.bf16.msra.mxu0 0
      %1395 = vmatprep.subr.bf16.mxu0 0
      %1396 = vmatpush1.bf16.msra.mxu0 0
      %1397 = vmatprep.subr.bf16.mxu0 0
      %1398 = vmatpush1.bf16.msra.mxu0 0
      %1399 = vmatprep.subr.bf16.mxu0 0
      %1400 = vmatpush1.bf16.msra.mxu0 0
      %1401 = vmatprep.subr.bf16.mxu0 0
      %1402 = vmatpush1.bf16.msra.mxu0 0
      %1403 = vmatprep.subr.bf16.mxu0 0
      %1404 = vmatpush1.bf16.msra.mxu0 0
      %1405 = vmatprep.subr.bf16.mxu0 0
      %1406 = vmatpush1.bf16.msra.mxu0 0
      %1407 = vmatprep.subr.bf16.mxu0 0
      %1408 = vmatpush1.bf16.msra.mxu0 0
      %1409 = vmatprep.subr.bf16.mxu0 0
      %1410 = vmatpush1.bf16.msra.mxu0 0
      %1411 = vmatprep.subr.bf16.mxu0 0
      %1412 = vmatpush1.bf16.msra.mxu0 0
      %1413 = vmatprep.subr.bf16.mxu0 0
      %1414 = vmatpush1.bf16.msra.mxu0 0
      %1415 = vmatprep.mubr.bf16.mxu0 0
      %1416 = vmatmul.mubr.bf16.gmra.mrb[0].mxu0 %v1333
      %v1417 = vpop.f32.mrb[0].mxu0
      %v1418 = vadd.f32 %v1206, %v1417
      %v1419 = vpop.f32.mrb[0].mxu0
      %v1420 = vpop.f32.mrb[0].mxu0
      %v1421 = vadd.f32 %v1209, %v1420
      %v1422 = vpop.f32.mrb[0].mxu0
      %1423 = vmatprep.mubr.bf16.mxu0 0
      %1424 = vmatmul.mubr.bf16.gmra.mrb[0].mxu0 %v1336
      %v1425 = vpop.f32.mrb[0].mxu0
      %v1426 = vadd.f32 %v1214, %v1425
      %v1427 = vpop.f32.mrb[0].mxu0
      %v1428 = vpop.f32.mrb[0].mxu0
      %v1429 = vadd.f32 %v1217, %v1428
      %v1430 = vpop.f32.mrb[0].mxu0
      %1431 = vmatprep.mubr.bf16.mxu0 0
      %1432 = vmatmul.mubr.bf16.gmra.mrb[0].mxu0 %v1339
      %v1433 = vpop.f32.mrb[0].mxu0
      %v1434 = vadd.f32 %v1222, %v1433
      %v1435 = vpop.f32.mrb[0].mxu0
      %v1436 = vpop.f32.mrb[0].mxu0
      %v1437 = vadd.f32 %v1225, %v1436
      %v1438 = vpop.f32.mrb[0].mxu0
      %1439 = vmatprep.mubr.bf16.mxu0 0
      %1440 = vmatmul.mubr.bf16.gmra.mrb[0].mxu0 %v1342
      %v1441 = vpop.f32.mrb[0].mxu0
      %v1442 = vadd.f32 %v1230, %v1441
      %v1443 = vpop.f32.mrb[0].mxu0
      %v1444 = vpop.f32.mrb[0].mxu0
      %v1445 = vadd.f32 %v1233, %v1444
      %v1446 = vpop.f32.mrb[0].mxu0
      %1447 = vmatprep.mubr.bf16.mxu0 0
      %1448 = vmatmul.mubr.bf16.gmra.mrb[0].mxu0 %v1345
      %v1449 = vpop.f32.mrb[0].mxu0
      %v1450 = vadd.f32 %v1238, %v1449
      %v1451 = vpop.f32.mrb[0].mxu0
      %v1452 = vpop.f32.mrb[0].mxu0
      %v1453 = vadd.f32 %v1241, %v1452
      %v1454 = vpop.f32.mrb[0].mxu0
      %1455 = vmatprep.mubr.bf16.mxu0 0
      %1456 = vmatmul.mubr.bf16.gmra.mrb[0].mxu0 %v1348
      %v1457 = vpop.f32.mrb[0].mxu0
      %v1458 = vadd.f32 %v1246, %v1457
      %v1459 = vpop.f32.mrb[0].mxu0
      %v1460 = vpop.f32.mrb[0].mxu0
      %v1461 = vadd.f32 %v1249, %v1460
      %v1462 = vpop.f32.mrb[0].mxu0
      %1463 = vmatprep.mubr.bf16.mxu0 0
      %1464 = vmatmul.mubr.bf16.gmra.mrb[0].mxu0 %v1351
      %v1465 = vpop.f32.mrb[0].mxu0
      %v1466 = vadd.f32 %v1254, %v1465
      %v1467 = vpop.f32.mrb[0].mxu0
      %v1468 = vpop.f32.mrb[0].mxu0
      %v1469 = vadd.f32 %v1257, %v1468
      %v1470 = vpop.f32.mrb[0].mxu0
      %1471 = vmatprep.mubr.bf16.mxu0 0
      %1472 = vmatmul.mubr.bf16.gmra.mrb[0].mxu0 %v1354
      %v1473 = vpop.f32.mrb[0].mxu0
      %v1474 = vadd.f32 %v1262, %v1473
      %v1475 = vpop.f32.mrb[0].mxu0
      %v1476 = vpop.f32.mrb[0].mxu0
      %v1477 = vadd.f32 %v1265, %v1476
      %v1478 = vpop.f32.mrb[0].mxu0
      %1479 = vmatprep.mubr.bf16.mxu0 0
      %1480 = vmatmul.mubr.bf16.gmra.mrb[0].mxu0 %v1357
      %v1481 = vpop.f32.mrb[0].mxu0
      %v1482 = vadd.f32 %v1270, %v1481
      %v1483 = vpop.f32.mrb[0].mxu0
      %v1484 = vpop.f32.mrb[0].mxu0
      %v1485 = vadd.f32 %v1273, %v1484
      %v1486 = vpop.f32.mrb[0].mxu0
      %1487 = vmatprep.mubr.bf16.mxu0 0
      %1488 = vmatmul.mubr.bf16.gmra.mrb[0].mxu0 %v1360
      %v1489 = vpop.f32.mrb[0].mxu0
      %v1490 = vadd.f32 %v1278, %v1489
      %v1491 = vpop.f32.mrb[0].mxu0
      %v1492 = vpop.f32.mrb[0].mxu0
      %v1493 = vadd.f32 %v1281, %v1492
      %v1494 = vpop.f32.mrb[0].mxu0
      %1495 = vmatprep.mubr.bf16.mxu0 0
      %1496 = vmatmul.mubr.bf16.gmra.mrb[0].mxu0 %v1363
      %v1497 = vpop.f32.mrb[0].mxu0
      %v1498 = vadd.f32 %v1286, %v1497
      %v1499 = vpop.f32.mrb[0].mxu0
      %v1500 = vpop.f32.mrb[0].mxu0
      %v1501 = vadd.f32 %v1289, %v1500
      %v1502 = vpop.f32.mrb[0].mxu0
      %1503 = vmatprep.mubr.bf16.mxu0 0
      %1504 = vmatmul.mubr.bf16.gmra.mrb[0].mxu0 %v1366
      %v1505 = vpop.f32.mrb[0].mxu0
      %v1506 = vadd.f32 %v1294, %v1505
      %v1507 = vpop.f32.mrb[0].mxu0
      %v1508 = vpop.f32.mrb[0].mxu0
      %v1509 = vadd.f32 %v1297, %v1508
      %v1510 = vpop.f32.mrb[0].mxu0
      %1511 = vmatprep.mubr.bf16.mxu0 0
      %1512 = vmatmul.mubr.bf16.gmra.mrb[0].mxu0 %v1369
      %v1513 = vpop.f32.mrb[0].mxu0
      %v1514 = vadd.f32 %v1302, %v1513
      %v1515 = vpop.f32.mrb[0].mxu0
      %v1516 = vpop.f32.mrb[0].mxu0
      %v1517 = vadd.f32 %v1305, %v1516
      %v1518 = vpop.f32.mrb[0].mxu0
      %1519 = vmatprep.mubr.bf16.mxu0 0
      %1520 = vmatmul.mubr.bf16.gmra.mrb[0].mxu0 %v1372
      %v1521 = vpop.f32.mrb[0].mxu0
      %v1522 = vadd.f32 %v1310, %v1521
      %v1523 = vpop.f32.mrb[0].mxu0
      %v1524 = vpop.f32.mrb[0].mxu0
      %v1525 = vadd.f32 %v1313, %v1524
      %v1526 = vpop.f32.mrb[0].mxu0
      %1527 = vmatprep.mubr.bf16.mxu0 0
      %1528 = vmatmul.mubr.bf16.gmra.mrb[0].mxu0 %v1375
      %v1529 = vpop.f32.mrb[0].mxu0
      %v1530 = vadd.f32 %v1318, %v1529
      %v1531 = vpop.f32.mrb[0].mxu0
      %v1532 = vpop.f32.mrb[0].mxu0
      %v1533 = vadd.f32 %v1321, %v1532
      %v1534 = vpop.f32.mrb[0].mxu0
      %1535 = vmatprep.mubr.bf16.mxu0 0
      %1536 = vmatmul.mubr.bf16.gmra.mrb[0].mxu0 %v1378
      %v1537 = vpop.f32.mrb[0].mxu0
      %v1538 = vadd.f32 %v1326, %v1537
      %v1539 = vpop.f32.mrb[0].mxu0
      %v1540 = vpop.f32.mrb[0].mxu0
      %v1541 = vadd.f32 %v1329, %v1540
      %v1542 = vpop.f32.mrb[0].mxu0
      %1543 = vdwg.mxu0
      %v1544 = vld [vmem:[#allocation2 + $0x2] sm:$0xff]
      %v1545 = vld [vmem:[#allocation2 + $0xa] sm:$0xff]
      %v1546 = vld [vmem:[#allocation2 + $0x1a] sm:$0xff]
      %v1547 = vld [vmem:[#allocation2 + $0x22] sm:$0xff]
      %v1548 = vld [vmem:[#allocation2 + $0x32] sm:$0xff]
      %v1549 = vld [vmem:[#allocation2 + $0x3a] sm:$0xff]
      %v1550 = vld [vmem:[#allocation2 + $0x4a] sm:$0xff]
      %v1551 = vld [vmem:[#allocation2 + $0x52] sm:$0xff]
      %v1552 = vld [vmem:[#allocation2 + $0x62] sm:$0xff]
      %v1553 = vld [vmem:[#allocation2 + $0x6a] sm:$0xff]
      %v1554 = vld [vmem:[#allocation2 + $0x7a] sm:$0xff]
      %v1555 = vld [vmem:[#allocation2 + $0x82] sm:$0xff]
      %v1556 = vld [vmem:[#allocation2 + $0x92] sm:$0xff]
      %v1557 = vld [vmem:[#allocation2 + $0x9a] sm:$0xff]
      %v1558 = vld [vmem:[#allocation2 + $0xaa] sm:$0xff]
      %v1559 = vld [vmem:[#allocation2 + $0xb2] sm:$0xff]
      %v1560 = vld [vmem:[#allocation2 + $0xc2] sm:$0xff]
      %v1561 = vld [vmem:[#allocation2 + $0xca] sm:$0xff]
      %v1562 = vld [vmem:[#allocation2 + $0xda] sm:$0xff]
      %v1563 = vld [vmem:[#allocation2 + $0xe2] sm:$0xff]
      %v1564 = vld [vmem:[#allocation2 + $0xf2] sm:$0xff]
      %v1565 = vld [vmem:[#allocation2 + $0xfa] sm:$0xff]
      %v1566 = vld [vmem:[#allocation2 + $0x10a] sm:$0xff]
      %v1567 = vld [vmem:[#allocation2 + $0x112] sm:$0xff]
      %v1568 = vld [vmem:[#allocation2 + $0x122] sm:$0xff]
      %v1569 = vld [vmem:[#allocation2 + $0x12a] sm:$0xff]
      %v1570 = vld [vmem:[#allocation2 + $0x13a] sm:$0xff]
      %v1571 = vld [vmem:[#allocation2 + $0x142] sm:$0xff]
      %v1572 = vld [vmem:[#allocation2 + $0x152] sm:$0xff]
      %v1573 = vld [vmem:[#allocation2 + $0x15a] sm:$0xff]
      %v1574 = vld [vmem:[#allocation2 + $0x16a] sm:$0xff]
      %v1575 = vld [vmem:[#allocation2 + $0x172] sm:$0xff]
      %v1576 = vpack.c.bf16 %v1545, %v1544
      %v1577 = vpack.c.bf16 %v1547, %v1546
      %v1578 = vpack.c.bf16 %v1549, %v1548
      %v1579 = vpack.c.bf16 %v1551, %v1550
      %v1580 = vpack.c.bf16 %v1553, %v1552
      %v1581 = vpack.c.bf16 %v1555, %v1554
      %v1582 = vpack.c.bf16 %v1557, %v1556
      %v1583 = vpack.c.bf16 %v1559, %v1558
      %v1584 = vpack.c.bf16 %v1561, %v1560
      %v1585 = vpack.c.bf16 %v1563, %v1562
      %v1586 = vpack.c.bf16 %v1565, %v1564
      %v1587 = vpack.c.bf16 %v1567, %v1566
      %v1588 = vpack.c.bf16 %v1569, %v1568
      %v1589 = vpack.c.bf16 %v1571, %v1570
      %v1590 = vpack.c.bf16 %v1573, %v1572
      %v1591 = vpack.c.bf16 %v1575, %v1574
      %s1592 = scalar_lea.vmem %s6, 4
      %v1593 = vld [vmem:[%s1592] sm:$0x3]
      %v1595 = vsel %vm786, %v1576, 0
      %v1598 = vsel %vm786, %v1577, 0
      %v1601 = vsel %vm786, %v1578, 0
      %v1604 = vsel %vm786, %v1579, 0
      %v1607 = vsel %vm786, %v1580, 0
      %v1610 = vsel %vm786, %v1581, 0
      %v1613 = vsel %vm786, %v1582, 0
      %v1616 = vsel %vm786, %v1583, 0
      %v1619 = vsel %vm786, %v1584, 0
      %v1622 = vsel %vm786, %v1585, 0
      %v1625 = vsel %vm786, %v1586, 0
      %v1628 = vsel %vm786, %v1587, 0
      %v1631 = vsel %vm786, %v1588, 0
      %v1634 = vsel %vm786, %v1589, 0
      %v1637 = vsel %vm786, %v1590, 0
      %v1640 = vsel %vm786, %v1591, 0
      %v1643 = vand.u32 %v1593, %v1167
      %1645 = vmatprep.subr.bf16.mxu0 0
      %1646 = vmatpush1.bf16.msra.mxu0 %v1643
      %1647 = vmatprep.subr.bf16.mxu0 0
      %1648 = vmatpush1.bf16.msra.mxu0 0
      %1649 = vmatprep.subr.bf16.mxu0 0
      %1650 = vmatpush1.bf16.msra.mxu0 0
      %1651 = vmatprep.subr.bf16.mxu0 0
      %1652 = vmatpush1.bf16.msra.mxu0 0
      %1653 = vmatprep.subr.bf16.mxu0 0
      %1654 = vmatpush1.bf16.msra.mxu0 0
      %1655 = vmatprep.subr.bf16.mxu0 0
      %1656 = vmatpush1.bf16.msra.mxu0 0
      %1657 = vmatprep.subr.bf16.mxu0 0
      %1658 = vmatpush1.bf16.msra.mxu0 0
      %1659 = vmatprep.subr.bf16.mxu0 0
      %1660 = vmatpush1.bf16.msra.mxu0 0
      %1661 = vmatprep.subr.bf16.mxu0 0
      %1662 = vmatpush1.bf16.msra.mxu0 0
      %1663 = vmatprep.subr.bf16.mxu0 0
      %1664 = vmatpush1.bf16.msra.mxu0 0
      %1665 = vmatprep.subr.bf16.mxu0 0
      %1666 = vmatpush1.bf16.msra.mxu0 0
      %1667 = vmatprep.subr.bf16.mxu0 0
      %1668 = vmatpush1.bf16.msra.mxu0 0
      %1669 = vmatprep.subr.bf16.mxu0 0
      %1670 = vmatpush1.bf16.msra.mxu0 0
      %1671 = vmatprep.subr.bf16.mxu0 0
      %1672 = vmatpush1.bf16.msra.mxu0 0
      %1673 = vmatprep.subr.bf16.mxu0 0
      %1674 = vmatpush1.bf16.msra.mxu0 0
      %1675 = vmatprep.subr.bf16.mxu0 0
      %1676 = vmatpush1.bf16.msra.mxu0 0
      %1677 = vmatprep.mubr.bf16.mxu0 0
      %1678 = vmatmul.mubr.bf16.gmra.mrb[0].mxu0 %v1595
      %v1679 = vpop.f32.mrb[0].mxu0
      %v1680 = vadd.f32 0.0, %v1679
      %v1681 = vpop.f32.mrb[0].mxu0
      %v1682 = vpop.f32.mrb[0].mxu0
      %v1683 = vadd.f32 0.0, %v1682
      %v1684 = vpop.f32.mrb[0].mxu0
      %1685 = vmatprep.mubr.bf16.mxu0 0
      %1686 = vmatmul.mubr.bf16.gmra.mrb[0].mxu0 %v1598
      %v1687 = vpop.f32.mrb[0].mxu0
      %v1688 = vadd.f32 0.0, %v1687
      %v1689 = vpop.f32.mrb[0].mxu0
      %v1690 = vpop.f32.mrb[0].mxu0
      %v1691 = vadd.f32 0.0, %v1690
      %v1692 = vpop.f32.mrb[0].mxu0
      %1693 = vmatprep.mubr.bf16.mxu0 0
      %1694 = vmatmul.mubr.bf16.gmra.mrb[0].mxu0 %v1601
      %v1695 = vpop.f32.mrb[0].mxu0
      %v1696 = vadd.f32 0.0, %v1695
      %v1697 = vpop.f32.mrb[0].mxu0
      %v1698 = vpop.f32.mrb[0].mxu0
      %v1699 = vadd.f32 0.0, %v1698
      %v1700 = vpop.f32.mrb[0].mxu0
      %1701 = vmatprep.mubr.bf16.mxu0 0
      %1702 = vmatmul.mubr.bf16.gmra.mrb[0].mxu0 %v1604
      %v1703 = vpop.f32.mrb[0].mxu0
      %v1704 = vadd.f32 0.0, %v1703
      %v1705 = vpop.f32.mrb[0].mxu0
      %v1706 = vpop.f32.mrb[0].mxu0
      %v1707 = vadd.f32 0.0, %v1706
      %v1708 = vpop.f32.mrb[0].mxu0
      %1709 = vmatprep.mubr.bf16.mxu0 0
      %1710 = vmatmul.mubr.bf16.gmra.mrb[0].mxu0 %v1607
      %v1711 = vpop.f32.mrb[0].mxu0
      %v1712 = vadd.f32 0.0, %v1711
      %v1713 = vpop.f32.mrb[0].mxu0
      %v1714 = vpop.f32.mrb[0].mxu0
      %v1715 = vadd.f32 0.0, %v1714
      %v1716 = vpop.f32.mrb[0].mxu0
      %1717 = vmatprep.mubr.bf16.mxu0 0
      %1718 = vmatmul.mubr.bf16.gmra.mrb[0].mxu0 %v1610
      %v1719 = vpop.f32.mrb[0].mxu0
      %v1720 = vadd.f32 0.0, %v1719
      %v1721 = vpop.f32.mrb[0].mxu0
      %v1722 = vpop.f32.mrb[0].mxu0
      %v1723 = vadd.f32 0.0, %v1722
      %v1724 = vpop.f32.mrb[0].mxu0
      %1725 = vmatprep.mubr.bf16.mxu0 0
      %1726 = vmatmul.mubr.bf16.gmra.mrb[0].mxu0 %v1613
      %v1727 = vpop.f32.mrb[0].mxu0
      %v1728 = vadd.f32 0.0, %v1727
      %v1729 = vpop.f32.mrb[0].mxu0
      %v1730 = vpop.f32.mrb[0].mxu0
      %v1731 = vadd.f32 0.0, %v1730
      %v1732 = vpop.f32.mrb[0].mxu0
      %1733 = vmatprep.mubr.bf16.mxu0 0
      %1734 = vmatmul.mubr.bf16.gmra.mrb[0].mxu0 %v1616
      %v1735 = vpop.f32.mrb[0].mxu0
      %v1736 = vadd.f32 0.0, %v1735
      %v1737 = vpop.f32.mrb[0].mxu0
      %v1738 = vpop.f32.mrb[0].mxu0
      %v1739 = vadd.f32 0.0, %v1738
      %v1740 = vpop.f32.mrb[0].mxu0
      %1741 = vmatprep.mubr.bf16.mxu0 0
      %1742 = vmatmul.mubr.bf16.gmra.mrb[0].mxu0 %v1619
      %v1743 = vpop.f32.mrb[0].mxu0
      %v1744 = vadd.f32 0.0, %v1743
      %v1745 = vpop.f32.mrb[0].mxu0
      %v1746 = vpop.f32.mrb[0].mxu0
      %v1747 = vadd.f32 0.0, %v1746
      %v1748 = vpop.f32.mrb[0].mxu0
      %1749 = vmatprep.mubr.bf16.mxu0 0
      %1750 = vmatmul.mubr.bf16.gmra.mrb[0].mxu0 %v1622
      %v1751 = vpop.f32.mrb[0].mxu0
      %v1752 = vadd.f32 0.0, %v1751
      %v1753 = vpop.f32.mrb[0].mxu0
      %v1754 = vpop.f32.mrb[0].mxu0
      %v1755 = vadd.f32 0.0, %v1754
      %v1756 = vpop.f32.mrb[0].mxu0
      %1757 = vmatprep.mubr.bf16.mxu0 0
      %1758 = vmatmul.mubr.bf16.gmra.mrb[0].mxu0 %v1625
      %v1759 = vpop.f32.mrb[0].mxu0
      %v1760 = vadd.f32 0.0, %v1759
      %v1761 = vpop.f32.mrb[0].mxu0
      %v1762 = vpop.f32.mrb[0].mxu0
      %v1763 = vadd.f32 0.0, %v1762
      %v1764 = vpop.f32.mrb[0].mxu0
      %1765 = vmatprep.mubr.bf16.mxu0 0
      %1766 = vmatmul.mubr.bf16.gmra.mrb[0].mxu0 %v1628
      %v1767 = vpop.f32.mrb[0].mxu0
      %v1768 = vadd.f32 0.0, %v1767
      %v1769 = vpop.f32.mrb[0].mxu0
      %v1770 = vpop.f32.mrb[0].mxu0
      %v1771 = vadd.f32 0.0, %v1770
      %v1772 = vpop.f32.mrb[0].mxu0
      %1773 = vmatprep.mubr.bf16.mxu0 0
      %1774 = vmatmul.mubr.bf16.gmra.mrb[0].mxu0 %v1631
      %v1775 = vpop.f32.mrb[0].mxu0
      %v1776 = vadd.f32 0.0, %v1775
      %v1777 = vpop.f32.mrb[0].mxu0
      %v1778 = vpop.f32.mrb[0].mxu0
      %v1779 = vadd.f32 0.0, %v1778
      %v1780 = vpop.f32.mrb[0].mxu0
      %1781 = vmatprep.mubr.bf16.mxu0 0
      %1782 = vmatmul.mubr.bf16.gmra.mrb[0].mxu0 %v1634
      %v1783 = vpop.f32.mrb[0].mxu0
      %v1784 = vadd.f32 0.0, %v1783
      %v1785 = vpop.f32.mrb[0].mxu0
      %v1786 = vpop.f32.mrb[0].mxu0
      %v1787 = vadd.f32 0.0, %v1786
      %v1788 = vpop.f32.mrb[0].mxu0
      %1789 = vmatprep.mubr.bf16.mxu0 0
      %1790 = vmatmul.mubr.bf16.gmra.mrb[0].mxu0 %v1637
      %v1791 = vpop.f32.mrb[0].mxu0
      %v1792 = vadd.f32 0.0, %v1791
      %v1793 = vpop.f32.mrb[0].mxu0
      %v1794 = vpop.f32.mrb[0].mxu0
      %v1795 = vadd.f32 0.0, %v1794
      %v1796 = vpop.f32.mrb[0].mxu0
      %1797 = vmatprep.mubr.bf16.mxu0 0
      %1798 = vmatmul.mubr.bf16.gmra.mrb[0].mxu0 %v1640
      %v1799 = vpop.f32.mrb[0].mxu0
      %v1800 = vadd.f32 0.0, %v1799
      %v1801 = vpop.f32.mrb[0].mxu0
      %v1802 = vpop.f32.mrb[0].mxu0
      %v1803 = vadd.f32 0.0, %v1802
      %v1804 = vpop.f32.mrb[0].mxu0
      %1805 = vdwg.mxu0
      %v1806 = vadd.f32 %v1418, %v1680
      %v1807 = vadd.f32 %v1421, %v1683
      %v1808 = vadd.f32 %v1426, %v1688
      %v1809 = vadd.f32 %v1429, %v1691
      %v1810 = vadd.f32 %v1434, %v1696
      %v1811 = vadd.f32 %v1437, %v1699
      %v1812 = vadd.f32 %v1442, %v1704
      %v1813 = vadd.f32 %v1445, %v1707
      %v1814 = vadd.f32 %v1450, %v1712
      %v1815 = vadd.f32 %v1453, %v1715
      %v1816 = vadd.f32 %v1458, %v1720
      %v1817 = vadd.f32 %v1461, %v1723
      %v1818 = vadd.f32 %v1466, %v1728
      %v1819 = vadd.f32 %v1469, %v1731
      %v1820 = vadd.f32 %v1474, %v1736
      %v1821 = vadd.f32 %v1477, %v1739
      %v1822 = vadd.f32 %v1482, %v1744
      %v1823 = vadd.f32 %v1485, %v1747
      %v1824 = vadd.f32 %v1490, %v1752
      %v1825 = vadd.f32 %v1493, %v1755
      %v1826 = vadd.f32 %v1498, %v1760
      %v1827 = vadd.f32 %v1501, %v1763
      %v1828 = vadd.f32 %v1506, %v1768
      %v1829 = vadd.f32 %v1509, %v1771
      %v1830 = vadd.f32 %v1514, %v1776
      %v1831 = vadd.f32 %v1517, %v1779
      %v1832 = vadd.f32 %v1522, %v1784
      %v1833 = vadd.f32 %v1525, %v1787
      %v1834 = vadd.f32 %v1530, %v1792
      %v1835 = vadd.f32 %v1533, %v1795
      %v1836 = vadd.f32 %v1538, %v1800
      %v1837 = vadd.f32 %v1541, %v1803
      %v1838 = vld [vmem:[%s785] sm:$0xff]
      %v1839 = vld [vmem:[%s785 + $0x8] sm:$0xff]
      %v1840 = vld [vmem:[%s785 + $0x18] sm:$0xff]
      %v1841 = vld [vmem:[%s785 + $0x20] sm:$0xff]
      %v1842 = vld [vmem:[%s785 + $0x30] sm:$0xff]
      %v1843 = vld [vmem:[%s785 + $0x38] sm:$0xff]
      %v1844 = vld [vmem:[%s785 + $0x48] sm:$0xff]
      %v1845 = vld [vmem:[%s785 + $0x50] sm:$0xff]
      %v1846 = vld [vmem:[%s785 + $0x60] sm:$0xff]
      %v1847 = vld [vmem:[%s785 + $0x68] sm:$0xff]
      %v1848 = vld [vmem:[%s785 + $0x78] sm:$0xff]
      %v1849 = vld [vmem:[%s785 + $0x80] sm:$0xff]
      %v1850 = vld [vmem:[%s785 + $0x90] sm:$0xff]
      %v1851 = vld [vmem:[%s785 + $0x98] sm:$0xff]
      %v1852 = vld [vmem:[%s785 + $0xa8] sm:$0xff]
      %v1853 = vld [vmem:[%s785 + $0xb0] sm:$0xff]
      %v1854 = vld [vmem:[%s785 + $0xc0] sm:$0xff]
      %v1855 = vld [vmem:[%s785 + $0xc8] sm:$0xff]
      %v1856 = vld [vmem:[%s785 + $0xd8] sm:$0xff]
      %v1857 = vld [vmem:[%s785 + $0xe0] sm:$0xff]
      %v1858 = vld [vmem:[%s785 + $0xf0] sm:$0xff]
      %v1859 = vld [vmem:[%s785 + $0xf8] sm:$0xff]
      %v1860 = vld [vmem:[%s785 + $0x108] sm:$0xff]
      %v1861 = vld [vmem:[%s785 + $0x110] sm:$0xff]
      %v1862 = vld [vmem:[%s785 + $0x120] sm:$0xff]
      %v1863 = vld [vmem:[%s785 + $0x128] sm:$0xff]
      %v1864 = vld [vmem:[%s785 + $0x138] sm:$0xff]
      %v1865 = vld [vmem:[%s785 + $0x140] sm:$0xff]
      %v1866 = vld [vmem:[%s785 + $0x150] sm:$0xff]
      %v1867 = vld [vmem:[%s785 + $0x158] sm:$0xff]
      %v1868 = vld [vmem:[%s785 + $0x168] sm:$0xff]
      %v1869 = vld [vmem:[%s785 + $0x170] sm:$0xff]
      %v1870 = vpack.c.bf16 %v1839, %v1838
      %v1871 = vpack.c.bf16 %v1841, %v1840
      %v1872 = vpack.c.bf16 %v1843, %v1842
      %v1873 = vpack.c.bf16 %v1845, %v1844
      %v1874 = vpack.c.bf16 %v1847, %v1846
      %v1875 = vpack.c.bf16 %v1849, %v1848
      %v1876 = vpack.c.bf16 %v1851, %v1850
      %v1877 = vpack.c.bf16 %v1853, %v1852
      %v1878 = vpack.c.bf16 %v1855, %v1854
      %v1879 = vpack.c.bf16 %v1857, %v1856
      %v1880 = vpack.c.bf16 %v1859, %v1858
      %v1881 = vpack.c.bf16 %v1861, %v1860
      %v1882 = vpack.c.bf16 %v1863, %v1862
      %v1883 = vpack.c.bf16 %v1865, %v1864
      %v1884 = vpack.c.bf16 %v1867, %v1866
      %v1885 = vpack.c.bf16 %v1869, %v1868
      %s1886 = scalar_lea.vmem %s6, 6
      %v1887 = vld [vmem:[%s1886] sm:$0x3]
      %v1889 = vsel %vm786, %v1870, 0
      %v1892 = vsel %vm786, %v1871, 0
      %v1895 = vsel %vm786, %v1872, 0
      %v1898 = vsel %vm786, %v1873, 0
      %v1901 = vsel %vm786, %v1874, 0
      %v1904 = vsel %vm786, %v1875, 0
      %v1907 = vsel %vm786, %v1876, 0
      %v1910 = vsel %vm786, %v1877, 0
      %v1913 = vsel %vm786, %v1878, 0
      %v1916 = vsel %vm786, %v1879, 0
      %v1919 = vsel %vm786, %v1880, 0
      %v1922 = vsel %vm786, %v1881, 0
      %v1925 = vsel %vm786, %v1882, 0
      %v1928 = vsel %vm786, %v1883, 0
      %v1931 = vsel %vm786, %v1884, 0
      %v1934 = vsel %vm786, %v1885, 0
      %v1937 = vand.u32 %v1887, %v1167
      %1939 = vmatprep.subr.bf16.mxu0 0
      %1940 = vmatpush1.bf16.msra.mxu0 %v1937
      %1941 = vmatprep.subr.bf16.mxu0 0
      %1942 = vmatpush1.bf16.msra.mxu0 0
      %1943 = vmatprep.subr.bf16.mxu0 0
      %1944 = vmatpush1.bf16.msra.mxu0 0
      %1945 = vmatprep.subr.bf16.mxu0 0
      %1946 = vmatpush1.bf16.msra.mxu0 0
      %1947 = vmatprep.subr.bf16.mxu0 0
      %1948 = vmatpush1.bf16.msra.mxu0 0
      %1949 = vmatprep.subr.bf16.mxu0 0
      %1950 = vmatpush1.bf16.msra.mxu0 0
      %1951 = vmatprep.subr.bf16.mxu0 0
      %1952 = vmatpush1.bf16.msra.mxu0 0
      %1953 = vmatprep.subr.bf16.mxu0 0
      %1954 = vmatpush1.bf16.msra.mxu0 0
      %1955 = vmatprep.subr.bf16.mxu0 0
      %1956 = vmatpush1.bf16.msra.mxu0 0
      %1957 = vmatprep.subr.bf16.mxu0 0
      %1958 = vmatpush1.bf16.msra.mxu0 0
      %1959 = vmatprep.subr.bf16.mxu0 0
      %1960 = vmatpush1.bf16.msra.mxu0 0
      %1961 = vmatprep.subr.bf16.mxu0 0
      %1962 = vmatpush1.bf16.msra.mxu0 0
      %1963 = vmatprep.subr.bf16.mxu0 0
      %1964 = vmatpush1.bf16.msra.mxu0 0
      %1965 = vmatprep.subr.bf16.mxu0 0
      %1966 = vmatpush1.bf16.msra.mxu0 0
      %1967 = vmatprep.subr.bf16.mxu0 0
      %1968 = vmatpush1.bf16.msra.mxu0 0
      %1969 = vmatprep.subr.bf16.mxu0 0
      %1970 = vmatpush1.bf16.msra.mxu0 0
      %1971 = vmatprep.mubr.bf16.mxu0 0
      %1972 = vmatmul.mubr.bf16.gmra.mrb[0].mxu0 %v1889
      %v1973 = vpop.f32.mrb[0].mxu0
      %v1974 = vadd.f32 0.0, %v1973
      %v1975 = vpop.f32.mrb[0].mxu0
      %v1976 = vpop.f32.mrb[0].mxu0
      %v1977 = vadd.f32 0.0, %v1976
      %v1978 = vpop.f32.mrb[0].mxu0
      %1979 = vmatprep.mubr.bf16.mxu0 0
      %1980 = vmatmul.mubr.bf16.gmra.mrb[0].mxu0 %v1892
      %v1981 = vpop.f32.mrb[0].mxu0
      %v1982 = vadd.f32 0.0, %v1981
      %v1983 = vpop.f32.mrb[0].mxu0
      %v1984 = vpop.f32.mrb[0].mxu0
      %v1985 = vadd.f32 0.0, %v1984
      %v1986 = vpop.f32.mrb[0].mxu0
      %1987 = vmatprep.mubr.bf16.mxu0 0
      %1988 = vmatmul.mubr.bf16.gmra.mrb[0].mxu0 %v1895
      %v1989 = vpop.f32.mrb[0].mxu0
      %v1990 = vadd.f32 0.0, %v1989
      %v1991 = vpop.f32.mrb[0].mxu0
      %v1992 = vpop.f32.mrb[0].mxu0
      %v1993 = vadd.f32 0.0, %v1992
      %v1994 = vpop.f32.mrb[0].mxu0
      %1995 = vmatprep.mubr.bf16.mxu0 0
      %1996 = vmatmul.mubr.bf16.gmra.mrb[0].mxu0 %v1898
      %v1997 = vpop.f32.mrb[0].mxu0
      %v1998 = vadd.f32 0.0, %v1997
      %v1999 = vpop.f32.mrb[0].mxu0
      %v2000 = vpop.f32.mrb[0].mxu0
      %v2001 = vadd.f32 0.0, %v2000
      %v2002 = vpop.f32.mrb[0].mxu0
      %2003 = vmatprep.mubr.bf16.mxu0 0
      %2004 = vmatmul.mubr.bf16.gmra.mrb[0].mxu0 %v1901
      %v2005 = vpop.f32.mrb[0].mxu0
      %v2006 = vadd.f32 0.0, %v2005
      %v2007 = vpop.f32.mrb[0].mxu0
      %v2008 = vpop.f32.mrb[0].mxu0
      %v2009 = vadd.f32 0.0, %v2008
      %v2010 = vpop.f32.mrb[0].mxu0
      %2011 = vmatprep.mubr.bf16.mxu0 0
      %2012 = vmatmul.mubr.bf16.gmra.mrb[0].mxu0 %v1904
      %v2013 = vpop.f32.mrb[0].mxu0
      %v2014 = vadd.f32 0.0, %v2013
      %v2015 = vpop.f32.mrb[0].mxu0
      %v2016 = vpop.f32.mrb[0].mxu0
      %v2017 = vadd.f32 0.0, %v2016
      %v2018 = vpop.f32.mrb[0].mxu0
      %2019 = vmatprep.mubr.bf16.mxu0 0
      %2020 = vmatmul.mubr.bf16.gmra.mrb[0].mxu0 %v1907
      %v2021 = vpop.f32.mrb[0].mxu0
      %v2022 = vadd.f32 0.0, %v2021
      %v2023 = vpop.f32.mrb[0].mxu0
      %v2024 = vpop.f32.mrb[0].mxu0
      %v2025 = vadd.f32 0.0, %v2024
      %v2026 = vpop.f32.mrb[0].mxu0
      %2027 = vmatprep.mubr.bf16.mxu0 0
      %2028 = vmatmul.mubr.bf16.gmra.mrb[0].mxu0 %v1910
      %v2029 = vpop.f32.mrb[0].mxu0
      %v2030 = vadd.f32 0.0, %v2029
      %v2031 = vpop.f32.mrb[0].mxu0
      %v2032 = vpop.f32.mrb[0].mxu0
      %v2033 = vadd.f32 0.0, %v2032
      %v2034 = vpop.f32.mrb[0].mxu0
      %2035 = vmatprep.mubr.bf16.mxu0 0
      %2036 = vmatmul.mubr.bf16.gmra.mrb[0].mxu0 %v1913
      %v2037 = vpop.f32.mrb[0].mxu0
      %v2038 = vadd.f32 0.0, %v2037
      %v2039 = vpop.f32.mrb[0].mxu0
      %v2040 = vpop.f32.mrb[0].mxu0
      %v2041 = vadd.f32 0.0, %v2040
      %v2042 = vpop.f32.mrb[0].mxu0
      %2043 = vmatprep.mubr.bf16.mxu0 0
      %2044 = vmatmul.mubr.bf16.gmra.mrb[0].mxu0 %v1916
      %v2045 = vpop.f32.mrb[0].mxu0
      %v2046 = vadd.f32 0.0, %v2045
      %v2047 = vpop.f32.mrb[0].mxu0
      %v2048 = vpop.f32.mrb[0].mxu0
      %v2049 = vadd.f32 0.0, %v2048
      %v2050 = vpop.f32.mrb[0].mxu0
      %2051 = vmatprep.mubr.bf16.mxu0 0
      %2052 = vmatmul.mubr.bf16.gmra.mrb[0].mxu0 %v1919
      %v2053 = vpop.f32.mrb[0].mxu0
      %v2054 = vadd.f32 0.0, %v2053
      %v2055 = vpop.f32.mrb[0].mxu0
      %v2056 = vpop.f32.mrb[0].mxu0
      %v2057 = vadd.f32 0.0, %v2056
      %v2058 = vpop.f32.mrb[0].mxu0
      %2059 = vmatprep.mubr.bf16.mxu0 0
      %2060 = vmatmul.mubr.bf16.gmra.mrb[0].mxu0 %v1922
      %v2061 = vpop.f32.mrb[0].mxu0
      %v2062 = vadd.f32 0.0, %v2061
      %v2063 = vpop.f32.mrb[0].mxu0
      %v2064 = vpop.f32.mrb[0].mxu0
      %v2065 = vadd.f32 0.0, %v2064
      %v2066 = vpop.f32.mrb[0].mxu0
      %2067 = vmatprep.mubr.bf16.mxu0 0
      %2068 = vmatmul.mubr.bf16.gmra.mrb[0].mxu0 %v1925
      %v2069 = vpop.f32.mrb[0].mxu0
      %v2070 = vadd.f32 0.0, %v2069
      %v2071 = vpop.f32.mrb[0].mxu0
      %v2072 = vpop.f32.mrb[0].mxu0
      %v2073 = vadd.f32 0.0, %v2072
      %v2074 = vpop.f32.mrb[0].mxu0
      %2075 = vmatprep.mubr.bf16.mxu0 0
      %2076 = vmatmul.mubr.bf16.gmra.mrb[0].mxu0 %v1928
      %v2077 = vpop.f32.mrb[0].mxu0
      %v2078 = vadd.f32 0.0, %v2077
      %v2079 = vpop.f32.mrb[0].mxu0
      %v2080 = vpop.f32.mrb[0].mxu0
      %v2081 = vadd.f32 0.0, %v2080
      %v2082 = vpop.f32.mrb[0].mxu0
      %2083 = vmatprep.mubr.bf16.mxu0 0
      %2084 = vmatmul.mubr.bf16.gmra.mrb[0].mxu0 %v1931
      %v2085 = vpop.f32.mrb[0].mxu0
      %v2086 = vadd.f32 0.0, %v2085
      %v2087 = vpop.f32.mrb[0].mxu0
      %v2088 = vpop.f32.mrb[0].mxu0
      %v2089 = vadd.f32 0.0, %v2088
      %v2090 = vpop.f32.mrb[0].mxu0
      %2091 = vmatprep.mubr.bf16.mxu0 0
      %2092 = vmatmul.mubr.bf16.gmra.mrb[0].mxu0 %v1934
      %v2093 = vpop.f32.mrb[0].mxu0
      %v2094 = vadd.f32 0.0, %v2093
      %v2095 = vpop.f32.mrb[0].mxu0
      %v2096 = vpop.f32.mrb[0].mxu0
      %v2097 = vadd.f32 0.0, %v2096
      %v2098 = vpop.f32.mrb[0].mxu0
      %2099 = vdwg.mxu0
      %v2100 = vadd.f32 %v1806, %v1974
      %v2101 = vadd.f32 %v1807, %v1977
      %v2102 = vadd.f32 %v1808, %v1982
      %v2103 = vadd.f32 %v1809, %v1985
      %v2104 = vadd.f32 %v1810, %v1990
      %v2105 = vadd.f32 %v1811, %v1993
      %v2106 = vadd.f32 %v1812, %v1998
      %v2107 = vadd.f32 %v1813, %v2001
      %v2108 = vadd.f32 %v1814, %v2006
      %v2109 = vadd.f32 %v1815, %v2009
      %v2110 = vadd.f32 %v1816, %v2014
      %v2111 = vadd.f32 %v1817, %v2017
      %v2112 = vadd.f32 %v1818, %v2022
      %v2113 = vadd.f32 %v1819, %v2025
      %v2114 = vadd.f32 %v1820, %v2030
      %v2115 = vadd.f32 %v1821, %v2033
      %v2116 = vadd.f32 %v1822, %v2038
      %v2117 = vadd.f32 %v1823, %v2041
      %v2118 = vadd.f32 %v1824, %v2046
      %v2119 = vadd.f32 %v1825, %v2049
      %v2120 = vadd.f32 %v1826, %v2054
      %v2121 = vadd.f32 %v1827, %v2057
      %v2122 = vadd.f32 %v1828, %v2062
      %v2123 = vadd.f32 %v1829, %v2065
      %v2124 = vadd.f32 %v1830, %v2070
      %v2125 = vadd.f32 %v1831, %v2073
      %v2126 = vadd.f32 %v1832, %v2078
      %v2127 = vadd.f32 %v1833, %v2081
      %v2128 = vadd.f32 %v1834, %v2086
      %v2129 = vadd.f32 %v1835, %v2089
      %v2130 = vadd.f32 %v1836, %v2094
      %v2131 = vadd.f32 %v1837, %v2097
      %v2132 = vld [vmem:[%s785 + $0x1] sm:$0xff]
      %v2133 = vld [vmem:[%s785 + $0x9] sm:$0xff]
      %v2134 = vld [vmem:[%s785 + $0x19] sm:$0xff]
      %v2135 = vld [vmem:[%s785 + $0x21] sm:$0xff]
      %v2136 = vld [vmem:[%s785 + $0x31] sm:$0xff]
      %v2137 = vld [vmem:[%s785 + $0x39] sm:$0xff]
      %v2138 = vld [vmem:[%s785 + $0x49] sm:$0xff]
      %v2139 = vld [vmem:[%s785 + $0x51] sm:$0xff]
      %v2140 = vld [vmem:[%s785 + $0x61] sm:$0xff]
      %v2141 = vld [vmem:[%s785 + $0x69] sm:$0xff]
      %v2142 = vld [vmem:[%s785 + $0x79] sm:$0xff]
      %v2143 = vld [vmem:[%s785 + $0x81] sm:$0xff]
      %v2144 = vld [vmem:[%s785 + $0x91] sm:$0xff]
      %v2145 = vld [vmem:[%s785 + $0x99] sm:$0xff]
      %v2146 = vld [vmem:[%s785 + $0xa9] sm:$0xff]
      %v2147 = vld [vmem:[%s785 + $0xb1] sm:$0xff]
      %v2148 = vld [vmem:[%s785 + $0xc1] sm:$0xff]
      %v2149 = vld [vmem:[%s785 + $0xc9] sm:$0xff]
      %v2150 = vld [vmem:[%s785 + $0xd9] sm:$0xff]
      %v2151 = vld [vmem:[%s785 + $0xe1] sm:$0xff]
      %v2152 = vld [vmem:[%s785 + $0xf1] sm:$0xff]
      %v2153 = vld [vmem:[%s785 + $0xf9] sm:$0xff]
      %v2154 = vld [vmem:[%s785 + $0x109] sm:$0xff]
      %v2155 = vld [vmem:[%s785 + $0x111] sm:$0xff]
      %v2156 = vld [vmem:[%s785 + $0x121] sm:$0xff]
      %v2157 = vld [vmem:[%s785 + $0x129] sm:$0xff]
      %v2158 = vld [vmem:[%s785 + $0x139] sm:$0xff]
      %v2159 = vld [vmem:[%s785 + $0x141] sm:$0xff]
      %v2160 = vld [vmem:[%s785 + $0x151] sm:$0xff]
      %v2161 = vld [vmem:[%s785 + $0x159] sm:$0xff]
      %v2162 = vld [vmem:[%s785 + $0x169] sm:$0xff]
      %v2163 = vld [vmem:[%s785 + $0x171] sm:$0xff]
      %v2164 = vpack.c.bf16 %v2133, %v2132
      %v2165 = vpack.c.bf16 %v2135, %v2134
      %v2166 = vpack.c.bf16 %v2137, %v2136
      %v2167 = vpack.c.bf16 %v2139, %v2138
      %v2168 = vpack.c.bf16 %v2141, %v2140
      %v2169 = vpack.c.bf16 %v2143, %v2142
      %v2170 = vpack.c.bf16 %v2145, %v2144
      %v2171 = vpack.c.bf16 %v2147, %v2146
      %v2172 = vpack.c.bf16 %v2149, %v2148
      %v2173 = vpack.c.bf16 %v2151, %v2150
      %v2174 = vpack.c.bf16 %v2153, %v2152
      %v2175 = vpack.c.bf16 %v2155, %v2154
      %v2176 = vpack.c.bf16 %v2157, %v2156
      %v2177 = vpack.c.bf16 %v2159, %v2158
      %v2178 = vpack.c.bf16 %v2161, %v2160
      %v2179 = vpack.c.bf16 %v2163, %v2162
      %s2180 = scalar_lea.vmem %s6, 8
      %v2181 = vld [vmem:[%s2180] sm:$0x3]
      %v2183 = vsel %vm786, %v2164, 0
      %v2186 = vsel %vm786, %v2165, 0
      %v2189 = vsel %vm786, %v2166, 0
      %v2192 = vsel %vm786, %v2167, 0
      %v2195 = vsel %vm786, %v2168, 0
      %v2198 = vsel %vm786, %v2169, 0
      %v2201 = vsel %vm786, %v2170, 0
      %v2204 = vsel %vm786, %v2171, 0
      %v2207 = vsel %vm786, %v2172, 0
      %v2210 = vsel %vm786, %v2173, 0
      %v2213 = vsel %vm786, %v2174, 0
      %v2216 = vsel %vm786, %v2175, 0
      %v2219 = vsel %vm786, %v2176, 0
      %v2222 = vsel %vm786, %v2177, 0
      %v2225 = vsel %vm786, %v2178, 0
      %v2228 = vsel %vm786, %v2179, 0
      %v2231 = vand.u32 %v2181, %v1167
      %2233 = vmatprep.subr.bf16.mxu0 0
      %2234 = vmatpush1.bf16.msra.mxu0 %v2231
      %2235 = vmatprep.subr.bf16.mxu0 0
      %2236 = vmatpush1.bf16.msra.mxu0 0
      %2237 = vmatprep.subr.bf16.mxu0 0
      %2238 = vmatpush1.bf16.msra.mxu0 0
      %2239 = vmatprep.subr.bf16.mxu0 0
      %2240 = vmatpush1.bf16.msra.mxu0 0
      %2241 = vmatprep.subr.bf16.mxu0 0
      %2242 = vmatpush1.bf16.msra.mxu0 0
      %2243 = vmatprep.subr.bf16.mxu0 0
      %2244 = vmatpush1.bf16.msra.mxu0 0
      %2245 = vmatprep.subr.bf16.mxu0 0
      %2246 = vmatpush1.bf16.msra.mxu0 0
      %2247 = vmatprep.subr.bf16.mxu0 0
      %2248 = vmatpush1.bf16.msra.mxu0 0
      %2249 = vmatprep.subr.bf16.mxu0 0
      %2250 = vmatpush1.bf16.msra.mxu0 0
      %2251 = vmatprep.subr.bf16.mxu0 0
      %2252 = vmatpush1.bf16.msra.mxu0 0
      %2253 = vmatprep.subr.bf16.mxu0 0
      %2254 = vmatpush1.bf16.msra.mxu0 0
      %2255 = vmatprep.subr.bf16.mxu0 0
      %2256 = vmatpush1.bf16.msra.mxu0 0
      %2257 = vmatprep.subr.bf16.mxu0 0
      %2258 = vmatpush1.bf16.msra.mxu0 0
      %2259 = vmatprep.subr.bf16.mxu0 0
      %2260 = vmatpush1.bf16.msra.mxu0 0
      %2261 = vmatprep.subr.bf16.mxu0 0
      %2262 = vmatpush1.bf16.msra.mxu0 0
      %2263 = vmatprep.subr.bf16.mxu0 0
      %2264 = vmatpush1.bf16.msra.mxu0 0
      %2265 = vmatprep.mubr.bf16.mxu0 0
      %2266 = vmatmul.mubr.bf16.gmra.mrb[0].mxu0 %v2183
      %v2267 = vpop.f32.mrb[0].mxu0
      %v2268 = vadd.f32 0.0, %v2267
      %v2269 = vpop.f32.mrb[0].mxu0
      %v2270 = vpop.f32.mrb[0].mxu0
      %v2271 = vadd.f32 0.0, %v2270
      %v2272 = vpop.f32.mrb[0].mxu0
      %2273 = vmatprep.mubr.bf16.mxu0 0
      %2274 = vmatmul.mubr.bf16.gmra.mrb[0].mxu0 %v2186
      %v2275 = vpop.f32.mrb[0].mxu0
      %v2276 = vadd.f32 0.0, %v2275
      %v2277 = vpop.f32.mrb[0].mxu0
      %v2278 = vpop.f32.mrb[0].mxu0
      %v2279 = vadd.f32 0.0, %v2278
      %v2280 = vpop.f32.mrb[0].mxu0
      %2281 = vmatprep.mubr.bf16.mxu0 0
      %2282 = vmatmul.mubr.bf16.gmra.mrb[0].mxu0 %v2189
      %v2283 = vpop.f32.mrb[0].mxu0
      %v2284 = vadd.f32 0.0, %v2283
      %v2285 = vpop.f32.mrb[0].mxu0
      %v2286 = vpop.f32.mrb[0].mxu0
      %v2287 = vadd.f32 0.0, %v2286
      %v2288 = vpop.f32.mrb[0].mxu0
      %2289 = vmatprep.mubr.bf16.mxu0 0
      %2290 = vmatmul.mubr.bf16.gmra.mrb[0].mxu0 %v2192
      %v2291 = vpop.f32.mrb[0].mxu0
      %v2292 = vadd.f32 0.0, %v2291
      %v2293 = vpop.f32.mrb[0].mxu0
      %v2294 = vpop.f32.mrb[0].mxu0
      %v2295 = vadd.f32 0.0, %v2294
      %v2296 = vpop.f32.mrb[0].mxu0
      %2297 = vmatprep.mubr.bf16.mxu0 0
      %2298 = vmatmul.mubr.bf16.gmra.mrb[0].mxu0 %v2195
      %v2299 = vpop.f32.mrb[0].mxu0
      %v2300 = vadd.f32 0.0, %v2299
      %v2301 = vpop.f32.mrb[0].mxu0
      %v2302 = vpop.f32.mrb[0].mxu0
      %v2303 = vadd.f32 0.0, %v2302
      %v2304 = vpop.f32.mrb[0].mxu0
      %2305 = vmatprep.mubr.bf16.mxu0 0
      %2306 = vmatmul.mubr.bf16.gmra.mrb[0].mxu0 %v2198
      %v2307 = vpop.f32.mrb[0].mxu0
      %v2308 = vadd.f32 0.0, %v2307
      %v2309 = vpop.f32.mrb[0].mxu0
      %v2310 = vpop.f32.mrb[0].mxu0
      %v2311 = vadd.f32 0.0, %v2310
      %v2312 = vpop.f32.mrb[0].mxu0
      %2313 = vmatprep.mubr.bf16.mxu0 0
      %2314 = vmatmul.mubr.bf16.gmra.mrb[0].mxu0 %v2201
      %v2315 = vpop.f32.mrb[0].mxu0
      %v2316 = vadd.f32 0.0, %v2315
      %v2317 = vpop.f32.mrb[0].mxu0
      %v2318 = vpop.f32.mrb[0].mxu0
      %v2319 = vadd.f32 0.0, %v2318
      %v2320 = vpop.f32.mrb[0].mxu0
      %2321 = vmatprep.mubr.bf16.mxu0 0
      %2322 = vmatmul.mubr.bf16.gmra.mrb[0].mxu0 %v2204
      %v2323 = vpop.f32.mrb[0].mxu0
      %v2324 = vadd.f32 0.0, %v2323
      %v2325 = vpop.f32.mrb[0].mxu0
      %v2326 = vpop.f32.mrb[0].mxu0
      %v2327 = vadd.f32 0.0, %v2326
      %v2328 = vpop.f32.mrb[0].mxu0
      %2329 = vmatprep.mubr.bf16.mxu0 0
      %2330 = vmatmul.mubr.bf16.gmra.mrb[0].mxu0 %v2207
      %v2331 = vpop.f32.mrb[0].mxu0
      %v2332 = vadd.f32 0.0, %v2331
      %v2333 = vpop.f32.mrb[0].mxu0
      %v2334 = vpop.f32.mrb[0].mxu0
      %v2335 = vadd.f32 0.0, %v2334
      %v2336 = vpop.f32.mrb[0].mxu0
      %2337 = vmatprep.mubr.bf16.mxu0 0
      %2338 = vmatmul.mubr.bf16.gmra.mrb[0].mxu0 %v2210
      %v2339 = vpop.f32.mrb[0].mxu0
      %v2340 = vadd.f32 0.0, %v2339
      %v2341 = vpop.f32.mrb[0].mxu0
      %v2342 = vpop.f32.mrb[0].mxu0
      %v2343 = vadd.f32 0.0, %v2342
      %v2344 = vpop.f32.mrb[0].mxu0
      %2345 = vmatprep.mubr.bf16.mxu0 0
      %2346 = vmatmul.mubr.bf16.gmra.mrb[0].mxu0 %v2213
      %v2347 = vpop.f32.mrb[0].mxu0
      %v2348 = vadd.f32 0.0, %v2347
      %v2349 = vpop.f32.mrb[0].mxu0
      %v2350 = vpop.f32.mrb[0].mxu0
      %v2351 = vadd.f32 0.0, %v2350
      %v2352 = vpop.f32.mrb[0].mxu0
      %2353 = vmatprep.mubr.bf16.mxu0 0
      %2354 = vmatmul.mubr.bf16.gmra.mrb[0].mxu0 %v2216
      %v2355 = vpop.f32.mrb[0].mxu0
      %v2356 = vadd.f32 0.0, %v2355
      %v2357 = vpop.f32.mrb[0].mxu0
      %v2358 = vpop.f32.mrb[0].mxu0
      %v2359 = vadd.f32 0.0, %v2358
      %v2360 = vpop.f32.mrb[0].mxu0
      %2361 = vmatprep.mubr.bf16.mxu0 0
      %2362 = vmatmul.mubr.bf16.gmra.mrb[0].mxu0 %v2219
      %v2363 = vpop.f32.mrb[0].mxu0
      %v2364 = vadd.f32 0.0, %v2363
      %v2365 = vpop.f32.mrb[0].mxu0
      %v2366 = vpop.f32.mrb[0].mxu0
      %v2367 = vadd.f32 0.0, %v2366
      %v2368 = vpop.f32.mrb[0].mxu0
      %2369 = vmatprep.mubr.bf16.mxu0 0
      %2370 = vmatmul.mubr.bf16.gmra.mrb[0].mxu0 %v2222
      %v2371 = vpop.f32.mrb[0].mxu0
      %v2372 = vadd.f32 0.0, %v2371
      %v2373 = vpop.f32.mrb[0].mxu0
      %v2374 = vpop.f32.mrb[0].mxu0
      %v2375 = vadd.f32 0.0, %v2374
      %v2376 = vpop.f32.mrb[0].mxu0
      %2377 = vmatprep.mubr.bf16.mxu0 0
      %2378 = vmatmul.mubr.bf16.gmra.mrb[0].mxu0 %v2225
      %v2379 = vpop.f32.mrb[0].mxu0
      %v2380 = vadd.f32 0.0, %v2379
      %v2381 = vpop.f32.mrb[0].mxu0
      %v2382 = vpop.f32.mrb[0].mxu0
      %v2383 = vadd.f32 0.0, %v2382
      %v2384 = vpop.f32.mrb[0].mxu0
      %2385 = vmatprep.mubr.bf16.mxu0 0
      %2386 = vmatmul.mubr.bf16.gmra.mrb[0].mxu0 %v2228
      %v2387 = vpop.f32.mrb[0].mxu0
      %v2388 = vadd.f32 0.0, %v2387
      %v2389 = vpop.f32.mrb[0].mxu0
      %v2390 = vpop.f32.mrb[0].mxu0
      %v2391 = vadd.f32 0.0, %v2390
      %v2392 = vpop.f32.mrb[0].mxu0
      %2393 = vdwg.mxu0
      %v2394 = vadd.f32 %v2100, %v2268
      %v2395 = vadd.f32 %v2101, %v2271
      %v2396 = vadd.f32 %v2102, %v2276
      %v2397 = vadd.f32 %v2103, %v2279
      %v2398 = vadd.f32 %v2104, %v2284
      %v2399 = vadd.f32 %v2105, %v2287
      %v2400 = vadd.f32 %v2106, %v2292
      %v2401 = vadd.f32 %v2107, %v2295
      %v2402 = vadd.f32 %v2108, %v2300
      %v2403 = vadd.f32 %v2109, %v2303
      %v2404 = vadd.f32 %v2110, %v2308
      %v2405 = vadd.f32 %v2111, %v2311
      %v2406 = vadd.f32 %v2112, %v2316
      %v2407 = vadd.f32 %v2113, %v2319
      %v2408 = vadd.f32 %v2114, %v2324
      %v2409 = vadd.f32 %v2115, %v2327
      %v2410 = vadd.f32 %v2116, %v2332
      %v2411 = vadd.f32 %v2117, %v2335
      %v2412 = vadd.f32 %v2118, %v2340
      %v2413 = vadd.f32 %v2119, %v2343
      %v2414 = vadd.f32 %v2120, %v2348
      %v2415 = vadd.f32 %v2121, %v2351
      %v2416 = vadd.f32 %v2122, %v2356
      %v2417 = vadd.f32 %v2123, %v2359
      %v2418 = vadd.f32 %v2124, %v2364
      %v2419 = vadd.f32 %v2125, %v2367
      %v2420 = vadd.f32 %v2126, %v2372
      %v2421 = vadd.f32 %v2127, %v2375
      %v2422 = vadd.f32 %v2128, %v2380
      %v2423 = vadd.f32 %v2129, %v2383
      %v2424 = vadd.f32 %v2130, %v2388
      %v2425 = vadd.f32 %v2131, %v2391
      %v2426 = vld [vmem:[%s785 + $0x2] sm:$0xff]
      %v2427 = vld [vmem:[%s785 + $0xa] sm:$0xff]
      %v2428 = vld [vmem:[%s785 + $0x1a] sm:$0xff]
      %v2429 = vld [vmem:[%s785 + $0x22] sm:$0xff]
      %v2430 = vld [vmem:[%s785 + $0x32] sm:$0xff]
      %v2431 = vld [vmem:[%s785 + $0x3a] sm:$0xff]
      %v2432 = vld [vmem:[%s785 + $0x4a] sm:$0xff]
      %v2433 = vld [vmem:[%s785 + $0x52] sm:$0xff]
      %v2434 = vld [vmem:[%s785 + $0x62] sm:$0xff]
      %v2435 = vld [vmem:[%s785 + $0x6a] sm:$0xff]
      %v2436 = vld [vmem:[%s785 + $0x7a] sm:$0xff]
      %v2437 = vld [vmem:[%s785 + $0x82] sm:$0xff]
      %v2438 = vld [vmem:[%s785 + $0x92] sm:$0xff]
      %v2439 = vld [vmem:[%s785 + $0x9a] sm:$0xff]
      %v2440 = vld [vmem:[%s785 + $0xaa] sm:$0xff]
      %v2441 = vld [vmem:[%s785 + $0xb2] sm:$0xff]
      %v2442 = vld [vmem:[%s785 + $0xc2] sm:$0xff]
      %v2443 = vld [vmem:[%s785 + $0xca] sm:$0xff]
      %v2444 = vld [vmem:[%s785 + $0xda] sm:$0xff]
      %v2445 = vld [vmem:[%s785 + $0xe2] sm:$0xff]
      %v2446 = vld [vmem:[%s785 + $0xf2] sm:$0xff]
      %v2447 = vld [vmem:[%s785 + $0xfa] sm:$0xff]
      %v2448 = vld [vmem:[%s785 + $0x10a] sm:$0xff]
      %v2449 = vld [vmem:[%s785 + $0x112] sm:$0xff]
      %v2450 = vld [vmem:[%s785 + $0x122] sm:$0xff]
      %v2451 = vld [vmem:[%s785 + $0x12a] sm:$0xff]
      %v2452 = vld [vmem:[%s785 + $0x13a] sm:$0xff]
      %v2453 = vld [vmem:[%s785 + $0x142] sm:$0xff]
      %v2454 = vld [vmem:[%s785 + $0x152] sm:$0xff]
      %v2455 = vld [vmem:[%s785 + $0x15a] sm:$0xff]
      %v2456 = vld [vmem:[%s785 + $0x16a] sm:$0xff]
      %v2457 = vld [vmem:[%s785 + $0x172] sm:$0xff]
      %v2458 = vpack.c.bf16 %v2427, %v2426
      %v2459 = vpack.c.bf16 %v2429, %v2428
      %v2460 = vpack.c.bf16 %v2431, %v2430
      %v2461 = vpack.c.bf16 %v2433, %v2432
      %v2462 = vpack.c.bf16 %v2435, %v2434
      %v2463 = vpack.c.bf16 %v2437, %v2436
      %v2464 = vpack.c.bf16 %v2439, %v2438
      %v2465 = vpack.c.bf16 %v2441, %v2440
      %v2466 = vpack.c.bf16 %v2443, %v2442
      %v2467 = vpack.c.bf16 %v2445, %v2444
      %v2468 = vpack.c.bf16 %v2447, %v2446
      %v2469 = vpack.c.bf16 %v2449, %v2448
      %v2470 = vpack.c.bf16 %v2451, %v2450
      %v2471 = vpack.c.bf16 %v2453, %v2452
      %v2472 = vpack.c.bf16 %v2455, %v2454
      %v2473 = vpack.c.bf16 %v2457, %v2456
      %s2474 = scalar_lea.vmem %s6, 10
      %v2475 = vld [vmem:[%s2474] sm:$0x3]
      %v2477 = vsel %vm786, %v2458, 0
      %v2480 = vsel %vm786, %v2459, 0
      %v2483 = vsel %vm786, %v2460, 0
      %v2486 = vsel %vm786, %v2461, 0
      %v2489 = vsel %vm786, %v2462, 0
      %v2492 = vsel %vm786, %v2463, 0
      %v2495 = vsel %vm786, %v2464, 0
      %v2498 = vsel %vm786, %v2465, 0
      %v2501 = vsel %vm786, %v2466, 0
      %v2504 = vsel %vm786, %v2467, 0
      %v2507 = vsel %vm786, %v2468, 0
      %v2510 = vsel %vm786, %v2469, 0
      %v2513 = vsel %vm786, %v2470, 0
      %v2516 = vsel %vm786, %v2471, 0
      %v2519 = vsel %vm786, %v2472, 0
      %v2522 = vsel %vm786, %v2473, 0
      %v2525 = vand.u32 %v2475, %v1167
      %2527 = vmatprep.subr.bf16.mxu0 0
      %2528 = vmatpush1.bf16.msra.mxu0 %v2525
      %2529 = vmatprep.subr.bf16.mxu0 0
      %2530 = vmatpush1.bf16.msra.mxu0 0
      %2531 = vmatprep.subr.bf16.mxu0 0
      %2532 = vmatpush1.bf16.msra.mxu0 0
      %2533 = vmatprep.subr.bf16.mxu0 0
      %2534 = vmatpush1.bf16.msra.mxu0 0
      %2535 = vmatprep.subr.bf16.mxu0 0
      %2536 = vmatpush1.bf16.msra.mxu0 0
      %2537 = vmatprep.subr.bf16.mxu0 0
      %2538 = vmatpush1.bf16.msra.mxu0 0
      %2539 = vmatprep.subr.bf16.mxu0 0
      %2540 = vmatpush1.bf16.msra.mxu0 0
      %2541 = vmatprep.subr.bf16.mxu0 0
      %2542 = vmatpush1.bf16.msra.mxu0 0
      %2543 = vmatprep.subr.bf16.mxu0 0
      %2544 = vmatpush1.bf16.msra.mxu0 0
      %2545 = vmatprep.subr.bf16.mxu0 0
      %2546 = vmatpush1.bf16.msra.mxu0 0
      %2547 = vmatprep.subr.bf16.mxu0 0
      %2548 = vmatpush1.bf16.msra.mxu0 0
      %2549 = vmatprep.subr.bf16.mxu0 0
      %2550 = vmatpush1.bf16.msra.mxu0 0
      %2551 = vmatprep.subr.bf16.mxu0 0
      %2552 = vmatpush1.bf16.msra.mxu0 0
      %2553 = vmatprep.subr.bf16.mxu0 0
      %2554 = vmatpush1.bf16.msra.mxu0 0
      %2555 = vmatprep.subr.bf16.mxu0 0
      %2556 = vmatpush1.bf16.msra.mxu0 0
      %2557 = vmatprep.subr.bf16.mxu0 0
      %2558 = vmatpush1.bf16.msra.mxu0 0
      %2559 = vmatprep.mubr.bf16.mxu0 0
      %2560 = vmatmul.mubr.bf16.gmra.mrb[0].mxu0 %v2477
      %v2561 = vpop.f32.mrb[0].mxu0
      %v2562 = vadd.f32 0.0, %v2561
      %v2563 = vpop.f32.mrb[0].mxu0
      %v2564 = vpop.f32.mrb[0].mxu0
      %v2565 = vadd.f32 0.0, %v2564
      %v2566 = vpop.f32.mrb[0].mxu0
      %2567 = vmatprep.mubr.bf16.mxu0 0
      %2568 = vmatmul.mubr.bf16.gmra.mrb[0].mxu0 %v2480
      %v2569 = vpop.f32.mrb[0].mxu0
      %v2570 = vadd.f32 0.0, %v2569
      %v2571 = vpop.f32.mrb[0].mxu0
      %v2572 = vpop.f32.mrb[0].mxu0
      %v2573 = vadd.f32 0.0, %v2572
      %v2574 = vpop.f32.mrb[0].mxu0
      %2575 = vmatprep.mubr.bf16.mxu0 0
      %2576 = vmatmul.mubr.bf16.gmra.mrb[0].mxu0 %v2483
      %v2577 = vpop.f32.mrb[0].mxu0
      %v2578 = vadd.f32 0.0, %v2577
      %v2579 = vpop.f32.mrb[0].mxu0
      %v2580 = vpop.f32.mrb[0].mxu0
      %v2581 = vadd.f32 0.0, %v2580
      %v2582 = vpop.f32.mrb[0].mxu0
      %2583 = vmatprep.mubr.bf16.mxu0 0
      %2584 = vmatmul.mubr.bf16.gmra.mrb[0].mxu0 %v2486
      %v2585 = vpop.f32.mrb[0].mxu0
      %v2586 = vadd.f32 0.0, %v2585
      %v2587 = vpop.f32.mrb[0].mxu0
      %v2588 = vpop.f32.mrb[0].mxu0
      %v2589 = vadd.f32 0.0, %v2588
      %v2590 = vpop.f32.mrb[0].mxu0
      %2591 = vmatprep.mubr.bf16.mxu0 0
      %2592 = vmatmul.mubr.bf16.gmra.mrb[0].mxu0 %v2489
      %v2593 = vpop.f32.mrb[0].mxu0
      %v2594 = vadd.f32 0.0, %v2593
      %v2595 = vpop.f32.mrb[0].mxu0
      %v2596 = vpop.f32.mrb[0].mxu0
      %v2597 = vadd.f32 0.0, %v2596
      %v2598 = vpop.f32.mrb[0].mxu0
      %2599 = vmatprep.mubr.bf16.mxu0 0
      %2600 = vmatmul.mubr.bf16.gmra.mrb[0].mxu0 %v2492
      %v2601 = vpop.f32.mrb[0].mxu0
      %v2602 = vadd.f32 0.0, %v2601
      %v2603 = vpop.f32.mrb[0].mxu0
      %v2604 = vpop.f32.mrb[0].mxu0
      %v2605 = vadd.f32 0.0, %v2604
      %v2606 = vpop.f32.mrb[0].mxu0
      %2607 = vmatprep.mubr.bf16.mxu0 0
      %2608 = vmatmul.mubr.bf16.gmra.mrb[0].mxu0 %v2495
      %v2609 = vpop.f32.mrb[0].mxu0
      %v2610 = vadd.f32 0.0, %v2609
      %v2611 = vpop.f32.mrb[0].mxu0
      %v2612 = vpop.f32.mrb[0].mxu0
      %v2613 = vadd.f32 0.0, %v2612
      %v2614 = vpop.f32.mrb[0].mxu0
      %2615 = vmatprep.mubr.bf16.mxu0 0
      %2616 = vmatmul.mubr.bf16.gmra.mrb[0].mxu0 %v2498
      %v2617 = vpop.f32.mrb[0].mxu0
      %v2618 = vadd.f32 0.0, %v2617
      %v2619 = vpop.f32.mrb[0].mxu0
      %v2620 = vpop.f32.mrb[0].mxu0
      %v2621 = vadd.f32 0.0, %v2620
      %v2622 = vpop.f32.mrb[0].mxu0
      %2623 = vmatprep.mubr.bf16.mxu0 0
      %2624 = vmatmul.mubr.bf16.gmra.mrb[0].mxu0 %v2501
      %v2625 = vpop.f32.mrb[0].mxu0
      %v2626 = vadd.f32 0.0, %v2625
      %v2627 = vpop.f32.mrb[0].mxu0
      %v2628 = vpop.f32.mrb[0].mxu0
      %v2629 = vadd.f32 0.0, %v2628
      %v2630 = vpop.f32.mrb[0].mxu0
      %2631 = vmatprep.mubr.bf16.mxu0 0
      %2632 = vmatmul.mubr.bf16.gmra.mrb[0].mxu0 %v2504
      %v2633 = vpop.f32.mrb[0].mxu0
      %v2634 = vadd.f32 0.0, %v2633
      %v2635 = vpop.f32.mrb[0].mxu0
      %v2636 = vpop.f32.mrb[0].mxu0
      %v2637 = vadd.f32 0.0, %v2636
      %v2638 = vpop.f32.mrb[0].mxu0
      %2639 = vmatprep.mubr.bf16.mxu0 0
      %2640 = vmatmul.mubr.bf16.gmra.mrb[0].mxu0 %v2507
      %v2641 = vpop.f32.mrb[0].mxu0
      %v2642 = vadd.f32 0.0, %v2641
      %v2643 = vpop.f32.mrb[0].mxu0
      %v2644 = vpop.f32.mrb[0].mxu0
      %v2645 = vadd.f32 0.0, %v2644
      %v2646 = vpop.f32.mrb[0].mxu0
      %2647 = vmatprep.mubr.bf16.mxu0 0
      %2648 = vmatmul.mubr.bf16.gmra.mrb[0].mxu0 %v2510
      %v2649 = vpop.f32.mrb[0].mxu0
      %v2650 = vadd.f32 0.0, %v2649
      %v2651 = vpop.f32.mrb[0].mxu0
      %v2652 = vpop.f32.mrb[0].mxu0
      %v2653 = vadd.f32 0.0, %v2652
      %v2654 = vpop.f32.mrb[0].mxu0
      %2655 = vmatprep.mubr.bf16.mxu0 0
      %2656 = vmatmul.mubr.bf16.gmra.mrb[0].mxu0 %v2513
      %v2657 = vpop.f32.mrb[0].mxu0
      %v2658 = vadd.f32 0.0, %v2657
      %v2659 = vpop.f32.mrb[0].mxu0
      %v2660 = vpop.f32.mrb[0].mxu0
      %v2661 = vadd.f32 0.0, %v2660
      %v2662 = vpop.f32.mrb[0].mxu0
      %2663 = vmatprep.mubr.bf16.mxu0 0
      %2664 = vmatmul.mubr.bf16.gmra.mrb[0].mxu0 %v2516
      %v2665 = vpop.f32.mrb[0].mxu0
      %v2666 = vadd.f32 0.0, %v2665
      %v2667 = vpop.f32.mrb[0].mxu0
      %v2668 = vpop.f32.mrb[0].mxu0
      %v2669 = vadd.f32 0.0, %v2668
      %v2670 = vpop.f32.mrb[0].mxu0
      %2671 = vmatprep.mubr.bf16.mxu0 0
      %2672 = vmatmul.mubr.bf16.gmra.mrb[0].mxu0 %v2519
      %v2673 = vpop.f32.mrb[0].mxu0
      %v2674 = vadd.f32 0.0, %v2673
      %v2675 = vpop.f32.mrb[0].mxu0
      %v2676 = vpop.f32.mrb[0].mxu0
      %v2677 = vadd.f32 0.0, %v2676
      %v2678 = vpop.f32.mrb[0].mxu0
      %2679 = vmatprep.mubr.bf16.mxu0 0
      %2680 = vmatmul.mubr.bf16.gmra.mrb[0].mxu0 %v2522
      %v2681 = vpop.f32.mrb[0].mxu0
      %v2682 = vadd.f32 0.0, %v2681
      %v2683 = vpop.f32.mrb[0].mxu0
      %v2684 = vpop.f32.mrb[0].mxu0
      %v2685 = vadd.f32 0.0, %v2684
      %v2686 = vpop.f32.mrb[0].mxu0
      %2687 = vdwg.mxu0
      %v2688 = vadd.f32 %v2394, %v2562
      %v2689 = vadd.f32 %v2395, %v2565
      %v2690 = vadd.f32 %v2396, %v2570
      %v2691 = vadd.f32 %v2397, %v2573
      %v2692 = vadd.f32 %v2398, %v2578
      %v2693 = vadd.f32 %v2399, %v2581
      %v2694 = vadd.f32 %v2400, %v2586
      %v2695 = vadd.f32 %v2401, %v2589
      %v2696 = vadd.f32 %v2402, %v2594
      %v2697 = vadd.f32 %v2403, %v2597
      %v2698 = vadd.f32 %v2404, %v2602
      %v2699 = vadd.f32 %v2405, %v2605
      %v2700 = vadd.f32 %v2406, %v2610
      %v2701 = vadd.f32 %v2407, %v2613
      %v2702 = vadd.f32 %v2408, %v2618
      %v2703 = vadd.f32 %v2409, %v2621
      %v2704 = vadd.f32 %v2410, %v2626
      %v2705 = vadd.f32 %v2411, %v2629
      %v2706 = vadd.f32 %v2412, %v2634
      %v2707 = vadd.f32 %v2413, %v2637
      %v2708 = vadd.f32 %v2414, %v2642
      %v2709 = vadd.f32 %v2415, %v2645
      %v2710 = vadd.f32 %v2416, %v2650
      %v2711 = vadd.f32 %v2417, %v2653
      %v2712 = vadd.f32 %v2418, %v2658
      %v2713 = vadd.f32 %v2419, %v2661
      %v2714 = vadd.f32 %v2420, %v2666
      %v2715 = vadd.f32 %v2421, %v2669
      %v2716 = vadd.f32 %v2422, %v2674
      %v2717 = vadd.f32 %v2423, %v2677
      %v2718 = vadd.f32 %v2424, %v2682
      %v2719 = vadd.f32 %v2425, %v2685
      %s2720 = scalar_lea.vmem [#allocation2], 48
      %v2721 = vld [vmem:[%s2720] sm:$0xff]
      %v2722 = vld [vmem:[%s2720 + $0x8] sm:$0xff]
      %v2723 = vld [vmem:[%s2720 + $0x18] sm:$0xff]
      %v2724 = vld [vmem:[%s2720 + $0x20] sm:$0xff]
      %v2725 = vld [vmem:[%s2720 + $0x30] sm:$0xff]
      %v2726 = vld [vmem:[%s2720 + $0x38] sm:$0xff]
      %v2727 = vld [vmem:[%s2720 + $0x48] sm:$0xff]
      %v2728 = vld [vmem:[%s2720 + $0x50] sm:$0xff]
      %v2729 = vld [vmem:[%s2720 + $0x60] sm:$0xff]
      %v2730 = vld [vmem:[%s2720 + $0x68] sm:$0xff]
      %v2731 = vld [vmem:[%s2720 + $0x78] sm:$0xff]
      %v2732 = vld [vmem:[%s2720 + $0x80] sm:$0xff]
      %v2733 = vld [vmem:[%s2720 + $0x90] sm:$0xff]
      %v2734 = vld [vmem:[%s2720 + $0x98] sm:$0xff]
      %v2735 = vld [vmem:[%s2720 + $0xa8] sm:$0xff]
      %v2736 = vld [vmem:[%s2720 + $0xb0] sm:$0xff]
      %v2737 = vld [vmem:[%s2720 + $0xc0] sm:$0xff]
      %v2738 = vld [vmem:[%s2720 + $0xc8] sm:$0xff]
      %v2739 = vld [vmem:[%s2720 + $0xd8] sm:$0xff]
      %v2740 = vld [vmem:[%s2720 + $0xe0] sm:$0xff]
      %v2741 = vld [vmem:[%s2720 + $0xf0] sm:$0xff]
      %v2742 = vld [vmem:[%s2720 + $0xf8] sm:$0xff]
      %v2743 = vld [vmem:[%s2720 + $0x108] sm:$0xff]
      %v2744 = vld [vmem:[%s2720 + $0x110] sm:$0xff]
      %v2745 = vld [vmem:[%s2720 + $0x120] sm:$0xff]
      %v2746 = vld [vmem:[%s2720 + $0x128] sm:$0xff]
      %v2747 = vld [vmem:[%s2720 + $0x138] sm:$0xff]
      %v2748 = vld [vmem:[%s2720 + $0x140] sm:$0xff]
      %v2749 = vld [vmem:[%s2720 + $0x150] sm:$0xff]
      %v2750 = vld [vmem:[%s2720 + $0x158] sm:$0xff]
      %v2751 = vld [vmem:[%s2720 + $0x168] sm:$0xff]
      %v2752 = vld [vmem:[%s2720 + $0x170] sm:$0xff]
      %v2753 = vpack.c.bf16 %v2722, %v2721
      %v2754 = vpack.c.bf16 %v2724, %v2723
      %v2755 = vpack.c.bf16 %v2726, %v2725
      %v2756 = vpack.c.bf16 %v2728, %v2727
      %v2757 = vpack.c.bf16 %v2730, %v2729
      %v2758 = vpack.c.bf16 %v2732, %v2731
      %v2759 = vpack.c.bf16 %v2734, %v2733
      %v2760 = vpack.c.bf16 %v2736, %v2735
      %v2761 = vpack.c.bf16 %v2738, %v2737
      %v2762 = vpack.c.bf16 %v2740, %v2739
      %v2763 = vpack.c.bf16 %v2742, %v2741
      %v2764 = vpack.c.bf16 %v2744, %v2743
      %v2765 = vpack.c.bf16 %v2746, %v2745
      %v2766 = vpack.c.bf16 %v2748, %v2747
      %v2767 = vpack.c.bf16 %v2750, %v2749
      %v2768 = vpack.c.bf16 %v2752, %v2751
      %s2769 = scalar_lea.vmem %s6, 12
      %v2770 = vld [vmem:[%s2769] sm:$0x3]
      %v2772 = vsel %vm786, %v2753, 0
      %v2775 = vsel %vm786, %v2754, 0
      %v2778 = vsel %vm786, %v2755, 0
      %v2781 = vsel %vm786, %v2756, 0
      %v2784 = vsel %vm786, %v2757, 0
      %v2787 = vsel %vm786, %v2758, 0
      %v2790 = vsel %vm786, %v2759, 0
      %v2793 = vsel %vm786, %v2760, 0
      %v2796 = vsel %vm786, %v2761, 0
      %v2799 = vsel %vm786, %v2762, 0
      %v2802 = vsel %vm786, %v2763, 0
      %v2805 = vsel %vm786, %v2764, 0
      %v2808 = vsel %vm786, %v2765, 0
      %v2811 = vsel %vm786, %v2766, 0
      %v2814 = vsel %vm786, %v2767, 0
      %v2817 = vsel %vm786, %v2768, 0
      %v2820 = vand.u32 %v2770, %v1167
      %2822 = vmatprep.subr.bf16.mxu0 0
      %2823 = vmatpush1.bf16.msra.mxu0 %v2820
      %2824 = vmatprep.subr.bf16.mxu0 0
      %2825 = vmatpush1.bf16.msra.mxu0 0
      %2826 = vmatprep.subr.bf16.mxu0 0
      %2827 = vmatpush1.bf16.msra.mxu0 0
      %2828 = vmatprep.subr.bf16.mxu0 0
      %2829 = vmatpush1.bf16.msra.mxu0 0
      %2830 = vmatprep.subr.bf16.mxu0 0
      %2831 = vmatpush1.bf16.msra.mxu0 0
      %2832 = vmatprep.subr.bf16.mxu0 0
      %2833 = vmatpush1.bf16.msra.mxu0 0
      %2834 = vmatprep.subr.bf16.mxu0 0
      %2835 = vmatpush1.bf16.msra.mxu0 0
      %2836 = vmatprep.subr.bf16.mxu0 0
      %2837 = vmatpush1.bf16.msra.mxu0 0
      %2838 = vmatprep.subr.bf16.mxu0 0
      %2839 = vmatpush1.bf16.msra.mxu0 0
      %2840 = vmatprep.subr.bf16.mxu0 0
      %2841 = vmatpush1.bf16.msra.mxu0 0
      %2842 = vmatprep.subr.bf16.mxu0 0
      %2843 = vmatpush1.bf16.msra.mxu0 0
      %2844 = vmatprep.subr.bf16.mxu0 0
      %2845 = vmatpush1.bf16.msra.mxu0 0
      %2846 = vmatprep.subr.bf16.mxu0 0
      %2847 = vmatpush1.bf16.msra.mxu0 0
      %2848 = vmatprep.subr.bf16.mxu0 0
      %2849 = vmatpush1.bf16.msra.mxu0 0
      %2850 = vmatprep.subr.bf16.mxu0 0
      %2851 = vmatpush1.bf16.msra.mxu0 0
      %2852 = vmatprep.subr.bf16.mxu0 0
      %2853 = vmatpush1.bf16.msra.mxu0 0
      %2854 = vmatprep.mubr.bf16.mxu0 0
      %2855 = vmatmul.mubr.bf16.gmra.mrb[0].mxu0 %v2772
      %v2856 = vpop.f32.mrb[0].mxu0
      %v2857 = vadd.f32 0.0, %v2856
      %v2858 = vpop.f32.mrb[0].mxu0
      %v2859 = vpop.f32.mrb[0].mxu0
      %v2860 = vadd.f32 0.0, %v2859
      %v2861 = vpop.f32.mrb[0].mxu0
      %2862 = vmatprep.mubr.bf16.mxu0 0
      %2863 = vmatmul.mubr.bf16.gmra.mrb[0].mxu0 %v2775
      %v2864 = vpop.f32.mrb[0].mxu0
      %v2865 = vadd.f32 0.0, %v2864
      %v2866 = vpop.f32.mrb[0].mxu0
      %v2867 = vpop.f32.mrb[0].mxu0
      %v2868 = vadd.f32 0.0, %v2867
      %v2869 = vpop.f32.mrb[0].mxu0
      %2870 = vmatprep.mubr.bf16.mxu0 0
      %2871 = vmatmul.mubr.bf16.gmra.mrb[0].mxu0 %v2778
      %v2872 = vpop.f32.mrb[0].mxu0
      %v2873 = vadd.f32 0.0, %v2872
      %v2874 = vpop.f32.mrb[0].mxu0
      %v2875 = vpop.f32.mrb[0].mxu0
      %v2876 = vadd.f32 0.0, %v2875
      %v2877 = vpop.f32.mrb[0].mxu0
      %2878 = vmatprep.mubr.bf16.mxu0 0
      %2879 = vmatmul.mubr.bf16.gmra.mrb[0].mxu0 %v2781
      %v2880 = vpop.f32.mrb[0].mxu0
      %v2881 = vadd.f32 0.0, %v2880
      %v2882 = vpop.f32.mrb[0].mxu0
      %v2883 = vpop.f32.mrb[0].mxu0
      %v2884 = vadd.f32 0.0, %v2883
      %v2885 = vpop.f32.mrb[0].mxu0
      %2886 = vmatprep.mubr.bf16.mxu0 0
      %2887 = vmatmul.mubr.bf16.gmra.mrb[0].mxu0 %v2784
      %v2888 = vpop.f32.mrb[0].mxu0
      %v2889 = vadd.f32 0.0, %v2888
      %v2890 = vpop.f32.mrb[0].mxu0
      %v2891 = vpop.f32.mrb[0].mxu0
      %v2892 = vadd.f32 0.0, %v2891
      %v2893 = vpop.f32.mrb[0].mxu0
      %2894 = vmatprep.mubr.bf16.mxu0 0
      %2895 = vmatmul.mubr.bf16.gmra.mrb[0].mxu0 %v2787
      %v2896 = vpop.f32.mrb[0].mxu0
      %v2897 = vadd.f32 0.0, %v2896
      %v2898 = vpop.f32.mrb[0].mxu0
      %v2899 = vpop.f32.mrb[0].mxu0
      %v2900 = vadd.f32 0.0, %v2899
      %v2901 = vpop.f32.mrb[0].mxu0
      %2902 = vmatprep.mubr.bf16.mxu0 0
      %2903 = vmatmul.mubr.bf16.gmra.mrb[0].mxu0 %v2790
      %v2904 = vpop.f32.mrb[0].mxu0
      %v2905 = vadd.f32 0.0, %v2904
      %v2906 = vpop.f32.mrb[0].mxu0
      %v2907 = vpop.f32.mrb[0].mxu0
      %v2908 = vadd.f32 0.0, %v2907
      %v2909 = vpop.f32.mrb[0].mxu0
      %2910 = vmatprep.mubr.bf16.mxu0 0
      %2911 = vmatmul.mubr.bf16.gmra.mrb[0].mxu0 %v2793
      %v2912 = vpop.f32.mrb[0].mxu0
      %v2913 = vadd.f32 0.0, %v2912
      %v2914 = vpop.f32.mrb[0].mxu0
      %v2915 = vpop.f32.mrb[0].mxu0
      %v2916 = vadd.f32 0.0, %v2915
      %v2917 = vpop.f32.mrb[0].mxu0
      %2918 = vmatprep.mubr.bf16.mxu0 0
      %2919 = vmatmul.mubr.bf16.gmra.mrb[0].mxu0 %v2796
      %v2920 = vpop.f32.mrb[0].mxu0
      %v2921 = vadd.f32 0.0, %v2920
      %v2922 = vpop.f32.mrb[0].mxu0
      %v2923 = vpop.f32.mrb[0].mxu0
      %v2924 = vadd.f32 0.0, %v2923
      %v2925 = vpop.f32.mrb[0].mxu0
      %2926 = vmatprep.mubr.bf16.mxu0 0
      %2927 = vmatmul.mubr.bf16.gmra.mrb[0].mxu0 %v2799
      %v2928 = vpop.f32.mrb[0].mxu0
      %v2929 = vadd.f32 0.0, %v2928
      %v2930 = vpop.f32.mrb[0].mxu0
      %v2931 = vpop.f32.mrb[0].mxu0
      %v2932 = vadd.f32 0.0, %v2931
      %v2933 = vpop.f32.mrb[0].mxu0
      %2934 = vmatprep.mubr.bf16.mxu0 0
      %2935 = vmatmul.mubr.bf16.gmra.mrb[0].mxu0 %v2802
      %v2936 = vpop.f32.mrb[0].mxu0
      %v2937 = vadd.f32 0.0, %v2936
      %v2938 = vpop.f32.mrb[0].mxu0
      %v2939 = vpop.f32.mrb[0].mxu0
      %v2940 = vadd.f32 0.0, %v2939
      %v2941 = vpop.f32.mrb[0].mxu0
      %2942 = vmatprep.mubr.bf16.mxu0 0
      %2943 = vmatmul.mubr.bf16.gmra.mrb[0].mxu0 %v2805
      %v2944 = vpop.f32.mrb[0].mxu0
      %v2945 = vadd.f32 0.0, %v2944
      %v2946 = vpop.f32.mrb[0].mxu0
      %v2947 = vpop.f32.mrb[0].mxu0
      %v2948 = vadd.f32 0.0, %v2947
      %v2949 = vpop.f32.mrb[0].mxu0
      %2950 = vmatprep.mubr.bf16.mxu0 0
      %2951 = vmatmul.mubr.bf16.gmra.mrb[0].mxu0 %v2808
      %v2952 = vpop.f32.mrb[0].mxu0
      %v2953 = vadd.f32 0.0, %v2952
      %v2954 = vpop.f32.mrb[0].mxu0
      %v2955 = vpop.f32.mrb[0].mxu0
      %v2956 = vadd.f32 0.0, %v2955
      %v2957 = vpop.f32.mrb[0].mxu0
      %2958 = vmatprep.mubr.bf16.mxu0 0
      %2959 = vmatmul.mubr.bf16.gmra.mrb[0].mxu0 %v2811
      %v2960 = vpop.f32.mrb[0].mxu0
      %v2961 = vadd.f32 0.0, %v2960
      %v2962 = vpop.f32.mrb[0].mxu0
      %v2963 = vpop.f32.mrb[0].mxu0
      %v2964 = vadd.f32 0.0, %v2963
      %v2965 = vpop.f32.mrb[0].mxu0
      %2966 = vmatprep.mubr.bf16.mxu0 0
      %2967 = vmatmul.mubr.bf16.gmra.mrb[0].mxu0 %v2814
      %v2968 = vpop.f32.mrb[0].mxu0
      %v2969 = vadd.f32 0.0, %v2968
      %v2970 = vpop.f32.mrb[0].mxu0
      %v2971 = vpop.f32.mrb[0].mxu0
      %v2972 = vadd.f32 0.0, %v2971
      %v2973 = vpop.f32.mrb[0].mxu0
      %2974 = vmatprep.mubr.bf16.mxu0 0
      %2975 = vmatmul.mubr.bf16.gmra.mrb[0].mxu0 %v2817
      %v2976 = vpop.f32.mrb[0].mxu0
      %v2977 = vadd.f32 0.0, %v2976
      %v2978 = vpop.f32.mrb[0].mxu0
      %v2979 = vpop.f32.mrb[0].mxu0
      %v2980 = vadd.f32 0.0, %v2979
      %v2981 = vpop.f32.mrb[0].mxu0
      %2982 = vdwg.mxu0
      %v2983 = vadd.f32 %v2688, %v2857
      %v2984 = vadd.f32 %v2689, %v2860
      %v2985 = vadd.f32 %v2690, %v2865
      %v2986 = vadd.f32 %v2691, %v2868
      %v2987 = vadd.f32 %v2692, %v2873
      %v2988 = vadd.f32 %v2693, %v2876
      %v2989 = vadd.f32 %v2694, %v2881
      %v2990 = vadd.f32 %v2695, %v2884
      %v2991 = vadd.f32 %v2696, %v2889
      %v2992 = vadd.f32 %v2697, %v2892
      %v2993 = vadd.f32 %v2698, %v2897
      %v2994 = vadd.f32 %v2699, %v2900
      %v2995 = vadd.f32 %v2700, %v2905
      %v2996 = vadd.f32 %v2701, %v2908
      %v2997 = vadd.f32 %v2702, %v2913
      %v2998 = vadd.f32 %v2703, %v2916
      %v2999 = vadd.f32 %v2704, %v2921
      %v3000 = vadd.f32 %v2705, %v2924
      %v3001 = vadd.f32 %v2706, %v2929
      %v3002 = vadd.f32 %v2707, %v2932
      %v3003 = vadd.f32 %v2708, %v2937
      %v3004 = vadd.f32 %v2709, %v2940
      %v3005 = vadd.f32 %v2710, %v2945
      %v3006 = vadd.f32 %v2711, %v2948
      %v3007 = vadd.f32 %v2712, %v2953
      %v3008 = vadd.f32 %v2713, %v2956
      %v3009 = vadd.f32 %v2714, %v2961
      %v3010 = vadd.f32 %v2715, %v2964
      %v3011 = vadd.f32 %v2716, %v2969
      %v3012 = vadd.f32 %v2717, %v2972
      %v3013 = vadd.f32 %v2718, %v2977
      %v3014 = vadd.f32 %v2719, %v2980
      %v3015 = vld [vmem:[%s2720 + $0x1] sm:$0xff]
      %v3016 = vld [vmem:[%s2720 + $0x9] sm:$0xff]
      %v3017 = vld [vmem:[%s2720 + $0x19] sm:$0xff]
      %v3018 = vld [vmem:[%s2720 + $0x21] sm:$0xff]
      %v3019 = vld [vmem:[%s2720 + $0x31] sm:$0xff]
      %v3020 = vld [vmem:[%s2720 + $0x39] sm:$0xff]
      %v3021 = vld [vmem:[%s2720 + $0x49] sm:$0xff]
      %v3022 = vld [vmem:[%s2720 + $0x51] sm:$0xff]
      %v3023 = vld [vmem:[%s2720 + $0x61] sm:$0xff]
      %v3024 = vld [vmem:[%s2720 + $0x69] sm:$0xff]
      %v3025 = vld [vmem:[%s2720 + $0x79] sm:$0xff]
      %v3026 = vld [vmem:[%s2720 + $0x81] sm:$0xff]
      %v3027 = vld [vmem:[%s2720 + $0x91] sm:$0xff]
      %v3028 = vld [vmem:[%s2720 + $0x99] sm:$0xff]
      %v3029 = vld [vmem:[%s2720 + $0xa9] sm:$0xff]
      %v3030 = vld [vmem:[%s2720 + $0xb1] sm:$0xff]
      %v3031 = vld [vmem:[%s2720 + $0xc1] sm:$0xff]
      %v3032 = vld [vmem:[%s2720 + $0xc9] sm:$0xff]
      %v3033 = vld [vmem:[%s2720 + $0xd9] sm:$0xff]
      %v3034 = vld [vmem:[%s2720 + $0xe1] sm:$0xff]
      %v3035 = vld [vmem:[%s2720 + $0xf1] sm:$0xff]
      %v3036 = vld [vmem:[%s2720 + $0xf9] sm:$0xff]
      %v3037 = vld [vmem:[%s2720 + $0x109] sm:$0xff]
      %v3038 = vld [vmem:[%s2720 + $0x111] sm:$0xff]
      %v3039 = vld [vmem:[%s2720 + $0x121] sm:$0xff]
      %v3040 = vld [vmem:[%s2720 + $0x129] sm:$0xff]
      %v3041 = vld [vmem:[%s2720 + $0x139] sm:$0xff]
      %v3042 = vld [vmem:[%s2720 + $0x141] sm:$0xff]
      %v3043 = vld [vmem:[%s2720 + $0x151] sm:$0xff]
      %v3044 = vld [vmem:[%s2720 + $0x159] sm:$0xff]
      %v3045 = vld [vmem:[%s2720 + $0x169] sm:$0xff]
      %v3046 = vld [vmem:[%s2720 + $0x171] sm:$0xff]
      %v3047 = vpack.c.bf16 %v3016, %v3015
      %v3048 = vpack.c.bf16 %v3018, %v3017
      %v3049 = vpack.c.bf16 %v3020, %v3019
      %v3050 = vpack.c.bf16 %v3022, %v3021
      %v3051 = vpack.c.bf16 %v3024, %v3023
      %v3052 = vpack.c.bf16 %v3026, %v3025
      %v3053 = vpack.c.bf16 %v3028, %v3027
      %v3054 = vpack.c.bf16 %v3030, %v3029
      %v3055 = vpack.c.bf16 %v3032, %v3031
      %v3056 = vpack.c.bf16 %v3034, %v3033
      %v3057 = vpack.c.bf16 %v3036, %v3035
      %v3058 = vpack.c.bf16 %v3038, %v3037
      %v3059 = vpack.c.bf16 %v3040, %v3039
      %v3060 = vpack.c.bf16 %v3042, %v3041
      %v3061 = vpack.c.bf16 %v3044, %v3043
      %v3062 = vpack.c.bf16 %v3046, %v3045
      %s3063 = scalar_lea.vmem %s6, 14
      %v3064 = vld [vmem:[%s3063] sm:$0x3]
      %v3066 = vsel %vm786, %v3047, 0
      %v3069 = vsel %vm786, %v3048, 0
      %v3072 = vsel %vm786, %v3049, 0
      %v3075 = vsel %vm786, %v3050, 0
      %v3078 = vsel %vm786, %v3051, 0
      %v3081 = vsel %vm786, %v3052, 0
      %v3084 = vsel %vm786, %v3053, 0
      %v3087 = vsel %vm786, %v3054, 0
      %v3090 = vsel %vm786, %v3055, 0
      %v3093 = vsel %vm786, %v3056, 0
      %v3096 = vsel %vm786, %v3057, 0
      %v3099 = vsel %vm786, %v3058, 0
      %v3102 = vsel %vm786, %v3059, 0
      %v3105 = vsel %vm786, %v3060, 0
      %v3108 = vsel %vm786, %v3061, 0
      %v3111 = vsel %vm786, %v3062, 0
      %v3114 = vand.u32 %v3064, %v1167
      %3116 = vmatprep.subr.bf16.mxu0 0
      %3117 = vmatpush1.bf16.msra.mxu0 %v3114
      %3118 = vmatprep.subr.bf16.mxu0 0
      %3119 = vmatpush1.bf16.msra.mxu0 0
      %3120 = vmatprep.subr.bf16.mxu0 0
      %3121 = vmatpush1.bf16.msra.mxu0 0
      %3122 = vmatprep.subr.bf16.mxu0 0
      %3123 = vmatpush1.bf16.msra.mxu0 0
      %3124 = vmatprep.subr.bf16.mxu0 0
      %3125 = vmatpush1.bf16.msra.mxu0 0
      %3126 = vmatprep.subr.bf16.mxu0 0
      %3127 = vmatpush1.bf16.msra.mxu0 0
      %3128 = vmatprep.subr.bf16.mxu0 0
      %3129 = vmatpush1.bf16.msra.mxu0 0
      %3130 = vmatprep.subr.bf16.mxu0 0
      %3131 = vmatpush1.bf16.msra.mxu0 0
      %3132 = vmatprep.subr.bf16.mxu0 0
      %3133 = vmatpush1.bf16.msra.mxu0 0
      %3134 = vmatprep.subr.bf16.mxu0 0
      %3135 = vmatpush1.bf16.msra.mxu0 0
      %3136 = vmatprep.subr.bf16.mxu0 0
      %3137 = vmatpush1.bf16.msra.mxu0 0
      %3138 = vmatprep.subr.bf16.mxu0 0
      %3139 = vmatpush1.bf16.msra.mxu0 0
      %3140 = vmatprep.subr.bf16.mxu0 0
      %3141 = vmatpush1.bf16.msra.mxu0 0
      %3142 = vmatprep.subr.bf16.mxu0 0
      %3143 = vmatpush1.bf16.msra.mxu0 0
      %3144 = vmatprep.subr.bf16.mxu0 0
      %3145 = vmatpush1.bf16.msra.mxu0 0
      %3146 = vmatprep.subr.bf16.mxu0 0
      %3147 = vmatpush1.bf16.msra.mxu0 0
      %3148 = vmatprep.mubr.bf16.mxu0 0
      %3149 = vmatmul.mubr.bf16.gmra.mrb[0].mxu0 %v3066
      %v3150 = vpop.f32.mrb[0].mxu0
      %v3151 = vadd.f32 0.0, %v3150
      %v3152 = vpop.f32.mrb[0].mxu0
      %v3153 = vpop.f32.mrb[0].mxu0
      %v3154 = vadd.f32 0.0, %v3153
      %v3155 = vpop.f32.mrb[0].mxu0
      %3156 = vmatprep.mubr.bf16.mxu0 0
      %3157 = vmatmul.mubr.bf16.gmra.mrb[0].mxu0 %v3069
      %v3158 = vpop.f32.mrb[0].mxu0
      %v3159 = vadd.f32 0.0, %v3158
      %v3160 = vpop.f32.mrb[0].mxu0
      %v3161 = vpop.f32.mrb[0].mxu0
      %v3162 = vadd.f32 0.0, %v3161
      %v3163 = vpop.f32.mrb[0].mxu0
      %3164 = vmatprep.mubr.bf16.mxu0 0
      %3165 = vmatmul.mubr.bf16.gmra.mrb[0].mxu0 %v3072
      %v3166 = vpop.f32.mrb[0].mxu0
      %v3167 = vadd.f32 0.0, %v3166
      %v3168 = vpop.f32.mrb[0].mxu0
      %v3169 = vpop.f32.mrb[0].mxu0
      %v3170 = vadd.f32 0.0, %v3169
      %v3171 = vpop.f32.mrb[0].mxu0
      %3172 = vmatprep.mubr.bf16.mxu0 0
      %3173 = vmatmul.mubr.bf16.gmra.mrb[0].mxu0 %v3075
      %v3174 = vpop.f32.mrb[0].mxu0
      %v3175 = vadd.f32 0.0, %v3174
      %v3176 = vpop.f32.mrb[0].mxu0
      %v3177 = vpop.f32.mrb[0].mxu0
      %v3178 = vadd.f32 0.0, %v3177
      %v3179 = vpop.f32.mrb[0].mxu0
      %3180 = vmatprep.mubr.bf16.mxu0 0
      %3181 = vmatmul.mubr.bf16.gmra.mrb[0].mxu0 %v3078
      %v3182 = vpop.f32.mrb[0].mxu0
      %v3183 = vadd.f32 0.0, %v3182
      %v3184 = vpop.f32.mrb[0].mxu0
      %v3185 = vpop.f32.mrb[0].mxu0
      %v3186 = vadd.f32 0.0, %v3185
      %v3187 = vpop.f32.mrb[0].mxu0
      %3188 = vmatprep.mubr.bf16.mxu0 0
      %3189 = vmatmul.mubr.bf16.gmra.mrb[0].mxu0 %v3081
      %v3190 = vpop.f32.mrb[0].mxu0
      %v3191 = vadd.f32 0.0, %v3190
      %v3192 = vpop.f32.mrb[0].mxu0
      %v3193 = vpop.f32.mrb[0].mxu0
      %v3194 = vadd.f32 0.0, %v3193
      %v3195 = vpop.f32.mrb[0].mxu0
      %3196 = vmatprep.mubr.bf16.mxu0 0
      %3197 = vmatmul.mubr.bf16.gmra.mrb[0].mxu0 %v3084
      %v3198 = vpop.f32.mrb[0].mxu0
      %v3199 = vadd.f32 0.0, %v3198
      %v3200 = vpop.f32.mrb[0].mxu0
      %v3201 = vpop.f32.mrb[0].mxu0
      %v3202 = vadd.f32 0.0, %v3201
      %v3203 = vpop.f32.mrb[0].mxu0
      %3204 = vmatprep.mubr.bf16.mxu0 0
      %3205 = vmatmul.mubr.bf16.gmra.mrb[0].mxu0 %v3087
      %v3206 = vpop.f32.mrb[0].mxu0
      %v3207 = vadd.f32 0.0, %v3206
      %v3208 = vpop.f32.mrb[0].mxu0
      %v3209 = vpop.f32.mrb[0].mxu0
      %v3210 = vadd.f32 0.0, %v3209
      %v3211 = vpop.f32.mrb[0].mxu0
      %3212 = vmatprep.mubr.bf16.mxu0 0
      %3213 = vmatmul.mubr.bf16.gmra.mrb[0].mxu0 %v3090
      %v3214 = vpop.f32.mrb[0].mxu0
      %v3215 = vadd.f32 0.0, %v3214
      %v3216 = vpop.f32.mrb[0].mxu0
      %v3217 = vpop.f32.mrb[0].mxu0
      %v3218 = vadd.f32 0.0, %v3217
      %v3219 = vpop.f32.mrb[0].mxu0
      %3220 = vmatprep.mubr.bf16.mxu0 0
      %3221 = vmatmul.mubr.bf16.gmra.mrb[0].mxu0 %v3093
      %v3222 = vpop.f32.mrb[0].mxu0
      %v3223 = vadd.f32 0.0, %v3222
      %v3224 = vpop.f32.mrb[0].mxu0
      %v3225 = vpop.f32.mrb[0].mxu0
      %v3226 = vadd.f32 0.0, %v3225
      %v3227 = vpop.f32.mrb[0].mxu0
      %3228 = vmatprep.mubr.bf16.mxu0 0
      %3229 = vmatmul.mubr.bf16.gmra.mrb[0].mxu0 %v3096
      %v3230 = vpop.f32.mrb[0].mxu0
      %v3231 = vadd.f32 0.0, %v3230
      %v3232 = vpop.f32.mrb[0].mxu0
      %v3233 = vpop.f32.mrb[0].mxu0
      %v3234 = vadd.f32 0.0, %v3233
      %v3235 = vpop.f32.mrb[0].mxu0
      %3236 = vmatprep.mubr.bf16.mxu0 0
      %3237 = vmatmul.mubr.bf16.gmra.mrb[0].mxu0 %v3099
      %v3238 = vpop.f32.mrb[0].mxu0
      %v3239 = vadd.f32 0.0, %v3238
      %v3240 = vpop.f32.mrb[0].mxu0
      %v3241 = vpop.f32.mrb[0].mxu0
      %v3242 = vadd.f32 0.0, %v3241
      %v3243 = vpop.f32.mrb[0].mxu0
      %3244 = vmatprep.mubr.bf16.mxu0 0
      %3245 = vmatmul.mubr.bf16.gmra.mrb[0].mxu0 %v3102
      %v3246 = vpop.f32.mrb[0].mxu0
      %v3247 = vadd.f32 0.0, %v3246
      %v3248 = vpop.f32.mrb[0].mxu0
      %v3249 = vpop.f32.mrb[0].mxu0
      %v3250 = vadd.f32 0.0, %v3249
      %v3251 = vpop.f32.mrb[0].mxu0
      %3252 = vmatprep.mubr.bf16.mxu0 0
      %3253 = vmatmul.mubr.bf16.gmra.mrb[0].mxu0 %v3105
      %v3254 = vpop.f32.mrb[0].mxu0
      %v3255 = vadd.f32 0.0, %v3254
      %v3256 = vpop.f32.mrb[0].mxu0
      %v3257 = vpop.f32.mrb[0].mxu0
      %v3258 = vadd.f32 0.0, %v3257
      %v3259 = vpop.f32.mrb[0].mxu0
      %3260 = vmatprep.mubr.bf16.mxu0 0
      %3261 = vmatmul.mubr.bf16.gmra.mrb[0].mxu0 %v3108
      %v3262 = vpop.f32.mrb[0].mxu0
      %v3263 = vadd.f32 0.0, %v3262
      %v3264 = vpop.f32.mrb[0].mxu0
      %v3265 = vpop.f32.mrb[0].mxu0
      %v3266 = vadd.f32 0.0, %v3265
      %v3267 = vpop.f32.mrb[0].mxu0
      %3268 = vmatprep.mubr.bf16.mxu0 0
      %3269 = vmatmul.mubr.bf16.gmra.mrb[0].mxu0 %v3111
      %v3270 = vpop.f32.mrb[0].mxu0
      %v3271 = vadd.f32 0.0, %v3270
      %v3272 = vpop.f32.mrb[0].mxu0
      %v3273 = vpop.f32.mrb[0].mxu0
      %v3274 = vadd.f32 0.0, %v3273
      %v3275 = vpop.f32.mrb[0].mxu0
      %3276 = vdwg.mxu0
      %v3277 = vadd.f32 %v2983, %v3151
      %v3278 = vadd.f32 %v2984, %v3154
      %v3279 = vadd.f32 %v2985, %v3159
      %v3280 = vadd.f32 %v2986, %v3162
      %v3281 = vadd.f32 %v2987, %v3167
      %v3282 = vadd.f32 %v2988, %v3170
      %v3283 = vadd.f32 %v2989, %v3175
      %v3284 = vadd.f32 %v2990, %v3178
      %v3285 = vadd.f32 %v2991, %v3183
      %v3286 = vadd.f32 %v2992, %v3186
      %v3287 = vadd.f32 %v2993, %v3191
      %v3288 = vadd.f32 %v2994, %v3194
      %v3289 = vadd.f32 %v2995, %v3199
      %v3290 = vadd.f32 %v2996, %v3202
      %v3291 = vadd.f32 %v2997, %v3207
      %v3292 = vadd.f32 %v2998, %v3210
      %v3293 = vadd.f32 %v2999, %v3215
      %v3294 = vadd.f32 %v3000, %v3218
      %v3295 = vadd.f32 %v3001, %v3223
      %v3296 = vadd.f32 %v3002, %v3226
      %v3297 = vadd.f32 %v3003, %v3231
      %v3298 = vadd.f32 %v3004, %v3234
      %v3299 = vadd.f32 %v3005, %v3239
      %v3300 = vadd.f32 %v3006, %v3242
      %v3301 = vadd.f32 %v3007, %v3247
      %v3302 = vadd.f32 %v3008, %v3250
      %v3303 = vadd.f32 %v3009, %v3255
      %v3304 = vadd.f32 %v3010, %v3258
      %v3305 = vadd.f32 %v3011, %v3263
      %v3306 = vadd.f32 %v3012, %v3266
      %v3307 = vadd.f32 %v3013, %v3271
      %v3308 = vadd.f32 %v3014, %v3274
      %v3309 = vld [vmem:[%s2720 + $0x2] sm:$0xff]
      %v3310 = vld [vmem:[%s2720 + $0xa] sm:$0xff]
      %v3311 = vld [vmem:[%s2720 + $0x1a] sm:$0xff]
      %v3312 = vld [vmem:[%s2720 + $0x22] sm:$0xff]
      %v3313 = vld [vmem:[%s2720 + $0x32] sm:$0xff]
      %v3314 = vld [vmem:[%s2720 + $0x3a] sm:$0xff]
      %v3315 = vld [vmem:[%s2720 + $0x4a] sm:$0xff]
      %v3316 = vld [vmem:[%s2720 + $0x52] sm:$0xff]
      %v3317 = vld [vmem:[%s2720 + $0x62] sm:$0xff]
      %v3318 = vld [vmem:[%s2720 + $0x6a] sm:$0xff]
      %v3319 = vld [vmem:[%s2720 + $0x7a] sm:$0xff]
      %v3320 = vld [vmem:[%s2720 + $0x82] sm:$0xff]
      %v3321 = vld [vmem:[%s2720 + $0x92] sm:$0xff]
      %v3322 = vld [vmem:[%s2720 + $0x9a] sm:$0xff]
      %v3323 = vld [vmem:[%s2720 + $0xaa] sm:$0xff]
      %v3324 = vld [vmem:[%s2720 + $0xb2] sm:$0xff]
      %v3325 = vld [vmem:[%s2720 + $0xc2] sm:$0xff]
      %v3326 = vld [vmem:[%s2720 + $0xca] sm:$0xff]
      %v3327 = vld [vmem:[%s2720 + $0xda] sm:$0xff]
      %v3328 = vld [vmem:[%s2720 + $0xe2] sm:$0xff]
      %v3329 = vld [vmem:[%s2720 + $0xf2] sm:$0xff]
      %v3330 = vld [vmem:[%s2720 + $0xfa] sm:$0xff]
      %v3331 = vld [vmem:[%s2720 + $0x10a] sm:$0xff]
      %v3332 = vld [vmem:[%s2720 + $0x112] sm:$0xff]
      %v3333 = vld [vmem:[%s2720 + $0x122] sm:$0xff]
      %v3334 = vld [vmem:[%s2720 + $0x12a] sm:$0xff]
      %v3335 = vld [vmem:[%s2720 + $0x13a] sm:$0xff]
      %v3336 = vld [vmem:[%s2720 + $0x142] sm:$0xff]
      %v3337 = vld [vmem:[%s2720 + $0x152] sm:$0xff]
      %v3338 = vld [vmem:[%s2720 + $0x15a] sm:$0xff]
      %v3339 = vld [vmem:[%s2720 + $0x16a] sm:$0xff]
      %v3340 = vld [vmem:[%s2720 + $0x172] sm:$0xff]
      %v3341 = vpack.c.bf16 %v3310, %v3309
      %v3342 = vpack.c.bf16 %v3312, %v3311
      %v3343 = vpack.c.bf16 %v3314, %v3313
      %v3344 = vpack.c.bf16 %v3316, %v3315
      %v3345 = vpack.c.bf16 %v3318, %v3317
      %v3346 = vpack.c.bf16 %v3320, %v3319
      %v3347 = vpack.c.bf16 %v3322, %v3321
      %v3348 = vpack.c.bf16 %v3324, %v3323
      %v3349 = vpack.c.bf16 %v3326, %v3325
      %v3350 = vpack.c.bf16 %v3328, %v3327
      %v3351 = vpack.c.bf16 %v3330, %v3329
      %v3352 = vpack.c.bf16 %v3332, %v3331
      %v3353 = vpack.c.bf16 %v3334, %v3333
      %v3354 = vpack.c.bf16 %v3336, %v3335
      %v3355 = vpack.c.bf16 %v3338, %v3337
      %v3356 = vpack.c.bf16 %v3340, %v3339
      %s3357 = scalar_lea.vmem %s6, 16
      %v3358 = vld [vmem:[%s3357] sm:$0x3]
      %v3360 = vsel %vm786, %v3341, 0
      %v3363 = vsel %vm786, %v3342, 0
      %v3366 = vsel %vm786, %v3343, 0
      %v3369 = vsel %vm786, %v3344, 0
      %v3372 = vsel %vm786, %v3345, 0
      %v3375 = vsel %vm786, %v3346, 0
      %v3378 = vsel %vm786, %v3347, 0
      %v3381 = vsel %vm786, %v3348, 0
      %v3384 = vsel %vm786, %v3349, 0
      %v3387 = vsel %vm786, %v3350, 0
      %v3390 = vsel %vm786, %v3351, 0
      %v3393 = vsel %vm786, %v3352, 0
      %v3396 = vsel %vm786, %v3353, 0
      %v3399 = vsel %vm786, %v3354, 0
      %v3402 = vsel %vm786, %v3355, 0
      %v3405 = vsel %vm786, %v3356, 0
      %v3408 = vand.u32 %v3358, %v1167
      %3410 = vmatprep.subr.bf16.mxu0 0
      %3411 = vmatpush1.bf16.msra.mxu0 %v3408
      %3412 = vmatprep.subr.bf16.mxu0 0
      %3413 = vmatpush1.bf16.msra.mxu0 0
      %3414 = vmatprep.subr.bf16.mxu0 0
      %3415 = vmatpush1.bf16.msra.mxu0 0
      %3416 = vmatprep.subr.bf16.mxu0 0
      %3417 = vmatpush1.bf16.msra.mxu0 0
      %3418 = vmatprep.subr.bf16.mxu0 0
      %3419 = vmatpush1.bf16.msra.mxu0 0
      %3420 = vmatprep.subr.bf16.mxu0 0
      %3421 = vmatpush1.bf16.msra.mxu0 0
      %3422 = vmatprep.subr.bf16.mxu0 0
      %3423 = vmatpush1.bf16.msra.mxu0 0
      %3424 = vmatprep.subr.bf16.mxu0 0
      %3425 = vmatpush1.bf16.msra.mxu0 0
      %3426 = vmatprep.subr.bf16.mxu0 0
      %3427 = vmatpush1.bf16.msra.mxu0 0
      %3428 = vmatprep.subr.bf16.mxu0 0
      %3429 = vmatpush1.bf16.msra.mxu0 0
      %3430 = vmatprep.subr.bf16.mxu0 0
      %3431 = vmatpush1.bf16.msra.mxu0 0
      %3432 = vmatprep.subr.bf16.mxu0 0
      %3433 = vmatpush1.bf16.msra.mxu0 0
      %3434 = vmatprep.subr.bf16.mxu0 0
      %3435 = vmatpush1.bf16.msra.mxu0 0
      %3436 = vmatprep.subr.bf16.mxu0 0
      %3437 = vmatpush1.bf16.msra.mxu0 0
      %3438 = vmatprep.subr.bf16.mxu0 0
      %3439 = vmatpush1.bf16.msra.mxu0 0
      %3440 = vmatprep.subr.bf16.mxu0 0
      %3441 = vmatpush1.bf16.msra.mxu0 0
      %3442 = vmatprep.mubr.bf16.mxu0 0
      %3443 = vmatmul.mubr.bf16.gmra.mrb[0].mxu0 %v3360
      %v3444 = vpop.f32.mrb[0].mxu0
      %v3445 = vadd.f32 0.0, %v3444
      %v3446 = vpop.f32.mrb[0].mxu0
      %v3447 = vpop.f32.mrb[0].mxu0
      %v3448 = vadd.f32 0.0, %v3447
      %v3449 = vpop.f32.mrb[0].mxu0
      %3450 = vmatprep.mubr.bf16.mxu0 0
      %3451 = vmatmul.mubr.bf16.gmra.mrb[0].mxu0 %v3363
      %v3452 = vpop.f32.mrb[0].mxu0
      %v3453 = vadd.f32 0.0, %v3452
      %v3454 = vpop.f32.mrb[0].mxu0
      %v3455 = vpop.f32.mrb[0].mxu0
      %v3456 = vadd.f32 0.0, %v3455
      %v3457 = vpop.f32.mrb[0].mxu0
      %3458 = vmatprep.mubr.bf16.mxu0 0
      %3459 = vmatmul.mubr.bf16.gmra.mrb[0].mxu0 %v3366
      %v3460 = vpop.f32.mrb[0].mxu0
      %v3461 = vadd.f32 0.0, %v3460
      %v3462 = vpop.f32.mrb[0].mxu0
      %v3463 = vpop.f32.mrb[0].mxu0
      %v3464 = vadd.f32 0.0, %v3463
      %v3465 = vpop.f32.mrb[0].mxu0
      %3466 = vmatprep.mubr.bf16.mxu0 0
      %3467 = vmatmul.mubr.bf16.gmra.mrb[0].mxu0 %v3369
      %v3468 = vpop.f32.mrb[0].mxu0
      %v3469 = vadd.f32 0.0, %v3468
      %v3470 = vpop.f32.mrb[0].mxu0
      %v3471 = vpop.f32.mrb[0].mxu0
      %v3472 = vadd.f32 0.0, %v3471
      %v3473 = vpop.f32.mrb[0].mxu0
      %3474 = vmatprep.mubr.bf16.mxu0 0
      %3475 = vmatmul.mubr.bf16.gmra.mrb[0].mxu0 %v3372
      %v3476 = vpop.f32.mrb[0].mxu0
      %v3477 = vadd.f32 0.0, %v3476
      %v3478 = vpop.f32.mrb[0].mxu0
      %v3479 = vpop.f32.mrb[0].mxu0
      %v3480 = vadd.f32 0.0, %v3479
      %v3481 = vpop.f32.mrb[0].mxu0
      %3482 = vmatprep.mubr.bf16.mxu0 0
      %3483 = vmatmul.mubr.bf16.gmra.mrb[0].mxu0 %v3375
      %v3484 = vpop.f32.mrb[0].mxu0
      %v3485 = vadd.f32 0.0, %v3484
      %v3486 = vpop.f32.mrb[0].mxu0
      %v3487 = vpop.f32.mrb[0].mxu0
      %v3488 = vadd.f32 0.0, %v3487
      %v3489 = vpop.f32.mrb[0].mxu0
      %3490 = vmatprep.mubr.bf16.mxu0 0
      %3491 = vmatmul.mubr.bf16.gmra.mrb[0].mxu0 %v3378
      %v3492 = vpop.f32.mrb[0].mxu0
      %v3493 = vadd.f32 0.0, %v3492
      %v3494 = vpop.f32.mrb[0].mxu0
      %v3495 = vpop.f32.mrb[0].mxu0
      %v3496 = vadd.f32 0.0, %v3495
      %v3497 = vpop.f32.mrb[0].mxu0
      %3498 = vmatprep.mubr.bf16.mxu0 0
      %3499 = vmatmul.mubr.bf16.gmra.mrb[0].mxu0 %v3381
      %v3500 = vpop.f32.mrb[0].mxu0
      %v3501 = vadd.f32 0.0, %v3500
      %v3502 = vpop.f32.mrb[0].mxu0
      %v3503 = vpop.f32.mrb[0].mxu0
      %v3504 = vadd.f32 0.0, %v3503
      %v3505 = vpop.f32.mrb[0].mxu0
      %3506 = vmatprep.mubr.bf16.mxu0 0
      %3507 = vmatmul.mubr.bf16.gmra.mrb[0].mxu0 %v3384
      %v3508 = vpop.f32.mrb[0].mxu0
      %v3509 = vadd.f32 0.0, %v3508
      %v3510 = vpop.f32.mrb[0].mxu0
      %v3511 = vpop.f32.mrb[0].mxu0
      %v3512 = vadd.f32 0.0, %v3511
      %v3513 = vpop.f32.mrb[0].mxu0
      %3514 = vmatprep.mubr.bf16.mxu0 0
      %3515 = vmatmul.mubr.bf16.gmra.mrb[0].mxu0 %v3387
      %v3516 = vpop.f32.mrb[0].mxu0
      %v3517 = vadd.f32 0.0, %v3516
      %v3518 = vpop.f32.mrb[0].mxu0
      %v3519 = vpop.f32.mrb[0].mxu0
      %v3520 = vadd.f32 0.0, %v3519
      %v3521 = vpop.f32.mrb[0].mxu0
      %3522 = vmatprep.mubr.bf16.mxu0 0
      %3523 = vmatmul.mubr.bf16.gmra.mrb[0].mxu0 %v3390
      %v3524 = vpop.f32.mrb[0].mxu0
      %v3525 = vadd.f32 0.0, %v3524
      %v3526 = vpop.f32.mrb[0].mxu0
      %v3527 = vpop.f32.mrb[0].mxu0
      %v3528 = vadd.f32 0.0, %v3527
      %v3529 = vpop.f32.mrb[0].mxu0
      %3530 = vmatprep.mubr.bf16.mxu0 0
      %3531 = vmatmul.mubr.bf16.gmra.mrb[0].mxu0 %v3393
      %v3532 = vpop.f32.mrb[0].mxu0
      %v3533 = vadd.f32 0.0, %v3532
      %v3534 = vpop.f32.mrb[0].mxu0
      %v3535 = vpop.f32.mrb[0].mxu0
      %v3536 = vadd.f32 0.0, %v3535
      %v3537 = vpop.f32.mrb[0].mxu0
      %3538 = vmatprep.mubr.bf16.mxu0 0
      %3539 = vmatmul.mubr.bf16.gmra.mrb[0].mxu0 %v3396
      %v3540 = vpop.f32.mrb[0].mxu0
      %v3541 = vadd.f32 0.0, %v3540
      %v3542 = vpop.f32.mrb[0].mxu0
      %v3543 = vpop.f32.mrb[0].mxu0
      %v3544 = vadd.f32 0.0, %v3543
      %v3545 = vpop.f32.mrb[0].mxu0
      %3546 = vmatprep.mubr.bf16.mxu0 0
      %3547 = vmatmul.mubr.bf16.gmra.mrb[0].mxu0 %v3399
      %v3548 = vpop.f32.mrb[0].mxu0
      %v3549 = vadd.f32 0.0, %v3548
      %v3550 = vpop.f32.mrb[0].mxu0
      %v3551 = vpop.f32.mrb[0].mxu0
      %v3552 = vadd.f32 0.0, %v3551
      %v3553 = vpop.f32.mrb[0].mxu0
      %3554 = vmatprep.mubr.bf16.mxu0 0
      %3555 = vmatmul.mubr.bf16.gmra.mrb[0].mxu0 %v3402
      %v3556 = vpop.f32.mrb[0].mxu0
      %v3557 = vadd.f32 0.0, %v3556
      %v3558 = vpop.f32.mrb[0].mxu0
      %v3559 = vpop.f32.mrb[0].mxu0
      %v3560 = vadd.f32 0.0, %v3559
      %v3561 = vpop.f32.mrb[0].mxu0
      %3562 = vmatprep.mubr.bf16.mxu0 0
      %3563 = vmatmul.mubr.bf16.gmra.mrb[0].mxu0 %v3405
      %v3564 = vpop.f32.mrb[0].mxu0
      %v3565 = vadd.f32 0.0, %v3564
      %v3566 = vpop.f32.mrb[0].mxu0
      %v3567 = vpop.f32.mrb[0].mxu0
      %v3568 = vadd.f32 0.0, %v3567
      %v3569 = vpop.f32.mrb[0].mxu0
      %3570 = vdwg.mxu0
      %v3571 = vadd.f32 %v3277, %v3445
      %v3572 = vadd.f32 %v3278, %v3448
      %v3573 = vadd.f32 %v3279, %v3453
      %v3574 = vadd.f32 %v3280, %v3456
      %v3575 = vadd.f32 %v3281, %v3461
      %v3576 = vadd.f32 %v3282, %v3464
      %v3577 = vadd.f32 %v3283, %v3469
      %v3578 = vadd.f32 %v3284, %v3472
      %v3579 = vadd.f32 %v3285, %v3477
      %v3580 = vadd.f32 %v3286, %v3480
      %v3581 = vadd.f32 %v3287, %v3485
      %v3582 = vadd.f32 %v3288, %v3488
      %v3583 = vadd.f32 %v3289, %v3493
      %v3584 = vadd.f32 %v3290, %v3496
      %v3585 = vadd.f32 %v3291, %v3501
      %v3586 = vadd.f32 %v3292, %v3504
      %v3587 = vadd.f32 %v3293, %v3509
      %v3588 = vadd.f32 %v3294, %v3512
      %v3589 = vadd.f32 %v3295, %v3517
      %v3590 = vadd.f32 %v3296, %v3520
      %v3591 = vadd.f32 %v3297, %v3525
      %v3592 = vadd.f32 %v3298, %v3528
      %v3593 = vadd.f32 %v3299, %v3533
      %v3594 = vadd.f32 %v3300, %v3536
      %v3595 = vadd.f32 %v3301, %v3541
      %v3596 = vadd.f32 %v3302, %v3544
      %v3597 = vadd.f32 %v3303, %v3549
      %v3598 = vadd.f32 %v3304, %v3552
      %v3599 = vadd.f32 %v3305, %v3557
      %v3600 = vadd.f32 %v3306, %v3560
      %v3601 = vadd.f32 %v3307, %v3565
      %v3602 = vadd.f32 %v3308, %v3568
      %v3603 = vld [vmem:[#allocation3] sm:$0xff]
      %v3604 = vld [vmem:[#allocation3 + $0x8] sm:$0xff]
      %v3605 = vld [vmem:[#allocation3 + $0x18] sm:$0xff]
      %v3606 = vld [vmem:[#allocation3 + $0x20] sm:$0xff]
      %v3607 = vld [vmem:[#allocation3 + $0x30] sm:$0xff]
      %v3608 = vld [vmem:[#allocation3 + $0x38] sm:$0xff]
      %v3609 = vld [vmem:[#allocation3 + $0x48] sm:$0xff]
      %v3610 = vld [vmem:[#allocation3 + $0x50] sm:$0xff]
      %v3611 = vld [vmem:[#allocation3 + $0x60] sm:$0xff]
      %v3612 = vld [vmem:[#allocation3 + $0x68] sm:$0xff]
      %v3613 = vld [vmem:[#allocation3 + $0x78] sm:$0xff]
      %v3614 = vld [vmem:[#allocation3 + $0x80] sm:$0xff]
      %v3615 = vld [vmem:[#allocation3 + $0x90] sm:$0xff]
      %v3616 = vld [vmem:[#allocation3 + $0x98] sm:$0xff]
      %v3617 = vld [vmem:[#allocation3 + $0xa8] sm:$0xff]
      %v3618 = vld [vmem:[#allocation3 + $0xb0] sm:$0xff]
      %v3619 = vld [vmem:[#allocation3 + $0xc0] sm:$0xff]
      %v3620 = vld [vmem:[#allocation3 + $0xc8] sm:$0xff]
      %v3621 = vld [vmem:[#allocation3 + $0xd8] sm:$0xff]
      %v3622 = vld [vmem:[#allocation3 + $0xe0] sm:$0xff]
      %v3623 = vld [vmem:[#allocation3 + $0xf0] sm:$0xff]
      %v3624 = vld [vmem:[#allocation3 + $0xf8] sm:$0xff]
      %v3625 = vld [vmem:[#allocation3 + $0x108] sm:$0xff]
      %v3626 = vld [vmem:[#allocation3 + $0x110] sm:$0xff]
      %v3627 = vld [vmem:[#allocation3 + $0x120] sm:$0xff]
      %v3628 = vld [vmem:[#allocation3 + $0x128] sm:$0xff]
      %v3629 = vld [vmem:[#allocation3 + $0x138] sm:$0xff]
      %v3630 = vld [vmem:[#allocation3 + $0x140] sm:$0xff]
      %v3631 = vld [vmem:[#allocation3 + $0x150] sm:$0xff]
      %v3632 = vld [vmem:[#allocation3 + $0x158] sm:$0xff]
      %v3633 = vld [vmem:[#allocation3 + $0x168] sm:$0xff]
      %v3634 = vld [vmem:[#allocation3 + $0x170] sm:$0xff]
      %v3635 = vpack.c.bf16 %v3604, %v3603
      %v3636 = vpack.c.bf16 %v3606, %v3605
      %v3637 = vpack.c.bf16 %v3608, %v3607
      %v3638 = vpack.c.bf16 %v3610, %v3609
      %v3639 = vpack.c.bf16 %v3612, %v3611
      %v3640 = vpack.c.bf16 %v3614, %v3613
      %v3641 = vpack.c.bf16 %v3616, %v3615
      %v3642 = vpack.c.bf16 %v3618, %v3617
      %v3643 = vpack.c.bf16 %v3620, %v3619
      %v3644 = vpack.c.bf16 %v3622, %v3621
      %v3645 = vpack.c.bf16 %v3624, %v3623
      %v3646 = vpack.c.bf16 %v3626, %v3625
      %v3647 = vpack.c.bf16 %v3628, %v3627
      %v3648 = vpack.c.bf16 %v3630, %v3629
      %v3649 = vpack.c.bf16 %v3632, %v3631
      %v3650 = vpack.c.bf16 %v3634, %v3633
      %v3651 = vld [vmem:[%s7] sm:$0x7]
      %v3653 = vsel %vm954, %v3635, 0
      %v3656 = vsel %vm954, %v3636, 0
      %v3659 = vsel %vm954, %v3637, 0
      %v3662 = vsel %vm954, %v3638, 0
      %v3665 = vsel %vm954, %v3639, 0
      %v3668 = vsel %vm954, %v3640, 0
      %v3671 = vsel %vm954, %v3641, 0
      %v3674 = vsel %vm954, %v3642, 0
      %v3677 = vsel %vm954, %v3643, 0
      %v3680 = vsel %vm954, %v3644, 0
      %v3683 = vsel %vm954, %v3645, 0
      %v3686 = vsel %vm954, %v3646, 0
      %v3689 = vsel %vm954, %v3647, 0
      %v3692 = vsel %vm954, %v3648, 0
      %v3695 = vsel %vm954, %v3649, 0
      %v3698 = vsel %vm954, %v3650, 0
      %vm3700 = vcmask 1042432
      %v3701 = vsel %vm1165, 4294967295, 65535
      %v3702 = vsel %vm3700, %v3701, 0
      %v3704 = vand.u32 %v3651, %v3702
      %3706 = vmatprep.subr.bf16.mxu0 0
      %3707 = vmatpush1.bf16.msra.mxu0 %v3704
      %3708 = vmatprep.subr.bf16.mxu0 0
      %3709 = vmatpush1.bf16.msra.mxu0 0
      %3710 = vmatprep.subr.bf16.mxu0 0
      %3711 = vmatpush1.bf16.msra.mxu0 0
      %3712 = vmatprep.subr.bf16.mxu0 0
      %3713 = vmatpush1.bf16.msra.mxu0 0
      %3714 = vmatprep.subr.bf16.mxu0 0
      %3715 = vmatpush1.bf16.msra.mxu0 0
      %3716 = vmatprep.subr.bf16.mxu0 0
      %3717 = vmatpush1.bf16.msra.mxu0 0
      %3718 = vmatprep.subr.bf16.mxu0 0
      %3719 = vmatpush1.bf16.msra.mxu0 0
      %3720 = vmatprep.subr.bf16.mxu0 0
      %3721 = vmatpush1.bf16.msra.mxu0 0
      %3722 = vmatprep.subr.bf16.mxu0 0
      %3723 = vmatpush1.bf16.msra.mxu0 0
      %3724 = vmatprep.subr.bf16.mxu0 0
      %3725 = vmatpush1.bf16.msra.mxu0 0
      %3726 = vmatprep.subr.bf16.mxu0 0
      %3727 = vmatpush1.bf16.msra.mxu0 0
      %3728 = vmatprep.subr.bf16.mxu0 0
      %3729 = vmatpush1.bf16.msra.mxu0 0
      %3730 = vmatprep.subr.bf16.mxu0 0
      %3731 = vmatpush1.bf16.msra.mxu0 0
      %3732 = vmatprep.subr.bf16.mxu0 0
      %3733 = vmatpush1.bf16.msra.mxu0 0
      %3734 = vmatprep.subr.bf16.mxu0 0
      %3735 = vmatpush1.bf16.msra.mxu0 0
      %3736 = vmatprep.subr.bf16.mxu0 0
      %3737 = vmatpush1.bf16.msra.mxu0 0
      %3738 = vmatprep.mubr.bf16.mxu0 0
      %3739 = vmatmul.mubr.bf16.gmra.mrb[0].mxu0 %v3653
      %v3740 = vpop.f32.mrb[0].mxu0
      %v3741 = vadd.f32 0.0, %v3740
      %v3742 = vpop.f32.mrb[0].mxu0
      %v3743 = vpop.f32.mrb[0].mxu0
      %v3744 = vadd.f32 0.0, %v3743
      %v3745 = vpop.f32.mrb[0].mxu0
      %3746 = vmatprep.mubr.bf16.mxu0 0
      %3747 = vmatmul.mubr.bf16.gmra.mrb[0].mxu0 %v3656
      %v3748 = vpop.f32.mrb[0].mxu0
      %v3749 = vadd.f32 0.0, %v3748
      %v3750 = vpop.f32.mrb[0].mxu0
      %v3751 = vpop.f32.mrb[0].mxu0
      %v3752 = vadd.f32 0.0, %v3751
      %v3753 = vpop.f32.mrb[0].mxu0
      %3754 = vmatprep.mubr.bf16.mxu0 0
      %3755 = vmatmul.mubr.bf16.gmra.mrb[0].mxu0 %v3659
      %v3756 = vpop.f32.mrb[0].mxu0
      %v3757 = vadd.f32 0.0, %v3756
      %v3758 = vpop.f32.mrb[0].mxu0
      %v3759 = vpop.f32.mrb[0].mxu0
      %v3760 = vadd.f32 0.0, %v3759
      %v3761 = vpop.f32.mrb[0].mxu0
      %3762 = vmatprep.mubr.bf16.mxu0 0
      %3763 = vmatmul.mubr.bf16.gmra.mrb[0].mxu0 %v3662
      %v3764 = vpop.f32.mrb[0].mxu0
      %v3765 = vadd.f32 0.0, %v3764
      %v3766 = vpop.f32.mrb[0].mxu0
      %v3767 = vpop.f32.mrb[0].mxu0
      %v3768 = vadd.f32 0.0, %v3767
      %v3769 = vpop.f32.mrb[0].mxu0
      %3770 = vmatprep.mubr.bf16.mxu0 0
      %3771 = vmatmul.mubr.bf16.gmra.mrb[0].mxu0 %v3665
      %v3772 = vpop.f32.mrb[0].mxu0
      %v3773 = vadd.f32 0.0, %v3772
      %v3774 = vpop.f32.mrb[0].mxu0
      %v3775 = vpop.f32.mrb[0].mxu0
      %v3776 = vadd.f32 0.0, %v3775
      %v3777 = vpop.f32.mrb[0].mxu0
      %3778 = vmatprep.mubr.bf16.mxu0 0
      %3779 = vmatmul.mubr.bf16.gmra.mrb[0].mxu0 %v3668
      %v3780 = vpop.f32.mrb[0].mxu0
      %v3781 = vadd.f32 0.0, %v3780
      %v3782 = vpop.f32.mrb[0].mxu0
      %v3783 = vpop.f32.mrb[0].mxu0
      %v3784 = vadd.f32 0.0, %v3783
      %v3785 = vpop.f32.mrb[0].mxu0
      %3786 = vmatprep.mubr.bf16.mxu0 0
      %3787 = vmatmul.mubr.bf16.gmra.mrb[0].mxu0 %v3671
      %v3788 = vpop.f32.mrb[0].mxu0
      %v3789 = vadd.f32 0.0, %v3788
      %v3790 = vpop.f32.mrb[0].mxu0
      %v3791 = vpop.f32.mrb[0].mxu0
      %v3792 = vadd.f32 0.0, %v3791
      %v3793 = vpop.f32.mrb[0].mxu0
      %3794 = vmatprep.mubr.bf16.mxu0 0
      %3795 = vmatmul.mubr.bf16.gmra.mrb[0].mxu0 %v3674
      %v3796 = vpop.f32.mrb[0].mxu0
      %v3797 = vadd.f32 0.0, %v3796
      %v3798 = vpop.f32.mrb[0].mxu0
      %v3799 = vpop.f32.mrb[0].mxu0
      %v3800 = vadd.f32 0.0, %v3799
      %v3801 = vpop.f32.mrb[0].mxu0
      %3802 = vmatprep.mubr.bf16.mxu0 0
      %3803 = vmatmul.mubr.bf16.gmra.mrb[0].mxu0 %v3677
      %v3804 = vpop.f32.mrb[0].mxu0
      %v3805 = vadd.f32 0.0, %v3804
      %v3806 = vpop.f32.mrb[0].mxu0
      %v3807 = vpop.f32.mrb[0].mxu0
      %v3808 = vadd.f32 0.0, %v3807
      %v3809 = vpop.f32.mrb[0].mxu0
      %3810 = vmatprep.mubr.bf16.mxu0 0
      %3811 = vmatmul.mubr.bf16.gmra.mrb[0].mxu0 %v3680
      %v3812 = vpop.f32.mrb[0].mxu0
      %v3813 = vadd.f32 0.0, %v3812
      %v3814 = vpop.f32.mrb[0].mxu0
      %v3815 = vpop.f32.mrb[0].mxu0
      %v3816 = vadd.f32 0.0, %v3815
      %v3817 = vpop.f32.mrb[0].mxu0
      %3818 = vmatprep.mubr.bf16.mxu0 0
      %3819 = vmatmul.mubr.bf16.gmra.mrb[0].mxu0 %v3683
      %v3820 = vpop.f32.mrb[0].mxu0
      %v3821 = vadd.f32 0.0, %v3820
      %v3822 = vpop.f32.mrb[0].mxu0
      %v3823 = vpop.f32.mrb[0].mxu0
      %v3824 = vadd.f32 0.0, %v3823
      %v3825 = vpop.f32.mrb[0].mxu0
      %3826 = vmatprep.mubr.bf16.mxu0 0
      %3827 = vmatmul.mubr.bf16.gmra.mrb[0].mxu0 %v3686
      %v3828 = vpop.f32.mrb[0].mxu0
      %v3829 = vadd.f32 0.0, %v3828
      %v3830 = vpop.f32.mrb[0].mxu0
      %v3831 = vpop.f32.mrb[0].mxu0
      %v3832 = vadd.f32 0.0, %v3831
      %v3833 = vpop.f32.mrb[0].mxu0
      %3834 = vmatprep.mubr.bf16.mxu0 0
      %3835 = vmatmul.mubr.bf16.gmra.mrb[0].mxu0 %v3689
      %v3836 = vpop.f32.mrb[0].mxu0
      %v3837 = vadd.f32 0.0, %v3836
      %v3838 = vpop.f32.mrb[0].mxu0
      %v3839 = vpop.f32.mrb[0].mxu0
      %v3840 = vadd.f32 0.0, %v3839
      %v3841 = vpop.f32.mrb[0].mxu0
      %3842 = vmatprep.mubr.bf16.mxu0 0
      %3843 = vmatmul.mubr.bf16.gmra.mrb[0].mxu0 %v3692
      %v3844 = vpop.f32.mrb[0].mxu0
      %v3845 = vadd.f32 0.0, %v3844
      %v3846 = vpop.f32.mrb[0].mxu0
      %v3847 = vpop.f32.mrb[0].mxu0
      %v3848 = vadd.f32 0.0, %v3847
      %v3849 = vpop.f32.mrb[0].mxu0
      %3850 = vmatprep.mubr.bf16.mxu0 0
      %3851 = vmatmul.mubr.bf16.gmra.mrb[0].mxu0 %v3695
      %v3852 = vpop.f32.mrb[0].mxu0
      %v3853 = vadd.f32 0.0, %v3852
      %v3854 = vpop.f32.mrb[0].mxu0
      %v3855 = vpop.f32.mrb[0].mxu0
      %v3856 = vadd.f32 0.0, %v3855
      %v3857 = vpop.f32.mrb[0].mxu0
      %3858 = vmatprep.mubr.bf16.mxu0 0
      %3859 = vmatmul.mubr.bf16.gmra.mrb[0].mxu0 %v3698
      %v3860 = vpop.f32.mrb[0].mxu0
      %v3861 = vadd.f32 0.0, %v3860
      %v3862 = vpop.f32.mrb[0].mxu0
      %v3863 = vpop.f32.mrb[0].mxu0
      %v3864 = vadd.f32 0.0, %v3863
      %v3865 = vpop.f32.mrb[0].mxu0
      %3866 = vdwg.mxu0
      %v3867 = vadd.f32 %v3571, %v3741
      %v3868 = vadd.f32 %v3572, %v3744
      %v3869 = vadd.f32 %v3573, %v3749
      %v3870 = vadd.f32 %v3574, %v3752
      %v3871 = vadd.f32 %v3575, %v3757
      %v3872 = vadd.f32 %v3576, %v3760
      %v3873 = vadd.f32 %v3577, %v3765
      %v3874 = vadd.f32 %v3578, %v3768
      %v3875 = vadd.f32 %v3579, %v3773
      %v3876 = vadd.f32 %v3580, %v3776
      %v3877 = vadd.f32 %v3581, %v3781
      %v3878 = vadd.f32 %v3582, %v3784
      %v3879 = vadd.f32 %v3583, %v3789
      %v3880 = vadd.f32 %v3584, %v3792
      %v3881 = vadd.f32 %v3585, %v3797
      %v3882 = vadd.f32 %v3586, %v3800
      %v3883 = vadd.f32 %v3587, %v3805
      %v3884 = vadd.f32 %v3588, %v3808
      %v3885 = vadd.f32 %v3589, %v3813
      %v3886 = vadd.f32 %v3590, %v3816
      %v3887 = vadd.f32 %v3591, %v3821
      %v3888 = vadd.f32 %v3592, %v3824
      %v3889 = vadd.f32 %v3593, %v3829
      %v3890 = vadd.f32 %v3594, %v3832
      %v3891 = vadd.f32 %v3595, %v3837
      %v3892 = vadd.f32 %v3596, %v3840
      %v3893 = vadd.f32 %v3597, %v3845
      %v3894 = vadd.f32 %v3598, %v3848
      %v3895 = vadd.f32 %v3599, %v3853
      %v3896 = vadd.f32 %v3600, %v3856
      %v3897 = vadd.f32 %v3601, %v3861
      %v3898 = vadd.f32 %v3602, %v3864
      %v3899 = vld [vmem:[#allocation3 + $0x1] sm:$0xff]
      %v3900 = vld [vmem:[#allocation3 + $0x9] sm:$0xff]
      %v3901 = vld [vmem:[#allocation3 + $0x19] sm:$0xff]
      %v3902 = vld [vmem:[#allocation3 + $0x21] sm:$0xff]
      %v3903 = vld [vmem:[#allocation3 + $0x31] sm:$0xff]
      %v3904 = vld [vmem:[#allocation3 + $0x39] sm:$0xff]
      %v3905 = vld [vmem:[#allocation3 + $0x49] sm:$0xff]
      %v3906 = vld [vmem:[#allocation3 + $0x51] sm:$0xff]
      %v3907 = vld [vmem:[#allocation3 + $0x61] sm:$0xff]
      %v3908 = vld [vmem:[#allocation3 + $0x69] sm:$0xff]
      %v3909 = vld [vmem:[#allocation3 + $0x79] sm:$0xff]
      %v3910 = vld [vmem:[#allocation3 + $0x81] sm:$0xff]
      %v3911 = vld [vmem:[#allocation3 + $0x91] sm:$0xff]
      %v3912 = vld [vmem:[#allocation3 + $0x99] sm:$0xff]
      %v3913 = vld [vmem:[#allocation3 + $0xa9] sm:$0xff]
      %v3914 = vld [vmem:[#allocation3 + $0xb1] sm:$0xff]
      %v3915 = vld [vmem:[#allocation3 + $0xc1] sm:$0xff]
      %v3916 = vld [vmem:[#allocation3 + $0xc9] sm:$0xff]
      %v3917 = vld [vmem:[#allocation3 + $0xd9] sm:$0xff]
      %v3918 = vld [vmem:[#allocation3 + $0xe1] sm:$0xff]
      %v3919 = vld [vmem:[#allocation3 + $0xf1] sm:$0xff]
      %v3920 = vld [vmem:[#allocation3 + $0xf9] sm:$0xff]
      %v3921 = vld [vmem:[#allocation3 + $0x109] sm:$0xff]
      %v3922 = vld [vmem:[#allocation3 + $0x111] sm:$0xff]
      %v3923 = vld [vmem:[#allocation3 + $0x121] sm:$0xff]
      %v3924 = vld [vmem:[#allocation3 + $0x129] sm:$0xff]
      %v3925 = vld [vmem:[#allocation3 + $0x139] sm:$0xff]
      %v3926 = vld [vmem:[#allocation3 + $0x141] sm:$0xff]
      %v3927 = vld [vmem:[#allocation3 + $0x151] sm:$0xff]
      %v3928 = vld [vmem:[#allocation3 + $0x159] sm:$0xff]
      %v3929 = vld [vmem:[#allocation3 + $0x169] sm:$0xff]
      %v3930 = vld [vmem:[#allocation3 + $0x171] sm:$0xff]
      %v3931 = vpack.c.bf16 %v3900, %v3899
      %v3932 = vpack.c.bf16 %v3902, %v3901
      %v3933 = vpack.c.bf16 %v3904, %v3903
      %v3934 = vpack.c.bf16 %v3906, %v3905
      %v3935 = vpack.c.bf16 %v3908, %v3907
      %v3936 = vpack.c.bf16 %v3910, %v3909
      %v3937 = vpack.c.bf16 %v3912, %v3911
      %v3938 = vpack.c.bf16 %v3914, %v3913
      %v3939 = vpack.c.bf16 %v3916, %v3915
      %v3940 = vpack.c.bf16 %v3918, %v3917
      %v3941 = vpack.c.bf16 %v3920, %v3919
      %v3942 = vpack.c.bf16 %v3922, %v3921
      %v3943 = vpack.c.bf16 %v3924, %v3923
      %v3944 = vpack.c.bf16 %v3926, %v3925
      %v3945 = vpack.c.bf16 %v3928, %v3927
      %v3946 = vpack.c.bf16 %v3930, %v3929
      %s3947 = scalar_lea.vmem %s7, 4
      %v3948 = vld [vmem:[%s3947] sm:$0x7]
      %v3950 = vsel %vm954, %v3931, 0
      %v3953 = vsel %vm954, %v3932, 0
      %v3956 = vsel %vm954, %v3933, 0
      %v3959 = vsel %vm954, %v3934, 0
      %v3962 = vsel %vm954, %v3935, 0
      %v3965 = vsel %vm954, %v3936, 0
      %v3968 = vsel %vm954, %v3937, 0
      %v3971 = vsel %vm954, %v3938, 0
      %v3974 = vsel %vm954, %v3939, 0
      %v3977 = vsel %vm954, %v3940, 0
      %v3980 = vsel %vm954, %v3941, 0
      %v3983 = vsel %vm954, %v3942, 0
      %v3986 = vsel %vm954, %v3943, 0
      %v3989 = vsel %vm954, %v3944, 0
      %v3992 = vsel %vm954, %v3945, 0
      %v3995 = vsel %vm954, %v3946, 0
      %v3998 = vand.u32 %v3948, %v3702
      %4000 = vmatprep.subr.bf16.mxu0 0
      %4001 = vmatpush1.bf16.msra.mxu0 %v3998
      %4002 = vmatprep.subr.bf16.mxu0 0
      %4003 = vmatpush1.bf16.msra.mxu0 0
      %4004 = vmatprep.subr.bf16.mxu0 0
      %4005 = vmatpush1.bf16.msra.mxu0 0
      %4006 = vmatprep.subr.bf16.mxu0 0
      %4007 = vmatpush1.bf16.msra.mxu0 0
      %4008 = vmatprep.subr.bf16.mxu0 0
      %4009 = vmatpush1.bf16.msra.mxu0 0
      %4010 = vmatprep.subr.bf16.mxu0 0
      %4011 = vmatpush1.bf16.msra.mxu0 0
      %4012 = vmatprep.subr.bf16.mxu0 0
      %4013 = vmatpush1.bf16.msra.mxu0 0
      %4014 = vmatprep.subr.bf16.mxu0 0
      %4015 = vmatpush1.bf16.msra.mxu0 0
      %4016 = vmatprep.subr.bf16.mxu0 0
      %4017 = vmatpush1.bf16.msra.mxu0 0
      %4018 = vmatprep.subr.bf16.mxu0 0
      %4019 = vmatpush1.bf16.msra.mxu0 0
      %4020 = vmatprep.subr.bf16.mxu0 0
      %4021 = vmatpush1.bf16.msra.mxu0 0
      %4022 = vmatprep.subr.bf16.mxu0 0
      %4023 = vmatpush1.bf16.msra.mxu0 0
      %4024 = vmatprep.subr.bf16.mxu0 0
      %4025 = vmatpush1.bf16.msra.mxu0 0
      %4026 = vmatprep.subr.bf16.mxu0 0
      %4027 = vmatpush1.bf16.msra.mxu0 0
      %4028 = vmatprep.subr.bf16.mxu0 0
      %4029 = vmatpush1.bf16.msra.mxu0 0
      %4030 = vmatprep.subr.bf16.mxu0 0
      %4031 = vmatpush1.bf16.msra.mxu0 0
      %4032 = vmatprep.mubr.bf16.mxu0 0
      %4033 = vmatmul.mubr.bf16.gmra.mrb[0].mxu0 %v3950
      %v4034 = vpop.f32.mrb[0].mxu0
      %v4035 = vadd.f32 0.0, %v4034
      %v4036 = vpop.f32.mrb[0].mxu0
      %v4037 = vpop.f32.mrb[0].mxu0
      %v4038 = vadd.f32 0.0, %v4037
      %v4039 = vpop.f32.mrb[0].mxu0
      %4040 = vmatprep.mubr.bf16.mxu0 0
      %4041 = vmatmul.mubr.bf16.gmra.mrb[0].mxu0 %v3953
      %v4042 = vpop.f32.mrb[0].mxu0
      %v4043 = vadd.f32 0.0, %v4042
      %v4044 = vpop.f32.mrb[0].mxu0
      %v4045 = vpop.f32.mrb[0].mxu0
      %v4046 = vadd.f32 0.0, %v4045
      %v4047 = vpop.f32.mrb[0].mxu0
      %4048 = vmatprep.mubr.bf16.mxu0 0
      %4049 = vmatmul.mubr.bf16.gmra.mrb[0].mxu0 %v3956
      %v4050 = vpop.f32.mrb[0].mxu0
      %v4051 = vadd.f32 0.0, %v4050
      %v4052 = vpop.f32.mrb[0].mxu0
      %v4053 = vpop.f32.mrb[0].mxu0
      %v4054 = vadd.f32 0.0, %v4053
      %v4055 = vpop.f32.mrb[0].mxu0
      %4056 = vmatprep.mubr.bf16.mxu0 0
      %4057 = vmatmul.mubr.bf16.gmra.mrb[0].mxu0 %v3959
      %v4058 = vpop.f32.mrb[0].mxu0
      %v4059 = vadd.f32 0.0, %v4058
      %v4060 = vpop.f32.mrb[0].mxu0
      %v4061 = vpop.f32.mrb[0].mxu0
      %v4062 = vadd.f32 0.0, %v4061
      %v4063 = vpop.f32.mrb[0].mxu0
      %4064 = vmatprep.mubr.bf16.mxu0 0
      %4065 = vmatmul.mubr.bf16.gmra.mrb[0].mxu0 %v3962
      %v4066 = vpop.f32.mrb[0].mxu0
      %v4067 = vadd.f32 0.0, %v4066
      %v4068 = vpop.f32.mrb[0].mxu0
      %v4069 = vpop.f32.mrb[0].mxu0
      %v4070 = vadd.f32 0.0, %v4069
      %v4071 = vpop.f32.mrb[0].mxu0
      %4072 = vmatprep.mubr.bf16.mxu0 0
      %4073 = vmatmul.mubr.bf16.gmra.mrb[0].mxu0 %v3965
      %v4074 = vpop.f32.mrb[0].mxu0
      %v4075 = vadd.f32 0.0, %v4074
      %v4076 = vpop.f32.mrb[0].mxu0
      %v4077 = vpop.f32.mrb[0].mxu0
      %v4078 = vadd.f32 0.0, %v4077
      %v4079 = vpop.f32.mrb[0].mxu0
      %4080 = vmatprep.mubr.bf16.mxu0 0
      %4081 = vmatmul.mubr.bf16.gmra.mrb[0].mxu0 %v3968
      %v4082 = vpop.f32.mrb[0].mxu0
      %v4083 = vadd.f32 0.0, %v4082
      %v4084 = vpop.f32.mrb[0].mxu0
      %v4085 = vpop.f32.mrb[0].mxu0
      %v4086 = vadd.f32 0.0, %v4085
      %v4087 = vpop.f32.mrb[0].mxu0
      %4088 = vmatprep.mubr.bf16.mxu0 0
      %4089 = vmatmul.mubr.bf16.gmra.mrb[0].mxu0 %v3971
      %v4090 = vpop.f32.mrb[0].mxu0
      %v4091 = vadd.f32 0.0, %v4090
      %v4092 = vpop.f32.mrb[0].mxu0
      %v4093 = vpop.f32.mrb[0].mxu0
      %v4094 = vadd.f32 0.0, %v4093
      %v4095 = vpop.f32.mrb[0].mxu0
      %4096 = vmatprep.mubr.bf16.mxu0 0
      %4097 = vmatmul.mubr.bf16.gmra.mrb[0].mxu0 %v3974
      %v4098 = vpop.f32.mrb[0].mxu0
      %v4099 = vadd.f32 0.0, %v4098
      %v4100 = vpop.f32.mrb[0].mxu0
      %v4101 = vpop.f32.mrb[0].mxu0
      %v4102 = vadd.f32 0.0, %v4101
      %v4103 = vpop.f32.mrb[0].mxu0
      %4104 = vmatprep.mubr.bf16.mxu0 0
      %4105 = vmatmul.mubr.bf16.gmra.mrb[0].mxu0 %v3977
      %v4106 = vpop.f32.mrb[0].mxu0
      %v4107 = vadd.f32 0.0, %v4106
      %v4108 = vpop.f32.mrb[0].mxu0
      %v4109 = vpop.f32.mrb[0].mxu0
      %v4110 = vadd.f32 0.0, %v4109
      %v4111 = vpop.f32.mrb[0].mxu0
      %4112 = vmatprep.mubr.bf16.mxu0 0
      %4113 = vmatmul.mubr.bf16.gmra.mrb[0].mxu0 %v3980
      %v4114 = vpop.f32.mrb[0].mxu0
      %v4115 = vadd.f32 0.0, %v4114
      %v4116 = vpop.f32.mrb[0].mxu0
      %v4117 = vpop.f32.mrb[0].mxu0
      %v4118 = vadd.f32 0.0, %v4117
      %v4119 = vpop.f32.mrb[0].mxu0
      %4120 = vmatprep.mubr.bf16.mxu0 0
      %4121 = vmatmul.mubr.bf16.gmra.mrb[0].mxu0 %v3983
      %v4122 = vpop.f32.mrb[0].mxu0
      %v4123 = vadd.f32 0.0, %v4122
      %v4124 = vpop.f32.mrb[0].mxu0
      %v4125 = vpop.f32.mrb[0].mxu0
      %v4126 = vadd.f32 0.0, %v4125
      %v4127 = vpop.f32.mrb[0].mxu0
      %4128 = vmatprep.mubr.bf16.mxu0 0
      %4129 = vmatmul.mubr.bf16.gmra.mrb[0].mxu0 %v3986
      %v4130 = vpop.f32.mrb[0].mxu0
      %v4131 = vadd.f32 0.0, %v4130
      %v4132 = vpop.f32.mrb[0].mxu0
      %v4133 = vpop.f32.mrb[0].mxu0
      %v4134 = vadd.f32 0.0, %v4133
      %v4135 = vpop.f32.mrb[0].mxu0
      %4136 = vmatprep.mubr.bf16.mxu0 0
      %4137 = vmatmul.mubr.bf16.gmra.mrb[0].mxu0 %v3989
      %v4138 = vpop.f32.mrb[0].mxu0
      %v4139 = vadd.f32 0.0, %v4138
      %v4140 = vpop.f32.mrb[0].mxu0
      %v4141 = vpop.f32.mrb[0].mxu0
      %v4142 = vadd.f32 0.0, %v4141
      %v4143 = vpop.f32.mrb[0].mxu0
      %4144 = vmatprep.mubr.bf16.mxu0 0
      %4145 = vmatmul.mubr.bf16.gmra.mrb[0].mxu0 %v3992
      %v4146 = vpop.f32.mrb[0].mxu0
      %v4147 = vadd.f32 0.0, %v4146
      %v4148 = vpop.f32.mrb[0].mxu0
      %v4149 = vpop.f32.mrb[0].mxu0
      %v4150 = vadd.f32 0.0, %v4149
      %v4151 = vpop.f32.mrb[0].mxu0
      %4152 = vmatprep.mubr.bf16.mxu0 0
      %4153 = vmatmul.mubr.bf16.gmra.mrb[0].mxu0 %v3995
      %v4154 = vpop.f32.mrb[0].mxu0
      %v4155 = vadd.f32 0.0, %v4154
      %v4156 = vpop.f32.mrb[0].mxu0
      %v4157 = vpop.f32.mrb[0].mxu0
      %v4158 = vadd.f32 0.0, %v4157
      %v4159 = vpop.f32.mrb[0].mxu0
      %4160 = vdwg.mxu0
      %v4161 = vadd.f32 %v3867, %v4035
      %v4162 = vadd.f32 %v3868, %v4038
      %v4163 = vadd.f32 %v3869, %v4043
      %v4164 = vadd.f32 %v3870, %v4046
      %v4165 = vadd.f32 %v3871, %v4051
      %v4166 = vadd.f32 %v3872, %v4054
      %v4167 = vadd.f32 %v3873, %v4059
      %v4168 = vadd.f32 %v3874, %v4062
      %v4169 = vadd.f32 %v3875, %v4067
      %v4170 = vadd.f32 %v3876, %v4070
      %v4171 = vadd.f32 %v3877, %v4075
      %v4172 = vadd.f32 %v3878, %v4078
      %v4173 = vadd.f32 %v3879, %v4083
      %v4174 = vadd.f32 %v3880, %v4086
      %v4175 = vadd.f32 %v3881, %v4091
      %v4176 = vadd.f32 %v3882, %v4094
      %v4177 = vadd.f32 %v3883, %v4099
      %v4178 = vadd.f32 %v3884, %v4102
      %v4179 = vadd.f32 %v3885, %v4107
      %v4180 = vadd.f32 %v3886, %v4110
      %v4181 = vadd.f32 %v3887, %v4115
      %v4182 = vadd.f32 %v3888, %v4118
      %v4183 = vadd.f32 %v3889, %v4123
      %v4184 = vadd.f32 %v3890, %v4126
      %v4185 = vadd.f32 %v3891, %v4131
      %v4186 = vadd.f32 %v3892, %v4134
      %v4187 = vadd.f32 %v3893, %v4139
      %v4188 = vadd.f32 %v3894, %v4142
      %v4189 = vadd.f32 %v3895, %v4147
      %v4190 = vadd.f32 %v3896, %v4150
      %v4191 = vadd.f32 %v3897, %v4155
      %v4192 = vadd.f32 %v3898, %v4158
      %v4193 = vld [vmem:[#allocation3 + $0x2] sm:$0xff]
      %v4194 = vld [vmem:[#allocation3 + $0xa] sm:$0xff]
      %v4195 = vld [vmem:[#allocation3 + $0x1a] sm:$0xff]
      %v4196 = vld [vmem:[#allocation3 + $0x22] sm:$0xff]
      %v4197 = vld [vmem:[#allocation3 + $0x32] sm:$0xff]
      %v4198 = vld [vmem:[#allocation3 + $0x3a] sm:$0xff]
      %v4199 = vld [vmem:[#allocation3 + $0x4a] sm:$0xff]
      %v4200 = vld [vmem:[#allocation3 + $0x52] sm:$0xff]
      %v4201 = vld [vmem:[#allocation3 + $0x62] sm:$0xff]
      %v4202 = vld [vmem:[#allocation3 + $0x6a] sm:$0xff]
      %v4203 = vld [vmem:[#allocation3 + $0x7a] sm:$0xff]
      %v4204 = vld [vmem:[#allocation3 + $0x82] sm:$0xff]
      %v4205 = vld [vmem:[#allocation3 + $0x92] sm:$0xff]
      %v4206 = vld [vmem:[#allocation3 + $0x9a] sm:$0xff]
      %v4207 = vld [vmem:[#allocation3 + $0xaa] sm:$0xff]
      %v4208 = vld [vmem:[#allocation3 + $0xb2] sm:$0xff]
      %v4209 = vld [vmem:[#allocation3 + $0xc2] sm:$0xff]
      %v4210 = vld [vmem:[#allocation3 + $0xca] sm:$0xff]
      %v4211 = vld [vmem:[#allocation3 + $0xda] sm:$0xff]
      %v4212 = vld [vmem:[#allocation3 + $0xe2] sm:$0xff]
      %v4213 = vld [vmem:[#allocation3 + $0xf2] sm:$0xff]
      %v4214 = vld [vmem:[#allocation3 + $0xfa] sm:$0xff]
      %v4215 = vld [vmem:[#allocation3 + $0x10a] sm:$0xff]
      %v4216 = vld [vmem:[#allocation3 + $0x112] sm:$0xff]
      %v4217 = vld [vmem:[#allocation3 + $0x122] sm:$0xff]
      %v4218 = vld [vmem:[#allocation3 + $0x12a] sm:$0xff]
      %v4219 = vld [vmem:[#allocation3 + $0x13a] sm:$0xff]
      %v4220 = vld [vmem:[#allocation3 + $0x142] sm:$0xff]
      %v4221 = vld [vmem:[#allocation3 + $0x152] sm:$0xff]
      %v4222 = vld [vmem:[#allocation3 + $0x15a] sm:$0xff]
      %v4223 = vld [vmem:[#allocation3 + $0x16a] sm:$0xff]
      %v4224 = vld [vmem:[#allocation3 + $0x172] sm:$0xff]
      %v4225 = vpack.c.bf16 %v4194, %v4193
      %v4226 = vpack.c.bf16 %v4196, %v4195
      %v4227 = vpack.c.bf16 %v4198, %v4197
      %v4228 = vpack.c.bf16 %v4200, %v4199
      %v4229 = vpack.c.bf16 %v4202, %v4201
      %v4230 = vpack.c.bf16 %v4204, %v4203
      %v4231 = vpack.c.bf16 %v4206, %v4205
      %v4232 = vpack.c.bf16 %v4208, %v4207
      %v4233 = vpack.c.bf16 %v4210, %v4209
      %v4234 = vpack.c.bf16 %v4212, %v4211
      %v4235 = vpack.c.bf16 %v4214, %v4213
      %v4236 = vpack.c.bf16 %v4216, %v4215
      %v4237 = vpack.c.bf16 %v4218, %v4217
      %v4238 = vpack.c.bf16 %v4220, %v4219
      %v4239 = vpack.c.bf16 %v4222, %v4221
      %v4240 = vpack.c.bf16 %v4224, %v4223
      %s4241 = scalar_lea.vmem %s7, 8
      %v4242 = vld [vmem:[%s4241] sm:$0x7]
      %v4244 = vsel %vm954, %v4225, 0
      %v4247 = vsel %vm954, %v4226, 0
      %v4250 = vsel %vm954, %v4227, 0
      %v4253 = vsel %vm954, %v4228, 0
      %v4256 = vsel %vm954, %v4229, 0
      %v4259 = vsel %vm954, %v4230, 0
      %v4262 = vsel %vm954, %v4231, 0
      %v4265 = vsel %vm954, %v4232, 0
      %v4268 = vsel %vm954, %v4233, 0
      %v4271 = vsel %vm954, %v4234, 0
      %v4274 = vsel %vm954, %v4235, 0
      %v4277 = vsel %vm954, %v4236, 0
      %v4280 = vsel %vm954, %v4237, 0
      %v4283 = vsel %vm954, %v4238, 0
      %v4286 = vsel %vm954, %v4239, 0
      %v4289 = vsel %vm954, %v4240, 0
      %v4292 = vand.u32 %v4242, %v3702
      %4294 = vmatprep.subr.bf16.mxu0 0
      %4295 = vmatpush1.bf16.msra.mxu0 %v4292
      %4296 = vmatprep.subr.bf16.mxu0 0
      %4297 = vmatpush1.bf16.msra.mxu0 0
      %4298 = vmatprep.subr.bf16.mxu0 0
      %4299 = vmatpush1.bf16.msra.mxu0 0
      %4300 = vmatprep.subr.bf16.mxu0 0
      %4301 = vmatpush1.bf16.msra.mxu0 0
      %4302 = vmatprep.subr.bf16.mxu0 0
      %4303 = vmatpush1.bf16.msra.mxu0 0
      %4304 = vmatprep.subr.bf16.mxu0 0
      %4305 = vmatpush1.bf16.msra.mxu0 0
      %4306 = vmatprep.subr.bf16.mxu0 0
      %4307 = vmatpush1.bf16.msra.mxu0 0
      %4308 = vmatprep.subr.bf16.mxu0 0
      %4309 = vmatpush1.bf16.msra.mxu0 0
      %4310 = vmatprep.subr.bf16.mxu0 0
      %4311 = vmatpush1.bf16.msra.mxu0 0
      %4312 = vmatprep.subr.bf16.mxu0 0
      %4313 = vmatpush1.bf16.msra.mxu0 0
      %4314 = vmatprep.subr.bf16.mxu0 0
      %4315 = vmatpush1.bf16.msra.mxu0 0
      %4316 = vmatprep.subr.bf16.mxu0 0
      %4317 = vmatpush1.bf16.msra.mxu0 0
      %4318 = vmatprep.subr.bf16.mxu0 0
      %4319 = vmatpush1.bf16.msra.mxu0 0
      %4320 = vmatprep.subr.bf16.mxu0 0
      %4321 = vmatpush1.bf16.msra.mxu0 0
      %4322 = vmatprep.subr.bf16.mxu0 0
      %4323 = vmatpush1.bf16.msra.mxu0 0
      %4324 = vmatprep.subr.bf16.mxu0 0
      %4325 = vmatpush1.bf16.msra.mxu0 0
      %4326 = vmatprep.mubr.bf16.mxu0 0
      %4327 = vmatmul.mubr.bf16.gmra.mrb[0].mxu0 %v4244
      %v4328 = vpop.f32.mrb[0].mxu0
      %v4329 = vadd.f32 0.0, %v4328
      %v4330 = vpop.f32.mrb[0].mxu0
      %v4331 = vpop.f32.mrb[0].mxu0
      %v4332 = vadd.f32 0.0, %v4331
      %v4333 = vpop.f32.mrb[0].mxu0
      %4334 = vmatprep.mubr.bf16.mxu0 0
      %4335 = vmatmul.mubr.bf16.gmra.mrb[0].mxu0 %v4247
      %v4336 = vpop.f32.mrb[0].mxu0
      %v4337 = vadd.f32 0.0, %v4336
      %v4338 = vpop.f32.mrb[0].mxu0
      %v4339 = vpop.f32.mrb[0].mxu0
      %v4340 = vadd.f32 0.0, %v4339
      %v4341 = vpop.f32.mrb[0].mxu0
      %4342 = vmatprep.mubr.bf16.mxu0 0
      %4343 = vmatmul.mubr.bf16.gmra.mrb[0].mxu0 %v4250
      %v4344 = vpop.f32.mrb[0].mxu0
      %v4345 = vadd.f32 0.0, %v4344
      %v4346 = vpop.f32.mrb[0].mxu0
      %v4347 = vpop.f32.mrb[0].mxu0
      %v4348 = vadd.f32 0.0, %v4347
      %v4349 = vpop.f32.mrb[0].mxu0
      %4350 = vmatprep.mubr.bf16.mxu0 0
      %4351 = vmatmul.mubr.bf16.gmra.mrb[0].mxu0 %v4253
      %v4352 = vpop.f32.mrb[0].mxu0
      %v4353 = vadd.f32 0.0, %v4352
      %v4354 = vpop.f32.mrb[0].mxu0
      %v4355 = vpop.f32.mrb[0].mxu0
      %v4356 = vadd.f32 0.0, %v4355
      %v4357 = vpop.f32.mrb[0].mxu0
      %4358 = vmatprep.mubr.bf16.mxu0 0
      %4359 = vmatmul.mubr.bf16.gmra.mrb[0].mxu0 %v4256
      %v4360 = vpop.f32.mrb[0].mxu0
      %v4361 = vadd.f32 0.0, %v4360
      %v4362 = vpop.f32.mrb[0].mxu0
      %v4363 = vpop.f32.mrb[0].mxu0
      %v4364 = vadd.f32 0.0, %v4363
      %v4365 = vpop.f32.mrb[0].mxu0
      %4366 = vmatprep.mubr.bf16.mxu0 0
      %4367 = vmatmul.mubr.bf16.gmra.mrb[0].mxu0 %v4259
      %v4368 = vpop.f32.mrb[0].mxu0
      %v4369 = vadd.f32 0.0, %v4368
      %v4370 = vpop.f32.mrb[0].mxu0
      %v4371 = vpop.f32.mrb[0].mxu0
      %v4372 = vadd.f32 0.0, %v4371
      %v4373 = vpop.f32.mrb[0].mxu0
      %4374 = vmatprep.mubr.bf16.mxu0 0
      %4375 = vmatmul.mubr.bf16.gmra.mrb[0].mxu0 %v4262
      %v4376 = vpop.f32.mrb[0].mxu0
      %v4377 = vadd.f32 0.0, %v4376
      %v4378 = vpop.f32.mrb[0].mxu0
      %v4379 = vpop.f32.mrb[0].mxu0
      %v4380 = vadd.f32 0.0, %v4379
      %v4381 = vpop.f32.mrb[0].mxu0
      %4382 = vmatprep.mubr.bf16.mxu0 0
      %4383 = vmatmul.mubr.bf16.gmra.mrb[0].mxu0 %v4265
      %v4384 = vpop.f32.mrb[0].mxu0
      %v4385 = vadd.f32 0.0, %v4384
      %v4386 = vpop.f32.mrb[0].mxu0
      %v4387 = vpop.f32.mrb[0].mxu0
      %v4388 = vadd.f32 0.0, %v4387
      %v4389 = vpop.f32.mrb[0].mxu0
      %4390 = vmatprep.mubr.bf16.mxu0 0
      %4391 = vmatmul.mubr.bf16.gmra.mrb[0].mxu0 %v4268
      %v4392 = vpop.f32.mrb[0].mxu0
      %v4393 = vadd.f32 0.0, %v4392
      %v4394 = vpop.f32.mrb[0].mxu0
      %v4395 = vpop.f32.mrb[0].mxu0
      %v4396 = vadd.f32 0.0, %v4395
      %v4397 = vpop.f32.mrb[0].mxu0
      %4398 = vmatprep.mubr.bf16.mxu0 0
      %4399 = vmatmul.mubr.bf16.gmra.mrb[0].mxu0 %v4271
      %v4400 = vpop.f32.mrb[0].mxu0
      %v4401 = vadd.f32 0.0, %v4400
      %v4402 = vpop.f32.mrb[0].mxu0
      %v4403 = vpop.f32.mrb[0].mxu0
      %v4404 = vadd.f32 0.0, %v4403
      %v4405 = vpop.f32.mrb[0].mxu0
      %4406 = vmatprep.mubr.bf16.mxu0 0
      %4407 = vmatmul.mubr.bf16.gmra.mrb[0].mxu0 %v4274
      %v4408 = vpop.f32.mrb[0].mxu0
      %v4409 = vadd.f32 0.0, %v4408
      %v4410 = vpop.f32.mrb[0].mxu0
      %v4411 = vpop.f32.mrb[0].mxu0
      %v4412 = vadd.f32 0.0, %v4411
      %v4413 = vpop.f32.mrb[0].mxu0
      %4414 = vmatprep.mubr.bf16.mxu0 0
      %4415 = vmatmul.mubr.bf16.gmra.mrb[0].mxu0 %v4277
      %v4416 = vpop.f32.mrb[0].mxu0
      %v4417 = vadd.f32 0.0, %v4416
      %v4418 = vpop.f32.mrb[0].mxu0
      %v4419 = vpop.f32.mrb[0].mxu0
      %v4420 = vadd.f32 0.0, %v4419
      %v4421 = vpop.f32.mrb[0].mxu0
      %4422 = vmatprep.mubr.bf16.mxu0 0
      %4423 = vmatmul.mubr.bf16.gmra.mrb[0].mxu0 %v4280
      %v4424 = vpop.f32.mrb[0].mxu0
      %v4425 = vadd.f32 0.0, %v4424
      %v4426 = vpop.f32.mrb[0].mxu0
      %v4427 = vpop.f32.mrb[0].mxu0
      %v4428 = vadd.f32 0.0, %v4427
      %v4429 = vpop.f32.mrb[0].mxu0
      %4430 = vmatprep.mubr.bf16.mxu0 0
      %4431 = vmatmul.mubr.bf16.gmra.mrb[0].mxu0 %v4283
      %v4432 = vpop.f32.mrb[0].mxu0
      %v4433 = vadd.f32 0.0, %v4432
      %v4434 = vpop.f32.mrb[0].mxu0
      %v4435 = vpop.f32.mrb[0].mxu0
      %v4436 = vadd.f32 0.0, %v4435
      %v4437 = vpop.f32.mrb[0].mxu0
      %4438 = vmatprep.mubr.bf16.mxu0 0
      %4439 = vmatmul.mubr.bf16.gmra.mrb[0].mxu0 %v4286
      %v4440 = vpop.f32.mrb[0].mxu0
      %v4441 = vadd.f32 0.0, %v4440
      %v4442 = vpop.f32.mrb[0].mxu0
      %v4443 = vpop.f32.mrb[0].mxu0
      %v4444 = vadd.f32 0.0, %v4443
      %v4445 = vpop.f32.mrb[0].mxu0
      %4446 = vmatprep.mubr.bf16.mxu0 0
      %4447 = vmatmul.mubr.bf16.gmra.mrb[0].mxu0 %v4289
      %v4448 = vpop.f32.mrb[0].mxu0
      %v4449 = vadd.f32 0.0, %v4448
      %v4450 = vpop.f32.mrb[0].mxu0
      %v4451 = vpop.f32.mrb[0].mxu0
      %v4452 = vadd.f32 0.0, %v4451
      %v4453 = vpop.f32.mrb[0].mxu0
      %4454 = vdwg.mxu0
      %v4455 = vadd.f32 %v4161, %v4329
      %v4456 = vadd.f32 %v4162, %v4332
      %v4457 = vadd.f32 %v4163, %v4337
      %v4458 = vadd.f32 %v4164, %v4340
      %v4459 = vadd.f32 %v4165, %v4345
      %v4460 = vadd.f32 %v4166, %v4348
      %v4461 = vadd.f32 %v4167, %v4353
      %v4462 = vadd.f32 %v4168, %v4356
      %v4463 = vadd.f32 %v4169, %v4361
      %v4464 = vadd.f32 %v4170, %v4364
      %v4465 = vadd.f32 %v4171, %v4369
      %v4466 = vadd.f32 %v4172, %v4372
      %v4467 = vadd.f32 %v4173, %v4377
      %v4468 = vadd.f32 %v4174, %v4380
      %v4469 = vadd.f32 %v4175, %v4385
      %v4470 = vadd.f32 %v4176, %v4388
      %v4471 = vadd.f32 %v4177, %v4393
      %v4472 = vadd.f32 %v4178, %v4396
      %v4473 = vadd.f32 %v4179, %v4401
      %v4474 = vadd.f32 %v4180, %v4404
      %v4475 = vadd.f32 %v4181, %v4409
      %v4476 = vadd.f32 %v4182, %v4412
      %v4477 = vadd.f32 %v4183, %v4417
      %v4478 = vadd.f32 %v4184, %v4420
      %v4479 = vadd.f32 %v4185, %v4425
      %v4480 = vadd.f32 %v4186, %v4428
      %v4481 = vadd.f32 %v4187, %v4433
      %v4482 = vadd.f32 %v4188, %v4436
      %v4483 = vadd.f32 %v4189, %v4441
      %v4484 = vadd.f32 %v4190, %v4444
      %v4485 = vadd.f32 %v4191, %v4449
      %v4486 = vadd.f32 %v4192, %v4452
      %v4487 = vld [vmem:[%s953] sm:$0xff]
      %v4488 = vld [vmem:[%s953 + $0x8] sm:$0xff]
      %v4489 = vld [vmem:[%s953 + $0x18] sm:$0xff]
      %v4490 = vld [vmem:[%s953 + $0x20] sm:$0xff]
      %v4491 = vld [vmem:[%s953 + $0x30] sm:$0xff]
      %v4492 = vld [vmem:[%s953 + $0x38] sm:$0xff]
      %v4493 = vld [vmem:[%s953 + $0x48] sm:$0xff]
      %v4494 = vld [vmem:[%s953 + $0x50] sm:$0xff]
      %v4495 = vld [vmem:[%s953 + $0x60] sm:$0xff]
      %v4496 = vld [vmem:[%s953 + $0x68] sm:$0xff]
      %v4497 = vld [vmem:[%s953 + $0x78] sm:$0xff]
      %v4498 = vld [vmem:[%s953 + $0x80] sm:$0xff]
      %v4499 = vld [vmem:[%s953 + $0x90] sm:$0xff]
      %v4500 = vld [vmem:[%s953 + $0x98] sm:$0xff]
      %v4501 = vld [vmem:[%s953 + $0xa8] sm:$0xff]
      %v4502 = vld [vmem:[%s953 + $0xb0] sm:$0xff]
      %v4503 = vld [vmem:[%s953 + $0xc0] sm:$0xff]
      %v4504 = vld [vmem:[%s953 + $0xc8] sm:$0xff]
      %v4505 = vld [vmem:[%s953 + $0xd8] sm:$0xff]
      %v4506 = vld [vmem:[%s953 + $0xe0] sm:$0xff]
      %v4507 = vld [vmem:[%s953 + $0xf0] sm:$0xff]
      %v4508 = vld [vmem:[%s953 + $0xf8] sm:$0xff]
      %v4509 = vld [vmem:[%s953 + $0x108] sm:$0xff]
      %v4510 = vld [vmem:[%s953 + $0x110] sm:$0xff]
      %v4511 = vld [vmem:[%s953 + $0x120] sm:$0xff]
      %v4512 = vld [vmem:[%s953 + $0x128] sm:$0xff]
      %v4513 = vld [vmem:[%s953 + $0x138] sm:$0xff]
      %v4514 = vld [vmem:[%s953 + $0x140] sm:$0xff]
      %v4515 = vld [vmem:[%s953 + $0x150] sm:$0xff]
      %v4516 = vld [vmem:[%s953 + $0x158] sm:$0xff]
      %v4517 = vld [vmem:[%s953 + $0x168] sm:$0xff]
      %v4518 = vld [vmem:[%s953 + $0x170] sm:$0xff]
      %v4519 = vpack.c.bf16 %v4488, %v4487
      %v4520 = vpack.c.bf16 %v4490, %v4489
      %v4521 = vpack.c.bf16 %v4492, %v4491
      %v4522 = vpack.c.bf16 %v4494, %v4493
      %v4523 = vpack.c.bf16 %v4496, %v4495
      %v4524 = vpack.c.bf16 %v4498, %v4497
      %v4525 = vpack.c.bf16 %v4500, %v4499
      %v4526 = vpack.c.bf16 %v4502, %v4501
      %v4527 = vpack.c.bf16 %v4504, %v4503
      %v4528 = vpack.c.bf16 %v4506, %v4505
      %v4529 = vpack.c.bf16 %v4508, %v4507
      %v4530 = vpack.c.bf16 %v4510, %v4509
      %v4531 = vpack.c.bf16 %v4512, %v4511
      %v4532 = vpack.c.bf16 %v4514, %v4513
      %v4533 = vpack.c.bf16 %v4516, %v4515
      %v4534 = vpack.c.bf16 %v4518, %v4517
      %s4535 = scalar_lea.vmem %s7, 12
      %v4536 = vld [vmem:[%s4535] sm:$0x7]
      %v4538 = vsel %vm954, %v4519, 0
      %v4541 = vsel %vm954, %v4520, 0
      %v4544 = vsel %vm954, %v4521, 0
      %v4547 = vsel %vm954, %v4522, 0
      %v4550 = vsel %vm954, %v4523, 0
      %v4553 = vsel %vm954, %v4524, 0
      %v4556 = vsel %vm954, %v4525, 0
      %v4559 = vsel %vm954, %v4526, 0
      %v4562 = vsel %vm954, %v4527, 0
      %v4565 = vsel %vm954, %v4528, 0
      %v4568 = vsel %vm954, %v4529, 0
      %v4571 = vsel %vm954, %v4530, 0
      %v4574 = vsel %vm954, %v4531, 0
      %v4577 = vsel %vm954, %v4532, 0
      %v4580 = vsel %vm954, %v4533, 0
      %v4583 = vsel %vm954, %v4534, 0
      %v4586 = vand.u32 %v4536, %v3702
      %4588 = vmatprep.subr.bf16.mxu0 0
      %4589 = vmatpush1.bf16.msra.mxu0 %v4586
      %4590 = vmatprep.subr.bf16.mxu0 0
      %4591 = vmatpush1.bf16.msra.mxu0 0
      %4592 = vmatprep.subr.bf16.mxu0 0
      %4593 = vmatpush1.bf16.msra.mxu0 0
      %4594 = vmatprep.subr.bf16.mxu0 0
      %4595 = vmatpush1.bf16.msra.mxu0 0
      %4596 = vmatprep.subr.bf16.mxu0 0
      %4597 = vmatpush1.bf16.msra.mxu0 0
      %4598 = vmatprep.subr.bf16.mxu0 0
      %4599 = vmatpush1.bf16.msra.mxu0 0
      %4600 = vmatprep.subr.bf16.mxu0 0
      %4601 = vmatpush1.bf16.msra.mxu0 0
      %4602 = vmatprep.subr.bf16.mxu0 0
      %4603 = vmatpush1.bf16.msra.mxu0 0
      %4604 = vmatprep.subr.bf16.mxu0 0
      %4605 = vmatpush1.bf16.msra.mxu0 0
      %4606 = vmatprep.subr.bf16.mxu0 0
      %4607 = vmatpush1.bf16.msra.mxu0 0
      %4608 = vmatprep.subr.bf16.mxu0 0
      %4609 = vmatpush1.bf16.msra.mxu0 0
      %4610 = vmatprep.subr.bf16.mxu0 0
      %4611 = vmatpush1.bf16.msra.mxu0 0
      %4612 = vmatprep.subr.bf16.mxu0 0
      %4613 = vmatpush1.bf16.msra.mxu0 0
      %4614 = vmatprep.subr.bf16.mxu0 0
      %4615 = vmatpush1.bf16.msra.mxu0 0
      %4616 = vmatprep.subr.bf16.mxu0 0
      %4617 = vmatpush1.bf16.msra.mxu0 0
      %4618 = vmatprep.subr.bf16.mxu0 0
      %4619 = vmatpush1.bf16.msra.mxu0 0
      %4620 = vmatprep.mubr.bf16.mxu0 0
      %4621 = vmatmul.mubr.bf16.gmra.mrb[0].mxu0 %v4538
      %v4622 = vpop.f32.mrb[0].mxu0
      %v4623 = vadd.f32 0.0, %v4622
      %v4624 = vpop.f32.mrb[0].mxu0
      %v4625 = vpop.f32.mrb[0].mxu0
      %v4626 = vadd.f32 0.0, %v4625
      %v4627 = vpop.f32.mrb[0].mxu0
      %4628 = vmatprep.mubr.bf16.mxu0 0
      %4629 = vmatmul.mubr.bf16.gmra.mrb[0].mxu0 %v4541
      %v4630 = vpop.f32.mrb[0].mxu0
      %v4631 = vadd.f32 0.0, %v4630
      %v4632 = vpop.f32.mrb[0].mxu0
      %v4633 = vpop.f32.mrb[0].mxu0
      %v4634 = vadd.f32 0.0, %v4633
      %v4635 = vpop.f32.mrb[0].mxu0
      %4636 = vmatprep.mubr.bf16.mxu0 0
      %4637 = vmatmul.mubr.bf16.gmra.mrb[0].mxu0 %v4544
      %v4638 = vpop.f32.mrb[0].mxu0
      %v4639 = vadd.f32 0.0, %v4638
      %v4640 = vpop.f32.mrb[0].mxu0
      %v4641 = vpop.f32.mrb[0].mxu0
      %v4642 = vadd.f32 0.0, %v4641
      %v4643 = vpop.f32.mrb[0].mxu0
      %4644 = vmatprep.mubr.bf16.mxu0 0
      %4645 = vmatmul.mubr.bf16.gmra.mrb[0].mxu0 %v4547
      %v4646 = vpop.f32.mrb[0].mxu0
      %v4647 = vadd.f32 0.0, %v4646
      %v4648 = vpop.f32.mrb[0].mxu0
      %v4649 = vpop.f32.mrb[0].mxu0
      %v4650 = vadd.f32 0.0, %v4649
      %v4651 = vpop.f32.mrb[0].mxu0
      %4652 = vmatprep.mubr.bf16.mxu0 0
      %4653 = vmatmul.mubr.bf16.gmra.mrb[0].mxu0 %v4550
      %v4654 = vpop.f32.mrb[0].mxu0
      %v4655 = vadd.f32 0.0, %v4654
      %v4656 = vpop.f32.mrb[0].mxu0
      %v4657 = vpop.f32.mrb[0].mxu0
      %v4658 = vadd.f32 0.0, %v4657
      %v4659 = vpop.f32.mrb[0].mxu0
      %4660 = vmatprep.mubr.bf16.mxu0 0
      %4661 = vmatmul.mubr.bf16.gmra.mrb[0].mxu0 %v4553
      %v4662 = vpop.f32.mrb[0].mxu0
      %v4663 = vadd.f32 0.0, %v4662
      %v4664 = vpop.f32.mrb[0].mxu0
      %v4665 = vpop.f32.mrb[0].mxu0
      %v4666 = vadd.f32 0.0, %v4665
      %v4667 = vpop.f32.mrb[0].mxu0
      %4668 = vmatprep.mubr.bf16.mxu0 0
      %4669 = vmatmul.mubr.bf16.gmra.mrb[0].mxu0 %v4556
      %v4670 = vpop.f32.mrb[0].mxu0
      %v4671 = vadd.f32 0.0, %v4670
      %v4672 = vpop.f32.mrb[0].mxu0
      %v4673 = vpop.f32.mrb[0].mxu0
      %v4674 = vadd.f32 0.0, %v4673
      %v4675 = vpop.f32.mrb[0].mxu0
      %4676 = vmatprep.mubr.bf16.mxu0 0
      %4677 = vmatmul.mubr.bf16.gmra.mrb[0].mxu0 %v4559
      %v4678 = vpop.f32.mrb[0].mxu0
      %v4679 = vadd.f32 0.0, %v4678
      %v4680 = vpop.f32.mrb[0].mxu0
      %v4681 = vpop.f32.mrb[0].mxu0
      %v4682 = vadd.f32 0.0, %v4681
      %v4683 = vpop.f32.mrb[0].mxu0
      %4684 = vmatprep.mubr.bf16.mxu0 0
      %4685 = vmatmul.mubr.bf16.gmra.mrb[0].mxu0 %v4562
      %v4686 = vpop.f32.mrb[0].mxu0
      %v4687 = vadd.f32 0.0, %v4686
      %v4688 = vpop.f32.mrb[0].mxu0
      %v4689 = vpop.f32.mrb[0].mxu0
      %v4690 = vadd.f32 0.0, %v4689
      %v4691 = vpop.f32.mrb[0].mxu0
      %4692 = vmatprep.mubr.bf16.mxu0 0
      %4693 = vmatmul.mubr.bf16.gmra.mrb[0].mxu0 %v4565
      %v4694 = vpop.f32.mrb[0].mxu0
      %v4695 = vadd.f32 0.0, %v4694
      %v4696 = vpop.f32.mrb[0].mxu0
      %v4697 = vpop.f32.mrb[0].mxu0
      %v4698 = vadd.f32 0.0, %v4697
      %v4699 = vpop.f32.mrb[0].mxu0
      %4700 = vmatprep.mubr.bf16.mxu0 0
      %4701 = vmatmul.mubr.bf16.gmra.mrb[0].mxu0 %v4568
      %v4702 = vpop.f32.mrb[0].mxu0
      %v4703 = vadd.f32 0.0, %v4702
      %v4704 = vpop.f32.mrb[0].mxu0
      %v4705 = vpop.f32.mrb[0].mxu0
      %v4706 = vadd.f32 0.0, %v4705
      %v4707 = vpop.f32.mrb[0].mxu0
      %4708 = vmatprep.mubr.bf16.mxu0 0
      %4709 = vmatmul.mubr.bf16.gmra.mrb[0].mxu0 %v4571
      %v4710 = vpop.f32.mrb[0].mxu0
      %v4711 = vadd.f32 0.0, %v4710
      %v4712 = vpop.f32.mrb[0].mxu0
      %v4713 = vpop.f32.mrb[0].mxu0
      %v4714 = vadd.f32 0.0, %v4713
      %v4715 = vpop.f32.mrb[0].mxu0
      %4716 = vmatprep.mubr.bf16.mxu0 0
      %4717 = vmatmul.mubr.bf16.gmra.mrb[0].mxu0 %v4574
      %v4718 = vpop.f32.mrb[0].mxu0
      %v4719 = vadd.f32 0.0, %v4718
      %v4720 = vpop.f32.mrb[0].mxu0
      %v4721 = vpop.f32.mrb[0].mxu0
      %v4722 = vadd.f32 0.0, %v4721
      %v4723 = vpop.f32.mrb[0].mxu0
      %4724 = vmatprep.mubr.bf16.mxu0 0
      %4725 = vmatmul.mubr.bf16.gmra.mrb[0].mxu0 %v4577
      %v4726 = vpop.f32.mrb[0].mxu0
      %v4727 = vadd.f32 0.0, %v4726
      %v4728 = vpop.f32.mrb[0].mxu0
      %v4729 = vpop.f32.mrb[0].mxu0
      %v4730 = vadd.f32 0.0, %v4729
      %v4731 = vpop.f32.mrb[0].mxu0
      %4732 = vmatprep.mubr.bf16.mxu0 0
      %4733 = vmatmul.mubr.bf16.gmra.mrb[0].mxu0 %v4580
      %v4734 = vpop.f32.mrb[0].mxu0
      %v4735 = vadd.f32 0.0, %v4734
      %v4736 = vpop.f32.mrb[0].mxu0
      %v4737 = vpop.f32.mrb[0].mxu0
      %v4738 = vadd.f32 0.0, %v4737
      %v4739 = vpop.f32.mrb[0].mxu0
      %4740 = vmatprep.mubr.bf16.mxu0 0
      %4741 = vmatmul.mubr.bf16.gmra.mrb[0].mxu0 %v4583
      %v4742 = vpop.f32.mrb[0].mxu0
      %v4743 = vadd.f32 0.0, %v4742
      %v4744 = vpop.f32.mrb[0].mxu0
      %v4745 = vpop.f32.mrb[0].mxu0
      %v4746 = vadd.f32 0.0, %v4745
      %v4747 = vpop.f32.mrb[0].mxu0
      %4748 = vdwg.mxu0
      %v4749 = vadd.f32 %v4455, %v4623
      %v4750 = vadd.f32 %v4456, %v4626
      %v4751 = vadd.f32 %v4457, %v4631
      %v4752 = vadd.f32 %v4458, %v4634
      %v4753 = vadd.f32 %v4459, %v4639
      %v4754 = vadd.f32 %v4460, %v4642
      %v4755 = vadd.f32 %v4461, %v4647
      %v4756 = vadd.f32 %v4462, %v4650
      %v4757 = vadd.f32 %v4463, %v4655
      %v4758 = vadd.f32 %v4464, %v4658
      %v4759 = vadd.f32 %v4465, %v4663
      %v4760 = vadd.f32 %v4466, %v4666
      %v4761 = vadd.f32 %v4467, %v4671
      %v4762 = vadd.f32 %v4468, %v4674
      %v4763 = vadd.f32 %v4469, %v4679
      %v4764 = vadd.f32 %v4470, %v4682
      %v4765 = vadd.f32 %v4471, %v4687
      %v4766 = vadd.f32 %v4472, %v4690
      %v4767 = vadd.f32 %v4473, %v4695
      %v4768 = vadd.f32 %v4474, %v4698
      %v4769 = vadd.f32 %v4475, %v4703
      %v4770 = vadd.f32 %v4476, %v4706
      %v4771 = vadd.f32 %v4477, %v4711
      %v4772 = vadd.f32 %v4478, %v4714
      %v4773 = vadd.f32 %v4479, %v4719
      %v4774 = vadd.f32 %v4480, %v4722
      %v4775 = vadd.f32 %v4481, %v4727
      %v4776 = vadd.f32 %v4482, %v4730
      %v4777 = vadd.f32 %v4483, %v4735
      %v4778 = vadd.f32 %v4484, %v4738
      %v4779 = vadd.f32 %v4485, %v4743
      %v4780 = vadd.f32 %v4486, %v4746
      %v4781 = vld [vmem:[%s953 + $0x1] sm:$0xff]
      %v4782 = vld [vmem:[%s953 + $0x9] sm:$0xff]
      %v4783 = vld [vmem:[%s953 + $0x19] sm:$0xff]
      %v4784 = vld [vmem:[%s953 + $0x21] sm:$0xff]
      %v4785 = vld [vmem:[%s953 + $0x31] sm:$0xff]
      %v4786 = vld [vmem:[%s953 + $0x39] sm:$0xff]
      %v4787 = vld [vmem:[%s953 + $0x49] sm:$0xff]
      %v4788 = vld [vmem:[%s953 + $0x51] sm:$0xff]
      %v4789 = vld [vmem:[%s953 + $0x61] sm:$0xff]
      %v4790 = vld [vmem:[%s953 + $0x69] sm:$0xff]
      %v4791 = vld [vmem:[%s953 + $0x79] sm:$0xff]
      %v4792 = vld [vmem:[%s953 + $0x81] sm:$0xff]
      %v4793 = vld [vmem:[%s953 + $0x91] sm:$0xff]
      %v4794 = vld [vmem:[%s953 + $0x99] sm:$0xff]
      %v4795 = vld [vmem:[%s953 + $0xa9] sm:$0xff]
      %v4796 = vld [vmem:[%s953 + $0xb1] sm:$0xff]
      %v4797 = vld [vmem:[%s953 + $0xc1] sm:$0xff]
      %v4798 = vld [vmem:[%s953 + $0xc9] sm:$0xff]
      %v4799 = vld [vmem:[%s953 + $0xd9] sm:$0xff]
      %v4800 = vld [vmem:[%s953 + $0xe1] sm:$0xff]
      %v4801 = vld [vmem:[%s953 + $0xf1] sm:$0xff]
      %v4802 = vld [vmem:[%s953 + $0xf9] sm:$0xff]
      %v4803 = vld [vmem:[%s953 + $0x109] sm:$0xff]
      %v4804 = vld [vmem:[%s953 + $0x111] sm:$0xff]
      %v4805 = vld [vmem:[%s953 + $0x121] sm:$0xff]
      %v4806 = vld [vmem:[%s953 + $0x129] sm:$0xff]
      %v4807 = vld [vmem:[%s953 + $0x139] sm:$0xff]
      %v4808 = vld [vmem:[%s953 + $0x141] sm:$0xff]
      %v4809 = vld [vmem:[%s953 + $0x151] sm:$0xff]
      %v4810 = vld [vmem:[%s953 + $0x159] sm:$0xff]
      %v4811 = vld [vmem:[%s953 + $0x169] sm:$0xff]
      %v4812 = vld [vmem:[%s953 + $0x171] sm:$0xff]
      %v4813 = vpack.c.bf16 %v4782, %v4781
      %v4814 = vpack.c.bf16 %v4784, %v4783
      %v4815 = vpack.c.bf16 %v4786, %v4785
      %v4816 = vpack.c.bf16 %v4788, %v4787
      %v4817 = vpack.c.bf16 %v4790, %v4789
      %v4818 = vpack.c.bf16 %v4792, %v4791
      %v4819 = vpack.c.bf16 %v4794, %v4793
      %v4820 = vpack.c.bf16 %v4796, %v4795
      %v4821 = vpack.c.bf16 %v4798, %v4797
      %v4822 = vpack.c.bf16 %v4800, %v4799
      %v4823 = vpack.c.bf16 %v4802, %v4801
      %v4824 = vpack.c.bf16 %v4804, %v4803
      %v4825 = vpack.c.bf16 %v4806, %v4805
      %v4826 = vpack.c.bf16 %v4808, %v4807
      %v4827 = vpack.c.bf16 %v4810, %v4809
      %v4828 = vpack.c.bf16 %v4812, %v4811
      %s4829 = scalar_lea.vmem %s7, 16
      %v4830 = vld [vmem:[%s4829] sm:$0x7]
      %v4832 = vsel %vm954, %v4813, 0
      %v4835 = vsel %vm954, %v4814, 0
      %v4838 = vsel %vm954, %v4815, 0
      %v4841 = vsel %vm954, %v4816, 0
      %v4844 = vsel %vm954, %v4817, 0
      %v4847 = vsel %vm954, %v4818, 0
      %v4850 = vsel %vm954, %v4819, 0
      %v4853 = vsel %vm954, %v4820, 0
      %v4856 = vsel %vm954, %v4821, 0
      %v4859 = vsel %vm954, %v4822, 0
      %v4862 = vsel %vm954, %v4823, 0
      %v4865 = vsel %vm954, %v4824, 0
      %v4868 = vsel %vm954, %v4825, 0
      %v4871 = vsel %vm954, %v4826, 0
      %v4874 = vsel %vm954, %v4827, 0
      %v4877 = vsel %vm954, %v4828, 0
      %v4880 = vand.u32 %v4830, %v3702
      %4882 = vmatprep.subr.bf16.mxu0 0
      %4883 = vmatpush1.bf16.msra.mxu0 %v4880
      %4884 = vmatprep.subr.bf16.mxu0 0
      %4885 = vmatpush1.bf16.msra.mxu0 0
      %4886 = vmatprep.subr.bf16.mxu0 0
      %4887 = vmatpush1.bf16.msra.mxu0 0
      %4888 = vmatprep.subr.bf16.mxu0 0
      %4889 = vmatpush1.bf16.msra.mxu0 0
      %4890 = vmatprep.subr.bf16.mxu0 0
      %4891 = vmatpush1.bf16.msra.mxu0 0
      %4892 = vmatprep.subr.bf16.mxu0 0
      %4893 = vmatpush1.bf16.msra.mxu0 0
      %4894 = vmatprep.subr.bf16.mxu0 0
      %4895 = vmatpush1.bf16.msra.mxu0 0
      %4896 = vmatprep.subr.bf16.mxu0 0
      %4897 = vmatpush1.bf16.msra.mxu0 0
      %4898 = vmatprep.subr.bf16.mxu0 0
      %4899 = vmatpush1.bf16.msra.mxu0 0
      %4900 = vmatprep.subr.bf16.mxu0 0
      %4901 = vmatpush1.bf16.msra.mxu0 0
      %4902 = vmatprep.subr.bf16.mxu0 0
      %4903 = vmatpush1.bf16.msra.mxu0 0
      %4904 = vmatprep.subr.bf16.mxu0 0
      %4905 = vmatpush1.bf16.msra.mxu0 0
      %4906 = vmatprep.subr.bf16.mxu0 0
      %4907 = vmatpush1.bf16.msra.mxu0 0
      %4908 = vmatprep.subr.bf16.mxu0 0
      %4909 = vmatpush1.bf16.msra.mxu0 0
      %4910 = vmatprep.subr.bf16.mxu0 0
      %4911 = vmatpush1.bf16.msra.mxu0 0
      %4912 = vmatprep.subr.bf16.mxu0 0
      %4913 = vmatpush1.bf16.msra.mxu0 0
      %4914 = vmatprep.mubr.bf16.mxu0 0
      %4915 = vmatmul.mubr.bf16.gmra.mrb[0].mxu0 %v4832
      %v4916 = vpop.f32.mrb[0].mxu0
      %v4917 = vadd.f32 0.0, %v4916
      %v4918 = vpop.f32.mrb[0].mxu0
      %v4919 = vpop.f32.mrb[0].mxu0
      %v4920 = vadd.f32 0.0, %v4919
      %v4921 = vpop.f32.mrb[0].mxu0
      %4922 = vmatprep.mubr.bf16.mxu0 0
      %4923 = vmatmul.mubr.bf16.gmra.mrb[0].mxu0 %v4835
      %v4924 = vpop.f32.mrb[0].mxu0
      %v4925 = vadd.f32 0.0, %v4924
      %v4926 = vpop.f32.mrb[0].mxu0
      %v4927 = vpop.f32.mrb[0].mxu0
      %v4928 = vadd.f32 0.0, %v4927
      %v4929 = vpop.f32.mrb[0].mxu0
      %4930 = vmatprep.mubr.bf16.mxu0 0
      %4931 = vmatmul.mubr.bf16.gmra.mrb[0].mxu0 %v4838
      %v4932 = vpop.f32.mrb[0].mxu0
      %v4933 = vadd.f32 0.0, %v4932
      %v4934 = vpop.f32.mrb[0].mxu0
      %v4935 = vpop.f32.mrb[0].mxu0
      %v4936 = vadd.f32 0.0, %v4935
      %v4937 = vpop.f32.mrb[0].mxu0
      %4938 = vmatprep.mubr.bf16.mxu0 0
      %4939 = vmatmul.mubr.bf16.gmra.mrb[0].mxu0 %v4841
      %v4940 = vpop.f32.mrb[0].mxu0
      %v4941 = vadd.f32 0.0, %v4940
      %v4942 = vpop.f32.mrb[0].mxu0
      %v4943 = vpop.f32.mrb[0].mxu0
      %v4944 = vadd.f32 0.0, %v4943
      %v4945 = vpop.f32.mrb[0].mxu0
      %4946 = vmatprep.mubr.bf16.mxu0 0
      %4947 = vmatmul.mubr.bf16.gmra.mrb[0].mxu0 %v4844
      %v4948 = vpop.f32.mrb[0].mxu0
      %v4949 = vadd.f32 0.0, %v4948
      %v4950 = vpop.f32.mrb[0].mxu0
      %v4951 = vpop.f32.mrb[0].mxu0
      %v4952 = vadd.f32 0.0, %v4951
      %v4953 = vpop.f32.mrb[0].mxu0
      %4954 = vmatprep.mubr.bf16.mxu0 0
      %4955 = vmatmul.mubr.bf16.gmra.mrb[0].mxu0 %v4847
      %v4956 = vpop.f32.mrb[0].mxu0
      %v4957 = vadd.f32 0.0, %v4956
      %v4958 = vpop.f32.mrb[0].mxu0
      %v4959 = vpop.f32.mrb[0].mxu0
      %v4960 = vadd.f32 0.0, %v4959
      %v4961 = vpop.f32.mrb[0].mxu0
      %4962 = vmatprep.mubr.bf16.mxu0 0
      %4963 = vmatmul.mubr.bf16.gmra.mrb[0].mxu0 %v4850
      %v4964 = vpop.f32.mrb[0].mxu0
      %v4965 = vadd.f32 0.0, %v4964
      %v4966 = vpop.f32.mrb[0].mxu0
      %v4967 = vpop.f32.mrb[0].mxu0
      %v4968 = vadd.f32 0.0, %v4967
      %v4969 = vpop.f32.mrb[0].mxu0
      %4970 = vmatprep.mubr.bf16.mxu0 0
      %4971 = vmatmul.mubr.bf16.gmra.mrb[0].mxu0 %v4853
      %v4972 = vpop.f32.mrb[0].mxu0
      %v4973 = vadd.f32 0.0, %v4972
      %v4974 = vpop.f32.mrb[0].mxu0
      %v4975 = vpop.f32.mrb[0].mxu0
      %v4976 = vadd.f32 0.0, %v4975
      %v4977 = vpop.f32.mrb[0].mxu0
      %4978 = vmatprep.mubr.bf16.mxu0 0
      %4979 = vmatmul.mubr.bf16.gmra.mrb[0].mxu0 %v4856
      %v4980 = vpop.f32.mrb[0].mxu0
      %v4981 = vadd.f32 0.0, %v4980
      %v4982 = vpop.f32.mrb[0].mxu0
      %v4983 = vpop.f32.mrb[0].mxu0
      %v4984 = vadd.f32 0.0, %v4983
      %v4985 = vpop.f32.mrb[0].mxu0
      %4986 = vmatprep.mubr.bf16.mxu0 0
      %4987 = vmatmul.mubr.bf16.gmra.mrb[0].mxu0 %v4859
      %v4988 = vpop.f32.mrb[0].mxu0
      %v4989 = vadd.f32 0.0, %v4988
      %v4990 = vpop.f32.mrb[0].mxu0
      %v4991 = vpop.f32.mrb[0].mxu0
      %v4992 = vadd.f32 0.0, %v4991
      %v4993 = vpop.f32.mrb[0].mxu0
      %4994 = vmatprep.mubr.bf16.mxu0 0
      %4995 = vmatmul.mubr.bf16.gmra.mrb[0].mxu0 %v4862
      %v4996 = vpop.f32.mrb[0].mxu0
      %v4997 = vadd.f32 0.0, %v4996
      %v4998 = vpop.f32.mrb[0].mxu0
      %v4999 = vpop.f32.mrb[0].mxu0
      %v5000 = vadd.f32 0.0, %v4999
      %v5001 = vpop.f32.mrb[0].mxu0
      %5002 = vmatprep.mubr.bf16.mxu0 0
      %5003 = vmatmul.mubr.bf16.gmra.mrb[0].mxu0 %v4865
      %v5004 = vpop.f32.mrb[0].mxu0
      %v5005 = vadd.f32 0.0, %v5004
      %v5006 = vpop.f32.mrb[0].mxu0
      %v5007 = vpop.f32.mrb[0].mxu0
      %v5008 = vadd.f32 0.0, %v5007
      %v5009 = vpop.f32.mrb[0].mxu0
      %5010 = vmatprep.mubr.bf16.mxu0 0
      %5011 = vmatmul.mubr.bf16.gmra.mrb[0].mxu0 %v4868
      %v5012 = vpop.f32.mrb[0].mxu0
      %v5013 = vadd.f32 0.0, %v5012
      %v5014 = vpop.f32.mrb[0].mxu0
      %v5015 = vpop.f32.mrb[0].mxu0
      %v5016 = vadd.f32 0.0, %v5015
      %v5017 = vpop.f32.mrb[0].mxu0
      %5018 = vmatprep.mubr.bf16.mxu0 0
      %5019 = vmatmul.mubr.bf16.gmra.mrb[0].mxu0 %v4871
      %v5020 = vpop.f32.mrb[0].mxu0
      %v5021 = vadd.f32 0.0, %v5020
      %v5022 = vpop.f32.mrb[0].mxu0
      %v5023 = vpop.f32.mrb[0].mxu0
      %v5024 = vadd.f32 0.0, %v5023
      %v5025 = vpop.f32.mrb[0].mxu0
      %5026 = vmatprep.mubr.bf16.mxu0 0
      %5027 = vmatmul.mubr.bf16.gmra.mrb[0].mxu0 %v4874
      %v5028 = vpop.f32.mrb[0].mxu0
      %v5029 = vadd.f32 0.0, %v5028
      %v5030 = vpop.f32.mrb[0].mxu0
      %v5031 = vpop.f32.mrb[0].mxu0
      %v5032 = vadd.f32 0.0, %v5031
      %v5033 = vpop.f32.mrb[0].mxu0
      %5034 = vmatprep.mubr.bf16.mxu0 0
      %5035 = vmatmul.mubr.bf16.gmra.mrb[0].mxu0 %v4877
      %v5036 = vpop.f32.mrb[0].mxu0
      %v5037 = vadd.f32 0.0, %v5036
      %v5038 = vpop.f32.mrb[0].mxu0
      %v5039 = vpop.f32.mrb[0].mxu0
      %v5040 = vadd.f32 0.0, %v5039
      %v5041 = vpop.f32.mrb[0].mxu0
      %5042 = vdwg.mxu0
      %v5043 = vadd.f32 %v4749, %v4917
      %v5044 = vadd.f32 %v4750, %v4920
      %v5045 = vadd.f32 %v4751, %v4925
      %v5046 = vadd.f32 %v4752, %v4928
      %v5047 = vadd.f32 %v4753, %v4933
      %v5048 = vadd.f32 %v4754, %v4936
      %v5049 = vadd.f32 %v4755, %v4941
      %v5050 = vadd.f32 %v4756, %v4944
      %v5051 = vadd.f32 %v4757, %v4949
      %v5052 = vadd.f32 %v4758, %v4952
      %v5053 = vadd.f32 %v4759, %v4957
      %v5054 = vadd.f32 %v4760, %v4960
      %v5055 = vadd.f32 %v4761, %v4965
      %v5056 = vadd.f32 %v4762, %v4968
      %v5057 = vadd.f32 %v4763, %v4973
      %v5058 = vadd.f32 %v4764, %v4976
      %v5059 = vadd.f32 %v4765, %v4981
      %v5060 = vadd.f32 %v4766, %v4984
      %v5061 = vadd.f32 %v4767, %v4989
      %v5062 = vadd.f32 %v4768, %v4992
      %v5063 = vadd.f32 %v4769, %v4997
      %v5064 = vadd.f32 %v4770, %v5000
      %v5065 = vadd.f32 %v4771, %v5005
      %v5066 = vadd.f32 %v4772, %v5008
      %v5067 = vadd.f32 %v4773, %v5013
      %v5068 = vadd.f32 %v4774, %v5016
      %v5069 = vadd.f32 %v4775, %v5021
      %v5070 = vadd.f32 %v4776, %v5024
      %v5071 = vadd.f32 %v4777, %v5029
      %v5072 = vadd.f32 %v4778, %v5032
      %v5073 = vadd.f32 %v4779, %v5037
      %v5074 = vadd.f32 %v4780, %v5040
      %v5075 = vld [vmem:[%s953 + $0x2] sm:$0xff]
      %v5076 = vld [vmem:[%s953 + $0xa] sm:$0xff]
      %v5077 = vld [vmem:[%s953 + $0x1a] sm:$0xff]
      %v5078 = vld [vmem:[%s953 + $0x22] sm:$0xff]
      %v5079 = vld [vmem:[%s953 + $0x32] sm:$0xff]
      %v5080 = vld [vmem:[%s953 + $0x3a] sm:$0xff]
      %v5081 = vld [vmem:[%s953 + $0x4a] sm:$0xff]
      %v5082 = vld [vmem:[%s953 + $0x52] sm:$0xff]
      %v5083 = vld [vmem:[%s953 + $0x62] sm:$0xff]
      %v5084 = vld [vmem:[%s953 + $0x6a] sm:$0xff]
      %v5085 = vld [vmem:[%s953 + $0x7a] sm:$0xff]
      %v5086 = vld [vmem:[%s953 + $0x82] sm:$0xff]
      %v5087 = vld [vmem:[%s953 + $0x92] sm:$0xff]
      %v5088 = vld [vmem:[%s953 + $0x9a] sm:$0xff]
      %v5089 = vld [vmem:[%s953 + $0xaa] sm:$0xff]
      %v5090 = vld [vmem:[%s953 + $0xb2] sm:$0xff]
      %v5091 = vld [vmem:[%s953 + $0xc2] sm:$0xff]
      %v5092 = vld [vmem:[%s953 + $0xca] sm:$0xff]
      %v5093 = vld [vmem:[%s953 + $0xda] sm:$0xff]
      %v5094 = vld [vmem:[%s953 + $0xe2] sm:$0xff]
      %v5095 = vld [vmem:[%s953 + $0xf2] sm:$0xff]
      %v5096 = vld [vmem:[%s953 + $0xfa] sm:$0xff]
      %v5097 = vld [vmem:[%s953 + $0x10a] sm:$0xff]
      %v5098 = vld [vmem:[%s953 + $0x112] sm:$0xff]
      %v5099 = vld [vmem:[%s953 + $0x122] sm:$0xff]
      %v5100 = vld [vmem:[%s953 + $0x12a] sm:$0xff]
      %v5101 = vld [vmem:[%s953 + $0x13a] sm:$0xff]
      %v5102 = vld [vmem:[%s953 + $0x142] sm:$0xff]
      %v5103 = vld [vmem:[%s953 + $0x152] sm:$0xff]
      %v5104 = vld [vmem:[%s953 + $0x15a] sm:$0xff]
      %v5105 = vld [vmem:[%s953 + $0x16a] sm:$0xff]
      %v5106 = vld [vmem:[%s953 + $0x172] sm:$0xff]
      %v5107 = vpack.c.bf16 %v5076, %v5075
      %v5108 = vpack.c.bf16 %v5078, %v5077
      %v5109 = vpack.c.bf16 %v5080, %v5079
      %v5110 = vpack.c.bf16 %v5082, %v5081
      %v5111 = vpack.c.bf16 %v5084, %v5083
      %v5112 = vpack.c.bf16 %v5086, %v5085
      %v5113 = vpack.c.bf16 %v5088, %v5087
      %v5114 = vpack.c.bf16 %v5090, %v5089
      %v5115 = vpack.c.bf16 %v5092, %v5091
      %v5116 = vpack.c.bf16 %v5094, %v5093
      %v5117 = vpack.c.bf16 %v5096, %v5095
      %v5118 = vpack.c.bf16 %v5098, %v5097
      %v5119 = vpack.c.bf16 %v5100, %v5099
      %v5120 = vpack.c.bf16 %v5102, %v5101
      %v5121 = vpack.c.bf16 %v5104, %v5103
      %v5122 = vpack.c.bf16 %v5106, %v5105
      %s5123 = scalar_lea.vmem %s7, 20
      %v5124 = vld [vmem:[%s5123] sm:$0x7]
      %v5126 = vsel %vm954, %v5107, 0
      %v5129 = vsel %vm954, %v5108, 0
      %v5132 = vsel %vm954, %v5109, 0
      %v5135 = vsel %vm954, %v5110, 0
      %v5138 = vsel %vm954, %v5111, 0
      %v5141 = vsel %vm954, %v5112, 0
      %v5144 = vsel %vm954, %v5113, 0
      %v5147 = vsel %vm954, %v5114, 0
      %v5150 = vsel %vm954, %v5115, 0
      %v5153 = vsel %vm954, %v5116, 0
      %v5156 = vsel %vm954, %v5117, 0
      %v5159 = vsel %vm954, %v5118, 0
      %v5162 = vsel %vm954, %v5119, 0
      %v5165 = vsel %vm954, %v5120, 0
      %v5168 = vsel %vm954, %v5121, 0
      %v5171 = vsel %vm954, %v5122, 0
      %v5174 = vand.u32 %v5124, %v3702
      %5176 = vmatprep.subr.bf16.mxu0 0
      %5177 = vmatpush1.bf16.msra.mxu0 %v5174
      %5178 = vmatprep.subr.bf16.mxu0 0
      %5179 = vmatpush1.bf16.msra.mxu0 0
      %5180 = vmatprep.subr.bf16.mxu0 0
      %5181 = vmatpush1.bf16.msra.mxu0 0
      %5182 = vmatprep.subr.bf16.mxu0 0
      %5183 = vmatpush1.bf16.msra.mxu0 0
      %5184 = vmatprep.subr.bf16.mxu0 0
      %5185 = vmatpush1.bf16.msra.mxu0 0
      %5186 = vmatprep.subr.bf16.mxu0 0
      %5187 = vmatpush1.bf16.msra.mxu0 0
      %5188 = vmatprep.subr.bf16.mxu0 0
      %5189 = vmatpush1.bf16.msra.mxu0 0
      %5190 = vmatprep.subr.bf16.mxu0 0
      %5191 = vmatpush1.bf16.msra.mxu0 0
      %5192 = vmatprep.subr.bf16.mxu0 0
      %5193 = vmatpush1.bf16.msra.mxu0 0
      %5194 = vmatprep.subr.bf16.mxu0 0
      %5195 = vmatpush1.bf16.msra.mxu0 0
      %5196 = vmatprep.subr.bf16.mxu0 0
      %5197 = vmatpush1.bf16.msra.mxu0 0
      %5198 = vmatprep.subr.bf16.mxu0 0
      %5199 = vmatpush1.bf16.msra.mxu0 0
      %5200 = vmatprep.subr.bf16.mxu0 0
      %5201 = vmatpush1.bf16.msra.mxu0 0
      %5202 = vmatprep.subr.bf16.mxu0 0
      %5203 = vmatpush1.bf16.msra.mxu0 0
      %5204 = vmatprep.subr.bf16.mxu0 0
      %5205 = vmatpush1.bf16.msra.mxu0 0
      %5206 = vmatprep.subr.bf16.mxu0 0
      %5207 = vmatpush1.bf16.msra.mxu0 0
      %5208 = vmatprep.mubr.bf16.mxu0 0
      %5209 = vmatmul.mubr.bf16.gmra.mrb[0].mxu0 %v5126
      %v5210 = vpop.f32.mrb[0].mxu0
      %v5211 = vadd.f32 0.0, %v5210
      %v5212 = vpop.f32.mrb[0].mxu0
      %v5213 = vpop.f32.mrb[0].mxu0
      %v5214 = vadd.f32 0.0, %v5213
      %v5215 = vpop.f32.mrb[0].mxu0
      %5216 = vmatprep.mubr.bf16.mxu0 0
      %5217 = vmatmul.mubr.bf16.gmra.mrb[0].mxu0 %v5129
      %v5218 = vpop.f32.mrb[0].mxu0
      %v5219 = vadd.f32 0.0, %v5218
      %v5220 = vpop.f32.mrb[0].mxu0
      %v5221 = vpop.f32.mrb[0].mxu0
      %v5222 = vadd.f32 0.0, %v5221
      %v5223 = vpop.f32.mrb[0].mxu0
      %5224 = vmatprep.mubr.bf16.mxu0 0
      %5225 = vmatmul.mubr.bf16.gmra.mrb[0].mxu0 %v5132
      %v5226 = vpop.f32.mrb[0].mxu0
      %v5227 = vadd.f32 0.0, %v5226
      %v5228 = vpop.f32.mrb[0].mxu0
      %v5229 = vpop.f32.mrb[0].mxu0
      %v5230 = vadd.f32 0.0, %v5229
      %v5231 = vpop.f32.mrb[0].mxu0
      %5232 = vmatprep.mubr.bf16.mxu0 0
      %5233 = vmatmul.mubr.bf16.gmra.mrb[0].mxu0 %v5135
      %v5234 = vpop.f32.mrb[0].mxu0
      %v5235 = vadd.f32 0.0, %v5234
      %v5236 = vpop.f32.mrb[0].mxu0
      %v5237 = vpop.f32.mrb[0].mxu0
      %v5238 = vadd.f32 0.0, %v5237
      %v5239 = vpop.f32.mrb[0].mxu0
      %5240 = vmatprep.mubr.bf16.mxu0 0
      %5241 = vmatmul.mubr.bf16.gmra.mrb[0].mxu0 %v5138
      %v5242 = vpop.f32.mrb[0].mxu0
      %v5243 = vadd.f32 0.0, %v5242
      %v5244 = vpop.f32.mrb[0].mxu0
      %v5245 = vpop.f32.mrb[0].mxu0
      %v5246 = vadd.f32 0.0, %v5245
      %v5247 = vpop.f32.mrb[0].mxu0
      %5248 = vmatprep.mubr.bf16.mxu0 0
      %5249 = vmatmul.mubr.bf16.gmra.mrb[0].mxu0 %v5141
      %v5250 = vpop.f32.mrb[0].mxu0
      %v5251 = vadd.f32 0.0, %v5250
      %v5252 = vpop.f32.mrb[0].mxu0
      %v5253 = vpop.f32.mrb[0].mxu0
      %v5254 = vadd.f32 0.0, %v5253
      %v5255 = vpop.f32.mrb[0].mxu0
      %5256 = vmatprep.mubr.bf16.mxu0 0
      %5257 = vmatmul.mubr.bf16.gmra.mrb[0].mxu0 %v5144
      %v5258 = vpop.f32.mrb[0].mxu0
      %v5259 = vadd.f32 0.0, %v5258
      %v5260 = vpop.f32.mrb[0].mxu0
      %v5261 = vpop.f32.mrb[0].mxu0
      %v5262 = vadd.f32 0.0, %v5261
      %v5263 = vpop.f32.mrb[0].mxu0
      %5264 = vmatprep.mubr.bf16.mxu0 0
      %5265 = vmatmul.mubr.bf16.gmra.mrb[0].mxu0 %v5147
      %v5266 = vpop.f32.mrb[0].mxu0
      %v5267 = vadd.f32 0.0, %v5266
      %v5268 = vpop.f32.mrb[0].mxu0
      %v5269 = vpop.f32.mrb[0].mxu0
      %v5270 = vadd.f32 0.0, %v5269
      %v5271 = vpop.f32.mrb[0].mxu0
      %5272 = vmatprep.mubr.bf16.mxu0 0
      %5273 = vmatmul.mubr.bf16.gmra.mrb[0].mxu0 %v5150
      %v5274 = vpop.f32.mrb[0].mxu0
      %v5275 = vadd.f32 0.0, %v5274
      %v5276 = vpop.f32.mrb[0].mxu0
      %v5277 = vpop.f32.mrb[0].mxu0
      %v5278 = vadd.f32 0.0, %v5277
      %v5279 = vpop.f32.mrb[0].mxu0
      %5280 = vmatprep.mubr.bf16.mxu0 0
      %5281 = vmatmul.mubr.bf16.gmra.mrb[0].mxu0 %v5153
      %v5282 = vpop.f32.mrb[0].mxu0
      %v5283 = vadd.f32 0.0, %v5282
      %v5284 = vpop.f32.mrb[0].mxu0
      %v5285 = vpop.f32.mrb[0].mxu0
      %v5286 = vadd.f32 0.0, %v5285
      %v5287 = vpop.f32.mrb[0].mxu0
      %5288 = vmatprep.mubr.bf16.mxu0 0
      %5289 = vmatmul.mubr.bf16.gmra.mrb[0].mxu0 %v5156
      %v5290 = vpop.f32.mrb[0].mxu0
      %v5291 = vadd.f32 0.0, %v5290
      %v5292 = vpop.f32.mrb[0].mxu0
      %v5293 = vpop.f32.mrb[0].mxu0
      %v5294 = vadd.f32 0.0, %v5293
      %v5295 = vpop.f32.mrb[0].mxu0
      %5296 = vmatprep.mubr.bf16.mxu0 0
      %5297 = vmatmul.mubr.bf16.gmra.mrb[0].mxu0 %v5159
      %v5298 = vpop.f32.mrb[0].mxu0
      %v5299 = vadd.f32 0.0, %v5298
      %v5300 = vpop.f32.mrb[0].mxu0
      %v5301 = vpop.f32.mrb[0].mxu0
      %v5302 = vadd.f32 0.0, %v5301
      %v5303 = vpop.f32.mrb[0].mxu0
      %5304 = vmatprep.mubr.bf16.mxu0 0
      %5305 = vmatmul.mubr.bf16.gmra.mrb[0].mxu0 %v5162
      %v5306 = vpop.f32.mrb[0].mxu0
      %v5307 = vadd.f32 0.0, %v5306
      %v5308 = vpop.f32.mrb[0].mxu0
      %v5309 = vpop.f32.mrb[0].mxu0
      %v5310 = vadd.f32 0.0, %v5309
      %v5311 = vpop.f32.mrb[0].mxu0
      %5312 = vmatprep.mubr.bf16.mxu0 0
      %5313 = vmatmul.mubr.bf16.gmra.mrb[0].mxu0 %v5165
      %v5314 = vpop.f32.mrb[0].mxu0
      %v5315 = vadd.f32 0.0, %v5314
      %v5316 = vpop.f32.mrb[0].mxu0
      %v5317 = vpop.f32.mrb[0].mxu0
      %v5318 = vadd.f32 0.0, %v5317
      %v5319 = vpop.f32.mrb[0].mxu0
      %5320 = vmatprep.mubr.bf16.mxu0 0
      %5321 = vmatmul.mubr.bf16.gmra.mrb[0].mxu0 %v5168
      %v5322 = vpop.f32.mrb[0].mxu0
      %v5323 = vadd.f32 0.0, %v5322
      %v5324 = vpop.f32.mrb[0].mxu0
      %v5325 = vpop.f32.mrb[0].mxu0
      %v5326 = vadd.f32 0.0, %v5325
      %v5327 = vpop.f32.mrb[0].mxu0
      %5328 = vmatprep.mubr.bf16.mxu0 0
      %5329 = vmatmul.mubr.bf16.gmra.mrb[0].mxu0 %v5171
      %v5330 = vpop.f32.mrb[0].mxu0
      %v5331 = vadd.f32 0.0, %v5330
      %v5332 = vpop.f32.mrb[0].mxu0
      %v5333 = vpop.f32.mrb[0].mxu0
      %v5334 = vadd.f32 0.0, %v5333
      %v5335 = vpop.f32.mrb[0].mxu0
      %5336 = vdwg.mxu0
      %v5337 = vadd.f32 %v5043, %v5211
      %v5338 = vadd.f32 %v5044, %v5214
      %v5339 = vadd.f32 %v5045, %v5219
      %v5340 = vadd.f32 %v5046, %v5222
      %v5341 = vadd.f32 %v5047, %v5227
      %v5342 = vadd.f32 %v5048, %v5230
      %v5343 = vadd.f32 %v5049, %v5235
      %v5344 = vadd.f32 %v5050, %v5238
      %v5345 = vadd.f32 %v5051, %v5243
      %v5346 = vadd.f32 %v5052, %v5246
      %v5347 = vadd.f32 %v5053, %v5251
      %v5348 = vadd.f32 %v5054, %v5254
      %v5349 = vadd.f32 %v5055, %v5259
      %v5350 = vadd.f32 %v5056, %v5262
      %v5351 = vadd.f32 %v5057, %v5267
      %v5352 = vadd.f32 %v5058, %v5270
      %v5353 = vadd.f32 %v5059, %v5275
      %v5354 = vadd.f32 %v5060, %v5278
      %v5355 = vadd.f32 %v5061, %v5283
      %v5356 = vadd.f32 %v5062, %v5286
      %v5357 = vadd.f32 %v5063, %v5291
      %v5358 = vadd.f32 %v5064, %v5294
      %v5359 = vadd.f32 %v5065, %v5299
      %v5360 = vadd.f32 %v5066, %v5302
      %v5361 = vadd.f32 %v5067, %v5307
      %v5362 = vadd.f32 %v5068, %v5310
      %v5363 = vadd.f32 %v5069, %v5315
      %v5364 = vadd.f32 %v5070, %v5318
      %v5365 = vadd.f32 %v5071, %v5323
      %v5366 = vadd.f32 %v5072, %v5326
      %v5367 = vadd.f32 %v5073, %v5331
      %v5368 = vadd.f32 %v5074, %v5334
      %s5369 = scalar_lea.vmem [#allocation3], 48
      %v5370 = vld [vmem:[%s5369] sm:$0xff]
      %v5371 = vld [vmem:[%s5369 + $0x8] sm:$0xff]
      %v5372 = vld [vmem:[%s5369 + $0x18] sm:$0xff]
      %v5373 = vld [vmem:[%s5369 + $0x20] sm:$0xff]
      %v5374 = vld [vmem:[%s5369 + $0x30] sm:$0xff]
      %v5375 = vld [vmem:[%s5369 + $0x38] sm:$0xff]
      %v5376 = vld [vmem:[%s5369 + $0x48] sm:$0xff]
      %v5377 = vld [vmem:[%s5369 + $0x50] sm:$0xff]
      %v5378 = vld [vmem:[%s5369 + $0x60] sm:$0xff]
      %v5379 = vld [vmem:[%s5369 + $0x68] sm:$0xff]
      %v5380 = vld [vmem:[%s5369 + $0x78] sm:$0xff]
      %v5381 = vld [vmem:[%s5369 + $0x80] sm:$0xff]
      %v5382 = vld [vmem:[%s5369 + $0x90] sm:$0xff]
      %v5383 = vld [vmem:[%s5369 + $0x98] sm:$0xff]
      %v5384 = vld [vmem:[%s5369 + $0xa8] sm:$0xff]
      %v5385 = vld [vmem:[%s5369 + $0xb0] sm:$0xff]
      %v5386 = vld [vmem:[%s5369 + $0xc0] sm:$0xff]
      %v5387 = vld [vmem:[%s5369 + $0xc8] sm:$0xff]
      %v5388 = vld [vmem:[%s5369 + $0xd8] sm:$0xff]
      %v5389 = vld [vmem:[%s5369 + $0xe0] sm:$0xff]
      %v5390 = vld [vmem:[%s5369 + $0xf0] sm:$0xff]
      %v5391 = vld [vmem:[%s5369 + $0xf8] sm:$0xff]
      %v5392 = vld [vmem:[%s5369 + $0x108] sm:$0xff]
      %v5393 = vld [vmem:[%s5369 + $0x110] sm:$0xff]
      %v5394 = vld [vmem:[%s5369 + $0x120] sm:$0xff]
      %v5395 = vld [vmem:[%s5369 + $0x128] sm:$0xff]
      %v5396 = vld [vmem:[%s5369 + $0x138] sm:$0xff]
      %v5397 = vld [vmem:[%s5369 + $0x140] sm:$0xff]
      %v5398 = vld [vmem:[%s5369 + $0x150] sm:$0xff]
      %v5399 = vld [vmem:[%s5369 + $0x158] sm:$0xff]
      %v5400 = vld [vmem:[%s5369 + $0x168] sm:$0xff]
      %v5401 = vld [vmem:[%s5369 + $0x170] sm:$0xff]
      %v5402 = vpack.c.bf16 %v5371, %v5370
      %v5403 = vpack.c.bf16 %v5373, %v5372
      %v5404 = vpack.c.bf16 %v5375, %v5374
      %v5405 = vpack.c.bf16 %v5377, %v5376
      %v5406 = vpack.c.bf16 %v5379, %v5378
      %v5407 = vpack.c.bf16 %v5381, %v5380
      %v5408 = vpack.c.bf16 %v5383, %v5382
      %v5409 = vpack.c.bf16 %v5385, %v5384
      %v5410 = vpack.c.bf16 %v5387, %v5386
      %v5411 = vpack.c.bf16 %v5389, %v5388
      %v5412 = vpack.c.bf16 %v5391, %v5390
      %v5413 = vpack.c.bf16 %v5393, %v5392
      %v5414 = vpack.c.bf16 %v5395, %v5394
      %v5415 = vpack.c.bf16 %v5397, %v5396
      %v5416 = vpack.c.bf16 %v5399, %v5398
      %v5417 = vpack.c.bf16 %v5401, %v5400
      %s5418 = scalar_lea.vmem %s7, 24
      %v5419 = vld [vmem:[%s5418] sm:$0x7]
      %v5421 = vsel %vm954, %v5402, 0
      %v5424 = vsel %vm954, %v5403, 0
      %v5427 = vsel %vm954, %v5404, 0
      %v5430 = vsel %vm954, %v5405, 0
      %v5433 = vsel %vm954, %v5406, 0
      %v5436 = vsel %vm954, %v5407, 0
      %v5439 = vsel %vm954, %v5408, 0
      %v5442 = vsel %vm954, %v5409, 0
      %v5445 = vsel %vm954, %v5410, 0
      %v5448 = vsel %vm954, %v5411, 0
      %v5451 = vsel %vm954, %v5412, 0
      %v5454 = vsel %vm954, %v5413, 0
      %v5457 = vsel %vm954, %v5414, 0
      %v5460 = vsel %vm954, %v5415, 0
      %v5463 = vsel %vm954, %v5416, 0
      %v5466 = vsel %vm954, %v5417, 0
      %v5469 = vand.u32 %v5419, %v3702
      %5471 = vmatprep.subr.bf16.mxu0 0
      %5472 = vmatpush1.bf16.msra.mxu0 %v5469
      %5473 = vmatprep.subr.bf16.mxu0 0
      %5474 = vmatpush1.bf16.msra.mxu0 0
      %5475 = vmatprep.subr.bf16.mxu0 0
      %5476 = vmatpush1.bf16.msra.mxu0 0
      %5477 = vmatprep.subr.bf16.mxu0 0
      %5478 = vmatpush1.bf16.msra.mxu0 0
      %5479 = vmatprep.subr.bf16.mxu0 0
      %5480 = vmatpush1.bf16.msra.mxu0 0
      %5481 = vmatprep.subr.bf16.mxu0 0
      %5482 = vmatpush1.bf16.msra.mxu0 0
      %5483 = vmatprep.subr.bf16.mxu0 0
      %5484 = vmatpush1.bf16.msra.mxu0 0
      %5485 = vmatprep.subr.bf16.mxu0 0
      %5486 = vmatpush1.bf16.msra.mxu0 0
      %5487 = vmatprep.subr.bf16.mxu0 0
      %5488 = vmatpush1.bf16.msra.mxu0 0
      %5489 = vmatprep.subr.bf16.mxu0 0
      %5490 = vmatpush1.bf16.msra.mxu0 0
      %5491 = vmatprep.subr.bf16.mxu0 0
      %5492 = vmatpush1.bf16.msra.mxu0 0
      %5493 = vmatprep.subr.bf16.mxu0 0
      %5494 = vmatpush1.bf16.msra.mxu0 0
      %5495 = vmatprep.subr.bf16.mxu0 0
      %5496 = vmatpush1.bf16.msra.mxu0 0
      %5497 = vmatprep.subr.bf16.mxu0 0
      %5498 = vmatpush1.bf16.msra.mxu0 0
      %5499 = vmatprep.subr.bf16.mxu0 0
      %5500 = vmatpush1.bf16.msra.mxu0 0
      %5501 = vmatprep.subr.bf16.mxu0 0
      %5502 = vmatpush1.bf16.msra.mxu0 0
      %5503 = vmatprep.mubr.bf16.mxu0 0
      %5504 = vmatmul.mubr.bf16.gmra.mrb[0].mxu0 %v5421
      %v5505 = vpop.f32.mrb[0].mxu0
      %v5506 = vadd.f32 0.0, %v5505
      %v5507 = vpop.f32.mrb[0].mxu0
      %v5508 = vpop.f32.mrb[0].mxu0
      %v5509 = vadd.f32 0.0, %v5508
      %v5510 = vpop.f32.mrb[0].mxu0
      %5511 = vmatprep.mubr.bf16.mxu0 0
      %5512 = vmatmul.mubr.bf16.gmra.mrb[0].mxu0 %v5424
      %v5513 = vpop.f32.mrb[0].mxu0
      %v5514 = vadd.f32 0.0, %v5513
      %v5515 = vpop.f32.mrb[0].mxu0
      %v5516 = vpop.f32.mrb[0].mxu0
      %v5517 = vadd.f32 0.0, %v5516
      %v5518 = vpop.f32.mrb[0].mxu0
      %5519 = vmatprep.mubr.bf16.mxu0 0
      %5520 = vmatmul.mubr.bf16.gmra.mrb[0].mxu0 %v5427
      %v5521 = vpop.f32.mrb[0].mxu0
      %v5522 = vadd.f32 0.0, %v5521
      %v5523 = vpop.f32.mrb[0].mxu0
      %v5524 = vpop.f32.mrb[0].mxu0
      %v5525 = vadd.f32 0.0, %v5524
      %v5526 = vpop.f32.mrb[0].mxu0
      %5527 = vmatprep.mubr.bf16.mxu0 0
      %5528 = vmatmul.mubr.bf16.gmra.mrb[0].mxu0 %v5430
      %v5529 = vpop.f32.mrb[0].mxu0
      %v5530 = vadd.f32 0.0, %v5529
      %v5531 = vpop.f32.mrb[0].mxu0
      %v5532 = vpop.f32.mrb[0].mxu0
      %v5533 = vadd.f32 0.0, %v5532
      %v5534 = vpop.f32.mrb[0].mxu0
      %5535 = vmatprep.mubr.bf16.mxu0 0
      %5536 = vmatmul.mubr.bf16.gmra.mrb[0].mxu0 %v5433
      %v5537 = vpop.f32.mrb[0].mxu0
      %v5538 = vadd.f32 0.0, %v5537
      %v5539 = vpop.f32.mrb[0].mxu0
      %v5540 = vpop.f32.mrb[0].mxu0
      %v5541 = vadd.f32 0.0, %v5540
      %v5542 = vpop.f32.mrb[0].mxu0
      %5543 = vmatprep.mubr.bf16.mxu0 0
      %5544 = vmatmul.mubr.bf16.gmra.mrb[0].mxu0 %v5436
      %v5545 = vpop.f32.mrb[0].mxu0
      %v5546 = vadd.f32 0.0, %v5545
      %v5547 = vpop.f32.mrb[0].mxu0
      %v5548 = vpop.f32.mrb[0].mxu0
      %v5549 = vadd.f32 0.0, %v5548
      %v5550 = vpop.f32.mrb[0].mxu0
      %5551 = vmatprep.mubr.bf16.mxu0 0
      %5552 = vmatmul.mubr.bf16.gmra.mrb[0].mxu0 %v5439
      %v5553 = vpop.f32.mrb[0].mxu0
      %v5554 = vadd.f32 0.0, %v5553
      %v5555 = vpop.f32.mrb[0].mxu0
      %v5556 = vpop.f32.mrb[0].mxu0
      %v5557 = vadd.f32 0.0, %v5556
      %v5558 = vpop.f32.mrb[0].mxu0
      %5559 = vmatprep.mubr.bf16.mxu0 0
      %5560 = vmatmul.mubr.bf16.gmra.mrb[0].mxu0 %v5442
      %v5561 = vpop.f32.mrb[0].mxu0
      %v5562 = vadd.f32 0.0, %v5561
      %v5563 = vpop.f32.mrb[0].mxu0
      %v5564 = vpop.f32.mrb[0].mxu0
      %v5565 = vadd.f32 0.0, %v5564
      %v5566 = vpop.f32.mrb[0].mxu0
      %5567 = vmatprep.mubr.bf16.mxu0 0
      %5568 = vmatmul.mubr.bf16.gmra.mrb[0].mxu0 %v5445
      %v5569 = vpop.f32.mrb[0].mxu0
      %v5570 = vadd.f32 0.0, %v5569
      %v5571 = vpop.f32.mrb[0].mxu0
      %v5572 = vpop.f32.mrb[0].mxu0
      %v5573 = vadd.f32 0.0, %v5572
      %v5574 = vpop.f32.mrb[0].mxu0
      %5575 = vmatprep.mubr.bf16.mxu0 0
      %5576 = vmatmul.mubr.bf16.gmra.mrb[0].mxu0 %v5448
      %v5577 = vpop.f32.mrb[0].mxu0
      %v5578 = vadd.f32 0.0, %v5577
      %v5579 = vpop.f32.mrb[0].mxu0
      %v5580 = vpop.f32.mrb[0].mxu0
      %v5581 = vadd.f32 0.0, %v5580
      %v5582 = vpop.f32.mrb[0].mxu0
      %5583 = vmatprep.mubr.bf16.mxu0 0
      %5584 = vmatmul.mubr.bf16.gmra.mrb[0].mxu0 %v5451
      %v5585 = vpop.f32.mrb[0].mxu0
      %v5586 = vadd.f32 0.0, %v5585
      %v5587 = vpop.f32.mrb[0].mxu0
      %v5588 = vpop.f32.mrb[0].mxu0
      %v5589 = vadd.f32 0.0, %v5588
      %v5590 = vpop.f32.mrb[0].mxu0
      %5591 = vmatprep.mubr.bf16.mxu0 0
      %5592 = vmatmul.mubr.bf16.gmra.mrb[0].mxu0 %v5454
      %v5593 = vpop.f32.mrb[0].mxu0
      %v5594 = vadd.f32 0.0, %v5593
      %v5595 = vpop.f32.mrb[0].mxu0
      %v5596 = vpop.f32.mrb[0].mxu0
      %v5597 = vadd.f32 0.0, %v5596
      %v5598 = vpop.f32.mrb[0].mxu0
      %5599 = vmatprep.mubr.bf16.mxu0 0
      %5600 = vmatmul.mubr.bf16.gmra.mrb[0].mxu0 %v5457
      %v5601 = vpop.f32.mrb[0].mxu0
      %v5602 = vadd.f32 0.0, %v5601
      %v5603 = vpop.f32.mrb[0].mxu0
      %v5604 = vpop.f32.mrb[0].mxu0
      %v5605 = vadd.f32 0.0, %v5604
      %v5606 = vpop.f32.mrb[0].mxu0
      %5607 = vmatprep.mubr.bf16.mxu0 0
      %5608 = vmatmul.mubr.bf16.gmra.mrb[0].mxu0 %v5460
      %v5609 = vpop.f32.mrb[0].mxu0
      %v5610 = vadd.f32 0.0, %v5609
      %v5611 = vpop.f32.mrb[0].mxu0
      %v5612 = vpop.f32.mrb[0].mxu0
      %v5613 = vadd.f32 0.0, %v5612
      %v5614 = vpop.f32.mrb[0].mxu0
      %5615 = vmatprep.mubr.bf16.mxu0 0
      %5616 = vmatmul.mubr.bf16.gmra.mrb[0].mxu0 %v5463
      %v5617 = vpop.f32.mrb[0].mxu0
      %v5618 = vadd.f32 0.0, %v5617
      %v5619 = vpop.f32.mrb[0].mxu0
      %v5620 = vpop.f32.mrb[0].mxu0
      %v5621 = vadd.f32 0.0, %v5620
      %v5622 = vpop.f32.mrb[0].mxu0
      %5623 = vmatprep.mubr.bf16.mxu0 0
      %5624 = vmatmul.mubr.bf16.gmra.mrb[0].mxu0 %v5466
      %v5625 = vpop.f32.mrb[0].mxu0
      %v5626 = vadd.f32 0.0, %v5625
      %v5627 = vpop.f32.mrb[0].mxu0
      %v5628 = vpop.f32.mrb[0].mxu0
      %v5629 = vadd.f32 0.0, %v5628
      %v5630 = vpop.f32.mrb[0].mxu0
      %5631 = vdwg.mxu0
      %v5632 = vadd.f32 %v5337, %v5506
      %v5633 = vadd.f32 %v5338, %v5509
      %v5634 = vadd.f32 %v5339, %v5514
      %v5635 = vadd.f32 %v5340, %v5517
      %v5636 = vadd.f32 %v5341, %v5522
      %v5637 = vadd.f32 %v5342, %v5525
      %v5638 = vadd.f32 %v5343, %v5530
      %v5639 = vadd.f32 %v5344, %v5533
      %v5640 = vadd.f32 %v5345, %v5538
      %v5641 = vadd.f32 %v5346, %v5541
      %v5642 = vadd.f32 %v5347, %v5546
      %v5643 = vadd.f32 %v5348, %v5549
      %v5644 = vadd.f32 %v5349, %v5554
      %v5645 = vadd.f32 %v5350, %v5557
      %v5646 = vadd.f32 %v5351, %v5562
      %v5647 = vadd.f32 %v5352, %v5565
      %v5648 = vadd.f32 %v5353, %v5570
      %v5649 = vadd.f32 %v5354, %v5573
      %v5650 = vadd.f32 %v5355, %v5578
      %v5651 = vadd.f32 %v5356, %v5581
      %v5652 = vadd.f32 %v5357, %v5586
      %v5653 = vadd.f32 %v5358, %v5589
      %v5654 = vadd.f32 %v5359, %v5594
      %v5655 = vadd.f32 %v5360, %v5597
      %v5656 = vadd.f32 %v5361, %v5602
      %v5657 = vadd.f32 %v5362, %v5605
      %v5658 = vadd.f32 %v5363, %v5610
      %v5659 = vadd.f32 %v5364, %v5613
      %v5660 = vadd.f32 %v5365, %v5618
      %v5661 = vadd.f32 %v5366, %v5621
      %v5662 = vadd.f32 %v5367, %v5626
      %v5663 = vadd.f32 %v5368, %v5629
      %v5664 = vld [vmem:[%s5369 + $0x1] sm:$0xff]
      %v5665 = vld [vmem:[%s5369 + $0x9] sm:$0xff]
      %v5666 = vld [vmem:[%s5369 + $0x19] sm:$0xff]
      %v5667 = vld [vmem:[%s5369 + $0x21] sm:$0xff]
      %v5668 = vld [vmem:[%s5369 + $0x31] sm:$0xff]
      %v5669 = vld [vmem:[%s5369 + $0x39] sm:$0xff]
      %v5670 = vld [vmem:[%s5369 + $0x49] sm:$0xff]
      %v5671 = vld [vmem:[%s5369 + $0x51] sm:$0xff]
      %v5672 = vld [vmem:[%s5369 + $0x61] sm:$0xff]
      %v5673 = vld [vmem:[%s5369 + $0x69] sm:$0xff]
      %v5674 = vld [vmem:[%s5369 + $0x79] sm:$0xff]
      %v5675 = vld [vmem:[%s5369 + $0x81] sm:$0xff]
      %v5676 = vld [vmem:[%s5369 + $0x91] sm:$0xff]
      %v5677 = vld [vmem:[%s5369 + $0x99] sm:$0xff]
      %v5678 = vld [vmem:[%s5369 + $0xa9] sm:$0xff]
      %v5679 = vld [vmem:[%s5369 + $0xb1] sm:$0xff]
      %v5680 = vld [vmem:[%s5369 + $0xc1] sm:$0xff]
      %v5681 = vld [vmem:[%s5369 + $0xc9] sm:$0xff]
      %v5682 = vld [vmem:[%s5369 + $0xd9] sm:$0xff]
      %v5683 = vld [vmem:[%s5369 + $0xe1] sm:$0xff]
      %v5684 = vld [vmem:[%s5369 + $0xf1] sm:$0xff]
      %v5685 = vld [vmem:[%s5369 + $0xf9] sm:$0xff]
      %v5686 = vld [vmem:[%s5369 + $0x109] sm:$0xff]
      %v5687 = vld [vmem:[%s5369 + $0x111] sm:$0xff]
      %v5688 = vld [vmem:[%s5369 + $0x121] sm:$0xff]
      %v5689 = vld [vmem:[%s5369 + $0x129] sm:$0xff]
      %v5690 = vld [vmem:[%s5369 + $0x139] sm:$0xff]
      %v5691 = vld [vmem:[%s5369 + $0x141] sm:$0xff]
      %v5692 = vld [vmem:[%s5369 + $0x151] sm:$0xff]
      %v5693 = vld [vmem:[%s5369 + $0x159] sm:$0xff]
      %v5694 = vld [vmem:[%s5369 + $0x169] sm:$0xff]
      %v5695 = vld [vmem:[%s5369 + $0x171] sm:$0xff]
      %v5696 = vpack.c.bf16 %v5665, %v5664
      %v5697 = vpack.c.bf16 %v5667, %v5666
      %v5698 = vpack.c.bf16 %v5669, %v5668
      %v5699 = vpack.c.bf16 %v5671, %v5670
      %v5700 = vpack.c.bf16 %v5673, %v5672
      %v5701 = vpack.c.bf16 %v5675, %v5674
      %v5702 = vpack.c.bf16 %v5677, %v5676
      %v5703 = vpack.c.bf16 %v5679, %v5678
      %v5704 = vpack.c.bf16 %v5681, %v5680
      %v5705 = vpack.c.bf16 %v5683, %v5682
      %v5706 = vpack.c.bf16 %v5685, %v5684
      %v5707 = vpack.c.bf16 %v5687, %v5686
      %v5708 = vpack.c.bf16 %v5689, %v5688
      %v5709 = vpack.c.bf16 %v5691, %v5690
      %v5710 = vpack.c.bf16 %v5693, %v5692
      %v5711 = vpack.c.bf16 %v5695, %v5694
      %s5712 = scalar_lea.vmem %s7, 28
      %v5713 = vld [vmem:[%s5712] sm:$0x7]
      %v5715 = vsel %vm954, %v5696, 0
      %v5718 = vsel %vm954, %v5697, 0
      %v5721 = vsel %vm954, %v5698, 0
      %v5724 = vsel %vm954, %v5699, 0
      %v5727 = vsel %vm954, %v5700, 0
      %v5730 = vsel %vm954, %v5701, 0
      %v5733 = vsel %vm954, %v5702, 0
      %v5736 = vsel %vm954, %v5703, 0
      %v5739 = vsel %vm954, %v5704, 0
      %v5742 = vsel %vm954, %v5705, 0
      %v5745 = vsel %vm954, %v5706, 0
      %v5748 = vsel %vm954, %v5707, 0
      %v5751 = vsel %vm954, %v5708, 0
      %v5754 = vsel %vm954, %v5709, 0
      %v5757 = vsel %vm954, %v5710, 0
      %v5760 = vsel %vm954, %v5711, 0
      %v5763 = vand.u32 %v5713, %v3702
      %5765 = vmatprep.subr.bf16.mxu0 0
      %5766 = vmatpush1.bf16.msra.mxu0 %v5763
      %5767 = vmatprep.subr.bf16.mxu0 0
      %5768 = vmatpush1.bf16.msra.mxu0 0
      %5769 = vmatprep.subr.bf16.mxu0 0
      %5770 = vmatpush1.bf16.msra.mxu0 0
      %5771 = vmatprep.subr.bf16.mxu0 0
      %5772 = vmatpush1.bf16.msra.mxu0 0
      %5773 = vmatprep.subr.bf16.mxu0 0
      %5774 = vmatpush1.bf16.msra.mxu0 0
      %5775 = vmatprep.subr.bf16.mxu0 0
      %5776 = vmatpush1.bf16.msra.mxu0 0
      %5777 = vmatprep.subr.bf16.mxu0 0
      %5778 = vmatpush1.bf16.msra.mxu0 0
      %5779 = vmatprep.subr.bf16.mxu0 0
      %5780 = vmatpush1.bf16.msra.mxu0 0
      %5781 = vmatprep.subr.bf16.mxu0 0
      %5782 = vmatpush1.bf16.msra.mxu0 0
      %5783 = vmatprep.subr.bf16.mxu0 0
      %5784 = vmatpush1.bf16.msra.mxu0 0
      %5785 = vmatprep.subr.bf16.mxu0 0
      %5786 = vmatpush1.bf16.msra.mxu0 0
      %5787 = vmatprep.subr.bf16.mxu0 0
      %5788 = vmatpush1.bf16.msra.mxu0 0
      %5789 = vmatprep.subr.bf16.mxu0 0
      %5790 = vmatpush1.bf16.msra.mxu0 0
      %5791 = vmatprep.subr.bf16.mxu0 0
      %5792 = vmatpush1.bf16.msra.mxu0 0
      %5793 = vmatprep.subr.bf16.mxu0 0
      %5794 = vmatpush1.bf16.msra.mxu0 0
      %5795 = vmatprep.subr.bf16.mxu0 0
      %5796 = vmatpush1.bf16.msra.mxu0 0
      %5797 = vmatprep.mubr.bf16.mxu0 0
      %5798 = vmatmul.mubr.bf16.gmra.mrb[0].mxu0 %v5715
      %v5799 = vpop.f32.mrb[0].mxu0
      %v5800 = vadd.f32 0.0, %v5799
      %v5801 = vpop.f32.mrb[0].mxu0
      %v5802 = vpop.f32.mrb[0].mxu0
      %v5803 = vadd.f32 0.0, %v5802
      %v5804 = vpop.f32.mrb[0].mxu0
      %5805 = vmatprep.mubr.bf16.mxu0 0
      %5806 = vmatmul.mubr.bf16.gmra.mrb[0].mxu0 %v5718
      %v5807 = vpop.f32.mrb[0].mxu0
      %v5808 = vadd.f32 0.0, %v5807
      %v5809 = vpop.f32.mrb[0].mxu0
      %v5810 = vpop.f32.mrb[0].mxu0
      %v5811 = vadd.f32 0.0, %v5810
      %v5812 = vpop.f32.mrb[0].mxu0
      %5813 = vmatprep.mubr.bf16.mxu0 0
      %5814 = vmatmul.mubr.bf16.gmra.mrb[0].mxu0 %v5721
      %v5815 = vpop.f32.mrb[0].mxu0
      %v5816 = vadd.f32 0.0, %v5815
      %v5817 = vpop.f32.mrb[0].mxu0
      %v5818 = vpop.f32.mrb[0].mxu0
      %v5819 = vadd.f32 0.0, %v5818
      %v5820 = vpop.f32.mrb[0].mxu0
      %5821 = vmatprep.mubr.bf16.mxu0 0
      %5822 = vmatmul.mubr.bf16.gmra.mrb[0].mxu0 %v5724
      %v5823 = vpop.f32.mrb[0].mxu0
      %v5824 = vadd.f32 0.0, %v5823
      %v5825 = vpop.f32.mrb[0].mxu0
      %v5826 = vpop.f32.mrb[0].mxu0
      %v5827 = vadd.f32 0.0, %v5826
      %v5828 = vpop.f32.mrb[0].mxu0
      %5829 = vmatprep.mubr.bf16.mxu0 0
      %5830 = vmatmul.mubr.bf16.gmra.mrb[0].mxu0 %v5727
      %v5831 = vpop.f32.mrb[0].mxu0
      %v5832 = vadd.f32 0.0, %v5831
      %v5833 = vpop.f32.mrb[0].mxu0
      %v5834 = vpop.f32.mrb[0].mxu0
      %v5835 = vadd.f32 0.0, %v5834
      %v5836 = vpop.f32.mrb[0].mxu0
      %5837 = vmatprep.mubr.bf16.mxu0 0
      %5838 = vmatmul.mubr.bf16.gmra.mrb[0].mxu0 %v5730
      %v5839 = vpop.f32.mrb[0].mxu0
      %v5840 = vadd.f32 0.0, %v5839
      %v5841 = vpop.f32.mrb[0].mxu0
      %v5842 = vpop.f32.mrb[0].mxu0
      %v5843 = vadd.f32 0.0, %v5842
      %v5844 = vpop.f32.mrb[0].mxu0
      %5845 = vmatprep.mubr.bf16.mxu0 0
      %5846 = vmatmul.mubr.bf16.gmra.mrb[0].mxu0 %v5733
      %v5847 = vpop.f32.mrb[0].mxu0
      %v5848 = vadd.f32 0.0, %v5847
      %v5849 = vpop.f32.mrb[0].mxu0
      %v5850 = vpop.f32.mrb[0].mxu0
      %v5851 = vadd.f32 0.0, %v5850
      %v5852 = vpop.f32.mrb[0].mxu0
      %5853 = vmatprep.mubr.bf16.mxu0 0
      %5854 = vmatmul.mubr.bf16.gmra.mrb[0].mxu0 %v5736
      %v5855 = vpop.f32.mrb[0].mxu0
      %v5856 = vadd.f32 0.0, %v5855
      %v5857 = vpop.f32.mrb[0].mxu0
      %v5858 = vpop.f32.mrb[0].mxu0
      %v5859 = vadd.f32 0.0, %v5858
      %v5860 = vpop.f32.mrb[0].mxu0
      %5861 = vmatprep.mubr.bf16.mxu0 0
      %5862 = vmatmul.mubr.bf16.gmra.mrb[0].mxu0 %v5739
      %v5863 = vpop.f32.mrb[0].mxu0
      %v5864 = vadd.f32 0.0, %v5863
      %v5865 = vpop.f32.mrb[0].mxu0
      %v5866 = vpop.f32.mrb[0].mxu0
      %v5867 = vadd.f32 0.0, %v5866
      %v5868 = vpop.f32.mrb[0].mxu0
      %5869 = vmatprep.mubr.bf16.mxu0 0
      %5870 = vmatmul.mubr.bf16.gmra.mrb[0].mxu0 %v5742
      %v5871 = vpop.f32.mrb[0].mxu0
      %v5872 = vadd.f32 0.0, %v5871
      %v5873 = vpop.f32.mrb[0].mxu0
      %v5874 = vpop.f32.mrb[0].mxu0
      %v5875 = vadd.f32 0.0, %v5874
      %v5876 = vpop.f32.mrb[0].mxu0
      %5877 = vmatprep.mubr.bf16.mxu0 0
      %5878 = vmatmul.mubr.bf16.gmra.mrb[0].mxu0 %v5745
      %v5879 = vpop.f32.mrb[0].mxu0
      %v5880 = vadd.f32 0.0, %v5879
      %v5881 = vpop.f32.mrb[0].mxu0
      %v5882 = vpop.f32.mrb[0].mxu0
      %v5883 = vadd.f32 0.0, %v5882
      %v5884 = vpop.f32.mrb[0].mxu0
      %5885 = vmatprep.mubr.bf16.mxu0 0
      %5886 = vmatmul.mubr.bf16.gmra.mrb[0].mxu0 %v5748
      %v5887 = vpop.f32.mrb[0].mxu0
      %v5888 = vadd.f32 0.0, %v5887
      %v5889 = vpop.f32.mrb[0].mxu0
      %v5890 = vpop.f32.mrb[0].mxu0
      %v5891 = vadd.f32 0.0, %v5890
      %v5892 = vpop.f32.mrb[0].mxu0
      %5893 = vmatprep.mubr.bf16.mxu0 0
      %5894 = vmatmul.mubr.bf16.gmra.mrb[0].mxu0 %v5751
      %v5895 = vpop.f32.mrb[0].mxu0
      %v5896 = vadd.f32 0.0, %v5895
      %v5897 = vpop.f32.mrb[0].mxu0
      %v5898 = vpop.f32.mrb[0].mxu0
      %v5899 = vadd.f32 0.0, %v5898
      %v5900 = vpop.f32.mrb[0].mxu0
      %5901 = vmatprep.mubr.bf16.mxu0 0
      %5902 = vmatmul.mubr.bf16.gmra.mrb[0].mxu0 %v5754
      %v5903 = vpop.f32.mrb[0].mxu0
      %v5904 = vadd.f32 0.0, %v5903
      %v5905 = vpop.f32.mrb[0].mxu0
      %v5906 = vpop.f32.mrb[0].mxu0
      %v5907 = vadd.f32 0.0, %v5906
      %v5908 = vpop.f32.mrb[0].mxu0
      %5909 = vmatprep.mubr.bf16.mxu0 0
      %5910 = vmatmul.mubr.bf16.gmra.mrb[0].mxu0 %v5757
      %v5911 = vpop.f32.mrb[0].mxu0
      %v5912 = vadd.f32 0.0, %v5911
      %v5913 = vpop.f32.mrb[0].mxu0
      %v5914 = vpop.f32.mrb[0].mxu0
      %v5915 = vadd.f32 0.0, %v5914
      %v5916 = vpop.f32.mrb[0].mxu0
      %5917 = vmatprep.mubr.bf16.mxu0 0
      %5918 = vmatmul.mubr.bf16.gmra.mrb[0].mxu0 %v5760
      %v5919 = vpop.f32.mrb[0].mxu0
      %v5920 = vadd.f32 0.0, %v5919
      %v5921 = vpop.f32.mrb[0].mxu0
      %v5922 = vpop.f32.mrb[0].mxu0
      %v5923 = vadd.f32 0.0, %v5922
      %v5924 = vpop.f32.mrb[0].mxu0
      %5925 = vdwg.mxu0
      %v5926 = vadd.f32 %v5632, %v5800
      %v5927 = vadd.f32 %v5633, %v5803
      %v5928 = vadd.f32 %v5634, %v5808
      %v5929 = vadd.f32 %v5635, %v5811
      %v5930 = vadd.f32 %v5636, %v5816
      %v5931 = vadd.f32 %v5637, %v5819
      %v5932 = vadd.f32 %v5638, %v5824
      %v5933 = vadd.f32 %v5639, %v5827
      %v5934 = vadd.f32 %v5640, %v5832
      %v5935 = vadd.f32 %v5641, %v5835
      %v5936 = vadd.f32 %v5642, %v5840
      %v5937 = vadd.f32 %v5643, %v5843
      %v5938 = vadd.f32 %v5644, %v5848
      %v5939 = vadd.f32 %v5645, %v5851
      %v5940 = vadd.f32 %v5646, %v5856
      %v5941 = vadd.f32 %v5647, %v5859
      %v5942 = vadd.f32 %v5648, %v5864
      %v5943 = vadd.f32 %v5649, %v5867
      %v5944 = vadd.f32 %v5650, %v5872
      %v5945 = vadd.f32 %v5651, %v5875
      %v5946 = vadd.f32 %v5652, %v5880
      %v5947 = vadd.f32 %v5653, %v5883
      %v5948 = vadd.f32 %v5654, %v5888
      %v5949 = vadd.f32 %v5655, %v5891
      %v5950 = vadd.f32 %v5656, %v5896
      %v5951 = vadd.f32 %v5657, %v5899
      %v5952 = vadd.f32 %v5658, %v5904
      %v5953 = vadd.f32 %v5659, %v5907
      %v5954 = vadd.f32 %v5660, %v5912
      %v5955 = vadd.f32 %v5661, %v5915
      %v5956 = vadd.f32 %v5662, %v5920
      %v5957 = vadd.f32 %v5663, %v5923
      %v5958 = vld [vmem:[%s5369 + $0x2] sm:$0xff]
      %v5959 = vld [vmem:[%s5369 + $0xa] sm:$0xff]
      %v5960 = vld [vmem:[%s5369 + $0x1a] sm:$0xff]
      %v5961 = vld [vmem:[%s5369 + $0x22] sm:$0xff]
      %v5962 = vld [vmem:[%s5369 + $0x32] sm:$0xff]
      %v5963 = vld [vmem:[%s5369 + $0x3a] sm:$0xff]
      %v5964 = vld [vmem:[%s5369 + $0x4a] sm:$0xff]
      %v5965 = vld [vmem:[%s5369 + $0x52] sm:$0xff]
      %v5966 = vld [vmem:[%s5369 + $0x62] sm:$0xff]
      %v5967 = vld [vmem:[%s5369 + $0x6a] sm:$0xff]
      %v5968 = vld [vmem:[%s5369 + $0x7a] sm:$0xff]
      %v5969 = vld [vmem:[%s5369 + $0x82] sm:$0xff]
      %v5970 = vld [vmem:[%s5369 + $0x92] sm:$0xff]
      %v5971 = vld [vmem:[%s5369 + $0x9a] sm:$0xff]
      %v5972 = vld [vmem:[%s5369 + $0xaa] sm:$0xff]
      %v5973 = vld [vmem:[%s5369 + $0xb2] sm:$0xff]
      %v5974 = vld [vmem:[%s5369 + $0xc2] sm:$0xff]
      %v5975 = vld [vmem:[%s5369 + $0xca] sm:$0xff]
      %v5976 = vld [vmem:[%s5369 + $0xda] sm:$0xff]
      %v5977 = vld [vmem:[%s5369 + $0xe2] sm:$0xff]
      %v5978 = vld [vmem:[%s5369 + $0xf2] sm:$0xff]
      %v5979 = vld [vmem:[%s5369 + $0xfa] sm:$0xff]
      %v5980 = vld [vmem:[%s5369 + $0x10a] sm:$0xff]
      %v5981 = vld [vmem:[%s5369 + $0x112] sm:$0xff]
      %v5982 = vld [vmem:[%s5369 + $0x122] sm:$0xff]
      %v5983 = vld [vmem:[%s5369 + $0x12a] sm:$0xff]
      %v5984 = vld [vmem:[%s5369 + $0x13a] sm:$0xff]
      %v5985 = vld [vmem:[%s5369 + $0x142] sm:$0xff]
      %v5986 = vld [vmem:[%s5369 + $0x152] sm:$0xff]
      %v5987 = vld [vmem:[%s5369 + $0x15a] sm:$0xff]
      %v5988 = vld [vmem:[%s5369 + $0x16a] sm:$0xff]
      %v5989 = vld [vmem:[%s5369 + $0x172] sm:$0xff]
      %v5990 = vpack.c.bf16 %v5959, %v5958
      %v5991 = vpack.c.bf16 %v5961, %v5960
      %v5992 = vpack.c.bf16 %v5963, %v5962
      %v5993 = vpack.c.bf16 %v5965, %v5964
      %v5994 = vpack.c.bf16 %v5967, %v5966
      %v5995 = vpack.c.bf16 %v5969, %v5968
      %v5996 = vpack.c.bf16 %v5971, %v5970
      %v5997 = vpack.c.bf16 %v5973, %v5972
      %v5998 = vpack.c.bf16 %v5975, %v5974
      %v5999 = vpack.c.bf16 %v5977, %v5976
      %v6000 = vpack.c.bf16 %v5979, %v5978
      %v6001 = vpack.c.bf16 %v5981, %v5980
      %v6002 = vpack.c.bf16 %v5983, %v5982
      %v6003 = vpack.c.bf16 %v5985, %v5984
      %v6004 = vpack.c.bf16 %v5987, %v5986
      %v6005 = vpack.c.bf16 %v5989, %v5988
      %s6006 = scalar_lea.vmem %s7, 32
      %v6007 = vld [vmem:[%s6006] sm:$0x7]
      %v6009 = vsel %vm954, %v5990, 0
      %v6012 = vsel %vm954, %v5991, 0
      %v6015 = vsel %vm954, %v5992, 0
      %v6018 = vsel %vm954, %v5993, 0
      %v6021 = vsel %vm954, %v5994, 0
      %v6024 = vsel %vm954, %v5995, 0
      %v6027 = vsel %vm954, %v5996, 0
      %v6030 = vsel %vm954, %v5997, 0
      %v6033 = vsel %vm954, %v5998, 0
      %v6036 = vsel %vm954, %v5999, 0
      %v6039 = vsel %vm954, %v6000, 0
      %v6042 = vsel %vm954, %v6001, 0
      %v6045 = vsel %vm954, %v6002, 0
      %v6048 = vsel %vm954, %v6003, 0
      %v6051 = vsel %vm954, %v6004, 0
      %v6054 = vsel %vm954, %v6005, 0
      %v6057 = vand.u32 %v6007, %v3702
      %6059 = vmatprep.subr.bf16.mxu0 0
      %6060 = vmatpush1.bf16.msra.mxu0 %v6057
      %6061 = vmatprep.subr.bf16.mxu0 0
      %6062 = vmatpush1.bf16.msra.mxu0 0
      %6063 = vmatprep.subr.bf16.mxu0 0
      %6064 = vmatpush1.bf16.msra.mxu0 0
      %6065 = vmatprep.subr.bf16.mxu0 0
      %6066 = vmatpush1.bf16.msra.mxu0 0
      %6067 = vmatprep.subr.bf16.mxu0 0
      %6068 = vmatpush1.bf16.msra.mxu0 0
      %6069 = vmatprep.subr.bf16.mxu0 0
      %6070 = vmatpush1.bf16.msra.mxu0 0
      %6071 = vmatprep.subr.bf16.mxu0 0
      %6072 = vmatpush1.bf16.msra.mxu0 0
      %6073 = vmatprep.subr.bf16.mxu0 0
      %6074 = vmatpush1.bf16.msra.mxu0 0
      %6075 = vmatprep.subr.bf16.mxu0 0
      %6076 = vmatpush1.bf16.msra.mxu0 0
      %6077 = vmatprep.subr.bf16.mxu0 0
      %6078 = vmatpush1.bf16.msra.mxu0 0
      %6079 = vmatprep.subr.bf16.mxu0 0
      %6080 = vmatpush1.bf16.msra.mxu0 0
      %6081 = vmatprep.subr.bf16.mxu0 0
      %6082 = vmatpush1.bf16.msra.mxu0 0
      %6083 = vmatprep.subr.bf16.mxu0 0
      %6084 = vmatpush1.bf16.msra.mxu0 0
      %6085 = vmatprep.subr.bf16.mxu0 0
      %6086 = vmatpush1.bf16.msra.mxu0 0
      %6087 = vmatprep.subr.bf16.mxu0 0
      %6088 = vmatpush1.bf16.msra.mxu0 0
      %6089 = vmatprep.subr.bf16.mxu0 0
      %6090 = vmatpush1.bf16.msra.mxu0 0
      %6091 = vmatprep.mubr.bf16.mxu0 0
      %6092 = vmatmul.mubr.bf16.gmra.mrb[0].mxu0 %v6009
      %v6093 = vpop.f32.mrb[0].mxu0
      %v6094 = vadd.f32 0.0, %v6093
      %v6095 = vpop.f32.mrb[0].mxu0
      %v6096 = vpop.f32.mrb[0].mxu0
      %v6097 = vadd.f32 0.0, %v6096
      %v6098 = vpop.f32.mrb[0].mxu0
      %6099 = vmatprep.mubr.bf16.mxu0 0
      %6100 = vmatmul.mubr.bf16.gmra.mrb[0].mxu0 %v6012
      %v6101 = vpop.f32.mrb[0].mxu0
      %v6102 = vadd.f32 0.0, %v6101
      %v6103 = vpop.f32.mrb[0].mxu0
      %v6104 = vpop.f32.mrb[0].mxu0
      %v6105 = vadd.f32 0.0, %v6104
      %v6106 = vpop.f32.mrb[0].mxu0
      %6107 = vmatprep.mubr.bf16.mxu0 0
      %6108 = vmatmul.mubr.bf16.gmra.mrb[0].mxu0 %v6015
      %v6109 = vpop.f32.mrb[0].mxu0
      %v6110 = vadd.f32 0.0, %v6109
      %v6111 = vpop.f32.mrb[0].mxu0
      %v6112 = vpop.f32.mrb[0].mxu0
      %v6113 = vadd.f32 0.0, %v6112
      %v6114 = vpop.f32.mrb[0].mxu0
      %6115 = vmatprep.mubr.bf16.mxu0 0
      %6116 = vmatmul.mubr.bf16.gmra.mrb[0].mxu0 %v6018
      %v6117 = vpop.f32.mrb[0].mxu0
      %v6118 = vadd.f32 0.0, %v6117
      %v6119 = vpop.f32.mrb[0].mxu0
      %v6120 = vpop.f32.mrb[0].mxu0
      %v6121 = vadd.f32 0.0, %v6120
      %v6122 = vpop.f32.mrb[0].mxu0
      %6123 = vmatprep.mubr.bf16.mxu0 0
      %6124 = vmatmul.mubr.bf16.gmra.mrb[0].mxu0 %v6021
      %v6125 = vpop.f32.mrb[0].mxu0
      %v6126 = vadd.f32 0.0, %v6125
      %v6127 = vpop.f32.mrb[0].mxu0
      %v6128 = vpop.f32.mrb[0].mxu0
      %v6129 = vadd.f32 0.0, %v6128
      %v6130 = vpop.f32.mrb[0].mxu0
      %6131 = vmatprep.mubr.bf16.mxu0 0
      %6132 = vmatmul.mubr.bf16.gmra.mrb[0].mxu0 %v6024
      %v6133 = vpop.f32.mrb[0].mxu0
      %v6134 = vadd.f32 0.0, %v6133
      %v6135 = vpop.f32.mrb[0].mxu0
      %v6136 = vpop.f32.mrb[0].mxu0
      %v6137 = vadd.f32 0.0, %v6136
      %v6138 = vpop.f32.mrb[0].mxu0
      %6139 = vmatprep.mubr.bf16.mxu0 0
      %6140 = vmatmul.mubr.bf16.gmra.mrb[0].mxu0 %v6027
      %v6141 = vpop.f32.mrb[0].mxu0
      %v6142 = vadd.f32 0.0, %v6141
      %v6143 = vpop.f32.mrb[0].mxu0
      %v6144 = vpop.f32.mrb[0].mxu0
      %v6145 = vadd.f32 0.0, %v6144
      %v6146 = vpop.f32.mrb[0].mxu0
      %6147 = vmatprep.mubr.bf16.mxu0 0
      %6148 = vmatmul.mubr.bf16.gmra.mrb[0].mxu0 %v6030
      %v6149 = vpop.f32.mrb[0].mxu0
      %v6150 = vadd.f32 0.0, %v6149
      %v6151 = vpop.f32.mrb[0].mxu0
      %v6152 = vpop.f32.mrb[0].mxu0
      %v6153 = vadd.f32 0.0, %v6152
      %v6154 = vpop.f32.mrb[0].mxu0
      %6155 = vmatprep.mubr.bf16.mxu0 0
      %6156 = vmatmul.mubr.bf16.gmra.mrb[0].mxu0 %v6033
      %v6157 = vpop.f32.mrb[0].mxu0
      %v6158 = vadd.f32 0.0, %v6157
      %v6159 = vpop.f32.mrb[0].mxu0
      %v6160 = vpop.f32.mrb[0].mxu0
      %v6161 = vadd.f32 0.0, %v6160
      %v6162 = vpop.f32.mrb[0].mxu0
      %6163 = vmatprep.mubr.bf16.mxu0 0
      %6164 = vmatmul.mubr.bf16.gmra.mrb[0].mxu0 %v6036
      %v6165 = vpop.f32.mrb[0].mxu0
      %v6166 = vadd.f32 0.0, %v6165
      %v6167 = vpop.f32.mrb[0].mxu0
      %v6168 = vpop.f32.mrb[0].mxu0
      %v6169 = vadd.f32 0.0, %v6168
      %v6170 = vpop.f32.mrb[0].mxu0
      %6171 = vmatprep.mubr.bf16.mxu0 0
      %6172 = vmatmul.mubr.bf16.gmra.mrb[0].mxu0 %v6039
      %v6173 = vpop.f32.mrb[0].mxu0
      %v6174 = vadd.f32 0.0, %v6173
      %v6175 = vpop.f32.mrb[0].mxu0
      %v6176 = vpop.f32.mrb[0].mxu0
      %v6177 = vadd.f32 0.0, %v6176
      %v6178 = vpop.f32.mrb[0].mxu0
      %6179 = vmatprep.mubr.bf16.mxu0 0
      %6180 = vmatmul.mubr.bf16.gmra.mrb[0].mxu0 %v6042
      %v6181 = vpop.f32.mrb[0].mxu0
      %v6182 = vadd.f32 0.0, %v6181
      %v6183 = vpop.f32.mrb[0].mxu0
      %v6184 = vpop.f32.mrb[0].mxu0
      %v6185 = vadd.f32 0.0, %v6184
      %v6186 = vpop.f32.mrb[0].mxu0
      %6187 = vmatprep.mubr.bf16.mxu0 0
      %6188 = vmatmul.mubr.bf16.gmra.mrb[0].mxu0 %v6045
      %v6189 = vpop.f32.mrb[0].mxu0
      %v6190 = vadd.f32 0.0, %v6189
      %v6191 = vpop.f32.mrb[0].mxu0
      %v6192 = vpop.f32.mrb[0].mxu0
      %v6193 = vadd.f32 0.0, %v6192
      %v6194 = vpop.f32.mrb[0].mxu0
      %6195 = vmatprep.mubr.bf16.mxu0 0
      %6196 = vmatmul.mubr.bf16.gmra.mrb[0].mxu0 %v6048
      %v6197 = vpop.f32.mrb[0].mxu0
      %v6198 = vadd.f32 0.0, %v6197
      %v6199 = vpop.f32.mrb[0].mxu0
      %v6200 = vpop.f32.mrb[0].mxu0
      %v6201 = vadd.f32 0.0, %v6200
      %v6202 = vpop.f32.mrb[0].mxu0
      %6203 = vmatprep.mubr.bf16.mxu0 0
      %6204 = vmatmul.mubr.bf16.gmra.mrb[0].mxu0 %v6051
      %v6205 = vpop.f32.mrb[0].mxu0
      %v6206 = vadd.f32 0.0, %v6205
      %v6207 = vpop.f32.mrb[0].mxu0
      %v6208 = vpop.f32.mrb[0].mxu0
      %v6209 = vadd.f32 0.0, %v6208
      %v6210 = vpop.f32.mrb[0].mxu0
      %6211 = vmatprep.mubr.bf16.mxu0 0
      %6212 = vmatmul.mubr.bf16.gmra.mrb[0].mxu0 %v6054
      %v6213 = vpop.f32.mrb[0].mxu0
      %v6214 = vadd.f32 0.0, %v6213
      %v6215 = vpop.f32.mrb[0].mxu0
      %v6216 = vpop.f32.mrb[0].mxu0
      %v6217 = vadd.f32 0.0, %v6216
      %v6218 = vpop.f32.mrb[0].mxu0
      %6219 = vdwg.mxu0
      %v6220 = vadd.f32 %v5926, %v6094
      %v6221 = vadd.f32 %v5927, %v6097
      %v6222 = vadd.f32 %v5928, %v6102
      %v6223 = vadd.f32 %v5929, %v6105
      %v6224 = vadd.f32 %v5930, %v6110
      %v6225 = vadd.f32 %v5931, %v6113
      %v6226 = vadd.f32 %v5932, %v6118
      %v6227 = vadd.f32 %v5933, %v6121
      %v6228 = vadd.f32 %v5934, %v6126
      %v6229 = vadd.f32 %v5935, %v6129
      %v6230 = vadd.f32 %v5936, %v6134
      %v6231 = vadd.f32 %v5937, %v6137
      %v6232 = vadd.f32 %v5938, %v6142
      %v6233 = vadd.f32 %v5939, %v6145
      %v6234 = vadd.f32 %v5940, %v6150
      %v6235 = vadd.f32 %v5941, %v6153
      %v6236 = vadd.f32 %v5942, %v6158
      %v6237 = vadd.f32 %v5943, %v6161
      %v6238 = vadd.f32 %v5944, %v6166
      %v6239 = vadd.f32 %v5945, %v6169
      %v6240 = vadd.f32 %v5946, %v6174
      %v6241 = vadd.f32 %v5947, %v6177
      %v6242 = vadd.f32 %v5948, %v6182
      %v6243 = vadd.f32 %v5949, %v6185
      %v6244 = vadd.f32 %v5950, %v6190
      %v6245 = vadd.f32 %v5951, %v6193
      %v6246 = vadd.f32 %v5952, %v6198
      %v6247 = vadd.f32 %v5953, %v6201
      %v6248 = vadd.f32 %v5954, %v6206
      %v6249 = vadd.f32 %v5955, %v6209
      %v6250 = vadd.f32 %v5956, %v6214
      %v6251 = vadd.f32 %v5957, %v6217
      %v6252 = vpack.c.bf16 %v6221, %v6220
      %v6253 = vpack.c.bf16 %v6223, %v6222
      %v6254 = vpack.c.bf16 %v6225, %v6224
      %v6255 = vpack.c.bf16 %v6227, %v6226
      %v6256 = vpack.c.bf16 %v6229, %v6228
      %v6257 = vpack.c.bf16 %v6231, %v6230
      %v6258 = vpack.c.bf16 %v6233, %v6232
      %v6259 = vpack.c.bf16 %v6235, %v6234
      %v6260 = vpack.c.bf16 %v6237, %v6236
      %v6261 = vpack.c.bf16 %v6239, %v6238
      %v6262 = vpack.c.bf16 %v6241, %v6240
      %v6263 = vpack.c.bf16 %v6243, %v6242
      %v6264 = vpack.c.bf16 %v6245, %v6244
      %v6265 = vpack.c.bf16 %v6247, %v6246
      %v6266 = vpack.c.bf16 %v6249, %v6248
      %v6267 = vpack.c.bf16 %v6251, %v6250
      %v6284 = vunpack.c.l.b16 %v6252
      %v6285 = vunpack.c.h.b16 %v6252
      %v6286 = vunpack.c.l.b16 %v6253
      %v6287 = vunpack.c.h.b16 %v6253
      %v6288 = vunpack.c.l.b16 %v6254
      %v6289 = vunpack.c.h.b16 %v6254
      %v6290 = vunpack.c.l.b16 %v6255
      %v6291 = vunpack.c.h.b16 %v6255
      %v6292 = vunpack.c.l.b16 %v6256
      %v6293 = vunpack.c.h.b16 %v6256
      %v6294 = vunpack.c.l.b16 %v6257
      %v6295 = vunpack.c.h.b16 %v6257
      %v6296 = vunpack.c.l.b16 %v6258
      %v6297 = vunpack.c.h.b16 %v6258
      %v6298 = vunpack.c.l.b16 %v6259
      %v6299 = vunpack.c.h.b16 %v6259
      %v6300 = vunpack.c.l.b16 %v6260
      %v6301 = vunpack.c.h.b16 %v6260
      %v6302 = vunpack.c.l.b16 %v6261
      %v6303 = vunpack.c.h.b16 %v6261
      %v6304 = vunpack.c.l.b16 %v6262
      %v6305 = vunpack.c.h.b16 %v6262
      %v6306 = vunpack.c.l.b16 %v6263
      %v6307 = vunpack.c.h.b16 %v6263
      %v6308 = vunpack.c.l.b16 %v6264
      %v6309 = vunpack.c.h.b16 %v6264
      %v6310 = vunpack.c.l.b16 %v6265
      %v6311 = vunpack.c.h.b16 %v6265
      %v6312 = vunpack.c.l.b16 %v6266
      %v6313 = vunpack.c.h.b16 %v6266
      %v6314 = vunpack.c.l.b16 %v6267
      %v6315 = vunpack.c.h.b16 %v6267
      %v6316 = vpack.c.b16 %v6284, %v6284
      %v6317 = vpack.c.b16 %v6285, %v6285
      %v6318 = vpack.c.b16 %v6286, %v6286
      %v6319 = vpack.c.b16 %v6287, %v6287
      %v6320 = vpack.c.b16 %v6288, %v6288
      %v6321 = vpack.c.b16 %v6289, %v6289
      %v6322 = vpack.c.b16 %v6290, %v6290
      %v6323 = vpack.c.b16 %v6291, %v6291
      %v6324 = vpack.c.b16 %v6292, %v6292
      %v6325 = vpack.c.b16 %v6293, %v6293
      %v6326 = vpack.c.b16 %v6294, %v6294
      %v6327 = vpack.c.b16 %v6295, %v6295
      %v6328 = vpack.c.b16 %v6296, %v6296
      %v6329 = vpack.c.b16 %v6297, %v6297
      %v6330 = vpack.c.b16 %v6298, %v6298
      %v6331 = vpack.c.b16 %v6299, %v6299
      %v6332 = vpack.c.b16 %v6300, %v6300
      %v6333 = vpack.c.b16 %v6301, %v6301
      %v6334 = vpack.c.b16 %v6302, %v6302
      %v6335 = vpack.c.b16 %v6303, %v6303
      %v6336 = vpack.c.b16 %v6304, %v6304
      %v6337 = vpack.c.b16 %v6305, %v6305
      %v6338 = vpack.c.b16 %v6306, %v6306
      %v6339 = vpack.c.b16 %v6307, %v6307
      %v6340 = vpack.c.b16 %v6308, %v6308
      %v6341 = vpack.c.b16 %v6309, %v6309
      %v6342 = vpack.c.b16 %v6310, %v6310
      %v6343 = vpack.c.b16 %v6311, %v6311
      %v6344 = vpack.c.b16 %v6312, %v6312
      %v6345 = vpack.c.b16 %v6313, %v6313
      %v6346 = vpack.c.b16 %v6314, %v6314
      %v6347 = vpack.c.b16 %v6315, %v6315
      %6380 = vst [vmem:[%s674] sm:$0xf] %v6316
      %6381 = vst [vmem:[%s674 + $0x4] sm:$0xf] %v6317
      %6382 = vst [vmem:[%s674 + $0x8] sm:$0xf] %v6318
      %6383 = vst [vmem:[%s674 + $0xc] sm:$0xf] %v6319
      %6384 = vst [vmem:[%s674 + $0x10] sm:$0xf] %v6320
      %6385 = vst [vmem:[%s674 + $0x14] sm:$0xf] %v6321
      %6386 = vst [vmem:[%s674 + $0x18] sm:$0xf] %v6322
      %6387 = vst [vmem:[%s674 + $0x1c] sm:$0xf] %v6323
      %6388 = vst [vmem:[%s674 + $0x20] sm:$0xf] %v6324
      %6389 = vst [vmem:[%s674 + $0x24] sm:$0xf] %v6325
      %6390 = vst [vmem:[%s674 + $0x28] sm:$0xf] %v6326
      %6391 = vst [vmem:[%s674 + $0x2c] sm:$0xf] %v6327
      %6392 = vst [vmem:[%s674 + $0x30] sm:$0xf] %v6328
      %6393 = vst [vmem:[%s674 + $0x34] sm:$0xf] %v6329
      %6394 = vst [vmem:[%s674 + $0x38] sm:$0xf] %v6330
      %6395 = vst [vmem:[%s674 + $0x3c] sm:$0xf] %v6331
      %6396 = vst [vmem:[%s674 + $0x40] sm:$0xf] %v6332
      %6397 = vst [vmem:[%s674 + $0x44] sm:$0xf] %v6333
      %6398 = vst [vmem:[%s674 + $0x48] sm:$0xf] %v6334
      %6399 = vst [vmem:[%s674 + $0x4c] sm:$0xf] %v6335
      %6400 = vst [vmem:[%s674 + $0x50] sm:$0xf] %v6336
      %6401 = vst [vmem:[%s674 + $0x54] sm:$0xf] %v6337
      %6402 = vst [vmem:[%s674 + $0x58] sm:$0xf] %v6338
      %6403 = vst [vmem:[%s674 + $0x5c] sm:$0xf] %v6339
      %6404 = vst [vmem:[%s674 + $0x60] sm:$0xf] %v6340
      %6405 = vst [vmem:[%s674 + $0x64] sm:$0xf] %v6341
      %6406 = vst [vmem:[%s674 + $0x68] sm:$0xf] %v6342
      %6407 = vst [vmem:[%s674 + $0x6c] sm:$0xf] %v6343
      %6408 = vst [vmem:[%s674 + $0x70] sm:$0xf] %v6344
      %6409 = vst [vmem:[%s674 + $0x74] sm:$0xf] %v6345
      %6410 = vst [vmem:[%s674 + $0x78] sm:$0xf] %v6346
      %6411 = vst [vmem:[%s674 + $0x7c] sm:$0xf] %v6347
      %v6412 = vadd.f32 %v6220, %v6221
      %v6413 = vadd.f32 %v6412, %v6222
      %v6414 = vadd.f32 %v6413, %v6223
      %v6415 = vadd.f32 %v6414, %v6224
      %v6416 = vadd.f32 %v6415, %v6225
      %v6417 = vadd.f32 %v6416, %v6226
      %v6418 = vadd.f32 %v6417, %v6227
      %v6419 = vadd.f32 %v6418, %v6228
      %v6420 = vadd.f32 %v6419, %v6229
      %v6421 = vadd.f32 %v6420, %v6230
      %v6422 = vadd.f32 %v6421, %v6231
      %v6423 = vadd.f32 %v6422, %v6232
      %v6424 = vadd.f32 %v6423, %v6233
      %v6425 = vadd.f32 %v6424, %v6234
      %v6426 = vadd.f32 %v6425, %v6235
      %v6427 = vadd.f32 %v6426, %v6236
      %v6428 = vadd.f32 %v6427, %v6237
      %v6429 = vadd.f32 %v6428, %v6238
      %v6430 = vadd.f32 %v6429, %v6239
      %v6431 = vadd.f32 %v6430, %v6240
      %v6432 = vadd.f32 %v6431, %v6241
      %v6433 = vadd.f32 %v6432, %v6242
      %v6434 = vadd.f32 %v6433, %v6243
      %v6435 = vadd.f32 %v6434, %v6244
      %v6436 = vadd.f32 %v6435, %v6245
      %v6437 = vadd.f32 %v6436, %v6246
      %v6438 = vadd.f32 %v6437, %v6247
      %v6439 = vadd.f32 %v6438, %v6248
      %v6440 = vadd.f32 %v6439, %v6249
      %v6441 = vadd.f32 %v6440, %v6250
      %v6442 = vadd.f32 %v6441, %v6251
      %v6443 = vrot.slane %v6442, 4
      %v6444 = vadd.f32 %v6442, %v6443
      %v6445 = vrot.slane %v6444, 2
      %v6446 = vadd.f32 %v6444, %v6445
      %v6447 = vrot.slane %v6446, 1
      %v6448 = vadd.f32 %v6446, %v6447
      %v6449 = vmul.f32 %v6220, %v6220
      %v6450 = vmul.f32 %v6221, %v6221
      %v6451 = vmul.f32 %v6222, %v6222
      %v6452 = vmul.f32 %v6223, %v6223
      %v6453 = vmul.f32 %v6224, %v6224
      %v6454 = vmul.f32 %v6225, %v6225
      %v6455 = vmul.f32 %v6226, %v6226
      %v6456 = vmul.f32 %v6227, %v6227
      %v6457 = vmul.f32 %v6228, %v6228
      %v6458 = vmul.f32 %v6229, %v6229
      %v6459 = vmul.f32 %v6230, %v6230
      %v6460 = vmul.f32 %v6231, %v6231
      %v6461 = vmul.f32 %v6232, %v6232
      %v6462 = vmul.f32 %v6233, %v6233
      %v6463 = vmul.f32 %v6234, %v6234
      %v6464 = vmul.f32 %v6235, %v6235
      %v6465 = vmul.f32 %v6236, %v6236
      %v6466 = vmul.f32 %v6237, %v6237
      %v6467 = vmul.f32 %v6238, %v6238
      %v6468 = vmul.f32 %v6239, %v6239
      %v6469 = vmul.f32 %v6240, %v6240
      %v6470 = vmul.f32 %v6241, %v6241
      %v6471 = vmul.f32 %v6242, %v6242
      %v6472 = vmul.f32 %v6243, %v6243
      %v6473 = vmul.f32 %v6244, %v6244
      %v6474 = vmul.f32 %v6245, %v6245
      %v6475 = vmul.f32 %v6246, %v6246
      %v6476 = vmul.f32 %v6247, %v6247
      %v6477 = vmul.f32 %v6248, %v6248
      %v6478 = vmul.f32 %v6249, %v6249
      %v6479 = vmul.f32 %v6250, %v6250
      %v6480 = vmul.f32 %v6251, %v6251
      %v6481 = vadd.f32 %v6449, %v6450
      %v6482 = vadd.f32 %v6481, %v6451
      %v6483 = vadd.f32 %v6482, %v6452
      %v6484 = vadd.f32 %v6483, %v6453
      %v6485 = vadd.f32 %v6484, %v6454
      %v6486 = vadd.f32 %v6485, %v6455
      %v6487 = vadd.f32 %v6486, %v6456
      %v6488 = vadd.f32 %v6487, %v6457
      %v6489 = vadd.f32 %v6488, %v6458
      %v6490 = vadd.f32 %v6489, %v6459
      %v6491 = vadd.f32 %v6490, %v6460
      %v6492 = vadd.f32 %v6491, %v6461
      %v6493 = vadd.f32 %v6492, %v6462
      %v6494 = vadd.f32 %v6493, %v6463
      %v6495 = vadd.f32 %v6494, %v6464
      %v6496 = vadd.f32 %v6495, %v6465
      %v6497 = vadd.f32 %v6496, %v6466
      %v6498 = vadd.f32 %v6497, %v6467
      %v6499 = vadd.f32 %v6498, %v6468
      %v6500 = vadd.f32 %v6499, %v6469
      %v6501 = vadd.f32 %v6500, %v6470
      %v6502 = vadd.f32 %v6501, %v6471
      %v6503 = vadd.f32 %v6502, %v6472
      %v6504 = vadd.f32 %v6503, %v6473
      %v6505 = vadd.f32 %v6504, %v6474
      %v6506 = vadd.f32 %v6505, %v6475
      %v6507 = vadd.f32 %v6506, %v6476
      %v6508 = vadd.f32 %v6507, %v6477
      %v6509 = vadd.f32 %v6508, %v6478
      %v6510 = vadd.f32 %v6509, %v6479
      %v6511 = vadd.f32 %v6510, %v6480
      %v6512 = vrot.slane %v6511, 4
      %v6513 = vadd.f32 %v6511, %v6512
      %v6514 = vrot.slane %v6513, 2
      %v6515 = vadd.f32 %v6513, %v6514
      %v6516 = vrot.slane %v6515, 1
      %v6517 = vadd.f32 %v6515, %v6516
      %v6518 = vsel %vm1164, %v6448, %v6517
      %6519 = vst [vmem:[%s682] sm:$0x3] %v6518
      %s6520 = smul.u32 16, %s26
      %p6521 = scmp.lt.s32.totalorder %s25, 1
      %s6522 = scalar_select %p6521, %s25, 1
      %p6523 = scmp.lt.s32.totalorder %s6520, 15
      %s6524 = scalar_select %p6523, %s6520, 15
      %s6525 = smul.addr %s6524, 2
      %s6526 = smul.addr %s6522, 32
      %s6527 = sadd.s32 %s6525, %s6526
      %s6528 = smul.addr %s6527, 4
      %s6529 = scalar_lea.vmem %s8, %s6528
      %p6530 = scmp.lt.s32.totalorder %s25, 1
      %s6531 = scalar_select %p6530, %s25, 1
      %p6532 = scmp.lt.s32.totalorder %s26, 0
      %s6533 = scalar_select %p6532, %s26, 0
      %s6534 = sadd.s32 %s6533, %s6531
      %s6535 = smul.addr %s6534, 2
      %s6536 = scalar_lea.vmem %s9, %s6535
      // Predicated region
      $region85: #{upsample_bn_forward.3} parent=51 // pred_check
        %p6537 = pneg %p295
      $region86: #{upsample_bn_forward.3} parent=51 // pred_check_branch
        %6539 = sbr.rel (%p6537) target = $region88
      $region87: #{upsample_bn_forward.3} parent=51 // pred_region
        %s6540 = smul.u32 16, %s26
      $region88: #{upsample_bn_forward.3} parent=51 // pred_fallthru
        _
      // Predicated region
      $region89: #{upsample_bn_forward.3} parent=51 // pred_check
        %p6541 = pneg %p323
      $region90: #{upsample_bn_forward.3} parent=51 // pred_check_branch
        %6543 = sbr.rel (%p6541) target = $region92
      $region91: #{upsample_bn_forward.3} parent=51 // pred_region
        _
      $region92: #{upsample_bn_forward.3} parent=51 // pred_fallthru
        _
    $region52: #{upsample_bn_forward.3} parent=5 // pred_fallthru
      _
    %p6544 = scmp.le.s32.totalorder 2, %s16
    // Predicated region
    $region93: #{upsample_bn_forward.3} parent=5 // pred_check
      %p6545 = pneg %p6544
    $region94: #{upsample_bn_forward.3} parent=5 // pred_check_branch
      %6547 = sbr.rel (%p6545) target = $region96
    $region95: #{upsample_bn_forward.3} parent=5 // pred_region
      %s6548 = ssub.s32 %s16, 2
      // Predicated region
      $region97: #{upsample_bn_forward.3} parent=95 // pred_check
        %p6549 = pneg %p301
      $region98: #{upsample_bn_forward.3} parent=95 // pred_check_branch
        %6551 = sbr.rel (%p6549) target = $region100
      $region99: #{upsample_bn_forward.3} parent=95 // pred_region
        %s6552 = smul.u32 16, %s28
        %p6553 = scmp.lt.s32.totalorder %s27, 1
        %s6554 = scalar_select %p6553, %s27, 1
        %p6555 = scmp.lt.s32.totalorder %s6552, 15
        %s6556 = scalar_select %p6555, %s6552, 15
        %s6557 = smul.addr %s6556, 2
        %s6558 = smul.addr %s6554, 32
        %s6559 = sadd.s32 %s6557, %s6558
        %s6560 = smul.addr %s6559, 4
        %s6561 = scalar_lea.vmem %s8, %s6560
      $region100: #{upsample_bn_forward.3} parent=95 // pred_fallthru
        _
      // Predicated region
      $region101: #{upsample_bn_forward.3} parent=95 // pred_check
        %p6562 = pneg %p329
      $region102: #{upsample_bn_forward.3} parent=95 // pred_check_branch
        %6564 = sbr.rel (%p6562) target = $region104
      $region103: #{upsample_bn_forward.3} parent=95 // pred_region
        %p6565 = scmp.lt.s32.totalorder %s27, 1
        %s6566 = scalar_select %p6565, %s27, 1
        %p6567 = scmp.lt.s32.totalorder %s28, 0
        %s6568 = scalar_select %p6567, %s28, 0
        %s6569 = sadd.s32 %s6568, %s6566
        %s6570 = smul.addr %s6569, 2
        %s6571 = scalar_lea.vmem %s9, %s6570
      $region104: #{upsample_bn_forward.3} parent=95 // pred_fallthru
        _
    $region96: #{upsample_bn_forward.3} parent=5 // pred_fallthru
      _
  $region6: #{upsample_bn_forward.3} parent=0 // loop_footer
    %s20 = sadd.s32 1, %s16
  $region7: #{upsample_bn_forward.3} parent=0 // loop_footer_branch
    %15 = sbr.rel target = $region3
  $region8: #{upsample_bn_forward.3} parent=0 // loop_exit
    _

</llo_original>
